<compile_context>
chip_gen: v5e
topology: v5e:2x2
jax: 0.10.0
libtpu: 0.0.40
codegen_flags: <defaults>
</compile_context>

<pallas_src>
import functools

import jax
import jax.numpy as jnp
from jax import lax
from jax.experimental import pallas as pl
from jax.experimental.pallas import tpu as pltpu


def _hardswish(x):
    # x * hardtanh(x + 3, 0, 6) / 6   (matches the PyTorch Hardswish)
    return x * jnp.clip(x + 3.0, 0.0, 6.0) / 6.0


def _round_up(x, m):
    return ((x + m - 1) // m) * m


def _pad_ch(c):
    # Lane-dense channel padding: small channel counts go to a full 128-lane
    # vreg; larger ones to a multiple of 8 (YOLO sizes are already 128-mults).
    return _round_up(c, 128) if c < 128 else _round_up(c, 8)


def _pick_tr(h, wp):
    # Target TR*Wp >= 512 (MXU M dimension), capped near the image height.
    tr = 8
    while tr * wp < 512 and tr < 64:
        tr *= 2
    return min(tr, max(8, _round_up(h, 8)))


# ---------------------------------------------------------------------------
# Fused kernel: per (image n, row-block r)
#   stage 1: 1x1 conv + BN + Hardswish on TR+2 halo rows
#   stage 2: 3x3 conv (as 3 wide-K matmuls) + BN + Hardswish (+ residual)
# ---------------------------------------------------------------------------
def _bottleneck_kernel(xtop_ref, xbody_ref, xbot_ref, w1_ref, b1_ref,
                       w2_ref, b2_ref, o_ref, yp_ref,
                       *, TR, W, Wp, Cmp, C2p, pad_rows, add):
    # xtop_ref : (1, 1,  Wp, C1p)  row above this block (zeros for r == 0)
    # xbody_ref: (1, TR, Wp, C1p)  the TR body rows
    # xbot_ref : (1, 1,  Wp, C1p)  row below this block (zeros for last r)
    # w1_ref   : (C1p, Cmp)        1x1 weights, BN scale folded
    # b1_ref   : (1, Cmp)  f32     BN shift of cv1
    # w2_ref   : (3, 3*Cmp, C2p)   per kernel-row, the 3 kw taps stacked on K
    # b2_ref   : (1, C2p)  f32     BN shift of cv2
    # o_ref    : (1, TR, Wp, C2p)  output row block
    # yp_ref   : (TR+2, Wp, 3*Cmp) VMEM scratch: width-im2col of cv1 output
    r = pl.program_id(1)
    last_r = pl.num_programs(1) - 1
    halo = TR + 2
    cdt = yp_ref.dtype
    c1p = xbody_ref.shape[-1]

    # ---- stage 1: 1x1 conv + BN + Hardswish on the TR+2 halo rows ----------
    xm = xbody_ref[0]                                            # (TR, Wp, C1p)
    xall = jnp.concatenate([xtop_ref[0], xm, xbot_ref[0]], axis=0)
    y1 = jnp.dot(xall.reshape(halo * Wp, c1p), w1_ref[...],
                 preferred_element_type=jnp.float32)
    y1 = _hardswish(y1 + b1_ref[...]).reshape(halo, Wp, Cmp)

    if Wp > W:
        # width-padding columns feed the dj=+-1 taps -> must be zero cv1 output
        col = lax.broadcasted_iota(jnp.int32, (halo, Wp, Cmp), 1)
        y1 = jnp.where(col < W, y1, 0.0)

    # ---- width im2col slab: lanes hold [cv1(w-1) | cv1(w) | cv1(w+1)] -------
    zc = jnp.zeros((halo, 1, Cmp), jnp.float32)
    left = jnp.concatenate([zc, y1[:, :Wp - 1, :]], axis=1)      # cv1[w-1]
    right = jnp.concatenate([y1[:, 1:, :], zc], axis=1)          # cv1[w+1]
    yp_ref[...] = jnp.concatenate([left, y1, right], axis=-1).astype(cdt)

    # cv1-output rows outside the image are zero (the 3x3 zero-padding acts on
    # the cv1 *output*); only the first / last row blocks pay for it.
    @pl.when(r == 0)
    def _():
        yp_ref[0:1] = jnp.zeros((1, Wp, 3 * Cmp), cdt)

    @pl.when(r == last_r)
    def _():
        yp_ref[halo - 1 - pad_rows:halo] = jnp.zeros(
            (pad_rows + 1, Wp, 3 * Cmp), cdt)

    # ---- stage 2: 3x3 conv as 3 wide-K (K = 3*Cmp) matmuls ------------------
    acc = jnp.zeros((TR * Wp, C2p), jnp.float32)
    for di in range(3):
        patch = yp_ref[di:di + TR]                               # (TR, Wp, 3*Cmp)
        acc = acc + jnp.dot(patch.reshape(TR * Wp, 3 * Cmp), w2_ref[di],
                            preferred_element_type=jnp.float32)
    y = _hardswish(acc + b2_ref[...])

    if add:
        # residual rows come from the body block already resident in VMEM
        y = y + xm.reshape(TR * Wp, C2p).astype(jnp.float32)

    o_ref[...] = y.reshape(1, TR, Wp, C2p).astype(o_ref.dtype)


# ---------------------------------------------------------------------------
# NHWC entry point (no layout round trips when stacking layers)
# ---------------------------------------------------------------------------
def bottleneck_pallas_nhwc(x_nhwc, params, shortcut=True, eps=1e-5,
                           dtype=jnp.bfloat16, out_dtype=jnp.float32):
    (w1, g1, bt1, m1, v1, w2, g2, bt2, m2, v2) = params
    N, H, W, C1 = x_nhwc.shape
    Cm = w1.shape[0]
    C2 = w2.shape[0]
    assert w1.shape[1] == C1 and w2.shape[1] == Cm and w2.shape[2:] == (3, 3)
    add = bool(shortcut and C1 == C2)

    C1p, Cmp, C2p = _pad_ch(C1), _pad_ch(Cm), _pad_ch(C2)
    if add:
        assert C1p == C2p

    Wp = _round_up(W, 8)
    TR = _pick_tr(H, Wp)
    Hp = _round_up(H, TR)
    pad_rows = Hp - H
    RB = Hp // TR

    f32 = jnp.float32
    # Fold BN (inference) into per-channel scale / shift.
    s1 = (g1 / jnp.sqrt(v1 + eps)).astype(f32)
    sh1 = (bt1 - m1 * s1).astype(f32)
    s2 = (g2 / jnp.sqrt(v2 + eps)).astype(f32)
    sh2 = (bt2 - m2 * s2).astype(f32)

    # cv1: (Cm, C1, 1, 1) -> (C1, Cm), BN scale folded into columns.
    w1_mat = jnp.transpose(w1.reshape(Cm, C1)).astype(f32) * s1[None, :]
    w1_mat = jnp.pad(w1_mat, ((0, C1p - C1), (0, Cmp - Cm))).astype(dtype)
    b1_row = jnp.pad(sh1, (0, Cmp - Cm)).reshape(1, Cmp).astype(f32)

    # cv2: (C2, Cm, 3, 3) -> (kh, kw, Cm, C2) -> (3, 3*Cmp, C2p): the three kw
    # taps of each kernel row are stacked along K (wide-K matmul).
    w2_k = jnp.transpose(w2, (2, 3, 1, 0)).astype(f32) * s2[None, None, None, :]
    w2_k = jnp.pad(w2_k, ((0, 0), (0, 0), (0, Cmp - Cm), (0, C2p - C2)))
    w2_wide = w2_k.reshape(3, 3 * Cmp, C2p).astype(dtype)
    b2_row = jnp.pad(sh2, (0, C2p - C2)).reshape(1, C2p).astype(f32)

    # Body rows (channel / width / H padded, compute dtype).
    x_body = jnp.pad(x_nhwc.astype(dtype),
                     ((0, 0), (0, Hp - H), (0, Wp - W), (0, C1p - C1)))
    # Per-row-block halo rows (row above / below each TR-row block).  The
    # rows for the image border are zeros; their cv1 output is overwritten in
    # the kernel anyway.
    zrow = jnp.zeros((N, 1, Wp, C1p), dtype)
    if RB > 1:
        x_top = jnp.concatenate([zrow, x_body[:, TR - 1:Hp - 1:TR]], axis=1)
        x_bot = jnp.concatenate([x_body[:, TR:Hp:TR], zrow], axis=1)
    else:
        x_top = zrow
        x_bot = zrow

    kernel = functools.partial(_bottleneck_kernel, TR=TR, W=W, Wp=Wp,
                               Cmp=Cmp, C2p=C2p, pad_rows=pad_rows, add=add)

    cbytes = jnp.dtype(dtype).itemsize
    obytes = jnp.dtype(out_dtype).itemsize
    vmem_need = (2 * (TR + 2) * Wp * C1p * cbytes            # x blocks (2 bufs)
                 + 2 * (C1p * Cmp + 3 * 3 * Cmp * C2p) * cbytes
                 + (TR + 2) * Wp * 3 * Cmp * cbytes          # yp scratch
                 + 2 * TR * Wp * C2p * obytes                # out blocks
                 + 4 * (Cmp + C2p) * 4)
    vmem_limit = int(min(64 * 1024 * 1024,
                         max(32 * 1024 * 1024, 2 * vmem_need)))

    def _specs(buffered):
        kw = dict(pipeline_mode=pl.Buffered(1)) if buffered else {}
        return [
            pl.BlockSpec((1, 1, Wp, C1p), lambda n, r: (n, r, 0, 0)),
            pl.BlockSpec((1, TR, Wp, C1p), lambda n, r: (n, r, 0, 0)),
            pl.BlockSpec((1, 1, Wp, C1p), lambda n, r: (n, r, 0, 0)),
            pl.BlockSpec((C1p, Cmp), lambda n, r: (0, 0), **kw),
            pl.BlockSpec((1, Cmp), lambda n, r: (0, 0), **kw),
            pl.BlockSpec((3, 3 * Cmp, C2p), lambda n, r: (0, 0, 0), **kw),
            pl.BlockSpec((1, C2p), lambda n, r: (0, 0), **kw),
        ]

    def _call(buffered):
        return pl.pallas_call(
            kernel,
            out_shape=jax.ShapeDtypeStruct((N, Hp, Wp, C2p), out_dtype),
            grid=(N, RB),
            in_specs=_specs(buffered),
            out_specs=pl.BlockSpec((1, TR, Wp, C2p), lambda n, r: (n, r, 0, 0)),
            scratch_shapes=[pltpu.VMEM((TR + 2, Wp, 3 * Cmp), dtype)],
            compiler_params=pltpu.CompilerParams(
                dimension_semantics=("parallel", "parallel"),
                vmem_limit_bytes=vmem_limit),
        )(x_top, x_body, x_bot, w1_mat, b1_row, w2_wide, b2_row)

    try:
        out = _call(True)
    except Exception:
        # pipeline_mode / pl.Buffered(1) unsupported on this JAX build:
        # fall back to the default (double-buffered) constant operands.
        out = _call(False)

    return out[:, :H, :W, :C2]          # strip H / W / channel padding


# ---------------------------------------------------------------------------
# NCHW wrapper (matches the PyTorch module interface)
# ---------------------------------------------------------------------------
def bottleneck_pallas(x_nchw, params, shortcut=True, eps=1e-5,
                      dtype=jnp.bfloat16, out_dtype=jnp.float32):
    x_nhwc = jnp.transpose(x_nchw, (0, 2, 3, 1))
    y = bottleneck_pallas_nhwc(x_nhwc, params, shortcut=shortcut, eps=eps,
                               dtype=dtype, out_dtype=out_dtype)
    return jnp.transpose(y, (0, 3, 1, 2))


# ---------------------------------------------------------------------------
# Pure-JAX reference (same math) for a correctness check
# ---------------------------------------------------------------------------
def bottleneck_ref(x_nchw, params, shortcut=True, eps=1e-5):
    (w1, g1, bt1, m1, v1, w2, g2, bt2, m2, v2) = params
    x = jnp.transpose(x_nchw, (0, 2, 3, 1)).astype(jnp.float32)

    def bn(y, g, b, m, v):
        return (y - m) / jnp.sqrt(v + eps) * g + b

    dn = ('NHWC', 'HWIO', 'NHWC')
    w1_hwio = jnp.transpose(w1, (2, 3, 1, 0))
    w2_hwio = jnp.transpose(w2, (2, 3, 1, 0))
    y = lax.conv_general_dilated(x, w1_hwio, (1, 1), 'VALID',
                                 dimension_numbers=dn)
    y = _hardswish(bn(y, g1, bt1, m1, v1))
    y = lax.conv_general_dilated(y, w2_hwio, (1, 1), 'SAME',
                                 dimension_numbers=dn)
    y = _hardswish(bn(y, g2, bt2, m2, v2))
    if shortcut and x.shape[-1] == y.shape[-1]:
        y = y + x
    return jnp.transpose(y, (0, 3, 1, 2))


if __name__ == "__main__":
    # Bottleneck(c1=4, c2=4, shortcut=True, g=1, e=0.5) -> c_ = 2
    N, C1, C2, H, W = 2, 4, 4, 16, 16
    Cm = int(C2 * 0.5)

    key = jax.random.PRNGKey(0)
    ks = jax.random.split(key, 11)
    w1 = 0.1 * jax.random.normal(ks[0], (Cm, C1, 1, 1), jnp.float32)
    w2 = 0.1 * jax.random.normal(ks[1], (C2, Cm, 3, 3), jnp.float32)
    g1 = 1.0 + 0.1 * jax.random.normal(ks[2], (Cm,), jnp.float32)
    bt1 = 0.1 * jax.random.normal(ks[3], (Cm,), jnp.float32)
    m1 = 0.1 * jax.random.normal(ks[4], (Cm,), jnp.float32)
    v1 = 0.5 + jnp.abs(jax.random.normal(ks[5], (Cm,), jnp.float32))
    g2 = 1.0 + 0.1 * jax.random.normal(ks[6], (C2,), jnp.float32)
    bt2 = 0.1 * jax.random.normal(ks[7], (C2,), jnp.float32)
    m2 = 0.1 * jax.random.normal(ks[8], (C2,), jnp.float32)
    v2 = 0.5 + jnp.abs(jax.random.normal(ks[9], (C2,), jnp.float32))
    x = jax.random.normal(ks[10], (N, C1, H, W), jnp.float32)  # NCHW like torch

    params = (w1, g1, bt1, m1, v1, w2, g2, bt2, m2, v2)
    ref = bottleneck_ref(x, params, shortcut=True)

    # default path: bf16 matmul operands, f32 accumulation / output
    out = jax.block_until_ready(bottleneck_pallas(x, params, shortcut=True))
    assert out.shape == (N, C2, H, W)
    err = float(jnp.max(jnp.abs(out - ref)))
    assert jnp.allclose(out, ref, rtol=5e-2, atol=5e-2), err

    # full f32 path, tight tolerance
    out_f32 = jax.block_until_ready(
        bottleneck_pallas(x, params, shortcut=True, dtype=jnp.float32))
    err32 = float(jnp.max(jnp.abs(out_f32 - ref)))
    assert jnp.allclose(out_f32, ref, rtol=1e-4, atol=1e-4), err32

    # shortcut off (exercises the add=False specialization), f32 path
    ref_ns = bottleneck_ref(x, params, shortcut=False)
    out_ns = jax.block_until_ready(
        bottleneck_pallas(x, params, shortcut=False, dtype=jnp.float32))
    err_ns = float(jnp.max(jnp.abs(out_ns - ref_ns)))
    assert jnp.allclose(out_ns, ref_ns, rtol=1e-4, atol=1e-4), err_ns

    # odd spatial size: exercises H->TR padding, W->8 padding and edge masking
    H2, W2 = 13, 12
    x2 = jax.random.normal(jax.random.PRNGKey(1), (N, C1, H2, W2), jnp.float32)
    ref2 = bottleneck_ref(x2, params, shortcut=True)
    out2 = jax.block_until_ready(bottleneck_pallas(x2, params, shortcut=True))
    assert out2.shape == (N, C2, H2, W2)
    err2 = float(jnp.max(jnp.abs(out2 - ref2)))
    assert jnp.allclose(out2, ref2, rtol=5e-2, atol=5e-2), err2

    print("KERNEL_OK")
</pallas_src>

<mosaic_0001>
module attributes {stable_mosaic.version = 11 : i64} {
  func.func @_bottleneck_kernel(%arg0: i32, %arg1: i32, %arg2: memref<1x1x16x128xbf16, #tpu.memory_space<vmem>>, %arg3: memref<1x16x16x128xbf16, #tpu.memory_space<vmem>>, %arg4: memref<1x1x16x128xbf16, #tpu.memory_space<vmem>>, %arg5: memref<128x128xbf16, #tpu.memory_space<vmem>>, %arg6: memref<1x128xf32, #tpu.memory_space<vmem>>, %arg7: memref<3x384x128xbf16, #tpu.memory_space<vmem>>, %arg8: memref<1x128xf32, #tpu.memory_space<vmem>>, %arg9: memref<1x16x16x128xf32, #tpu.memory_space<vmem>>, %arg10: memref<18x16x384xbf16, #tpu.memory_space<vmem>>) attributes {dimension_semantics = [#tpu.dimension_semantics<parallel>, #tpu.dimension_semantics<parallel>], iteration_bounds = array<i64: 2, 1>, scalar_prefetch = 0 : i64, scratch_operands = 1 : i64, tpu.core_type = #tpu.core_type<tc>, window_params = [{transform_indices = @transform_0, window_bounds = array<i64: 1, 1, 16, 128>}, {transform_indices = @transform_1, window_bounds = array<i64: 1, 16, 16, 128>}, {transform_indices = @transform_2, window_bounds = array<i64: 1, 1, 16, 128>}, {pipeline_mode = #tpu.pipeline_mode<synchronous>, transform_indices = @transform_3, window_bounds = array<i64: 128, 128>}, {pipeline_mode = #tpu.pipeline_mode<synchronous>, transform_indices = @transform_4, window_bounds = array<i64: 1, 128>}, {pipeline_mode = #tpu.pipeline_mode<synchronous>, transform_indices = @transform_5, window_bounds = array<i64: 3, 384, 128>}, {pipeline_mode = #tpu.pipeline_mode<synchronous>, transform_indices = @transform_6, window_bounds = array<i64: 1, 128>}, {transform_indices = @transform_7, window_bounds = array<i64: 1, 16, 16, 128>}]} {
    %c0 = arith.constant 0 : index
    %c0_0 = arith.constant 0 : index
    %c0_1 = arith.constant 0 : index
    %c0_2 = arith.constant 0 : index
    %0 = vector.load %arg3[%c0, %c0_0, %c0_1, %c0_2] : memref<1x16x16x128xbf16, #tpu.memory_space<vmem>>, vector<1x16x16x128xbf16>
    %1 = vector.shape_cast %0 : vector<1x16x16x128xbf16> to vector<16x16x128xbf16>
    %c0_3 = arith.constant 0 : index
    %c0_4 = arith.constant 0 : index
    %c0_5 = arith.constant 0 : index
    %c0_6 = arith.constant 0 : index
    %2 = vector.load %arg2[%c0_3, %c0_4, %c0_5, %c0_6] : memref<1x1x16x128xbf16, #tpu.memory_space<vmem>>, vector<1x1x16x128xbf16>
    %3 = vector.shape_cast %2 : vector<1x1x16x128xbf16> to vector<1x16x128xbf16>
    %c0_7 = arith.constant 0 : index
    %c0_8 = arith.constant 0 : index
    %c0_9 = arith.constant 0 : index
    %c0_10 = arith.constant 0 : index
    %4 = vector.load %arg4[%c0_7, %c0_8, %c0_9, %c0_10] : memref<1x1x16x128xbf16, #tpu.memory_space<vmem>>, vector<1x1x16x128xbf16>
    %5 = vector.shape_cast %4 : vector<1x1x16x128xbf16> to vector<1x16x128xbf16>
    %6 = tpu.concatenate %3, %1, %5 in 0 : vector<1x16x128xbf16>, vector<16x16x128xbf16>, vector<1x16x128xbf16> -> vector<18x16x128xbf16>
    %7 = vector.shape_cast %6 : vector<18x16x128xbf16> to vector<288x128xbf16>
    %c0_11 = arith.constant 0 : index
    %c0_12 = arith.constant 0 : index
    %8 = vector.load %arg5[%c0_11, %c0_12] : memref<128x128xbf16, #tpu.memory_space<vmem>>, vector<128x128xbf16>
    %cst = arith.constant dense<0.000000e+00> : vector<288x128xf32>
    %9 = tpu.matmul %7, %8, %cst {dimension_numbers = #tpu.dot_dimension_numbers<[1], [0], [0], [1], [0, 0, 1, 1], [], []>} : vector<288x128xbf16>, vector<128x128xbf16>, vector<288x128xf32> -> vector<288x128xf32>
    %c0_13 = arith.constant 0 : index
    %c0_14 = arith.constant 0 : index
    %10 = vector.load %arg6[%c0_13, %c0_14] : memref<1x128xf32, #tpu.memory_space<vmem>>, vector<1x128xf32>
    %11 = vector.broadcast %10 : vector<1x128xf32> to vector<288x128xf32>
    %12 = arith.addf %9, %11 : vector<288x128xf32>
    %cst_15 = arith.constant 3.000000e+00 : f32
    %13 = vector.broadcast %cst_15 : f32 to vector<288x128xf32>
    %14 = arith.addf %12, %13 : vector<288x128xf32>
    %cst_16 = arith.constant 0.000000e+00 : f32
    %cst_17 = arith.constant 6.000000e+00 : f32
    %15 = vector.broadcast %cst_16 : f32 to vector<288x128xf32>
    %16 = arith.maximumf %15, %14 : vector<288x128xf32>
    %17 = vector.broadcast %cst_17 : f32 to vector<288x128xf32>
    %18 = arith.minimumf %17, %16 : vector<288x128xf32>
    %19 = arith.mulf %12, %18 : vector<288x128xf32>
    %cst_18 = arith.constant 6.000000e+00 : f32
    %20 = vector.broadcast %cst_18 : f32 to vector<288x128xf32>
    %21 = arith.divf %19, %20 : vector<288x128xf32>
    %22 = vector.shape_cast %21 : vector<288x128xf32> to vector<18x16x128xf32>
    %cst_19 = arith.constant 0.000000e+00 : f32
    %23 = vector.broadcast %cst_19 : f32 to vector<18x1x128xf32>
    %24 = vector.extract_strided_slice %22 {offsets = [0, 0, 0], sizes = [18, 15, 128], strides = [1, 1, 1]} : vector<18x16x128xf32> to vector<18x15x128xf32>
    %25 = tpu.concatenate %23, %24 in 1 : vector<18x1x128xf32>, vector<18x15x128xf32> -> vector<18x16x128xf32>
    %26 = vector.extract_strided_slice %22 {offsets = [0, 1, 0], sizes = [18, 15, 128], strides = [1, 1, 1]} : vector<18x16x128xf32> to vector<18x15x128xf32>
    %27 = tpu.concatenate %26, %23 in 1 : vector<18x15x128xf32>, vector<18x1x128xf32> -> vector<18x16x128xf32>
    %28 = tpu.concatenate %25, %22, %27 in 2 : vector<18x16x128xf32>, vector<18x16x128xf32>, vector<18x16x128xf32> -> vector<18x16x384xf32>
    %29 = arith.truncf %28 : vector<18x16x384xf32> to vector<18x16x384xbf16>
    %c0_20 = arith.constant 0 : index
    %c0_21 = arith.constant 0 : index
    %c0_22 = arith.constant 0 : index
    %30 = vector.load %arg10[%c0_20, %c0_21, %c0_22] : memref<18x16x384xbf16, #tpu.memory_space<vmem>>, vector<18x16x384xbf16>
    tpu.vector_store %arg10[%c0_20, %c0_21, %c0_22], %29 {strides = array<i32>} : memref<18x16x384xbf16, #tpu.memory_space<vmem>>, vector<18x16x384xbf16>,
    %c0_i32 = arith.constant 0 : i32
    %31 = arith.cmpi eq, %arg1, %c0_i32 : i32
    %32 = arith.extui %31 : i1 to i32
    %c0_i32_23 = arith.constant 0 : i32
    %33 = arith.cmpi ne, %32, %c0_i32_23 : i32
    scf.if %33 {
      %cst_56 = arith.constant 0.000000e+00 : bf16
      %73 = vector.broadcast %cst_56 : bf16 to vector<1x16x384xbf16>
      %c0_57 = arith.constant 0 : index
      %c0_58 = arith.constant 0 : index
      %c0_59 = arith.constant 0 : index
      %74 = vector.load %arg10[%c0_57, %c0_58, %c0_59] : memref<18x16x384xbf16, #tpu.memory_space<vmem>>, vector<1x16x384xbf16>
      tpu.vector_store %arg10[%c0_57, %c0_58, %c0_59], %73 {strides = array<i32>} : memref<18x16x384xbf16, #tpu.memory_space<vmem>>, vector<1x16x384xbf16>,
    } else {
    }
    %c0_i32_24 = arith.constant 0 : i32
    %34 = arith.cmpi eq, %arg1, %c0_i32_24 : i32
    %35 = arith.extui %34 : i1 to i32
    %c0_i32_25 = arith.constant 0 : i32
    %36 = arith.cmpi ne, %35, %c0_i32_25 : i32
    scf.if %36 {
      %cst_56 = arith.constant 0.000000e+00 : bf16
      %73 = vector.broadcast %cst_56 : bf16 to vector<1x16x384xbf16>
      %c17 = arith.constant 17 : index
      %c0_57 = arith.constant 0 : index
      %c0_58 = arith.constant 0 : index
      %74 = vector.load %arg10[%c17, %c0_57, %c0_58] : memref<18x16x384xbf16, #tpu.memory_space<vmem>>, vector<1x16x384xbf16>
      tpu.vector_store %arg10[%c17, %c0_57, %c0_58], %73 {strides = array<i32>} : memref<18x16x384xbf16, #tpu.memory_space<vmem>>, vector<1x16x384xbf16>,
    } else {
    }
    %cst_26 = arith.constant 0.000000e+00 : f32
    %37 = vector.broadcast %cst_26 : f32 to vector<256x128xf32>
    %c0_27 = arith.constant 0 : index
    %c0_28 = arith.constant 0 : index
    %c0_29 = arith.constant 0 : index
    %38 = vector.load %arg10[%c0_27, %c0_28, %c0_29] : memref<18x16x384xbf16, #tpu.memory_space<vmem>>, vector<16x16x384xbf16>
    %39 = vector.shape_cast %38 : vector<16x16x384xbf16> to vector<256x384xbf16>
    %c0_30 = arith.constant 0 : index
    %c0_31 = arith.constant 0 : index
    %c0_32 = arith.constant 0 : index
    %40 = vector.load %arg7[%c0_30, %c0_31, %c0_32] : memref<3x384x128xbf16, #tpu.memory_space<vmem>>, vector<1x384x128xbf16>
    %41 = vector.shape_cast %40 : vector<1x384x128xbf16> to vector<384x128xbf16>
    %cst_33 = arith.constant dense<0.000000e+00> : vector<256x128xf32>
    %42 = tpu.matmul %39, %41, %cst_33 {dimension_numbers = #tpu.dot_dimension_numbers<[1], [0], [0], [1], [0, 0, 1, 1], [], []>} : vector<256x384xbf16>, vector<384x128xbf16>, vector<256x128xf32> -> vector<256x128xf32>
    %43 = arith.addf %37, %42 : vector<256x128xf32>
    %c1 = arith.constant 1 : index
    %c0_34 = arith.constant 0 : index
    %c0_35 = arith.constant 0 : index
    %44 = vector.load %arg10[%c1, %c0_34, %c0_35] : memref<18x16x384xbf16, #tpu.memory_space<vmem>>, vector<16x16x384xbf16>
    %45 = vector.shape_cast %44 : vector<16x16x384xbf16> to vector<256x384xbf16>
    %c1_36 = arith.constant 1 : index
    %c0_37 = arith.constant 0 : index
    %c0_38 = arith.constant 0 : index
    %46 = vector.load %arg7[%c1_36, %c0_37, %c0_38] : memref<3x384x128xbf16, #tpu.memory_space<vmem>>, vector<1x384x128xbf16>
    %47 = vector.shape_cast %46 : vector<1x384x128xbf16> to vector<384x128xbf16>
    %cst_39 = arith.constant dense<0.000000e+00> : vector<256x128xf32>
    %48 = tpu.matmul %45, %47, %cst_39 {dimension_numbers = #tpu.dot_dimension_numbers<[1], [0], [0], [1], [0, 0, 1, 1], [], []>} : vector<256x384xbf16>, vector<384x128xbf16>, vector<256x128xf32> -> vector<256x128xf32>
    %49 = arith.addf %43, %48 : vector<256x128xf32>
    %c2 = arith.constant 2 : index
    %c0_40 = arith.constant 0 : index
    %c0_41 = arith.constant 0 : index
    %50 = vector.load %arg10[%c2, %c0_40, %c0_41] : memref<18x16x384xbf16, #tpu.memory_space<vmem>>, vector<16x16x384xbf16>
    %51 = vector.shape_cast %50 : vector<16x16x384xbf16> to vector<256x384xbf16>
    %c2_42 = arith.constant 2 : index
    %c0_43 = arith.constant 0 : index
    %c0_44 = arith.constant 0 : index
    %52 = vector.load %arg7[%c2_42, %c0_43, %c0_44] : memref<3x384x128xbf16, #tpu.memory_space<vmem>>, vector<1x384x128xbf16>
    %53 = vector.shape_cast %52 : vector<1x384x128xbf16> to vector<384x128xbf16>
    %cst_45 = arith.constant dense<0.000000e+00> : vector<256x128xf32>
    %54 = tpu.matmul %51, %53, %cst_45 {dimension_numbers = #tpu.dot_dimension_numbers<[1], [0], [0], [1], [0, 0, 1, 1], [], []>} : vector<256x384xbf16>, vector<384x128xbf16>, vector<256x128xf32> -> vector<256x128xf32>
    %55 = arith.addf %49, %54 : vector<256x128xf32>
    %c0_46 = arith.constant 0 : index
    %c0_47 = arith.constant 0 : index
    %56 = vector.load %arg8[%c0_46, %c0_47] : memref<1x128xf32, #tpu.memory_space<vmem>>, vector<1x128xf32>
    %57 = vector.broadcast %56 : vector<1x128xf32> to vector<256x128xf32>
    %58 = arith.addf %55, %57 : vector<256x128xf32>
    %cst_48 = arith.constant 3.000000e+00 : f32
    %59 = vector.broadcast %cst_48 : f32 to vector<256x128xf32>
    %60 = arith.addf %58, %59 : vector<256x128xf32>
    %cst_49 = arith.constant 0.000000e+00 : f32
    %cst_50 = arith.constant 6.000000e+00 : f32
    %61 = vector.broadcast %cst_49 : f32 to vector<256x128xf32>
    %62 = arith.maximumf %61, %60 : vector<256x128xf32>
    %63 = vector.broadcast %cst_50 : f32 to vector<256x128xf32>
    %64 = arith.minimumf %63, %62 : vector<256x128xf32>
    %65 = arith.mulf %58, %64 : vector<256x128xf32>
    %cst_51 = arith.constant 6.000000e+00 : f32
    %66 = vector.broadcast %cst_51 : f32 to vector<256x128xf32>
    %67 = arith.divf %65, %66 : vector<256x128xf32>
    %68 = vector.shape_cast %1 : vector<16x16x128xbf16> to vector<256x128xbf16>
    %69 = arith.extf %68 : vector<256x128xbf16> to vector<256x128xf32>
    %70 = arith.addf %67, %69 : vector<256x128xf32>
    %71 = vector.shape_cast %70 : vector<256x128xf32> to vector<1x16x16x128xf32>
    %c0_52 = arith.constant 0 : index
    %c0_53 = arith.constant 0 : index
    %c0_54 = arith.constant 0 : index
    %c0_55 = arith.constant 0 : index
    %72 = vector.load %arg9[%c0_52, %c0_53, %c0_54, %c0_55] : memref<1x16x16x128xf32, #tpu.memory_space<vmem>>, vector<1x16x16x128xf32>
    tpu.vector_store %arg9[%c0_52, %c0_53, %c0_54, %c0_55], %71 {strides = array<i32>} : memref<1x16x16x128xf32, #tpu.memory_space<vmem>>, vector<1x16x16x128xf32>,
    return
  }
  func.func @transform_0(%arg0: i32, %arg1: i32) -> (i32, i32, i32, i32) {
    %c0_i32 = arith.constant 0 : i32
    %c0_i32_0 = arith.constant 0 : i32
    %c0_i32_1 = arith.constant 0 : i32
    return %arg0, %arg1, %c0_i32, %c0_i32_0 : i32, i32, i32, i32
  }
  func.func @transform_1(%arg0: i32, %arg1: i32) -> (i32, i32, i32, i32) {
    %c0_i32 = arith.constant 0 : i32
    %c0_i32_0 = arith.constant 0 : i32
    %c0_i32_1 = arith.constant 0 : i32
    return %arg0, %arg1, %c0_i32, %c0_i32_0 : i32, i32, i32, i32
  }
  func.func @transform_2(%arg0: i32, %arg1: i32) -> (i32, i32, i32, i32) {
    %c0_i32 = arith.constant 0 : i32
    %c0_i32_0 = arith.constant 0 : i32
    %c0_i32_1 = arith.constant 0 : i32
    return %arg0, %arg1, %c0_i32, %c0_i32_0 : i32, i32, i32, i32
  }
  func.func @transform_3(%arg0: i32, %arg1: i32) -> (i32, i32) {
    %c0_i32 = arith.constant 0 : i32
    %c0_i32_0 = arith.constant 0 : i32
    %c0_i32_1 = arith.constant 0 : i32
    return %c0_i32, %c0_i32_0 : i32, i32
  }
  func.func @transform_4(%arg0: i32, %arg1: i32) -> (i32, i32) {
    %c0_i32 = arith.constant 0 : i32
    %c0_i32_0 = arith.constant 0 : i32
    %c0_i32_1 = arith.constant 0 : i32
    return %c0_i32, %c0_i32_0 : i32, i32
  }
  func.func @transform_5(%arg0: i32, %arg1: i32) -> (i32, i32, i32) {
    %c0_i32 = arith.constant 0 : i32
    %c0_i32_0 = arith.constant 0 : i32
    %c0_i32_1 = arith.constant 0 : i32
    %c0_i32_2 = arith.constant 0 : i32
    return %c0_i32, %c0_i32_0, %c0_i32_1 : i32, i32, i32
  }
  func.func @transform_6(%arg0: i32, %arg1: i32) -> (i32, i32) {
    %c0_i32 = arith.constant 0 : i32
    %c0_i32_0 = arith.constant 0 : i32
    %c0_i32_1 = arith.constant 0 : i32
    return %c0_i32, %c0_i32_0 : i32, i32
  }
  func.func @transform_7(%arg0: i32, %arg1: i32) -> (i32, i32, i32, i32) {
    %c0_i32 = arith.constant 0 : i32
    %c0_i32_0 = arith.constant 0 : i32
    %c0_i32_1 = arith.constant 0 : i32
    return %arg0, %arg1, %c0_i32, %c0_i32_0 : i32, i32, i32, i32
  }
}

module attributes {stable_mosaic.version = 11 : i64} {
  func.func @_bottleneck_kernel(%arg0: i32, %arg1: i32, %arg2: memref<1x1x16x128xbf16, #tpu.memory_space<vmem>>, %arg3: memref<1x16x16x128xbf16, #tpu.memory_space<vmem>>, %arg4: memref<1x1x16x128xbf16, #tpu.memory_space<vmem>>, %arg5: memref<128x128xbf16, #tpu.memory_space<vmem>>, %arg6: memref<1x128xf32, #tpu.memory_space<vmem>>, %arg7: memref<3x384x128xbf16, #tpu.memory_space<vmem>>, %arg8: memref<1x128xf32, #tpu.memory_space<vmem>>, %arg9: memref<1x16x16x128xf32, #tpu.memory_space<vmem>>, %arg10: memref<18x16x384xbf16, #tpu.memory_space<vmem>>) attributes {dimension_semantics = [#tpu.dimension_semantics<parallel>, #tpu.dimension_semantics<parallel>], iteration_bounds = array<i64: 2, 1>, scalar_prefetch = 0 : i64, scratch_operands = 1 : i64, tpu.core_type = #tpu.core_type<tc>, window_params = [{transform_indices = @transform_0, window_bounds = array<i64: 1, 1, 16, 128>}, {transform_indices = @transform_1, window_bounds = array<i64: 1, 16, 16, 128>}, {transform_indices = @transform_2, window_bounds = array<i64: 1, 1, 16, 128>}, {pipeline_mode = #tpu.pipeline_mode<synchronous>, transform_indices = @transform_3, window_bounds = array<i64: 128, 128>}, {pipeline_mode = #tpu.pipeline_mode<synchronous>, transform_indices = @transform_4, window_bounds = array<i64: 1, 128>}, {pipeline_mode = #tpu.pipeline_mode<synchronous>, transform_indices = @transform_5, window_bounds = array<i64: 3, 384, 128>}, {pipeline_mode = #tpu.pipeline_mode<synchronous>, transform_indices = @transform_6, window_bounds = array<i64: 1, 128>}, {transform_indices = @transform_7, window_bounds = array<i64: 1, 16, 16, 128>}]} {
    %c0 = arith.constant 0 : index
    %c0_0 = arith.constant 0 : index
    %c0_1 = arith.constant 0 : index
    %c0_2 = arith.constant 0 : index
    %0 = vector.load %arg3[%c0, %c0_0, %c0_1, %c0_2] : memref<1x16x16x128xbf16, #tpu.memory_space<vmem>>, vector<1x16x16x128xbf16>
    %1 = vector.shape_cast %0 : vector<1x16x16x128xbf16> to vector<16x16x128xbf16>
    %c0_3 = arith.constant 0 : index
    %c0_4 = arith.constant 0 : index
    %c0_5 = arith.constant 0 : index
    %c0_6 = arith.constant 0 : index
    %2 = vector.load %arg2[%c0_3, %c0_4, %c0_5, %c0_6] : memref<1x1x16x128xbf16, #tpu.memory_space<vmem>>, vector<1x1x16x128xbf16>
    %3 = vector.shape_cast %2 : vector<1x1x16x128xbf16> to vector<1x16x128xbf16>
    %c0_7 = arith.constant 0 : index
    %c0_8 = arith.constant 0 : index
    %c0_9 = arith.constant 0 : index
    %c0_10 = arith.constant 0 : index
    %4 = vector.load %arg4[%c0_7, %c0_8, %c0_9, %c0_10] : memref<1x1x16x128xbf16, #tpu.memory_space<vmem>>, vector<1x1x16x128xbf16>
    %5 = vector.shape_cast %4 : vector<1x1x16x128xbf16> to vector<1x16x128xbf16>
    %6 = tpu.concatenate %3, %1, %5 in 0 : vector<1x16x128xbf16>, vector<16x16x128xbf16>, vector<1x16x128xbf16> -> vector<18x16x128xbf16>
    %7 = vector.shape_cast %6 : vector<18x16x128xbf16> to vector<288x128xbf16>
    %c0_11 = arith.constant 0 : index
    %c0_12 = arith.constant 0 : index
    %8 = vector.load %arg5[%c0_11, %c0_12] : memref<128x128xbf16, #tpu.memory_space<vmem>>, vector<128x128xbf16>
    %cst = arith.constant dense<0.000000e+00> : vector<288x128xf32>
    %9 = tpu.matmul %7, %8, %cst {dimension_numbers = #tpu.dot_dimension_numbers<[1], [0], [0], [1], [0, 0, 1, 1], [], []>} : vector<288x128xbf16>, vector<128x128xbf16>, vector<288x128xf32> -> vector<288x128xf32>
    %c0_13 = arith.constant 0 : index
    %c0_14 = arith.constant 0 : index
    %10 = vector.load %arg6[%c0_13, %c0_14] : memref<1x128xf32, #tpu.memory_space<vmem>>, vector<1x128xf32>
    %11 = vector.broadcast %10 : vector<1x128xf32> to vector<288x128xf32>
    %12 = arith.addf %9, %11 : vector<288x128xf32>
    %cst_15 = arith.constant 3.000000e+00 : f32
    %13 = vector.broadcast %cst_15 : f32 to vector<288x128xf32>
    %14 = arith.addf %12, %13 : vector<288x128xf32>
    %cst_16 = arith.constant 0.000000e+00 : f32
    %cst_17 = arith.constant 6.000000e+00 : f32
    %15 = vector.broadcast %cst_16 : f32 to vector<288x128xf32>
    %16 = arith.maximumf %15, %14 : vector<288x128xf32>
    %17 = vector.broadcast %cst_17 : f32 to vector<288x128xf32>
    %18 = arith.minimumf %17, %16 : vector<288x128xf32>
    %19 = arith.mulf %12, %18 : vector<288x128xf32>
    %cst_18 = arith.constant 6.000000e+00 : f32
    %20 = vector.broadcast %cst_18 : f32 to vector<288x128xf32>
    %21 = arith.divf %19, %20 : vector<288x128xf32>
    %22 = vector.shape_cast %21 : vector<288x128xf32> to vector<18x16x128xf32>
    %cst_19 = arith.constant 0.000000e+00 : f32
    %23 = vector.broadcast %cst_19 : f32 to vector<18x1x128xf32>
    %24 = vector.extract_strided_slice %22 {offsets = [0, 0, 0], sizes = [18, 15, 128], strides = [1, 1, 1]} : vector<18x16x128xf32> to vector<18x15x128xf32>
    %25 = tpu.concatenate %23, %24 in 1 : vector<18x1x128xf32>, vector<18x15x128xf32> -> vector<18x16x128xf32>
    %26 = vector.extract_strided_slice %22 {offsets = [0, 1, 0], sizes = [18, 15, 128], strides = [1, 1, 1]} : vector<18x16x128xf32> to vector<18x15x128xf32>
    %27 = tpu.concatenate %26, %23 in 1 : vector<18x15x128xf32>, vector<18x1x128xf32> -> vector<18x16x128xf32>
    %28 = tpu.concatenate %25, %22, %27 in 2 : vector<18x16x128xf32>, vector<18x16x128xf32>, vector<18x16x128xf32> -> vector<18x16x384xf32>
    %29 = arith.truncf %28 : vector<18x16x384xf32> to vector<18x16x384xbf16>
    %c0_20 = arith.constant 0 : index
    %c0_21 = arith.constant 0 : index
    %c0_22 = arith.constant 0 : index
    %30 = vector.load %arg10[%c0_20, %c0_21, %c0_22] : memref<18x16x384xbf16, #tpu.memory_space<vmem>>, vector<18x16x384xbf16>
    tpu.vector_store %arg10[%c0_20, %c0_21, %c0_22], %29 {strides = array<i32>} : memref<18x16x384xbf16, #tpu.memory_space<vmem>>, vector<18x16x384xbf16>,
    %c0_i32 = arith.constant 0 : i32
    %31 = arith.cmpi eq, %arg1, %c0_i32 : i32
    %32 = arith.extui %31 : i1 to i32
    %c0_i32_23 = arith.constant 0 : i32
    %33 = arith.cmpi ne, %32, %c0_i32_23 : i32
    scf.if %33 {
      %cst_56 = arith.constant 0.000000e+00 : bf16
      %73 = vector.broadcast %cst_56 : bf16 to vector<1x16x384xbf16>
      %c0_57 = arith.constant 0 : index
      %c0_58 = arith.constant 0 : index
      %c0_59 = arith.constant 0 : index
      %74 = vector.load %arg10[%c0_57, %c0_58, %c0_59] : memref<18x16x384xbf16, #tpu.memory_space<vmem>>, vector<1x16x384xbf16>
      tpu.vector_store %arg10[%c0_57, %c0_58, %c0_59], %73 {strides = array<i32>} : memref<18x16x384xbf16, #tpu.memory_space<vmem>>, vector<1x16x384xbf16>,
    } else {
    }
    %c0_i32_24 = arith.constant 0 : i32
    %34 = arith.cmpi eq, %arg1, %c0_i32_24 : i32
    %35 = arith.extui %34 : i1 to i32
    %c0_i32_25 = arith.constant 0 : i32
    %36 = arith.cmpi ne, %35, %c0_i32_25 : i32
    scf.if %36 {
      %cst_56 = arith.constant 0.000000e+00 : bf16
      %73 = vector.broadcast %cst_56 : bf16 to vector<1x16x384xbf16>
      %c17 = arith.constant 17 : index
      %c0_57 = arith.constant 0 : index
      %c0_58 = arith.constant 0 : index
      %74 = vector.load %arg10[%c17, %c0_57, %c0_58] : memref<18x16x384xbf16, #tpu.memory_space<vmem>>, vector<1x16x384xbf16>
      tpu.vector_store %arg10[%c17, %c0_57, %c0_58], %73 {strides = array<i32>} : memref<18x16x384xbf16, #tpu.memory_space<vmem>>, vector<1x16x384xbf16>,
    } else {
    }
    %cst_26 = arith.constant 0.000000e+00 : f32
    %37 = vector.broadcast %cst_26 : f32 to vector<256x128xf32>
    %c0_27 = arith.constant 0 : index
    %c0_28 = arith.constant 0 : index
    %c0_29 = arith.constant 0 : index
    %38 = vector.load %arg10[%c0_27, %c0_28, %c0_29] : memref<18x16x384xbf16, #tpu.memory_space<vmem>>, vector<16x16x384xbf16>
    %39 = vector.shape_cast %38 : vector<16x16x384xbf16> to vector<256x384xbf16>
    %c0_30 = arith.constant 0 : index
    %c0_31 = arith.constant 0 : index
    %c0_32 = arith.constant 0 : index
    %40 = vector.load %arg7[%c0_30, %c0_31, %c0_32] : memref<3x384x128xbf16, #tpu.memory_space<vmem>>, vector<1x384x128xbf16>
    %41 = vector.shape_cast %40 : vector<1x384x128xbf16> to vector<384x128xbf16>
    %cst_33 = arith.constant dense<0.000000e+00> : vector<256x128xf32>
    %42 = tpu.matmul %39, %41, %cst_33 {dimension_numbers = #tpu.dot_dimension_numbers<[1], [0], [0], [1], [0, 0, 1, 1], [], []>} : vector<256x384xbf16>, vector<384x128xbf16>, vector<256x128xf32> -> vector<256x128xf32>
    %43 = arith.addf %37, %42 : vector<256x128xf32>
    %c1 = arith.constant 1 : index
    %c0_34 = arith.constant 0 : index
    %c0_35 = arith.constant 0 : index
    %44 = vector.load %arg10[%c1, %c0_34, %c0_35] : memref<18x16x384xbf16, #tpu.memory_space<vmem>>, vector<16x16x384xbf16>
    %45 = vector.shape_cast %44 : vector<16x16x384xbf16> to vector<256x384xbf16>
    %c1_36 = arith.constant 1 : index
    %c0_37 = arith.constant 0 : index
    %c0_38 = arith.constant 0 : index
    %46 = vector.load %arg7[%c1_36, %c0_37, %c0_38] : memref<3x384x128xbf16, #tpu.memory_space<vmem>>, vector<1x384x128xbf16>
    %47 = vector.shape_cast %46 : vector<1x384x128xbf16> to vector<384x128xbf16>
    %cst_39 = arith.constant dense<0.000000e+00> : vector<256x128xf32>
    %48 = tpu.matmul %45, %47, %cst_39 {dimension_numbers = #tpu.dot_dimension_numbers<[1], [0], [0], [1], [0, 0, 1, 1], [], []>} : vector<256x384xbf16>, vector<384x128xbf16>, vector<256x128xf32> -> vector<256x128xf32>
    %49 = arith.addf %43, %48 : vector<256x128xf32>
    %c2 = arith.constant 2 : index
    %c0_40 = arith.constant 0 : index
    %c0_41 = arith.constant 0 : index
    %50 = vector.load %arg10[%c2, %c0_40, %c0_41] : memref<18x16x384xbf16, #tpu.memory_space<vmem>>, vector<16x16x384xbf16>
    %51 = vector.shape_cast %50 : vector<16x16x384xbf16> to vector<256x384xbf16>
    %c2_42 = arith.constant 2 : index
    %c0_43 = arith.constant 0 : index
    %c0_44 = arith.constant 0 : index
    %52 = vector.load %arg7[%c2_42, %c0_43, %c0_44] : memref<3x384x128xbf16, #tpu.memory_space<vmem>>, vector<1x384x128xbf16>
    %53 = vector.shape_cast %52 : vector<1x384x128xbf16> to vector<384x128xbf16>
    %cst_45 = arith.constant dense<0.000000e+00> : vector<256x128xf32>
    %54 = tpu.matmul %51, %53, %cst_45 {dimension_numbers = #tpu.dot_dimension_numbers<[1], [0], [0], [1], [0, 0, 1, 1], [], []>} : vector<256x384xbf16>, vector<384x128xbf16>, vector<256x128xf32> -> vector<256x128xf32>
    %55 = arith.addf %49, %54 : vector<256x128xf32>
    %c0_46 = arith.constant 0 : index
    %c0_47 = arith.constant 0 : index
    %56 = vector.load %arg8[%c0_46, %c0_47] : memref<1x128xf32, #tpu.memory_space<vmem>>, vector<1x128xf32>
    %57 = vector.broadcast %56 : vector<1x128xf32> to vector<256x128xf32>
    %58 = arith.addf %55, %57 : vector<256x128xf32>
    %cst_48 = arith.constant 3.000000e+00 : f32
    %59 = vector.broadcast %cst_48 : f32 to vector<256x128xf32>
    %60 = arith.addf %58, %59 : vector<256x128xf32>
    %cst_49 = arith.constant 0.000000e+00 : f32
    %cst_50 = arith.constant 6.000000e+00 : f32
    %61 = vector.broadcast %cst_49 : f32 to vector<256x128xf32>
    %62 = arith.maximumf %61, %60 : vector<256x128xf32>
    %63 = vector.broadcast %cst_50 : f32 to vector<256x128xf32>
    %64 = arith.minimumf %63, %62 : vector<256x128xf32>
    %65 = arith.mulf %58, %64 : vector<256x128xf32>
    %cst_51 = arith.constant 6.000000e+00 : f32
    %66 = vector.broadcast %cst_51 : f32 to vector<256x128xf32>
    %67 = arith.divf %65, %66 : vector<256x128xf32>
    %68 = vector.shape_cast %1 : vector<16x16x128xbf16> to vector<256x128xbf16>
    %69 = arith.extf %68 : vector<256x128xbf16> to vector<256x128xf32>
    %70 = arith.addf %67, %69 : vector<256x128xf32>
    %71 = vector.shape_cast %70 : vector<256x128xf32> to vector<1x16x16x128xf32>
    %c0_52 = arith.constant 0 : index
    %c0_53 = arith.constant 0 : index
    %c0_54 = arith.constant 0 : index
    %c0_55 = arith.constant 0 : index
    %72 = vector.load %arg9[%c0_52, %c0_53, %c0_54, %c0_55] : memref<1x16x16x128xf32, #tpu.memory_space<vmem>>, vector<1x16x16x128xf32>
    tpu.vector_store %arg9[%c0_52, %c0_53, %c0_54, %c0_55], %71 {strides = array<i32>} : memref<1x16x16x128xf32, #tpu.memory_space<vmem>>, vector<1x16x16x128xf32>,
    return
  }
  func.func @transform_0(%arg0: i32, %arg1: i32) -> (i32, i32, i32, i32) {
    %c0_i32 = arith.constant 0 : i32
    %c0_i32_0 = arith.constant 0 : i32
    %c0_i32_1 = arith.constant 0 : i32
    return %arg0, %arg1, %c0_i32, %c0_i32_0 : i32, i32, i32, i32
  }
  func.func @transform_1(%arg0: i32, %arg1: i32) -> (i32, i32, i32, i32) {
    %c0_i32 = arith.constant 0 : i32
    %c0_i32_0 = arith.constant 0 : i32
    %c0_i32_1 = arith.constant 0 : i32
    return %arg0, %arg1, %c0_i32, %c0_i32_0 : i32, i32, i32, i32
  }
  func.func @transform_2(%arg0: i32, %arg1: i32) -> (i32, i32, i32, i32) {
    %c0_i32 = arith.constant 0 : i32
    %c0_i32_0 = arith.constant 0 : i32
    %c0_i32_1 = arith.constant 0 : i32
    return %arg0, %arg1, %c0_i32, %c0_i32_0 : i32, i32, i32, i32
  }
  func.func @transform_3(%arg0: i32, %arg1: i32) -> (i32, i32) {
    %c0_i32 = arith.constant 0 : i32
    %c0_i32_0 = arith.constant 0 : i32
    %c0_i32_1 = arith.constant 0 : i32
    return %c0_i32, %c0_i32_0 : i32, i32
  }
  func.func @transform_4(%arg0: i32, %arg1: i32) -> (i32, i32) {
    %c0_i32 = arith.constant 0 : i32
    %c0_i32_0 = arith.constant 0 : i32
    %c0_i32_1 = arith.constant 0 : i32
    return %c0_i32, %c0_i32_0 : i32, i32
  }
  func.func @transform_5(%arg0: i32, %arg1: i32) -> (i32, i32, i32) {
    %c0_i32 = arith.constant 0 : i32
    %c0_i32_0 = arith.constant 0 : i32
    %c0_i32_1 = arith.constant 0 : i32
    %c0_i32_2 = arith.constant 0 : i32
    return %c0_i32, %c0_i32_0, %c0_i32_1 : i32, i32, i32
  }
  func.func @transform_6(%arg0: i32, %arg1: i32) -> (i32, i32) {
    %c0_i32 = arith.constant 0 : i32
    %c0_i32_0 = arith.constant 0 : i32
    %c0_i32_1 = arith.constant 0 : i32
    return %c0_i32, %c0_i32_0 : i32, i32
  }
  func.func @transform_7(%arg0: i32, %arg1: i32) -> (i32, i32, i32, i32) {
    %c0_i32 = arith.constant 0 : i32
    %c0_i32_0 = arith.constant 0 : i32
    %c0_i32_1 = arith.constant 0 : i32
    return %arg0, %arg1, %c0_i32, %c0_i32_0 : i32, i32, i32, i32
  }
}

</mosaic_0001>

<llo_original>
// kernel: tpu_custom_call.1
$region0: #{tpu_custom_call.1}
  #allocation0 [shape = 'u32[]', space=smem, size = 0x4, offset = 0x4, fixed_abs, tag = 'smem constant byte address 0x4 - core index']
  #allocation1 [shape = 'u32[72,128]{1,0:T(1,128)}', space=vmem, size = 0x9000, scoped, tag = 'internal scratch']
  #allocation2 [shape = 'bf16[18,16,384]{2,1,0:T(8,128)(2,1)}', space=vmem, size = 0x36000, scoped, tag = 'scratch operand']
  %s0 = inlined_call_operand.hbm [shape: bf16[2,1,16,128], index: 0, kind: input, shape index: {}]
  %s1 = inlined_call_operand.hbm [shape: bf16[2,16,16,128], index: 1, kind: input, shape index: {}]
  %s2 = inlined_call_operand.hbm [shape: bf16[2,1,16,128], index: 2, kind: input, shape index: {}]
  %s3 = inlined_call_operand.hbm [shape: bf16[128,128], index: 3, kind: input, shape index: {}]
  %s4 = inlined_call_operand.vmem [shape: f32[1,128], index: 4, kind: input, shape index: {}]
  %s5 = inlined_call_operand.hbm [shape: bf16[3,384,128], index: 5, kind: input, shape index: {}]
  %s6 = inlined_call_operand.vmem [shape: f32[1,128], index: 6, kind: input, shape index: {}]
  %s7 = inlined_call_operand.hbm [shape: f32[2,16,16,128], index: 7, kind: output, shape index: {}]
  %s8 = sld [smem:[#allocation0]]
  $region85: #{tpu_custom_call.1} parent=0
    _
  %s10 = ssub.s32 1, %s8
  %s11 = scalar_select 0, %s10, %s8
  $region1: #{tpu_custom_call.1} parent=0
    #allocation3 [shape = 'u8[8192]{0}', space=vmem, size = 0x2000, scoped, tag = 'input window, operand 0']
    #allocation4 [shape = 's32[2]{0}', space=sflag, size = 0x8, scoped, tag = 'scoped memory for tpu_custom_call.1']
    #allocation5 [shape = 's32[2]{0}', space=sflag, size = 0x8, scoped, tag = 'scoped memory for tpu_custom_call.1']
    #allocation6 [shape = 'u8[131072]{0}', space=vmem, size = 0x20000, scoped, tag = 'input window, operand 1']
    #allocation7 [shape = 's32[2]{0}', space=sflag, size = 0x8, scoped, tag = 'scoped memory for tpu_custom_call.1']
    #allocation8 [shape = 'u8[8192]{0}', space=vmem, size = 0x2000, scoped, tag = 'input window, operand 2']
    #allocation9 [shape = 'u8[32768]{0}', space=vmem, size = 0x8000, scoped, tag = 'input window, operand 3, single buffered']
    #allocation10 [shape = 's32[1]{0}', space=sflag, size = 0x4, scoped, tag = 'scoped memory for tpu_custom_call.1']
    #allocation11 [shape = 'u8[294912]{0}', space=vmem, size = 0x48000, scoped, tag = 'input window, operand 5, single buffered']
    #allocation12 [shape = 'u8[262144]{0}', space=vmem, size = 0x40000, scoped, tag = 'output window, operand 0']
    %12 = vsyncpa [#allocation4], 0
    %s13 = scalar_lea.sflag [#allocation4], 1
    %14 = vsyncpa %s13, 0
    %15 = vsyncpa [#allocation7], 0
    %s16 = scalar_lea.sflag [#allocation7], 1
    %17 = vsyncpa %s16, 0
    %18 = vsyncpa [#allocation10], 0
    %19 = vsyncpa [#allocation5], 0
    %s20 = scalar_lea.sflag [#allocation5], 1
    %21 = vsyncpa %s20, 0
    loop: start=0, step=1, limit=4
    $region2: #{tpu_custom_call.1} parent=1 // loop_pre_header
      _
    $region3: #{tpu_custom_call.1} parent=1 // loop_header
      %s23 = sphi 0, %s27
      %p24 = scmp.ge.s32.totalorder %s23, 4
      %s30 = sphi 0, %s42
      %s31 = sphi 0, %s38
      %s32 = sphi 0, %s30
      %s33 = sphi 0, %s31
      %s34 = sphi 0, %s32
      %s35 = sphi 0, %s33
      %s47 = sphi 0, %s49
      %s50 = sphi 0, %s47
      %s51 = sphi 0, %s50
      %s67 = sphi 0, %s51
      %s75 = sphi 0, %s77
      %s78 = sphi 0, %s75
      %s79 = sphi 0, %s78
      %s95 = sphi 0, %s79
      %s103 = sphi 0, %s105
      %s106 = sphi 0, %s103
      %s107 = sphi 0, %s106
      %s123 = sphi 0, %s107
      %s127 = sphi 0, %s127
      %s129 = sphi 0, %s127
      %s130 = sphi 0, %s129
      %s144 = sphi 0, %s130
      %s148 = sphi 0, %s148
      %s150 = sphi 0, %s148
      %s151 = sphi 0, %s150
      %s165 = sphi 0, %s151
      %s169 = sphi 0, %s169
      %s171 = sphi 0, %s169
      %s172 = sphi 0, %s171
      %s186 = sphi 0, %s172
      %s190 = sphi 0, %s190
      %s192 = sphi 0, %s190
      %s193 = sphi 0, %s192
      %s207 = sphi 0, %s193
      %s215 = sphi 0, %s217
      %s218 = sphi 0, %s215
      %s219 = sphi 0, %s218
      %s235 = sphi 0, %s219
    $region4: #{tpu_custom_call.1} parent=1 // loop_header_branch
      %26 = sbr.rel (%p24) target = $region8
    $region5: #{tpu_custom_call.1} parent=1 // loop_body
      %s28 = ssub.s32 %s23, 1
      %s29 = ssub.s32 %s23, 2
      %s36 = sadd.s32 1, %s31
      %p37 = scmp.ge.s32.totalorder %s36, 1
      %s38 = scalar_select %p37, 0, %s36
      %s39 = sadd.s32 1, %s30
      %s40 = scalar_select %p37, %s39, %s30
      %p41 = scmp.ge.s32.totalorder %s40, 2
      %s42 = scalar_select %p41, 0, %s40
      %s43 = ssub.s32 %s30, %s42
      %s44 = ssub.s32 %s31, %s38
      %s45 = sor.u32 %s43, %s44
      %p46 = scmp.eq.s32.totalorder %s45, 0
      %s48 = sadd.s32 %s47, 1
      %s49 = scalar_select %p46, %s47, %s48
      %p52 = pneg %p46
      %p53 = scmp.eq.s32.totalorder %s23, 1
      %p54 = por %p52, %p53
      %p55 = scmp.ne.s32.totalorder %s47, %s50
      %p56 = scmp.eq.s32.totalorder %s23, 0
      %p57 = por %p55, %p56
      %p58 = scmp.ne.s32.totalorder %s47, %s50
      %p59 = scmp.eq.s32.totalorder %s28, 1
      %p60 = por %p58, %p59
      %p61 = scmp.ne.s32.totalorder %s50, %s51
      %p62 = scmp.eq.s32.totalorder %s28, 0
      %p63 = por %p61, %p62
      %p64 = scmp.ne.s32.totalorder %s50, %s51
      %p65 = scmp.eq.s32.totalorder %s29, 1
      %p66 = por %p64, %p65
      %p68 = scmp.ne.s32.totalorder %s51, %s67
      %p69 = scmp.eq.s32.totalorder %s29, 0
      %p70 = por %p68, %p69
      %s71 = ssub.s32 %s30, %s42
      %s72 = ssub.s32 %s31, %s38
      %s73 = sor.u32 %s71, %s72
      %p74 = scmp.eq.s32.totalorder %s73, 0
      %s76 = sadd.s32 %s75, 1
      %s77 = scalar_select %p74, %s75, %s76
      %p80 = pneg %p74
      %p81 = scmp.eq.s32.totalorder %s23, 1
      %p82 = por %p80, %p81
      %p83 = scmp.ne.s32.totalorder %s75, %s78
      %p84 = scmp.eq.s32.totalorder %s23, 0
      %p85 = por %p83, %p84
      %p86 = scmp.ne.s32.totalorder %s75, %s78
      %p87 = scmp.eq.s32.totalorder %s28, 1
      %p88 = por %p86, %p87
      %p89 = scmp.ne.s32.totalorder %s78, %s79
      %p90 = scmp.eq.s32.totalorder %s28, 0
      %p91 = por %p89, %p90
      %p92 = scmp.ne.s32.totalorder %s78, %s79
      %p93 = scmp.eq.s32.totalorder %s29, 1
      %p94 = por %p92, %p93
      %p96 = scmp.ne.s32.totalorder %s79, %s95
      %p97 = scmp.eq.s32.totalorder %s29, 0
      %p98 = por %p96, %p97
      %s99 = ssub.s32 %s30, %s42
      %s100 = ssub.s32 %s31, %s38
      %s101 = sor.u32 %s99, %s100
      %p102 = scmp.eq.s32.totalorder %s101, 0
      %s104 = sadd.s32 %s103, 1
      %s105 = scalar_select %p102, %s103, %s104
      %p108 = pneg %p102
      %p109 = scmp.eq.s32.totalorder %s23, 1
      %p110 = por %p108, %p109
      %p111 = scmp.ne.s32.totalorder %s103, %s106
      %p112 = scmp.eq.s32.totalorder %s23, 0
      %p113 = por %p111, %p112
      %p114 = scmp.ne.s32.totalorder %s103, %s106
      %p115 = scmp.eq.s32.totalorder %s28, 1
      %p116 = por %p114, %p115
      %p117 = scmp.ne.s32.totalorder %s106, %s107
      %p118 = scmp.eq.s32.totalorder %s28, 0
      %p119 = por %p117, %p118
      %p120 = scmp.ne.s32.totalorder %s106, %s107
      %p121 = scmp.eq.s32.totalorder %s29, 1
      %p122 = por %p120, %p121
      %p124 = scmp.ne.s32.totalorder %s107, %s123
      %p125 = scmp.eq.s32.totalorder %s29, 0
      %p126 = por %p124, %p125
      %s128 = sadd.s32 %s127, 1
      %p131 = scmp.eq.s32.totalorder %s23, 1
      %p132 = scmp.ne.s32.totalorder %s127, %s129
      %p133 = scmp.eq.s32.totalorder %s23, 0
      %p134 = por %p132, %p133
      %p135 = scmp.ne.s32.totalorder %s127, %s129
      %p136 = scmp.eq.s32.totalorder %s28, 1
      %p137 = por %p135, %p136
      %p138 = scmp.ne.s32.totalorder %s129, %s130
      %p139 = scmp.eq.s32.totalorder %s28, 0
      %p140 = por %p138, %p139
      %p141 = scmp.ne.s32.totalorder %s129, %s130
      %p142 = scmp.eq.s32.totalorder %s29, 1
      %p143 = por %p141, %p142
      %p145 = scmp.ne.s32.totalorder %s130, %s144
      %p146 = scmp.eq.s32.totalorder %s29, 0
      %p147 = por %p145, %p146
      %s149 = sadd.s32 %s148, 1
      %p152 = scmp.eq.s32.totalorder %s23, 1
      %p153 = scmp.ne.s32.totalorder %s148, %s150
      %p154 = scmp.eq.s32.totalorder %s23, 0
      %p155 = por %p153, %p154
      %p156 = scmp.ne.s32.totalorder %s148, %s150
      %p157 = scmp.eq.s32.totalorder %s28, 1
      %p158 = por %p156, %p157
      %p159 = scmp.ne.s32.totalorder %s150, %s151
      %p160 = scmp.eq.s32.totalorder %s28, 0
      %p161 = por %p159, %p160
      %p162 = scmp.ne.s32.totalorder %s150, %s151
      %p163 = scmp.eq.s32.totalorder %s29, 1
      %p164 = por %p162, %p163
      %p166 = scmp.ne.s32.totalorder %s151, %s165
      %p167 = scmp.eq.s32.totalorder %s29, 0
      %p168 = por %p166, %p167
      %s170 = sadd.s32 %s169, 1
      %p173 = scmp.eq.s32.totalorder %s23, 1
      %p174 = scmp.ne.s32.totalorder %s169, %s171
      %p175 = scmp.eq.s32.totalorder %s23, 0
      %p176 = por %p174, %p175
      %p177 = scmp.ne.s32.totalorder %s169, %s171
      %p178 = scmp.eq.s32.totalorder %s28, 1
      %p179 = por %p177, %p178
      %p180 = scmp.ne.s32.totalorder %s171, %s172
      %p181 = scmp.eq.s32.totalorder %s28, 0
      %p182 = por %p180, %p181
      %p183 = scmp.ne.s32.totalorder %s171, %s172
      %p184 = scmp.eq.s32.totalorder %s29, 1
      %p185 = por %p183, %p184
      %p187 = scmp.ne.s32.totalorder %s172, %s186
      %p188 = scmp.eq.s32.totalorder %s29, 0
      %p189 = por %p187, %p188
      %s191 = sadd.s32 %s190, 1
      %p194 = scmp.eq.s32.totalorder %s23, 1
      %p195 = scmp.ne.s32.totalorder %s190, %s192
      %p196 = scmp.eq.s32.totalorder %s23, 0
      %p197 = por %p195, %p196
      %p198 = scmp.ne.s32.totalorder %s190, %s192
      %p199 = scmp.eq.s32.totalorder %s28, 1
      %p200 = por %p198, %p199
      %p201 = scmp.ne.s32.totalorder %s192, %s193
      %p202 = scmp.eq.s32.totalorder %s28, 0
      %p203 = por %p201, %p202
      %p204 = scmp.ne.s32.totalorder %s192, %s193
      %p205 = scmp.eq.s32.totalorder %s29, 1
      %p206 = por %p204, %p205
      %p208 = scmp.ne.s32.totalorder %s193, %s207
      %p209 = scmp.eq.s32.totalorder %s29, 0
      %p210 = por %p208, %p209
      %s211 = ssub.s32 %s30, %s42
      %s212 = ssub.s32 %s31, %s38
      %s213 = sor.u32 %s211, %s212
      %p214 = scmp.eq.s32.totalorder %s213, 0
      %s216 = sadd.s32 %s215, 1
      %s217 = scalar_select %p214, %s215, %s216
      %p220 = pneg %p214
      %p221 = scmp.eq.s32.totalorder %s23, 1
      %p222 = por %p220, %p221
      %p223 = scmp.ne.s32.totalorder %s215, %s218
      %p224 = scmp.eq.s32.totalorder %s23, 0
      %p225 = por %p223, %p224
      %p226 = scmp.ne.s32.totalorder %s215, %s218
      %p227 = scmp.eq.s32.totalorder %s28, 1
      %p228 = por %p226, %p227
      %p229 = scmp.ne.s32.totalorder %s218, %s219
      %p230 = scmp.eq.s32.totalorder %s28, 0
      %p231 = por %p229, %p230
      %p232 = scmp.ne.s32.totalorder %s218, %s219
      %p233 = scmp.eq.s32.totalorder %s29, 1
      %p234 = por %p232, %p233
      %p236 = scmp.ne.s32.totalorder %s219, %s235
      %p237 = scmp.eq.s32.totalorder %s29, 0
      %p238 = por %p236, %p237
      %p239 = scmp.le.s32.totalorder 1, %s23
      %p240 = scmp.lt.s32.totalorder %s23, 3
      %p241 = pnand %p239, %p240
      %p242 = pneg %p241
      // Predicated region
      $region9: #{tpu_custom_call.1} parent=5 // pred_check
        _
      $region10: #{tpu_custom_call.1} parent=5 // pred_check_branch
        %244 = sbr.rel (%p241) target = $region12
      $region11: #{tpu_custom_call.1} parent=5 // pred_region
        %s245 = ssub.s32 %s23, 1
        // Predicated region
        $region13: #{tpu_custom_call.1} parent=11 // pred_check
          %p246 = pneg %p140
        $region14: #{tpu_custom_call.1} parent=11 // pred_check_branch
          %248 = sbr.rel (%p246) target = $region16
        $region15: #{tpu_custom_call.1} parent=11 // pred_region
          %250 = vsyncadd [#allocation10], 0
          %s251 = sshll.u32 %s3, 4
          %s252 = int_to_ptr.hbm [resolvable:$true] %s251
          %s253 = sshll.u32 [#allocation9], 4
          %s254 = int_to_ptr.vmem [resolvable:$true] %s253
          %259 = dma.hbm_to_vmem [thread:$0]  %s252, 1024, %s254, [#allocation10], 64, 64, 4
        $region16: #{tpu_custom_call.1} parent=11 // pred_fallthru
          _
        // Predicated region
        $region17: #{tpu_custom_call.1} parent=11 // pred_check
          %p260 = pneg %p161
        $region18: #{tpu_custom_call.1} parent=11 // pred_check_branch
          %262 = sbr.rel (%p260) target = $region20
        $region19: #{tpu_custom_call.1} parent=11 // pred_region
          _
        $region20: #{tpu_custom_call.1} parent=11 // pred_fallthru
          _
        // Predicated region
        $region21: #{tpu_custom_call.1} parent=11 // pred_check
          %p263 = pneg %p182
        $region22: #{tpu_custom_call.1} parent=11 // pred_check_branch
          %265 = sbr.rel (%p263) target = $region24
        $region23: #{tpu_custom_call.1} parent=11 // pred_region
          %267 = vsyncadd [#allocation10], 0
          %s268 = sshll.u32 %s5, 4
          %s269 = int_to_ptr.hbm [resolvable:$true] %s268
          %s270 = sshll.u32 [#allocation11], 4
          %s271 = int_to_ptr.vmem [resolvable:$true] %s270
          %276 = dma.hbm_to_vmem [thread:$0]  %s269, 9216, %s271, [#allocation10], 64, 64, 4
        $region24: #{tpu_custom_call.1} parent=11 // pred_fallthru
          _
        // Predicated region
        $region25: #{tpu_custom_call.1} parent=11 // pred_check
          %p277 = pneg %p203
        $region26: #{tpu_custom_call.1} parent=11 // pred_check_branch
          %279 = sbr.rel (%p277) target = $region28
        $region27: #{tpu_custom_call.1} parent=11 // pred_region
          _
        $region28: #{tpu_custom_call.1} parent=11 // pred_fallthru
          _
      $region12: #{tpu_custom_call.1} parent=5 // pred_fallthru
        _
      %p280 = scmp.lt.s32.totalorder %s23, 2
      // Predicated region
      $region29: #{tpu_custom_call.1} parent=5 // pred_check
        %p281 = pneg %p280
      $region30: #{tpu_custom_call.1} parent=5 // pred_check_branch
        %283 = sbr.rel (%p281) target = $region32
      $region31: #{tpu_custom_call.1} parent=5 // pred_region
        // Predicated region
        $region33: #{tpu_custom_call.1} parent=31 // pred_check
          %p284 = pneg %p57
        $region34: #{tpu_custom_call.1} parent=31 // pred_check_branch
          %286 = sbr.rel (%p284) target = $region36
        $region35: #{tpu_custom_call.1} parent=31 // pred_region
          %s287 = sand.u32 %s47, 1
          %s288 = scalar_lea.sflag [#allocation4], %s287
          %s289 = sand.u32 %s47, 1
          %s290 = smul.addr %s289, 8
          %s291 = scalar_lea.vmem [#allocation3], %s290
          %293 = vsyncadd %s288, 0
          %s294 = smul.addr %s31, 2
          %s295 = smul.addr %s30, 2
          %s296 = sadd.s32 %s294, %s295
          %s297 = smul.addr %s296, 4
          %s298 = scalar_lea.hbm %s0, %s297
          %s299 = sshll.u32 %s298, 4
          %s300 = int_to_ptr.hbm [resolvable:$true] %s299
          %s301 = sshll.u32 %s291, 4
          %s302 = int_to_ptr.vmem [resolvable:$true] %s301
          %307 = dma.hbm_to_vmem [thread:$0]  %s300, 128, %s302, %s288, 64, 64, 4
        $region36: #{tpu_custom_call.1} parent=31 // pred_fallthru
          _
        // Predicated region
        $region37: #{tpu_custom_call.1} parent=31 // pred_check
          %p308 = pneg %p85
        $region38: #{tpu_custom_call.1} parent=31 // pred_check_branch
          %310 = sbr.rel (%p308) target = $region40
        $region39: #{tpu_custom_call.1} parent=31 // pred_region
          %s311 = sand.u32 %s23, 1
          %s312 = scalar_lea.sflag [#allocation7], %s311
          %s313 = sand.u32 %s75, 1
          %s314 = smul.addr %s313, 128
          %s315 = scalar_lea.vmem [#allocation6], %s314
          %s316 = smul.u32 16, %s31
          %318 = vsyncadd %s312, 0
          %s319 = smul.addr %s316, 2
          %s320 = smul.addr %s30, 32
          %s321 = sadd.s32 %s319, %s320
          %s322 = smul.addr %s321, 4
          %s323 = scalar_lea.hbm %s1, %s322
          %s324 = sshll.u32 %s323, 4
          %s325 = int_to_ptr.hbm [resolvable:$true] %s324
          %s326 = sshll.u32 %s315, 4
          %s327 = int_to_ptr.vmem [resolvable:$true] %s326
          %332 = dma.hbm_to_vmem [thread:$0]  %s325, 2048, %s327, %s312, 64, 64, 4
        $region40: #{tpu_custom_call.1} parent=31 // pred_fallthru
          _
        // Predicated region
        $region41: #{tpu_custom_call.1} parent=31 // pred_check
          %p333 = pneg %p113
        $region42: #{tpu_custom_call.1} parent=31 // pred_check_branch
          %335 = sbr.rel (%p333) target = $region44
        $region43: #{tpu_custom_call.1} parent=31 // pred_region
          %s336 = sand.u32 %s23, 1
          %s337 = scalar_lea.sflag [#allocation7], %s336
          %s338 = sand.u32 %s103, 1
          %s339 = smul.addr %s338, 8
          %s340 = scalar_lea.vmem [#allocation8], %s339
          %342 = vsyncadd %s337, 0
          %s343 = smul.addr %s31, 2
          %s344 = smul.addr %s30, 2
          %s345 = sadd.s32 %s343, %s344
          %s346 = smul.addr %s345, 4
          %s347 = scalar_lea.hbm %s2, %s346
          %s348 = sshll.u32 %s347, 4
          %s349 = int_to_ptr.hbm [resolvable:$true] %s348
          %s350 = sshll.u32 %s340, 4
          %s351 = int_to_ptr.vmem [resolvable:$true] %s350
          %356 = dma.hbm_to_vmem [thread:$0]  %s349, 128, %s351, %s337, 64, 64, 4
        $region44: #{tpu_custom_call.1} parent=31 // pred_fallthru
          _
      $region32: #{tpu_custom_call.1} parent=5 // pred_fallthru
        _
      %p357 = scmp.le.s32.totalorder 1, %s23
      %p358 = scmp.lt.s32.totalorder %s23, 3
      %p359 = pnand %p357, %p358
      %p360 = pneg %p359
      // Predicated region
      $region45: #{tpu_custom_call.1} parent=5 // pred_check
        _
      $region46: #{tpu_custom_call.1} parent=5 // pred_check_branch
        %362 = sbr.rel (%p359) target = $region48
      $region47: #{tpu_custom_call.1} parent=5 // pred_region
        %s363 = ssub.s32 %s23, 1
        %s364 = sand.u32 %s50, 1
        %s365 = scalar_lea.sflag [#allocation4], %s364
        %s366 = sand.u32 %s50, 1
        %s367 = smul.addr %s366, 8
        %s368 = scalar_lea.vmem [#allocation3], %s367
        // Predicated region
        $region49: #{tpu_custom_call.1} parent=47 // pred_check
          %p369 = pneg %p63
        $region50: #{tpu_custom_call.1} parent=47 // pred_check_branch
          %371 = sbr.rel (%p369) target = $region52
        $region51: #{tpu_custom_call.1} parent=47 // pred_region
          %373 = dma.done %s365, 128
        $region52: #{tpu_custom_call.1} parent=47 // pred_fallthru
          _
        %s374 = sand.u32 %s28, 1
        %s375 = scalar_lea.sflag [#allocation7], %s374
        %s376 = sand.u32 %s78, 1
        %s377 = smul.addr %s376, 128
        %s378 = scalar_lea.vmem [#allocation6], %s377
        // Predicated region
        $region53: #{tpu_custom_call.1} parent=47 // pred_check
          %p379 = pneg %p91
        $region54: #{tpu_custom_call.1} parent=47 // pred_check_branch
          %381 = sbr.rel (%p379) target = $region56
        $region55: #{tpu_custom_call.1} parent=47 // pred_region
          %383 = dma.done %s375, 2048
        $region56: #{tpu_custom_call.1} parent=47 // pred_fallthru
          _
        %s384 = sand.u32 %s28, 1
        %s385 = scalar_lea.sflag [#allocation7], %s384
        %s386 = sand.u32 %s106, 1
        %s387 = smul.addr %s386, 8
        %s388 = scalar_lea.vmem [#allocation8], %s387
        // Predicated region
        $region57: #{tpu_custom_call.1} parent=47 // pred_check
          %p389 = pneg %p119
        $region58: #{tpu_custom_call.1} parent=47 // pred_check_branch
          %391 = sbr.rel (%p389) target = $region60
        $region59: #{tpu_custom_call.1} parent=47 // pred_region
          %393 = dma.done %s385, 128
        $region60: #{tpu_custom_call.1} parent=47 // pred_fallthru
          _
        // Predicated region
        $region61: #{tpu_custom_call.1} parent=47 // pred_check
          %p394 = pneg %p140
        $region62: #{tpu_custom_call.1} parent=47 // pred_check_branch
          %396 = sbr.rel (%p394) target = $region64
        $region63: #{tpu_custom_call.1} parent=47 // pred_region
          %398 = dma.done [#allocation10], 1024
        $region64: #{tpu_custom_call.1} parent=47 // pred_fallthru
          _
        // Predicated region
        $region65: #{tpu_custom_call.1} parent=47 // pred_check
          %p399 = pneg %p182
        $region66: #{tpu_custom_call.1} parent=47 // pred_check_branch
          %401 = sbr.rel (%p399) target = $region68
        $region67: #{tpu_custom_call.1} parent=47 // pred_region
          %403 = dma.done [#allocation10], 9216
        $region68: #{tpu_custom_call.1} parent=47 // pred_fallthru
          _
        %s404 = sand.u32 %s50, 1
        %s405 = scalar_lea.sflag [#allocation4], %s404
        %s406 = sand.u32 %s50, 1
        %s407 = smul.addr %s406, 8
        %s408 = scalar_lea.vmem [#allocation3], %s407
        %p409 = pneg %p63
        %p410 = pneg %p60
        %s411 = sand.u32 %s28, 1
        %s412 = scalar_lea.sflag [#allocation7], %s411
        %s413 = sand.u32 %s78, 1
        %s414 = smul.addr %s413, 128
        %s415 = scalar_lea.vmem [#allocation6], %s414
        %p416 = pneg %p91
        %p417 = pneg %p88
        %s418 = sand.u32 %s28, 1
        %s419 = scalar_lea.sflag [#allocation7], %s418
        %s420 = sand.u32 %s106, 1
        %s421 = smul.addr %s420, 8
        %s422 = scalar_lea.vmem [#allocation8], %s421
        %p423 = pneg %p119
        %p424 = pneg %p116
        %p425 = pneg %p140
        %p426 = pneg %p137
        %p427 = pneg %p161
        %p428 = pneg %p158
        %p429 = pneg %p182
        %p430 = pneg %p179
        %p431 = pneg %p203
        %p432 = pneg %p200
        %p433 = pneg %p231
        %p434 = pneg %p228
        %s435 = sand.u32 %s218, 1
        %s436 = scalar_lea.sflag [#allocation5], %s435
        %s437 = sand.u32 %s218, 1
        %s438 = smul.addr %s437, 256
        %s439 = scalar_lea.vmem [#allocation12], %s438
        %s440 = smul.u32 16, %s33
        %s441 = smul.u32 16, %s33
        %v443 = vld [vmem:[%s378] sm:$0xf]
        %v444 = vld [vmem:[%s378 + $0x4] sm:$0xf]
        %v445 = vld [vmem:[%s378 + $0x8] sm:$0xf]
        %v446 = vld [vmem:[%s378 + $0xc] sm:$0xf]
        %v447 = vld [vmem:[%s378 + $0x10] sm:$0xf]
        %v448 = vld [vmem:[%s378 + $0x14] sm:$0xf]
        %v449 = vld [vmem:[%s378 + $0x18] sm:$0xf]
        %v450 = vld [vmem:[%s378 + $0x1c] sm:$0xf]
        %v451 = vld [vmem:[%s378 + $0x20] sm:$0xf]
        %v452 = vld [vmem:[%s378 + $0x24] sm:$0xf]
        %v453 = vld [vmem:[%s378 + $0x28] sm:$0xf]
        %v454 = vld [vmem:[%s378 + $0x2c] sm:$0xf]
        %v455 = vld [vmem:[%s378 + $0x30] sm:$0xf]
        %v456 = vld [vmem:[%s378 + $0x34] sm:$0xf]
        %v457 = vld [vmem:[%s378 + $0x38] sm:$0xf]
        %v458 = vld [vmem:[%s378 + $0x3c] sm:$0xf]
        %v459 = vld [vmem:[%s378 + $0x40] sm:$0xf]
        %v460 = vld [vmem:[%s378 + $0x44] sm:$0xf]
        %v461 = vld [vmem:[%s378 + $0x48] sm:$0xf]
        %v462 = vld [vmem:[%s378 + $0x4c] sm:$0xf]
        %v463 = vld [vmem:[%s378 + $0x50] sm:$0xf]
        %v464 = vld [vmem:[%s378 + $0x54] sm:$0xf]
        %v465 = vld [vmem:[%s378 + $0x58] sm:$0xf]
        %v466 = vld [vmem:[%s378 + $0x5c] sm:$0xf]
        %v467 = vld [vmem:[%s378 + $0x60] sm:$0xf]
        %v468 = vld [vmem:[%s378 + $0x64] sm:$0xf]
        %v469 = vld [vmem:[%s378 + $0x68] sm:$0xf]
        %v470 = vld [vmem:[%s378 + $0x6c] sm:$0xf]
        %v471 = vld [vmem:[%s378 + $0x70] sm:$0xf]
        %v472 = vld [vmem:[%s378 + $0x74] sm:$0xf]
        %v473 = vld [vmem:[%s378 + $0x78] sm:$0xf]
        %v474 = vld [vmem:[%s378 + $0x7c] sm:$0xf]
        %v475 = vld [vmem:[%s368] sm:$0xf]
        %v476 = vld [vmem:[%s368 + $0x4] sm:$0xf]
        %v477 = vld [vmem:[%s388] sm:$0xf]
        %v478 = vld [vmem:[%s388 + $0x4] sm:$0xf]
        %v479 = vld [vmem:[#allocation9] sm:$0xf]
        %v480 = vld [vmem:[#allocation9 + $0x4] sm:$0xf]
        %v481 = vld [vmem:[#allocation9 + $0x8] sm:$0xf]
        %v482 = vld [vmem:[#allocation9 + $0xc] sm:$0xf]
        %v483 = vld [vmem:[#allocation9 + $0x10] sm:$0xf]
        %v484 = vld [vmem:[#allocation9 + $0x14] sm:$0xf]
        %v485 = vld [vmem:[#allocation9 + $0x18] sm:$0xf]
        %v486 = vld [vmem:[#allocation9 + $0x1c] sm:$0xf]
        %v487 = vld [vmem:[#allocation9 + $0x20] sm:$0xf]
        %v488 = vld [vmem:[#allocation9 + $0x24] sm:$0xf]
        %v489 = vld [vmem:[#allocation9 + $0x28] sm:$0xf]
        %v490 = vld [vmem:[#allocation9 + $0x2c] sm:$0xf]
        %v491 = vld [vmem:[#allocation9 + $0x30] sm:$0xf]
        %v492 = vld [vmem:[#allocation9 + $0x34] sm:$0xf]
        %v493 = vld [vmem:[#allocation9 + $0x38] sm:$0xf]
        %v494 = vld [vmem:[#allocation9 + $0x3c] sm:$0xf]
        %v495 = vld [vmem:[%s4] sm:$0x1]
        %v497 = vperm.slane %v495, 0
        %v535 = vunpack.c.l.b16 %v475
        %v536 = vunpack.c.l.b16 %v476
        %v537 = vunpack.c.l.b16 %v443
        %v538 = vunpack.c.l.b16 %v444
        %v539 = vunpack.c.l.b16 %v445
        %v540 = vunpack.c.l.b16 %v446
        %v541 = vunpack.c.l.b16 %v447
        %v542 = vunpack.c.l.b16 %v448
        %v543 = vunpack.c.l.b16 %v449
        %v544 = vunpack.c.l.b16 %v450
        %v545 = vunpack.c.l.b16 %v451
        %v546 = vunpack.c.l.b16 %v452
        %v547 = vunpack.c.l.b16 %v453
        %v548 = vunpack.c.l.b16 %v454
        %v549 = vunpack.c.l.b16 %v455
        %v550 = vunpack.c.l.b16 %v456
        %v551 = vunpack.c.l.b16 %v457
        %v552 = vunpack.c.l.b16 %v458
        %v553 = vunpack.c.l.b16 %v459
        %v554 = vunpack.c.l.b16 %v460
        %v555 = vunpack.c.l.b16 %v461
        %v556 = vunpack.c.l.b16 %v462
        %v557 = vunpack.c.l.b16 %v463
        %v558 = vunpack.c.l.b16 %v464
        %v559 = vunpack.c.l.b16 %v465
        %v560 = vunpack.c.l.b16 %v466
        %v561 = vunpack.c.l.b16 %v467
        %v562 = vunpack.c.l.b16 %v468
        %v563 = vunpack.c.l.b16 %v469
        %v564 = vunpack.c.l.b16 %v470
        %v565 = vunpack.c.l.b16 %v471
        %v566 = vunpack.c.l.b16 %v472
        %v567 = vunpack.c.l.b16 %v473
        %v568 = vunpack.c.l.b16 %v474
        %v569 = vunpack.c.l.b16 %v477
        %v570 = vunpack.c.l.b16 %v478
        %v571 = vpack.c.b16 %v536, %v535
        %v572 = vpack.c.b16 %v538, %v537
        %v573 = vpack.c.b16 %v540, %v539
        %v574 = vpack.c.b16 %v542, %v541
        %v575 = vpack.c.b16 %v544, %v543
        %v576 = vpack.c.b16 %v546, %v545
        %v577 = vpack.c.b16 %v548, %v547
        %v578 = vpack.c.b16 %v550, %v549
        %v579 = vpack.c.b16 %v552, %v551
        %v580 = vpack.c.b16 %v554, %v553
        %v581 = vpack.c.b16 %v556, %v555
        %v582 = vpack.c.b16 %v558, %v557
        %v583 = vpack.c.b16 %v560, %v559
        %v584 = vpack.c.b16 %v562, %v561
        %v585 = vpack.c.b16 %v564, %v563
        %v586 = vpack.c.b16 %v566, %v565
        %v587 = vpack.c.b16 %v568, %v567
        %v588 = vpack.c.b16 %v570, %v569
        %v623 = vunpack.c.l.b16 %v479
        %v624 = vunpack.c.l.b16 %v480
        %v625 = vunpack.c.l.b16 %v481
        %v626 = vunpack.c.l.b16 %v482
        %v627 = vunpack.c.l.b16 %v483
        %v628 = vunpack.c.l.b16 %v484
        %v629 = vunpack.c.l.b16 %v485
        %v630 = vunpack.c.l.b16 %v486
        %v631 = vunpack.c.l.b16 %v487
        %v632 = vunpack.c.l.b16 %v488
        %v633 = vunpack.c.l.b16 %v489
        %v634 = vunpack.c.l.b16 %v490
        %v635 = vunpack.c.l.b16 %v491
        %v636 = vunpack.c.l.b16 %v492
        %v637 = vunpack.c.l.b16 %v493
        %v638 = vunpack.c.l.b16 %v494
        %v639 = vpack.c.b16 %v624, %v623
        %v640 = vpack.c.b16 %v626, %v625
        %v641 = vpack.c.b16 %v628, %v627
        %v642 = vpack.c.b16 %v630, %v629
        %v643 = vpack.c.b16 %v632, %v631
        %v644 = vpack.c.b16 %v634, %v633
        %v645 = vpack.c.b16 %v636, %v635
        %v646 = vpack.c.b16 %v638, %v637
        %655 = vmatpush.bf16.msra.mxu0 %v646
        %656 = vmatpush.bf16.msra.mxu0 %v645
        %657 = vmatpush.bf16.msra.mxu0 %v644
        %658 = vmatpush.bf16.msra.mxu0 %v643
        %659 = vmatpush.bf16.msra.mxu0 %v642
        %660 = vmatpush.bf16.msra.mxu0 %v641
        %661 = vmatpush.bf16.msra.mxu0 %v640
        %662 = vmatpush.bf16.msra.mxu0 %v639
        %663 = vmatmul.bf16.gmra.mxu0 %v571
        %v664 = vpop.f32.mrf.mxu0
        %v665 = vadd.f32 %v497, %v664
        %v666 = vpop.f32.mrf.mxu0
        %v667 = vadd.f32 %v497, %v666
        %668 = vmatmul.bf16.gmra.mxu0 %v572
        %v669 = vpop.f32.mrf.mxu0
        %v670 = vadd.f32 %v497, %v669
        %v671 = vpop.f32.mrf.mxu0
        %v672 = vadd.f32 %v497, %v671
        %673 = vmatmul.bf16.gmra.mxu0 %v573
        %v674 = vpop.f32.mrf.mxu0
        %v675 = vadd.f32 %v497, %v674
        %v676 = vpop.f32.mrf.mxu0
        %v677 = vadd.f32 %v497, %v676
        %678 = vmatmul.bf16.gmra.mxu0 %v574
        %v679 = vpop.f32.mrf.mxu0
        %v680 = vadd.f32 %v497, %v679
        %v681 = vpop.f32.mrf.mxu0
        %v682 = vadd.f32 %v497, %v681
        %683 = vmatmul.bf16.gmra.mxu0 %v575
        %v684 = vpop.f32.mrf.mxu0
        %v685 = vadd.f32 %v497, %v684
        %v686 = vpop.f32.mrf.mxu0
        %v687 = vadd.f32 %v497, %v686
        %688 = vmatmul.bf16.gmra.mxu0 %v576
        %v689 = vpop.f32.mrf.mxu0
        %v690 = vadd.f32 %v497, %v689
        %v691 = vpop.f32.mrf.mxu0
        %v692 = vadd.f32 %v497, %v691
        %693 = vmatmul.bf16.gmra.mxu0 %v577
        %v694 = vpop.f32.mrf.mxu0
        %v695 = vadd.f32 %v497, %v694
        %v696 = vpop.f32.mrf.mxu0
        %v697 = vadd.f32 %v497, %v696
        %698 = vmatmul.bf16.gmra.mxu0 %v578
        %v699 = vpop.f32.mrf.mxu0
        %v700 = vadd.f32 %v497, %v699
        %v701 = vpop.f32.mrf.mxu0
        %v702 = vadd.f32 %v497, %v701
        %703 = vmatmul.bf16.gmra.mxu0 %v579
        %v704 = vpop.f32.mrf.mxu0
        %v705 = vadd.f32 %v497, %v704
        %v706 = vpop.f32.mrf.mxu0
        %v707 = vadd.f32 %v497, %v706
        %708 = vmatmul.bf16.gmra.mxu0 %v580
        %v709 = vpop.f32.mrf.mxu0
        %v710 = vadd.f32 %v497, %v709
        %v711 = vpop.f32.mrf.mxu0
        %v712 = vadd.f32 %v497, %v711
        %713 = vmatmul.bf16.gmra.mxu0 %v581
        %v714 = vpop.f32.mrf.mxu0
        %v715 = vadd.f32 %v497, %v714
        %v716 = vpop.f32.mrf.mxu0
        %v717 = vadd.f32 %v497, %v716
        %718 = vmatmul.bf16.gmra.mxu0 %v582
        %v719 = vpop.f32.mrf.mxu0
        %v720 = vadd.f32 %v497, %v719
        %v721 = vpop.f32.mrf.mxu0
        %v722 = vadd.f32 %v497, %v721
        %723 = vmatmul.bf16.gmra.mxu0 %v583
        %v724 = vpop.f32.mrf.mxu0
        %v725 = vadd.f32 %v497, %v724
        %v726 = vpop.f32.mrf.mxu0
        %v727 = vadd.f32 %v497, %v726
        %728 = vmatmul.bf16.gmra.mxu0 %v584
        %v729 = vpop.f32.mrf.mxu0
        %v730 = vadd.f32 %v497, %v729
        %v731 = vpop.f32.mrf.mxu0
        %v732 = vadd.f32 %v497, %v731
        %733 = vmatmul.bf16.gmra.mxu0 %v585
        %v734 = vpop.f32.mrf.mxu0
        %v735 = vadd.f32 %v497, %v734
        %v736 = vpop.f32.mrf.mxu0
        %v737 = vadd.f32 %v497, %v736
        %738 = vmatmul.bf16.gmra.mxu0 %v586
        %v739 = vpop.f32.mrf.mxu0
        %v740 = vadd.f32 %v497, %v739
        %v741 = vpop.f32.mrf.mxu0
        %v742 = vadd.f32 %v497, %v741
        %743 = vmatmul.bf16.gmra.mxu0 %v587
        %v744 = vpop.f32.mrf.mxu0
        %v745 = vadd.f32 %v497, %v744
        %v746 = vpop.f32.mrf.mxu0
        %v747 = vadd.f32 %v497, %v746
        %748 = vmatmul.bf16.gmra.mxu0 %v588
        %v749 = vpop.f32.mrf.mxu0
        %v750 = vadd.f32 %v497, %v749
        %v751 = vpop.f32.mrf.mxu0
        %v752 = vadd.f32 %v497, %v751
        %753 = vdwg.mxu0
        %v754 = vadd.f32 %v665, 3.0
        %v755 = vadd.f32 %v667, 3.0
        %v756 = vadd.f32 %v670, 3.0
        %v757 = vadd.f32 %v672, 3.0
        %v758 = vadd.f32 %v675, 3.0
        %v759 = vadd.f32 %v677, 3.0
        %v760 = vadd.f32 %v680, 3.0
        %v761 = vadd.f32 %v682, 3.0
        %v762 = vadd.f32 %v685, 3.0
        %v763 = vadd.f32 %v687, 3.0
        %v764 = vadd.f32 %v690, 3.0
        %v765 = vadd.f32 %v692, 3.0
        %v766 = vadd.f32 %v695, 3.0
        %v767 = vadd.f32 %v697, 3.0
        %v768 = vadd.f32 %v700, 3.0
        %v769 = vadd.f32 %v702, 3.0
        %v770 = vadd.f32 %v705, 3.0
        %v771 = vadd.f32 %v707, 3.0
        %v772 = vadd.f32 %v710, 3.0
        %v773 = vadd.f32 %v712, 3.0
        %v774 = vadd.f32 %v715, 3.0
        %v775 = vadd.f32 %v717, 3.0
        %v776 = vadd.f32 %v720, 3.0
        %v777 = vadd.f32 %v722, 3.0
        %v778 = vadd.f32 %v725, 3.0
        %v779 = vadd.f32 %v727, 3.0
        %v780 = vadd.f32 %v730, 3.0
        %v781 = vadd.f32 %v732, 3.0
        %v782 = vadd.f32 %v735, 3.0
        %v783 = vadd.f32 %v737, 3.0
        %v784 = vadd.f32 %v740, 3.0
        %v785 = vadd.f32 %v742, 3.0
        %v786 = vadd.f32 %v745, 3.0
        %v787 = vadd.f32 %v747, 3.0
        %v788 = vadd.f32 %v750, 3.0
        %v789 = vadd.f32 %v752, 3.0
        %v790 = vmax.f32 %v754, 0.0
        %v791 = vmax.f32 %v755, 0.0
        %v792 = vmax.f32 %v756, 0.0
        %v793 = vmax.f32 %v757, 0.0
        %v794 = vmax.f32 %v758, 0.0
        %v795 = vmax.f32 %v759, 0.0
        %v796 = vmax.f32 %v760, 0.0
        %v797 = vmax.f32 %v761, 0.0
        %v798 = vmax.f32 %v762, 0.0
        %v799 = vmax.f32 %v763, 0.0
        %v800 = vmax.f32 %v764, 0.0
        %v801 = vmax.f32 %v765, 0.0
        %v802 = vmax.f32 %v766, 0.0
        %v803 = vmax.f32 %v767, 0.0
        %v804 = vmax.f32 %v768, 0.0
        %v805 = vmax.f32 %v769, 0.0
        %v806 = vmax.f32 %v770, 0.0
        %v807 = vmax.f32 %v771, 0.0
        %v808 = vmax.f32 %v772, 0.0
        %v809 = vmax.f32 %v773, 0.0
        %v810 = vmax.f32 %v774, 0.0
        %v811 = vmax.f32 %v775, 0.0
        %v812 = vmax.f32 %v776, 0.0
        %v813 = vmax.f32 %v777, 0.0
        %v814 = vmax.f32 %v778, 0.0
        %v815 = vmax.f32 %v779, 0.0
        %v816 = vmax.f32 %v780, 0.0
        %v817 = vmax.f32 %v781, 0.0
        %v818 = vmax.f32 %v782, 0.0
        %v819 = vmax.f32 %v783, 0.0
        %v820 = vmax.f32 %v784, 0.0
        %v821 = vmax.f32 %v785, 0.0
        %v822 = vmax.f32 %v786, 0.0
        %v823 = vmax.f32 %v787, 0.0
        %v824 = vmax.f32 %v788, 0.0
        %v825 = vmax.f32 %v789, 0.0
        %v826 = vmin.f32 %v790, 6.0
        %v827 = vmin.f32 %v791, 6.0
        %v828 = vmin.f32 %v792, 6.0
        %v829 = vmin.f32 %v793, 6.0
        %v830 = vmin.f32 %v794, 6.0
        %v831 = vmin.f32 %v795, 6.0
        %v832 = vmin.f32 %v796, 6.0
        %v833 = vmin.f32 %v797, 6.0
        %v834 = vmin.f32 %v798, 6.0
        %v835 = vmin.f32 %v799, 6.0
        %v836 = vmin.f32 %v800, 6.0
        %v837 = vmin.f32 %v801, 6.0
        %v838 = vmin.f32 %v802, 6.0
        %v839 = vmin.f32 %v803, 6.0
        %v840 = vmin.f32 %v804, 6.0
        %v841 = vmin.f32 %v805, 6.0
        %v842 = vmin.f32 %v806, 6.0
        %v843 = vmin.f32 %v807, 6.0
        %v844 = vmin.f32 %v808, 6.0
        %v845 = vmin.f32 %v809, 6.0
        %v846 = vmin.f32 %v810, 6.0
        %v847 = vmin.f32 %v811, 6.0
        %v848 = vmin.f32 %v812, 6.0
        %v849 = vmin.f32 %v813, 6.0
        %v850 = vmin.f32 %v814, 6.0
        %v851 = vmin.f32 %v815, 6.0
        %v852 = vmin.f32 %v816, 6.0
        %v853 = vmin.f32 %v817, 6.0
        %v854 = vmin.f32 %v818, 6.0
        %v855 = vmin.f32 %v819, 6.0
        %v856 = vmin.f32 %v820, 6.0
        %v857 = vmin.f32 %v821, 6.0
        %v858 = vmin.f32 %v822, 6.0
        %v859 = vmin.f32 %v823, 6.0
        %v860 = vmin.f32 %v824, 6.0
        %v861 = vmin.f32 %v825, 6.0
        %v862 = vmul.f32 %v665, %v826
        %v863 = vmul.f32 %v667, %v827
        %v864 = vmul.f32 %v670, %v828
        %v865 = vmul.f32 %v672, %v829
        %v866 = vmul.f32 %v675, %v830
        %v867 = vmul.f32 %v677, %v831
        %v868 = vmul.f32 %v680, %v832
        %v869 = vmul.f32 %v682, %v833
        %v870 = vmul.f32 %v685, %v834
        %v871 = vmul.f32 %v687, %v835
        %v872 = vmul.f32 %v690, %v836
        %v873 = vmul.f32 %v692, %v837
        %v874 = vmul.f32 %v695, %v838
        %v875 = vmul.f32 %v697, %v839
        %v876 = vmul.f32 %v700, %v840
        %v877 = vmul.f32 %v702, %v841
        %v878 = vmul.f32 %v705, %v842
        %v879 = vmul.f32 %v707, %v843
        %v880 = vmul.f32 %v710, %v844
        %v881 = vmul.f32 %v712, %v845
        %v882 = vmul.f32 %v715, %v846
        %v883 = vmul.f32 %v717, %v847
        %v884 = vmul.f32 %v720, %v848
        %v885 = vmul.f32 %v722, %v849
        %v886 = vmul.f32 %v725, %v850
        %v887 = vmul.f32 %v727, %v851
        %v888 = vmul.f32 %v730, %v852
        %v889 = vmul.f32 %v732, %v853
        %v890 = vmul.f32 %v735, %v854
        %v891 = vmul.f32 %v737, %v855
        %v892 = vmul.f32 %v740, %v856
        %v893 = vmul.f32 %v742, %v857
        %v894 = vmul.f32 %v745, %v858
        %v895 = vmul.f32 %v747, %v859
        %v896 = vmul.f32 %v750, %v860
        %v897 = vmul.f32 %v752, %v861
        %v898 = vrcp.pop 6.0
        %v899 = vmul.f32 6.0, %v898
        %v900 = vsub.f32 1.0, %v899
        %v901 = vmul.f32 %v898, %v900
        %v902 = vadd.f32 %v898, %v901
        %vm903 = vweird.f32 %v898
        %v904 = vsel %vm903, %v898, %v902
        %v905 = vmul.f32 %v862, %v904
        %v906 = vmul.f32 %v863, %v904
        %v907 = vmul.f32 %v864, %v904
        %v908 = vmul.f32 %v865, %v904
        %v909 = vmul.f32 %v866, %v904
        %v910 = vmul.f32 %v867, %v904
        %v911 = vmul.f32 %v868, %v904
        %v912 = vmul.f32 %v869, %v904
        %v913 = vmul.f32 %v870, %v904
        %v914 = vmul.f32 %v871, %v904
        %v915 = vmul.f32 %v872, %v904
        %v916 = vmul.f32 %v873, %v904
        %v917 = vmul.f32 %v874, %v904
        %v918 = vmul.f32 %v875, %v904
        %v919 = vmul.f32 %v876, %v904
        %v920 = vmul.f32 %v877, %v904
        %v921 = vmul.f32 %v878, %v904
        %v922 = vmul.f32 %v879, %v904
        %v923 = vmul.f32 %v880, %v904
        %v924 = vmul.f32 %v881, %v904
        %v925 = vmul.f32 %v882, %v904
        %v926 = vmul.f32 %v883, %v904
        %v927 = vmul.f32 %v884, %v904
        %v928 = vmul.f32 %v885, %v904
        %v929 = vmul.f32 %v886, %v904
        %v930 = vmul.f32 %v887, %v904
        %v931 = vmul.f32 %v888, %v904
        %v932 = vmul.f32 %v889, %v904
        %v933 = vmul.f32 %v890, %v904
        %v934 = vmul.f32 %v891, %v904
        %v935 = vmul.f32 %v892, %v904
        %v936 = vmul.f32 %v893, %v904
        %v937 = vmul.f32 %v894, %v904
        %v938 = vmul.f32 %v895, %v904
        %v939 = vmul.f32 %v896, %v904
        %v940 = vmul.f32 %v897, %v904
        %vm977 = vcmask 1040384
        %v978 = vrot.slane %v905, 7
        %v979 = vrot.slane %v906, 7
        %v980 = vsel %vm977, %v978, %v979
        %v981 = vrot.slane %v907, 7
        %v982 = vrot.slane %v908, 7
        %v983 = vsel %vm977, %v981, %v982
        %v984 = vrot.slane %v909, 7
        %v985 = vrot.slane %v910, 7
        %v986 = vsel %vm977, %v984, %v985
        %v987 = vrot.slane %v911, 7
        %v988 = vrot.slane %v912, 7
        %v989 = vsel %vm977, %v987, %v988
        %v990 = vrot.slane %v913, 7
        %v991 = vrot.slane %v914, 7
        %v992 = vsel %vm977, %v990, %v991
        %v993 = vrot.slane %v915, 7
        %v994 = vrot.slane %v916, 7
        %v995 = vsel %vm977, %v993, %v994
        %v996 = vrot.slane %v917, 7
        %v997 = vrot.slane %v918, 7
        %v998 = vsel %vm977, %v996, %v997
        %v999 = vrot.slane %v919, 7
        %v1000 = vrot.slane %v920, 7
        %v1001 = vsel %vm977, %v999, %v1000
        %v1002 = vrot.slane %v921, 7
        %v1003 = vrot.slane %v922, 7
        %v1004 = vsel %vm977, %v1002, %v1003
        %v1005 = vrot.slane %v923, 7
        %v1006 = vrot.slane %v924, 7
        %v1007 = vsel %vm977, %v1005, %v1006
        %v1008 = vrot.slane %v925, 7
        %v1009 = vrot.slane %v926, 7
        %v1010 = vsel %vm977, %v1008, %v1009
        %v1011 = vrot.slane %v927, 7
        %v1012 = vrot.slane %v928, 7
        %v1013 = vsel %vm977, %v1011, %v1012
        %v1014 = vrot.slane %v929, 7
        %v1015 = vrot.slane %v930, 7
        %v1016 = vsel %vm977, %v1014, %v1015
        %v1017 = vrot.slane %v931, 7
        %v1018 = vrot.slane %v932, 7
        %v1019 = vsel %vm977, %v1017, %v1018
        %v1020 = vrot.slane %v933, 7
        %v1021 = vrot.slane %v934, 7
        %v1022 = vsel %vm977, %v1020, %v1021
        %v1023 = vrot.slane %v935, 7
        %v1024 = vrot.slane %v936, 7
        %v1025 = vsel %vm977, %v1023, %v1024
        %v1026 = vrot.slane %v937, 7
        %v1027 = vrot.slane %v938, 7
        %v1028 = vsel %vm977, %v1026, %v1027
        %v1029 = vrot.slane %v939, 7
        %v1030 = vrot.slane %v940, 7
        %v1031 = vsel %vm977, %v1029, %v1030
        %v1068 = vsel %vm977, 0.0, %v978
        %v1069 = vsel %vm977, 0.0, %v981
        %v1070 = vsel %vm977, 0.0, %v984
        %v1071 = vsel %vm977, 0.0, %v987
        %v1072 = vsel %vm977, 0.0, %v990
        %v1073 = vsel %vm977, 0.0, %v993
        %v1074 = vsel %vm977, 0.0, %v996
        %v1075 = vsel %vm977, 0.0, %v999
        %v1076 = vsel %vm977, 0.0, %v1002
        %v1077 = vsel %vm977, 0.0, %v1005
        %v1078 = vsel %vm977, 0.0, %v1008
        %v1079 = vsel %vm977, 0.0, %v1011
        %v1080 = vsel %vm977, 0.0, %v1014
        %v1081 = vsel %vm977, 0.0, %v1017
        %v1082 = vsel %vm977, 0.0, %v1020
        %v1083 = vsel %vm977, 0.0, %v1023
        %v1084 = vsel %vm977, 0.0, %v1026
        %v1085 = vsel %vm977, 0.0, %v1029
        %vm1086 = vcmask 1046528
        %v1087 = vrot.slane %v905, 1
        %v1088 = vrot.slane %v906, 1
        %v1089 = vsel %vm1086, %v1087, %v1088
        %v1090 = vrot.slane %v907, 1
        %v1091 = vrot.slane %v908, 1
        %v1092 = vsel %vm1086, %v1090, %v1091
        %v1093 = vrot.slane %v909, 1
        %v1094 = vrot.slane %v910, 1
        %v1095 = vsel %vm1086, %v1093, %v1094
        %v1096 = vrot.slane %v911, 1
        %v1097 = vrot.slane %v912, 1
        %v1098 = vsel %vm1086, %v1096, %v1097
        %v1099 = vrot.slane %v913, 1
        %v1100 = vrot.slane %v914, 1
        %v1101 = vsel %vm1086, %v1099, %v1100
        %v1102 = vrot.slane %v915, 1
        %v1103 = vrot.slane %v916, 1
        %v1104 = vsel %vm1086, %v1102, %v1103
        %v1105 = vrot.slane %v917, 1
        %v1106 = vrot.slane %v918, 1
        %v1107 = vsel %vm1086, %v1105, %v1106
        %v1108 = vrot.slane %v919, 1
        %v1109 = vrot.slane %v920, 1
        %v1110 = vsel %vm1086, %v1108, %v1109
        %v1111 = vrot.slane %v921, 1
        %v1112 = vrot.slane %v922, 1
        %v1113 = vsel %vm1086, %v1111, %v1112
        %v1114 = vrot.slane %v923, 1
        %v1115 = vrot.slane %v924, 1
        %v1116 = vsel %vm1086, %v1114, %v1115
        %v1117 = vrot.slane %v925, 1
        %v1118 = vrot.slane %v926, 1
        %v1119 = vsel %vm1086, %v1117, %v1118
        %v1120 = vrot.slane %v927, 1
        %v1121 = vrot.slane %v928, 1
        %v1122 = vsel %vm1086, %v1120, %v1121
        %v1123 = vrot.slane %v929, 1
        %v1124 = vrot.slane %v930, 1
        %v1125 = vsel %vm1086, %v1123, %v1124
        %v1126 = vrot.slane %v931, 1
        %v1127 = vrot.slane %v932, 1
        %v1128 = vsel %vm1086, %v1126, %v1127
        %v1129 = vrot.slane %v933, 1
        %v1130 = vrot.slane %v934, 1
        %v1131 = vsel %vm1086, %v1129, %v1130
        %v1132 = vrot.slane %v935, 1
        %v1133 = vrot.slane %v936, 1
        %v1134 = vsel %vm1086, %v1132, %v1133
        %v1135 = vrot.slane %v937, 1
        %v1136 = vrot.slane %v938, 1
        %v1137 = vsel %vm1086, %v1135, %v1136
        %v1138 = vrot.slane %v939, 1
        %v1139 = vrot.slane %v940, 1
        %v1140 = vsel %vm1086, %v1138, %v1139
        %v1177 = vsel %vm1086, %v1088, 0.0
        %v1178 = vsel %vm1086, %v1091, 0.0
        %v1179 = vsel %vm1086, %v1094, 0.0
        %v1180 = vsel %vm1086, %v1097, 0.0
        %v1181 = vsel %vm1086, %v1100, 0.0
        %v1182 = vsel %vm1086, %v1103, 0.0
        %v1183 = vsel %vm1086, %v1106, 0.0
        %v1184 = vsel %vm1086, %v1109, 0.0
        %v1185 = vsel %vm1086, %v1112, 0.0
        %v1186 = vsel %vm1086, %v1115, 0.0
        %v1187 = vsel %vm1086, %v1118, 0.0
        %v1188 = vsel %vm1086, %v1121, 0.0
        %v1189 = vsel %vm1086, %v1124, 0.0
        %v1190 = vsel %vm1086, %v1127, 0.0
        %v1191 = vsel %vm1086, %v1130, 0.0
        %v1192 = vsel %vm1086, %v1133, 0.0
        %v1193 = vsel %vm1086, %v1136, 0.0
        %v1194 = vsel %vm1086, %v1139, 0.0
        %v1195 = vpack.c.bf16 %v905, %v1068
        %v1196 = vpack.c.bf16 %v1089, %v1089
        %v1197 = vpack.c.bf16 %v906, %v980
        %v1198 = vpack.c.bf16 %v1177, %v1177
        %v1199 = vpack.c.bf16 %v907, %v1069
        %v1200 = vpack.c.bf16 %v1092, %v1092
        %v1201 = vpack.c.bf16 %v908, %v983
        %v1202 = vpack.c.bf16 %v1178, %v1178
        %v1203 = vpack.c.bf16 %v909, %v1070
        %v1204 = vpack.c.bf16 %v1095, %v1095
        %v1205 = vpack.c.bf16 %v910, %v986
        %v1206 = vpack.c.bf16 %v1179, %v1179
        %v1207 = vpack.c.bf16 %v911, %v1071
        %v1208 = vpack.c.bf16 %v1098, %v1098
        %v1209 = vpack.c.bf16 %v912, %v989
        %v1210 = vpack.c.bf16 %v1180, %v1180
        %v1211 = vpack.c.bf16 %v913, %v1072
        %v1212 = vpack.c.bf16 %v1101, %v1101
        %v1213 = vpack.c.bf16 %v914, %v992
        %v1214 = vpack.c.bf16 %v1181, %v1181
        %v1215 = vpack.c.bf16 %v915, %v1073
        %v1216 = vpack.c.bf16 %v1104, %v1104
        %v1217 = vpack.c.bf16 %v916, %v995
        %v1218 = vpack.c.bf16 %v1182, %v1182
        %v1219 = vpack.c.bf16 %v917, %v1074
        %v1220 = vpack.c.bf16 %v1107, %v1107
        %v1221 = vpack.c.bf16 %v918, %v998
        %v1222 = vpack.c.bf16 %v1183, %v1183
        %v1223 = vpack.c.bf16 %v919, %v1075
        %v1224 = vpack.c.bf16 %v1110, %v1110
        %v1225 = vpack.c.bf16 %v920, %v1001
        %v1226 = vpack.c.bf16 %v1184, %v1184
        %v1227 = vpack.c.bf16 %v921, %v1076
        %v1228 = vpack.c.bf16 %v1113, %v1113
        %v1229 = vpack.c.bf16 %v922, %v1004
        %v1230 = vpack.c.bf16 %v1185, %v1185
        %v1231 = vpack.c.bf16 %v923, %v1077
        %v1232 = vpack.c.bf16 %v1116, %v1116
        %v1233 = vpack.c.bf16 %v924, %v1007
        %v1234 = vpack.c.bf16 %v1186, %v1186
        %v1235 = vpack.c.bf16 %v925, %v1078
        %v1236 = vpack.c.bf16 %v1119, %v1119
        %v1237 = vpack.c.bf16 %v926, %v1010
        %v1238 = vpack.c.bf16 %v1187, %v1187
        %v1239 = vpack.c.bf16 %v927, %v1079
        %v1240 = vpack.c.bf16 %v1122, %v1122
        %v1241 = vpack.c.bf16 %v928, %v1013
        %v1242 = vpack.c.bf16 %v1188, %v1188
        %v1243 = vpack.c.bf16 %v929, %v1080
        %v1244 = vpack.c.bf16 %v1125, %v1125
        %v1245 = vpack.c.bf16 %v930, %v1016
        %v1246 = vpack.c.bf16 %v1189, %v1189
        %v1247 = vpack.c.bf16 %v931, %v1081
        %v1248 = vpack.c.bf16 %v1128, %v1128
        %v1249 = vpack.c.bf16 %v932, %v1019
        %v1250 = vpack.c.bf16 %v1190, %v1190
        %v1251 = vpack.c.bf16 %v933, %v1082
        %v1252 = vpack.c.bf16 %v1131, %v1131
        %v1253 = vpack.c.bf16 %v934, %v1022
        %v1254 = vpack.c.bf16 %v1191, %v1191
        %v1255 = vpack.c.bf16 %v935, %v1083
        %v1256 = vpack.c.bf16 %v1134, %v1134
        %v1257 = vpack.c.bf16 %v936, %v1025
        %v1258 = vpack.c.bf16 %v1192, %v1192
        %v1259 = vpack.c.bf16 %v937, %v1084
        %v1260 = vpack.c.bf16 %v1137, %v1137
        %v1261 = vpack.c.bf16 %v938, %v1028
        %v1262 = vpack.c.bf16 %v1193, %v1193
        %v1263 = vpack.c.bf16 %v939, %v1085
        %v1264 = vpack.c.bf16 %v1140, %v1140
        %v1265 = vpack.c.bf16 %v940, %v1031
        %v1266 = vpack.c.bf16 %v1194, %v1194
        %1267 = vst [vmem:[#allocation2] sm:$0xff] %v1195
        %1268 = vst [vmem:[#allocation2 + $0x8] sm:$0xf] %v1196
        %1269 = vst [vmem:[#allocation2 + $0xc] sm:$0xff] %v1197
        %1270 = vst [vmem:[#allocation2 + $0x14] sm:$0xf] %v1198
        %1271 = vst [vmem:[#allocation2 + $0x18] sm:$0xff] %v1199
        %1272 = vst [vmem:[#allocation2 + $0x20] sm:$0xf] %v1200
        %1273 = vst [vmem:[#allocation2 + $0x24] sm:$0xff] %v1201
        %1274 = vst [vmem:[#allocation2 + $0x2c] sm:$0xf] %v1202
        %1275 = vst [vmem:[#allocation2 + $0x30] sm:$0xff] %v1203
        %1276 = vst [vmem:[#allocation2 + $0x38] sm:$0xf] %v1204
        %1277 = vst [vmem:[#allocation2 + $0x3c] sm:$0xff] %v1205
        %1278 = vst [vmem:[#allocation2 + $0x44] sm:$0xf] %v1206
        %1279 = vst [vmem:[#allocation2 + $0x48] sm:$0xff] %v1207
        %1280 = vst [vmem:[#allocation2 + $0x50] sm:$0xf] %v1208
        %1281 = vst [vmem:[#allocation2 + $0x54] sm:$0xff] %v1209
        %1282 = vst [vmem:[#allocation2 + $0x5c] sm:$0xf] %v1210
        %1283 = vst [vmem:[#allocation2 + $0x60] sm:$0xff] %v1211
        %1284 = vst [vmem:[#allocation2 + $0x68] sm:$0xf] %v1212
        %1285 = vst [vmem:[#allocation2 + $0x6c] sm:$0xff] %v1213
        %1286 = vst [vmem:[#allocation2 + $0x74] sm:$0xf] %v1214
        %1287 = vst [vmem:[#allocation2 + $0x78] sm:$0xff] %v1215
        %1288 = vst [vmem:[#allocation2 + $0x80] sm:$0xf] %v1216
        %1289 = vst [vmem:[#allocation2 + $0x84] sm:$0xff] %v1217
        %1290 = vst [vmem:[#allocation2 + $0x8c] sm:$0xf] %v1218
        %1291 = vst [vmem:[#allocation2 + $0x90] sm:$0xff] %v1219
        %1292 = vst [vmem:[#allocation2 + $0x98] sm:$0xf] %v1220
        %1293 = vst [vmem:[#allocation2 + $0x9c] sm:$0xff] %v1221
        %1294 = vst [vmem:[#allocation2 + $0xa4] sm:$0xf] %v1222
        %1295 = vst [vmem:[#allocation2 + $0xa8] sm:$0xff] %v1223
        %1296 = vst [vmem:[#allocation2 + $0xb0] sm:$0xf] %v1224
        %1297 = vst [vmem:[#allocation2 + $0xb4] sm:$0xff] %v1225
        %1298 = vst [vmem:[#allocation2 + $0xbc] sm:$0xf] %v1226
        %1299 = vst [vmem:[#allocation2 + $0xc0] sm:$0xff] %v1227
        %1300 = vst [vmem:[#allocation2 + $0xc8] sm:$0xf] %v1228
        %1301 = vst [vmem:[#allocation2 + $0xcc] sm:$0xff] %v1229
        %1302 = vst [vmem:[#allocation2 + $0xd4] sm:$0xf] %v1230
        %1303 = vst [vmem:[#allocation2 + $0xd8] sm:$0xff] %v1231
        %1304 = vst [vmem:[#allocation2 + $0xe0] sm:$0xf] %v1232
        %1305 = vst [vmem:[#allocation2 + $0xe4] sm:$0xff] %v1233
        %1306 = vst [vmem:[#allocation2 + $0xec] sm:$0xf] %v1234
        %1307 = vst [vmem:[#allocation2 + $0xf0] sm:$0xff] %v1235
        %1308 = vst [vmem:[#allocation2 + $0xf8] sm:$0xf] %v1236
        %1309 = vst [vmem:[#allocation2 + $0xfc] sm:$0xff] %v1237
        %1310 = vst [vmem:[#allocation2 + $0x104] sm:$0xf] %v1238
        %1311 = vst [vmem:[#allocation2 + $0x108] sm:$0xff] %v1239
        %1312 = vst [vmem:[#allocation2 + $0x110] sm:$0xf] %v1240
        %1313 = vst [vmem:[#allocation2 + $0x114] sm:$0xff] %v1241
        %1314 = vst [vmem:[#allocation2 + $0x11c] sm:$0xf] %v1242
        %1315 = vst [vmem:[#allocation2 + $0x120] sm:$0xff] %v1243
        %1316 = vst [vmem:[#allocation2 + $0x128] sm:$0xf] %v1244
        %1317 = vst [vmem:[#allocation2 + $0x12c] sm:$0xff] %v1245
        %1318 = vst [vmem:[#allocation2 + $0x134] sm:$0xf] %v1246
        %1319 = vst [vmem:[#allocation2 + $0x138] sm:$0xff] %v1247
        %1320 = vst [vmem:[#allocation2 + $0x140] sm:$0xf] %v1248
        %1321 = vst [vmem:[#allocation2 + $0x144] sm:$0xff] %v1249
        %1322 = vst [vmem:[#allocation2 + $0x14c] sm:$0xf] %v1250
        %1323 = vst [vmem:[#allocation2 + $0x150] sm:$0xff] %v1251
        %1324 = vst [vmem:[#allocation2 + $0x158] sm:$0xf] %v1252
        %1325 = vst [vmem:[#allocation2 + $0x15c] sm:$0xff] %v1253
        %1326 = vst [vmem:[#allocation2 + $0x164] sm:$0xf] %v1254
        %1327 = vst [vmem:[#allocation2 + $0x168] sm:$0xff] %v1255
        %1328 = vst [vmem:[#allocation2 + $0x170] sm:$0xf] %v1256
        %1329 = vst [vmem:[#allocation2 + $0x174] sm:$0xff] %v1257
        %1330 = vst [vmem:[#allocation2 + $0x17c] sm:$0xf] %v1258
        %1331 = vst [vmem:[#allocation2 + $0x180] sm:$0xff] %v1259
        %1332 = vst [vmem:[#allocation2 + $0x188] sm:$0xf] %v1260
        %1333 = vst [vmem:[#allocation2 + $0x18c] sm:$0xff] %v1261
        %1334 = vst [vmem:[#allocation2 + $0x194] sm:$0xf] %v1262
        %1335 = vst [vmem:[#allocation2 + $0x198] sm:$0xff] %v1263
        %1336 = vst [vmem:[#allocation2 + $0x1a0] sm:$0xf] %v1264
        %1337 = vst [vmem:[#allocation2 + $0x1a4] sm:$0xff] %v1265
        %1338 = vst [vmem:[#allocation2 + $0x1ac] sm:$0xf] %v1266
        %p1339 = scmp.eq.s32.totalorder %s33, 0
        // Predicated region
        $region69: #{tpu_custom_call.1} parent=47 // pred_check
          %p1340 = pneg %p1339
        $region70: #{tpu_custom_call.1} parent=47 // pred_check_branch
          %1342 = sbr.rel (%p1340) target = $region72
        $region71: #{tpu_custom_call.1} parent=47 // pred_region
          %1343 = vst [vmem:[#allocation2] sm:$0xff] 0
          %1344 = vst [vmem:[#allocation2 + $0x8] sm:$0xf] 0
          %1345 = vst [vmem:[#allocation2 + $0xc] sm:$0xff] 0
          %1346 = vst [vmem:[#allocation2 + $0x14] sm:$0xf] 0
          %s1347 = scalar_lea.vmem [#allocation2], 408
          %1348 = vst [vmem:[%s1347] sm:$0xff] 0
          %1349 = vst [vmem:[%s1347 + $0x8] sm:$0xf] 0
          %1350 = vst [vmem:[%s1347 + $0xc] sm:$0xff] 0
          %1351 = vst [vmem:[%s1347 + $0x14] sm:$0xf] 0
        $region72: #{tpu_custom_call.1} parent=47 // pred_fallthru
          _
        %v1352 = vld [vmem:[#allocation2] sm:$0xff]
        %v1353 = vld [vmem:[#allocation2 + $0x8] sm:$0xf]
        %v1354 = vld [vmem:[#allocation2 + $0xc] sm:$0xff]
        %v1355 = vld [vmem:[#allocation2 + $0x14] sm:$0xf]
        %v1356 = vld [vmem:[#allocation2 + $0x18] sm:$0xff]
        %v1357 = vld [vmem:[#allocation2 + $0x20] sm:$0xf]
        %v1358 = vld [vmem:[#allocation2 + $0x24] sm:$0xff]
        %v1359 = vld [vmem:[#allocation2 + $0x2c] sm:$0xf]
        %v1360 = vld [vmem:[#allocation2 + $0x30] sm:$0xff]
        %v1361 = vld [vmem:[#allocation2 + $0x38] sm:$0xf]
        %v1362 = vld [vmem:[#allocation2 + $0x3c] sm:$0xff]
        %v1363 = vld [vmem:[#allocation2 + $0x44] sm:$0xf]
        %v1364 = vld [vmem:[#allocation2 + $0x48] sm:$0xff]
        %v1365 = vld [vmem:[#allocation2 + $0x50] sm:$0xf]
        %v1366 = vld [vmem:[#allocation2 + $0x54] sm:$0xff]
        %v1367 = vld [vmem:[#allocation2 + $0x5c] sm:$0xf]
        %v1368 = vld [vmem:[#allocation2 + $0x60] sm:$0xff]
        %v1369 = vld [vmem:[#allocation2 + $0x68] sm:$0xf]
        %v1370 = vld [vmem:[#allocation2 + $0x6c] sm:$0xff]
        %v1371 = vld [vmem:[#allocation2 + $0x74] sm:$0xf]
        %v1372 = vld [vmem:[#allocation2 + $0x78] sm:$0xff]
        %v1373 = vld [vmem:[#allocation2 + $0x80] sm:$0xf]
        %v1374 = vld [vmem:[#allocation2 + $0x84] sm:$0xff]
        %v1375 = vld [vmem:[#allocation2 + $0x8c] sm:$0xf]
        %v1376 = vld [vmem:[#allocation2 + $0x90] sm:$0xff]
        %v1377 = vld [vmem:[#allocation2 + $0x98] sm:$0xf]
        %v1378 = vld [vmem:[#allocation2 + $0x9c] sm:$0xff]
        %v1379 = vld [vmem:[#allocation2 + $0xa4] sm:$0xf]
        %v1380 = vld [vmem:[#allocation2 + $0xa8] sm:$0xff]
        %v1381 = vld [vmem:[#allocation2 + $0xb0] sm:$0xf]
        %v1382 = vld [vmem:[#allocation2 + $0xb4] sm:$0xff]
        %v1383 = vld [vmem:[#allocation2 + $0xbc] sm:$0xf]
        %v1384 = vld [vmem:[#allocation2 + $0xc0] sm:$0xff]
        %v1385 = vld [vmem:[#allocation2 + $0xc8] sm:$0xf]
        %v1386 = vld [vmem:[#allocation2 + $0xcc] sm:$0xff]
        %v1387 = vld [vmem:[#allocation2 + $0xd4] sm:$0xf]
        %v1388 = vld [vmem:[#allocation2 + $0xd8] sm:$0xff]
        %v1389 = vld [vmem:[#allocation2 + $0xe0] sm:$0xf]
        %v1390 = vld [vmem:[#allocation2 + $0xe4] sm:$0xff]
        %v1391 = vld [vmem:[#allocation2 + $0xec] sm:$0xf]
        %v1392 = vld [vmem:[#allocation2 + $0xf0] sm:$0xff]
        %v1393 = vld [vmem:[#allocation2 + $0xf8] sm:$0xf]
        %v1394 = vld [vmem:[#allocation2 + $0xfc] sm:$0xff]
        %v1395 = vld [vmem:[#allocation2 + $0x104] sm:$0xf]
        %v1396 = vld [vmem:[#allocation2 + $0x108] sm:$0xff]
        %v1397 = vld [vmem:[#allocation2 + $0x110] sm:$0xf]
        %v1398 = vld [vmem:[#allocation2 + $0x114] sm:$0xff]
        %v1399 = vld [vmem:[#allocation2 + $0x11c] sm:$0xf]
        %v1400 = vld [vmem:[#allocation2 + $0x120] sm:$0xff]
        %v1401 = vld [vmem:[#allocation2 + $0x128] sm:$0xf]
        %v1402 = vld [vmem:[#allocation2 + $0x12c] sm:$0xff]
        %v1403 = vld [vmem:[#allocation2 + $0x134] sm:$0xf]
        %v1404 = vld [vmem:[#allocation2 + $0x138] sm:$0xff]
        %v1405 = vld [vmem:[#allocation2 + $0x140] sm:$0xf]
        %v1406 = vld [vmem:[#allocation2 + $0x144] sm:$0xff]
        %v1407 = vld [vmem:[#allocation2 + $0x14c] sm:$0xf]
        %v1408 = vld [vmem:[#allocation2 + $0x150] sm:$0xff]
        %v1409 = vld [vmem:[#allocation2 + $0x158] sm:$0xf]
        %v1410 = vld [vmem:[#allocation2 + $0x15c] sm:$0xff]
        %v1411 = vld [vmem:[#allocation2 + $0x164] sm:$0xf]
        %v1412 = vld [vmem:[#allocation2 + $0x168] sm:$0xff]
        %v1413 = vld [vmem:[#allocation2 + $0x170] sm:$0xf]
        %v1414 = vld [vmem:[#allocation2 + $0x174] sm:$0xff]
        %v1415 = vld [vmem:[#allocation2 + $0x17c] sm:$0xf]
        %v1416 = vld [vmem:[#allocation11] sm:$0xf]
        %v1417 = vld [vmem:[#allocation11 + $0x4] sm:$0xf]
        %v1418 = vld [vmem:[#allocation11 + $0x8] sm:$0xf]
        %v1419 = vld [vmem:[#allocation11 + $0xc] sm:$0xf]
        %v1420 = vld [vmem:[#allocation11 + $0x10] sm:$0xf]
        %v1421 = vld [vmem:[#allocation11 + $0x14] sm:$0xf]
        %v1422 = vld [vmem:[#allocation11 + $0x18] sm:$0xf]
        %v1423 = vld [vmem:[#allocation11 + $0x1c] sm:$0xf]
        %v1424 = vld [vmem:[#allocation11 + $0x20] sm:$0xf]
        %v1425 = vld [vmem:[#allocation11 + $0x24] sm:$0xf]
        %v1426 = vld [vmem:[#allocation11 + $0x28] sm:$0xf]
        %v1427 = vld [vmem:[#allocation11 + $0x2c] sm:$0xf]
        %v1428 = vld [vmem:[#allocation11 + $0x30] sm:$0xf]
        %v1429 = vld [vmem:[#allocation11 + $0x34] sm:$0xf]
        %v1430 = vld [vmem:[#allocation11 + $0x38] sm:$0xf]
        %v1431 = vld [vmem:[#allocation11 + $0x3c] sm:$0xf]
        %v1432 = vld [vmem:[#allocation11 + $0x40] sm:$0xf]
        %v1433 = vld [vmem:[#allocation11 + $0x44] sm:$0xf]
        %v1434 = vld [vmem:[#allocation11 + $0x48] sm:$0xf]
        %v1435 = vld [vmem:[#allocation11 + $0x4c] sm:$0xf]
        %v1436 = vld [vmem:[#allocation11 + $0x50] sm:$0xf]
        %v1437 = vld [vmem:[#allocation11 + $0x54] sm:$0xf]
        %v1438 = vld [vmem:[#allocation11 + $0x58] sm:$0xf]
        %v1439 = vld [vmem:[#allocation11 + $0x5c] sm:$0xf]
        %v1440 = vld [vmem:[#allocation11 + $0x60] sm:$0xf]
        %v1441 = vld [vmem:[#allocation11 + $0x64] sm:$0xf]
        %v1442 = vld [vmem:[#allocation11 + $0x68] sm:$0xf]
        %v1443 = vld [vmem:[#allocation11 + $0x6c] sm:$0xf]
        %v1444 = vld [vmem:[#allocation11 + $0x70] sm:$0xf]
        %v1445 = vld [vmem:[#allocation11 + $0x74] sm:$0xf]
        %v1446 = vld [vmem:[#allocation11 + $0x78] sm:$0xf]
        %v1447 = vld [vmem:[#allocation11 + $0x7c] sm:$0xf]
        %v1448 = vld [vmem:[#allocation11 + $0x80] sm:$0xf]
        %v1449 = vld [vmem:[#allocation11 + $0x84] sm:$0xf]
        %v1450 = vld [vmem:[#allocation11 + $0x88] sm:$0xf]
        %v1451 = vld [vmem:[#allocation11 + $0x8c] sm:$0xf]
        %v1452 = vld [vmem:[#allocation11 + $0x90] sm:$0xf]
        %v1453 = vld [vmem:[#allocation11 + $0x94] sm:$0xf]
        %v1454 = vld [vmem:[#allocation11 + $0x98] sm:$0xf]
        %v1455 = vld [vmem:[#allocation11 + $0x9c] sm:$0xf]
        %v1456 = vld [vmem:[#allocation11 + $0xa0] sm:$0xf]
        %v1457 = vld [vmem:[#allocation11 + $0xa4] sm:$0xf]
        %v1458 = vld [vmem:[#allocation11 + $0xa8] sm:$0xf]
        %v1459 = vld [vmem:[#allocation11 + $0xac] sm:$0xf]
        %v1460 = vld [vmem:[#allocation11 + $0xb0] sm:$0xf]
        %v1461 = vld [vmem:[#allocation11 + $0xb4] sm:$0xf]
        %v1462 = vld [vmem:[#allocation11 + $0xb8] sm:$0xf]
        %v1463 = vld [vmem:[#allocation11 + $0xbc] sm:$0xf]
        %s1464 = scalar_lea.vmem [#allocation2], 24
        %v1465 = vld [vmem:[%s1464] sm:$0xff]
        %v1466 = vld [vmem:[%s1464 + $0x8] sm:$0xf]
        %v1467 = vld [vmem:[%s1464 + $0xc] sm:$0xff]
        %v1468 = vld [vmem:[%s1464 + $0x14] sm:$0xf]
        %v1469 = vld [vmem:[%s1464 + $0x18] sm:$0xff]
        %v1470 = vld [vmem:[%s1464 + $0x20] sm:$0xf]
        %v1471 = vld [vmem:[%s1464 + $0x24] sm:$0xff]
        %v1472 = vld [vmem:[%s1464 + $0x2c] sm:$0xf]
        %v1473 = vld [vmem:[%s1464 + $0x30] sm:$0xff]
        %v1474 = vld [vmem:[%s1464 + $0x38] sm:$0xf]
        %v1475 = vld [vmem:[%s1464 + $0x3c] sm:$0xff]
        %v1476 = vld [vmem:[%s1464 + $0x44] sm:$0xf]
        %v1477 = vld [vmem:[%s1464 + $0x48] sm:$0xff]
        %v1478 = vld [vmem:[%s1464 + $0x50] sm:$0xf]
        %v1479 = vld [vmem:[%s1464 + $0x54] sm:$0xff]
        %v1480 = vld [vmem:[%s1464 + $0x5c] sm:$0xf]
        %v1481 = vld [vmem:[%s1464 + $0x60] sm:$0xff]
        %v1482 = vld [vmem:[%s1464 + $0x68] sm:$0xf]
        %v1483 = vld [vmem:[%s1464 + $0x6c] sm:$0xff]
        %v1484 = vld [vmem:[%s1464 + $0x74] sm:$0xf]
        %v1485 = vld [vmem:[%s1464 + $0x78] sm:$0xff]
        %v1486 = vld [vmem:[%s1464 + $0x80] sm:$0xf]
        %v1487 = vld [vmem:[%s1464 + $0x84] sm:$0xff]
        %v1488 = vld [vmem:[%s1464 + $0x8c] sm:$0xf]
        %v1489 = vld [vmem:[%s1464 + $0x90] sm:$0xff]
        %v1490 = vld [vmem:[%s1464 + $0x98] sm:$0xf]
        %v1491 = vld [vmem:[%s1464 + $0x9c] sm:$0xff]
        %v1492 = vld [vmem:[%s1464 + $0xa4] sm:$0xf]
        %v1493 = vld [vmem:[%s1464 + $0xa8] sm:$0xff]
        %v1494 = vld [vmem:[%s1464 + $0xb0] sm:$0xf]
        %v1495 = vld [vmem:[%s1464 + $0xb4] sm:$0xff]
        %v1496 = vld [vmem:[%s1464 + $0xbc] sm:$0xf]
        %v1497 = vld [vmem:[%s1464 + $0xc0] sm:$0xff]
        %v1498 = vld [vmem:[%s1464 + $0xc8] sm:$0xf]
        %v1499 = vld [vmem:[%s1464 + $0xcc] sm:$0xff]
        %v1500 = vld [vmem:[%s1464 + $0xd4] sm:$0xf]
        %v1501 = vld [vmem:[%s1464 + $0xd8] sm:$0xff]
        %v1502 = vld [vmem:[%s1464 + $0xe0] sm:$0xf]
        %v1503 = vld [vmem:[%s1464 + $0xe4] sm:$0xff]
        %v1504 = vld [vmem:[%s1464 + $0xec] sm:$0xf]
        %v1505 = vld [vmem:[%s1464 + $0xf0] sm:$0xff]
        %v1506 = vld [vmem:[%s1464 + $0xf8] sm:$0xf]
        %v1507 = vld [vmem:[%s1464 + $0xfc] sm:$0xff]
        %v1508 = vld [vmem:[%s1464 + $0x104] sm:$0xf]
        %v1509 = vld [vmem:[%s1464 + $0x108] sm:$0xff]
        %v1510 = vld [vmem:[%s1464 + $0x110] sm:$0xf]
        %v1511 = vld [vmem:[%s1464 + $0x114] sm:$0xff]
        %v1512 = vld [vmem:[%s1464 + $0x11c] sm:$0xf]
        %v1513 = vld [vmem:[%s1464 + $0x120] sm:$0xff]
        %v1514 = vld [vmem:[%s1464 + $0x128] sm:$0xf]
        %v1515 = vld [vmem:[%s1464 + $0x12c] sm:$0xff]
        %v1516 = vld [vmem:[%s1464 + $0x134] sm:$0xf]
        %v1517 = vld [vmem:[%s1464 + $0x138] sm:$0xff]
        %v1518 = vld [vmem:[%s1464 + $0x140] sm:$0xf]
        %v1519 = vld [vmem:[%s1464 + $0x144] sm:$0xff]
        %v1520 = vld [vmem:[%s1464 + $0x14c] sm:$0xf]
        %v1521 = vld [vmem:[%s1464 + $0x150] sm:$0xff]
        %v1522 = vld [vmem:[%s1464 + $0x158] sm:$0xf]
        %v1523 = vld [vmem:[%s1464 + $0x15c] sm:$0xff]
        %v1524 = vld [vmem:[%s1464 + $0x164] sm:$0xf]
        %v1525 = vld [vmem:[%s1464 + $0x168] sm:$0xff]
        %v1526 = vld [vmem:[%s1464 + $0x170] sm:$0xf]
        %v1527 = vld [vmem:[%s1464 + $0x174] sm:$0xff]
        %v1528 = vld [vmem:[%s1464 + $0x17c] sm:$0xf]
        %s1529 = scalar_lea.vmem [#allocation11], 192
        %v1530 = vld [vmem:[%s1529] sm:$0xf]
        %v1531 = vld [vmem:[%s1529 + $0x4] sm:$0xf]
        %v1532 = vld [vmem:[%s1529 + $0x8] sm:$0xf]
        %v1533 = vld [vmem:[%s1529 + $0xc] sm:$0xf]
        %v1534 = vld [vmem:[%s1529 + $0x10] sm:$0xf]
        %v1535 = vld [vmem:[%s1529 + $0x14] sm:$0xf]
        %v1536 = vld [vmem:[%s1529 + $0x18] sm:$0xf]
        %v1537 = vld [vmem:[%s1529 + $0x1c] sm:$0xf]
        %v1538 = vld [vmem:[%s1529 + $0x20] sm:$0xf]
        %v1539 = vld [vmem:[%s1529 + $0x24] sm:$0xf]
        %v1540 = vld [vmem:[%s1529 + $0x28] sm:$0xf]
        %v1541 = vld [vmem:[%s1529 + $0x2c] sm:$0xf]
        %v1542 = vld [vmem:[%s1529 + $0x30] sm:$0xf]
        %v1543 = vld [vmem:[%s1529 + $0x34] sm:$0xf]
        %v1544 = vld [vmem:[%s1529 + $0x38] sm:$0xf]
        %v1545 = vld [vmem:[%s1529 + $0x3c] sm:$0xf]
        %v1546 = vld [vmem:[%s1529 + $0x40] sm:$0xf]
        %v1547 = vld [vmem:[%s1529 + $0x44] sm:$0xf]
        %v1548 = vld [vmem:[%s1529 + $0x48] sm:$0xf]
        %v1549 = vld [vmem:[%s1529 + $0x4c] sm:$0xf]
        %v1550 = vld [vmem:[%s1529 + $0x50] sm:$0xf]
        %v1551 = vld [vmem:[%s1529 + $0x54] sm:$0xf]
        %v1552 = vld [vmem:[%s1529 + $0x58] sm:$0xf]
        %v1553 = vld [vmem:[%s1529 + $0x5c] sm:$0xf]
        %v1554 = vld [vmem:[%s1529 + $0x60] sm:$0xf]
        %v1555 = vld [vmem:[%s1529 + $0x64] sm:$0xf]
        %v1556 = vld [vmem:[%s1529 + $0x68] sm:$0xf]
        %v1557 = vld [vmem:[%s1529 + $0x6c] sm:$0xf]
        %v1558 = vld [vmem:[%s1529 + $0x70] sm:$0xf]
        %v1559 = vld [vmem:[%s1529 + $0x74] sm:$0xf]
        %v1560 = vld [vmem:[%s1529 + $0x78] sm:$0xf]
        %v1561 = vld [vmem:[%s1529 + $0x7c] sm:$0xf]
        %v1562 = vld [vmem:[%s1529 + $0x80] sm:$0xf]
        %v1563 = vld [vmem:[%s1529 + $0x84] sm:$0xf]
        %v1564 = vld [vmem:[%s1529 + $0x88] sm:$0xf]
        %v1565 = vld [vmem:[%s1529 + $0x8c] sm:$0xf]
        %v1566 = vld [vmem:[%s1529 + $0x90] sm:$0xf]
        %v1567 = vld [vmem:[%s1529 + $0x94] sm:$0xf]
        %v1568 = vld [vmem:[%s1529 + $0x98] sm:$0xf]
        %v1569 = vld [vmem:[%s1529 + $0x9c] sm:$0xf]
        %v1570 = vld [vmem:[%s1529 + $0xa0] sm:$0xf]
        %v1571 = vld [vmem:[%s1529 + $0xa4] sm:$0xf]
        %v1572 = vld [vmem:[%s1529 + $0xa8] sm:$0xf]
        %v1573 = vld [vmem:[%s1529 + $0xac] sm:$0xf]
        %v1574 = vld [vmem:[%s1529 + $0xb0] sm:$0xf]
        %v1575 = vld [vmem:[%s1529 + $0xb4] sm:$0xf]
        %v1576 = vld [vmem:[%s1529 + $0xb8] sm:$0xf]
        %v1577 = vld [vmem:[%s1529 + $0xbc] sm:$0xf]
        %v1642 = vunpack.c.l.b16 %v1465
        %v1643 = vunpack.c.h.b16 %v1465
        %v1644 = vunpack.c.l.b16 %v1466
        %v1645 = vunpack.c.l.b16 %v1467
        %v1646 = vunpack.c.h.b16 %v1467
        %v1647 = vunpack.c.l.b16 %v1468
        %v1648 = vunpack.c.l.b16 %v1469
        %v1649 = vunpack.c.h.b16 %v1469
        %v1650 = vunpack.c.l.b16 %v1470
        %v1651 = vunpack.c.l.b16 %v1471
        %v1652 = vunpack.c.h.b16 %v1471
        %v1653 = vunpack.c.l.b16 %v1472
        %v1654 = vunpack.c.l.b16 %v1473
        %v1655 = vunpack.c.h.b16 %v1473
        %v1656 = vunpack.c.l.b16 %v1474
        %v1657 = vunpack.c.l.b16 %v1475
        %v1658 = vunpack.c.h.b16 %v1475
        %v1659 = vunpack.c.l.b16 %v1476
        %v1660 = vunpack.c.l.b16 %v1477
        %v1661 = vunpack.c.h.b16 %v1477
        %v1662 = vunpack.c.l.b16 %v1478
        %v1663 = vunpack.c.l.b16 %v1479
        %v1664 = vunpack.c.h.b16 %v1479
        %v1665 = vunpack.c.l.b16 %v1480
        %v1666 = vunpack.c.l.b16 %v1481
        %v1667 = vunpack.c.h.b16 %v1481
        %v1668 = vunpack.c.l.b16 %v1482
        %v1669 = vunpack.c.l.b16 %v1483
        %v1670 = vunpack.c.h.b16 %v1483
        %v1671 = vunpack.c.l.b16 %v1484
        %v1672 = vunpack.c.l.b16 %v1485
        %v1673 = vunpack.c.h.b16 %v1485
        %v1674 = vunpack.c.l.b16 %v1486
        %v1675 = vunpack.c.l.b16 %v1487
        %v1676 = vunpack.c.h.b16 %v1487
        %v1677 = vunpack.c.l.b16 %v1488
        %v1678 = vunpack.c.l.b16 %v1489
        %v1679 = vunpack.c.h.b16 %v1489
        %v1680 = vunpack.c.l.b16 %v1490
        %v1681 = vunpack.c.l.b16 %v1491
        %v1682 = vunpack.c.h.b16 %v1491
        %v1683 = vunpack.c.l.b16 %v1492
        %v1684 = vunpack.c.l.b16 %v1493
        %v1685 = vunpack.c.h.b16 %v1493
        %v1686 = vunpack.c.l.b16 %v1494
        %v1687 = vunpack.c.l.b16 %v1495
        %v1688 = vunpack.c.h.b16 %v1495
        %v1689 = vunpack.c.l.b16 %v1496
        %v1690 = vunpack.c.l.b16 %v1497
        %v1691 = vunpack.c.h.b16 %v1497
        %v1692 = vunpack.c.l.b16 %v1498
        %v1693 = vunpack.c.l.b16 %v1499
        %v1694 = vunpack.c.h.b16 %v1499
        %v1695 = vunpack.c.l.b16 %v1500
        %v1696 = vunpack.c.l.b16 %v1501
        %v1697 = vunpack.c.h.b16 %v1501
        %v1698 = vunpack.c.l.b16 %v1502
        %v1699 = vunpack.c.l.b16 %v1503
        %v1700 = vunpack.c.h.b16 %v1503
        %v1701 = vunpack.c.l.b16 %v1504
        %v1702 = vunpack.c.l.b16 %v1505
        %v1703 = vunpack.c.h.b16 %v1505
        %v1704 = vunpack.c.l.b16 %v1506
        %v1705 = vunpack.c.l.b16 %v1507
        %v1706 = vunpack.c.h.b16 %v1507
        %v1707 = vunpack.c.l.b16 %v1508
        %v1708 = vunpack.c.l.b16 %v1509
        %v1709 = vunpack.c.h.b16 %v1509
        %v1710 = vunpack.c.l.b16 %v1510
        %v1711 = vunpack.c.l.b16 %v1511
        %v1712 = vunpack.c.h.b16 %v1511
        %v1713 = vunpack.c.l.b16 %v1512
        %v1714 = vunpack.c.l.b16 %v1513
        %v1715 = vunpack.c.h.b16 %v1513
        %v1716 = vunpack.c.l.b16 %v1514
        %v1717 = vunpack.c.l.b16 %v1515
        %v1718 = vunpack.c.h.b16 %v1515
        %v1719 = vunpack.c.l.b16 %v1516
        %v1720 = vunpack.c.l.b16 %v1517
        %v1721 = vunpack.c.h.b16 %v1517
        %v1722 = vunpack.c.l.b16 %v1518
        %v1723 = vunpack.c.l.b16 %v1519
        %v1724 = vunpack.c.h.b16 %v1519
        %v1725 = vunpack.c.l.b16 %v1520
        %v1726 = vunpack.c.l.b16 %v1521
        %v1727 = vunpack.c.h.b16 %v1521
        %v1728 = vunpack.c.l.b16 %v1522
        %v1729 = vunpack.c.l.b16 %v1523
        %v1730 = vunpack.c.h.b16 %v1523
        %v1731 = vunpack.c.l.b16 %v1524
        %v1732 = vunpack.c.l.b16 %v1525
        %v1733 = vunpack.c.h.b16 %v1525
        %v1734 = vunpack.c.l.b16 %v1526
        %v1735 = vunpack.c.l.b16 %v1527
        %v1736 = vunpack.c.h.b16 %v1527
        %v1737 = vunpack.c.l.b16 %v1528
        %v1738 = vpack.c.b16 %v1645, %v1642
        %v1739 = vpack.c.b16 %v1646, %v1643
        %v1740 = vpack.c.b16 %v1647, %v1644
        %v1741 = vpack.c.b16 %v1651, %v1648
        %v1742 = vpack.c.b16 %v1652, %v1649
        %v1743 = vpack.c.b16 %v1653, %v1650
        %v1744 = vpack.c.b16 %v1657, %v1654
        %v1745 = vpack.c.b16 %v1658, %v1655
        %v1746 = vpack.c.b16 %v1659, %v1656
        %v1747 = vpack.c.b16 %v1663, %v1660
        %v1748 = vpack.c.b16 %v1664, %v1661
        %v1749 = vpack.c.b16 %v1665, %v1662
        %v1750 = vpack.c.b16 %v1669, %v1666
        %v1751 = vpack.c.b16 %v1670, %v1667
        %v1752 = vpack.c.b16 %v1671, %v1668
        %v1753 = vpack.c.b16 %v1675, %v1672
        %v1754 = vpack.c.b16 %v1676, %v1673
        %v1755 = vpack.c.b16 %v1677, %v1674
        %v1756 = vpack.c.b16 %v1681, %v1678
        %v1757 = vpack.c.b16 %v1682, %v1679
        %v1758 = vpack.c.b16 %v1683, %v1680
        %v1759 = vpack.c.b16 %v1687, %v1684
        %v1760 = vpack.c.b16 %v1688, %v1685
        %v1761 = vpack.c.b16 %v1689, %v1686
        %v1762 = vpack.c.b16 %v1693, %v1690
        %v1763 = vpack.c.b16 %v1694, %v1691
        %v1764 = vpack.c.b16 %v1695, %v1692
        %v1765 = vpack.c.b16 %v1699, %v1696
        %v1766 = vpack.c.b16 %v1700, %v1697
        %v1767 = vpack.c.b16 %v1701, %v1698
        %v1768 = vpack.c.b16 %v1705, %v1702
        %v1769 = vpack.c.b16 %v1706, %v1703
        %v1770 = vpack.c.b16 %v1707, %v1704
        %v1771 = vpack.c.b16 %v1711, %v1708
        %v1772 = vpack.c.b16 %v1712, %v1709
        %v1773 = vpack.c.b16 %v1713, %v1710
        %v1774 = vpack.c.b16 %v1717, %v1714
        %v1775 = vpack.c.b16 %v1718, %v1715
        %v1776 = vpack.c.b16 %v1719, %v1716
        %v1777 = vpack.c.b16 %v1723, %v1720
        %v1778 = vpack.c.b16 %v1724, %v1721
        %v1779 = vpack.c.b16 %v1725, %v1722
        %v1780 = vpack.c.b16 %v1729, %v1726
        %v1781 = vpack.c.b16 %v1730, %v1727
        %v1782 = vpack.c.b16 %v1731, %v1728
        %v1783 = vpack.c.b16 %v1735, %v1732
        %v1784 = vpack.c.b16 %v1736, %v1733
        %v1785 = vpack.c.b16 %v1737, %v1734
        %v1882 = vunpack.c.l.b16 %v1530
        %v1883 = vunpack.c.l.b16 %v1531
        %v1884 = vunpack.c.l.b16 %v1532
        %v1885 = vunpack.c.l.b16 %v1533
        %v1886 = vunpack.c.l.b16 %v1534
        %v1887 = vunpack.c.l.b16 %v1535
        %v1888 = vunpack.c.l.b16 %v1536
        %v1889 = vunpack.c.l.b16 %v1537
        %v1890 = vunpack.c.l.b16 %v1538
        %v1891 = vunpack.c.l.b16 %v1539
        %v1892 = vunpack.c.l.b16 %v1540
        %v1893 = vunpack.c.l.b16 %v1541
        %v1894 = vunpack.c.l.b16 %v1542
        %v1895 = vunpack.c.l.b16 %v1543
        %v1896 = vunpack.c.l.b16 %v1544
        %v1897 = vunpack.c.l.b16 %v1545
        %v1898 = vunpack.c.l.b16 %v1546
        %v1899 = vunpack.c.l.b16 %v1547
        %v1900 = vunpack.c.l.b16 %v1548
        %v1901 = vunpack.c.l.b16 %v1549
        %v1902 = vunpack.c.l.b16 %v1550
        %v1903 = vunpack.c.l.b16 %v1551
        %v1904 = vunpack.c.l.b16 %v1552
        %v1905 = vunpack.c.l.b16 %v1553
        %v1906 = vunpack.c.l.b16 %v1554
        %v1907 = vunpack.c.l.b16 %v1555
        %v1908 = vunpack.c.l.b16 %v1556
        %v1909 = vunpack.c.l.b16 %v1557
        %v1910 = vunpack.c.l.b16 %v1558
        %v1911 = vunpack.c.l.b16 %v1559
        %v1912 = vunpack.c.l.b16 %v1560
        %v1913 = vunpack.c.l.b16 %v1561
        %v1914 = vunpack.c.l.b16 %v1562
        %v1915 = vunpack.c.l.b16 %v1563
        %v1916 = vunpack.c.l.b16 %v1564
        %v1917 = vunpack.c.l.b16 %v1565
        %v1918 = vunpack.c.l.b16 %v1566
        %v1919 = vunpack.c.l.b16 %v1567
        %v1920 = vunpack.c.l.b16 %v1568
        %v1921 = vunpack.c.l.b16 %v1569
        %v1922 = vunpack.c.l.b16 %v1570
        %v1923 = vunpack.c.l.b16 %v1571
        %v1924 = vunpack.c.l.b16 %v1572
        %v1925 = vunpack.c.l.b16 %v1573
        %v1926 = vunpack.c.l.b16 %v1574
        %v1927 = vunpack.c.l.b16 %v1575
        %v1928 = vunpack.c.l.b16 %v1576
        %v1929 = vunpack.c.l.b16 %v1577
        %v1930 = vpack.c.b16 %v1883, %v1882
        %v1931 = vpack.c.b16 %v1885, %v1884
        %v1932 = vpack.c.b16 %v1887, %v1886
        %v1933 = vpack.c.b16 %v1889, %v1888
        %v1934 = vpack.c.b16 %v1891, %v1890
        %v1935 = vpack.c.b16 %v1893, %v1892
        %v1936 = vpack.c.b16 %v1895, %v1894
        %v1937 = vpack.c.b16 %v1897, %v1896
        %v1938 = vpack.c.b16 %v1899, %v1898
        %v1939 = vpack.c.b16 %v1901, %v1900
        %v1940 = vpack.c.b16 %v1903, %v1902
        %v1941 = vpack.c.b16 %v1905, %v1904
        %v1942 = vpack.c.b16 %v1907, %v1906
        %v1943 = vpack.c.b16 %v1909, %v1908
        %v1944 = vpack.c.b16 %v1911, %v1910
        %v1945 = vpack.c.b16 %v1913, %v1912
        %v1946 = vpack.c.b16 %v1915, %v1914
        %v1947 = vpack.c.b16 %v1917, %v1916
        %v1948 = vpack.c.b16 %v1919, %v1918
        %v1949 = vpack.c.b16 %v1921, %v1920
        %v1950 = vpack.c.b16 %v1923, %v1922
        %v1951 = vpack.c.b16 %v1925, %v1924
        %v1952 = vpack.c.b16 %v1927, %v1926
        %v1953 = vpack.c.b16 %v1929, %v1928
        %1978 = vmatpush.bf16.msra.mxu0 %v1937
        %1979 = vmatpush.bf16.msra.mxu0 %v1936
        %1980 = vmatpush.bf16.msra.mxu0 %v1935
        %1981 = vmatpush.bf16.msra.mxu0 %v1934
        %1982 = vmatpush.bf16.msra.mxu0 %v1933
        %1983 = vmatpush.bf16.msra.mxu0 %v1932
        %1984 = vmatpush.bf16.msra.mxu0 %v1931
        %1985 = vmatpush.bf16.msra.mxu0 %v1930
        %1986 = vmatmul.bf16.gmra.mxu0 %v1738
        %v1987 = vpop.f32.mrf.mxu0
        %v1988 = vadd.f32 0.0, %v1987
        %v1989 = vpop.f32.mrf.mxu0
        %v1990 = vadd.f32 0.0, %v1989
        %1991 = vmatmul.bf16.gmra.mxu0 %v1741
        %v1992 = vpop.f32.mrf.mxu0
        %v1993 = vadd.f32 0.0, %v1992
        %v1994 = vpop.f32.mrf.mxu0
        %v1995 = vadd.f32 0.0, %v1994
        %1996 = vmatmul.bf16.gmra.mxu0 %v1744
        %v1997 = vpop.f32.mrf.mxu0
        %v1998 = vadd.f32 0.0, %v1997
        %v1999 = vpop.f32.mrf.mxu0
        %v2000 = vadd.f32 0.0, %v1999
        %2001 = vmatmul.bf16.gmra.mxu0 %v1747
        %v2002 = vpop.f32.mrf.mxu0
        %v2003 = vadd.f32 0.0, %v2002
        %v2004 = vpop.f32.mrf.mxu0
        %v2005 = vadd.f32 0.0, %v2004
        %2006 = vmatmul.bf16.gmra.mxu0 %v1750
        %v2007 = vpop.f32.mrf.mxu0
        %v2008 = vadd.f32 0.0, %v2007
        %v2009 = vpop.f32.mrf.mxu0
        %v2010 = vadd.f32 0.0, %v2009
        %2011 = vmatmul.bf16.gmra.mxu0 %v1753
        %v2012 = vpop.f32.mrf.mxu0
        %v2013 = vadd.f32 0.0, %v2012
        %v2014 = vpop.f32.mrf.mxu0
        %v2015 = vadd.f32 0.0, %v2014
        %2016 = vmatmul.bf16.gmra.mxu0 %v1756
        %v2017 = vpop.f32.mrf.mxu0
        %v2018 = vadd.f32 0.0, %v2017
        %v2019 = vpop.f32.mrf.mxu0
        %v2020 = vadd.f32 0.0, %v2019
        %2021 = vmatmul.bf16.gmra.mxu0 %v1759
        %v2022 = vpop.f32.mrf.mxu0
        %v2023 = vadd.f32 0.0, %v2022
        %v2024 = vpop.f32.mrf.mxu0
        %v2025 = vadd.f32 0.0, %v2024
        %2026 = vmatmul.bf16.gmra.mxu0 %v1762
        %v2027 = vpop.f32.mrf.mxu0
        %v2028 = vadd.f32 0.0, %v2027
        %v2029 = vpop.f32.mrf.mxu0
        %v2030 = vadd.f32 0.0, %v2029
        %2031 = vmatmul.bf16.gmra.mxu0 %v1765
        %v2032 = vpop.f32.mrf.mxu0
        %v2033 = vadd.f32 0.0, %v2032
        %v2034 = vpop.f32.mrf.mxu0
        %v2035 = vadd.f32 0.0, %v2034
        %2036 = vmatmul.bf16.gmra.mxu0 %v1768
        %v2037 = vpop.f32.mrf.mxu0
        %v2038 = vadd.f32 0.0, %v2037
        %v2039 = vpop.f32.mrf.mxu0
        %v2040 = vadd.f32 0.0, %v2039
        %2041 = vmatmul.bf16.gmra.mxu0 %v1771
        %v2042 = vpop.f32.mrf.mxu0
        %v2043 = vadd.f32 0.0, %v2042
        %v2044 = vpop.f32.mrf.mxu0
        %v2045 = vadd.f32 0.0, %v2044
        %2046 = vmatmul.bf16.gmra.mxu0 %v1774
        %v2047 = vpop.f32.mrf.mxu0
        %v2048 = vadd.f32 0.0, %v2047
        %v2049 = vpop.f32.mrf.mxu0
        %v2050 = vadd.f32 0.0, %v2049
        %2051 = vmatmul.bf16.gmra.mxu0 %v1777
        %v2052 = vpop.f32.mrf.mxu0
        %v2053 = vadd.f32 0.0, %v2052
        %v2054 = vpop.f32.mrf.mxu0
        %v2055 = vadd.f32 0.0, %v2054
        %2056 = vmatmul.bf16.gmra.mxu0 %v1780
        %v2057 = vpop.f32.mrf.mxu0
        %v2058 = vadd.f32 0.0, %v2057
        %v2059 = vpop.f32.mrf.mxu0
        %v2060 = vadd.f32 0.0, %v2059
        %2061 = vmatmul.bf16.gmra.mxu0 %v1783
        %v2062 = vpop.f32.mrf.mxu0
        %v2063 = vadd.f32 0.0, %v2062
        %v2064 = vpop.f32.mrf.mxu0
        %v2065 = vadd.f32 0.0, %v2064
        %2066 = vdwg.mxu0
        %2067 = vmatpush.bf16.msra.mxu0 %v1945
        %2068 = vmatpush.bf16.msra.mxu0 %v1944
        %2069 = vmatpush.bf16.msra.mxu0 %v1943
        %2070 = vmatpush.bf16.msra.mxu0 %v1942
        %2071 = vmatpush.bf16.msra.mxu0 %v1941
        %2072 = vmatpush.bf16.msra.mxu0 %v1940
        %2073 = vmatpush.bf16.msra.mxu0 %v1939
        %2074 = vmatpush.bf16.msra.mxu0 %v1938
        %2075 = vmatmul.bf16.gmra.mxu0 %v1739
        %v2076 = vpop.f32.mrf.mxu0
        %v2077 = vadd.f32 %v1988, %v2076
        %v2078 = vpop.f32.mrf.mxu0
        %v2079 = vadd.f32 %v1990, %v2078
        %2080 = vmatmul.bf16.gmra.mxu0 %v1742
        %v2081 = vpop.f32.mrf.mxu0
        %v2082 = vadd.f32 %v1993, %v2081
        %v2083 = vpop.f32.mrf.mxu0
        %v2084 = vadd.f32 %v1995, %v2083
        %2085 = vmatmul.bf16.gmra.mxu0 %v1745
        %v2086 = vpop.f32.mrf.mxu0
        %v2087 = vadd.f32 %v1998, %v2086
        %v2088 = vpop.f32.mrf.mxu0
        %v2089 = vadd.f32 %v2000, %v2088
        %2090 = vmatmul.bf16.gmra.mxu0 %v1748
        %v2091 = vpop.f32.mrf.mxu0
        %v2092 = vadd.f32 %v2003, %v2091
        %v2093 = vpop.f32.mrf.mxu0
        %v2094 = vadd.f32 %v2005, %v2093
        %2095 = vmatmul.bf16.gmra.mxu0 %v1751
        %v2096 = vpop.f32.mrf.mxu0
        %v2097 = vadd.f32 %v2008, %v2096
        %v2098 = vpop.f32.mrf.mxu0
        %v2099 = vadd.f32 %v2010, %v2098
        %2100 = vmatmul.bf16.gmra.mxu0 %v1754
        %v2101 = vpop.f32.mrf.mxu0
        %v2102 = vadd.f32 %v2013, %v2101
        %v2103 = vpop.f32.mrf.mxu0
        %v2104 = vadd.f32 %v2015, %v2103
        %2105 = vmatmul.bf16.gmra.mxu0 %v1757
        %v2106 = vpop.f32.mrf.mxu0
        %v2107 = vadd.f32 %v2018, %v2106
        %v2108 = vpop.f32.mrf.mxu0
        %v2109 = vadd.f32 %v2020, %v2108
        %2110 = vmatmul.bf16.gmra.mxu0 %v1760
        %v2111 = vpop.f32.mrf.mxu0
        %v2112 = vadd.f32 %v2023, %v2111
        %v2113 = vpop.f32.mrf.mxu0
        %v2114 = vadd.f32 %v2025, %v2113
        %2115 = vmatmul.bf16.gmra.mxu0 %v1763
        %v2116 = vpop.f32.mrf.mxu0
        %v2117 = vadd.f32 %v2028, %v2116
        %v2118 = vpop.f32.mrf.mxu0
        %v2119 = vadd.f32 %v2030, %v2118
        %2120 = vmatmul.bf16.gmra.mxu0 %v1766
        %v2121 = vpop.f32.mrf.mxu0
        %v2122 = vadd.f32 %v2033, %v2121
        %v2123 = vpop.f32.mrf.mxu0
        %v2124 = vadd.f32 %v2035, %v2123
        %2125 = vmatmul.bf16.gmra.mxu0 %v1769
        %v2126 = vpop.f32.mrf.mxu0
        %v2127 = vadd.f32 %v2038, %v2126
        %v2128 = vpop.f32.mrf.mxu0
        %v2129 = vadd.f32 %v2040, %v2128
        %2130 = vmatmul.bf16.gmra.mxu0 %v1772
        %v2131 = vpop.f32.mrf.mxu0
        %v2132 = vadd.f32 %v2043, %v2131
        %v2133 = vpop.f32.mrf.mxu0
        %v2134 = vadd.f32 %v2045, %v2133
        %2135 = vmatmul.bf16.gmra.mxu0 %v1775
        %v2136 = vpop.f32.mrf.mxu0
        %v2137 = vadd.f32 %v2048, %v2136
        %v2138 = vpop.f32.mrf.mxu0
        %v2139 = vadd.f32 %v2050, %v2138
        %2140 = vmatmul.bf16.gmra.mxu0 %v1778
        %v2141 = vpop.f32.mrf.mxu0
        %v2142 = vadd.f32 %v2053, %v2141
        %v2143 = vpop.f32.mrf.mxu0
        %v2144 = vadd.f32 %v2055, %v2143
        %2145 = vmatmul.bf16.gmra.mxu0 %v1781
        %v2146 = vpop.f32.mrf.mxu0
        %v2147 = vadd.f32 %v2058, %v2146
        %v2148 = vpop.f32.mrf.mxu0
        %v2149 = vadd.f32 %v2060, %v2148
        %2150 = vmatmul.bf16.gmra.mxu0 %v1784
        %v2151 = vpop.f32.mrf.mxu0
        %v2152 = vadd.f32 %v2063, %v2151
        %v2153 = vpop.f32.mrf.mxu0
        %v2154 = vadd.f32 %v2065, %v2153
        %2155 = vdwg.mxu0
        %2156 = vmatpush.bf16.msra.mxu0 %v1953
        %2157 = vmatpush.bf16.msra.mxu0 %v1952
        %2158 = vmatpush.bf16.msra.mxu0 %v1951
        %2159 = vmatpush.bf16.msra.mxu0 %v1950
        %2160 = vmatpush.bf16.msra.mxu0 %v1949
        %2161 = vmatpush.bf16.msra.mxu0 %v1948
        %2162 = vmatpush.bf16.msra.mxu0 %v1947
        %2163 = vmatpush.bf16.msra.mxu0 %v1946
        %2164 = vmatmul.bf16.gmra.mxu0 %v1740
        %v2165 = vpop.f32.mrf.mxu0
        %v2166 = vadd.f32 %v2077, %v2165
        %v2167 = vpop.f32.mrf.mxu0
        %v2168 = vadd.f32 %v2079, %v2167
        %2169 = vmatmul.bf16.gmra.mxu0 %v1743
        %v2170 = vpop.f32.mrf.mxu0
        %v2171 = vadd.f32 %v2082, %v2170
        %v2172 = vpop.f32.mrf.mxu0
        %v2173 = vadd.f32 %v2084, %v2172
        %2174 = vmatmul.bf16.gmra.mxu0 %v1746
        %v2175 = vpop.f32.mrf.mxu0
        %v2176 = vadd.f32 %v2087, %v2175
        %v2177 = vpop.f32.mrf.mxu0
        %v2178 = vadd.f32 %v2089, %v2177
        %2179 = vmatmul.bf16.gmra.mxu0 %v1749
        %v2180 = vpop.f32.mrf.mxu0
        %v2181 = vadd.f32 %v2092, %v2180
        %v2182 = vpop.f32.mrf.mxu0
        %v2183 = vadd.f32 %v2094, %v2182
        %2184 = vmatmul.bf16.gmra.mxu0 %v1752
        %v2185 = vpop.f32.mrf.mxu0
        %v2186 = vadd.f32 %v2097, %v2185
        %v2187 = vpop.f32.mrf.mxu0
        %v2188 = vadd.f32 %v2099, %v2187
        %2189 = vmatmul.bf16.gmra.mxu0 %v1755
        %v2190 = vpop.f32.mrf.mxu0
        %v2191 = vadd.f32 %v2102, %v2190
        %v2192 = vpop.f32.mrf.mxu0
        %v2193 = vadd.f32 %v2104, %v2192
        %2194 = vmatmul.bf16.gmra.mxu0 %v1758
        %v2195 = vpop.f32.mrf.mxu0
        %v2196 = vadd.f32 %v2107, %v2195
        %v2197 = vpop.f32.mrf.mxu0
        %v2198 = vadd.f32 %v2109, %v2197
        %2199 = vmatmul.bf16.gmra.mxu0 %v1761
        %v2200 = vpop.f32.mrf.mxu0
        %v2201 = vadd.f32 %v2112, %v2200
        %v2202 = vpop.f32.mrf.mxu0
        %v2203 = vadd.f32 %v2114, %v2202
        %2204 = vmatmul.bf16.gmra.mxu0 %v1764
        %v2205 = vpop.f32.mrf.mxu0
        %v2206 = vadd.f32 %v2117, %v2205
        %v2207 = vpop.f32.mrf.mxu0
        %v2208 = vadd.f32 %v2119, %v2207
        %2209 = vmatmul.bf16.gmra.mxu0 %v1767
        %v2210 = vpop.f32.mrf.mxu0
        %v2211 = vadd.f32 %v2122, %v2210
        %v2212 = vpop.f32.mrf.mxu0
        %v2213 = vadd.f32 %v2124, %v2212
        %2214 = vmatmul.bf16.gmra.mxu0 %v1770
        %v2215 = vpop.f32.mrf.mxu0
        %v2216 = vadd.f32 %v2127, %v2215
        %v2217 = vpop.f32.mrf.mxu0
        %v2218 = vadd.f32 %v2129, %v2217
        %2219 = vmatmul.bf16.gmra.mxu0 %v1773
        %v2220 = vpop.f32.mrf.mxu0
        %v2221 = vadd.f32 %v2132, %v2220
        %v2222 = vpop.f32.mrf.mxu0
        %v2223 = vadd.f32 %v2134, %v2222
        %2224 = vmatmul.bf16.gmra.mxu0 %v1776
        %v2225 = vpop.f32.mrf.mxu0
        %v2226 = vadd.f32 %v2137, %v2225
        %v2227 = vpop.f32.mrf.mxu0
        %v2228 = vadd.f32 %v2139, %v2227
        %2229 = vmatmul.bf16.gmra.mxu0 %v1779
        %v2230 = vpop.f32.mrf.mxu0
        %v2231 = vadd.f32 %v2142, %v2230
        %v2232 = vpop.f32.mrf.mxu0
        %v2233 = vadd.f32 %v2144, %v2232
        %2234 = vmatmul.bf16.gmra.mxu0 %v1782
        %v2235 = vpop.f32.mrf.mxu0
        %v2236 = vadd.f32 %v2147, %v2235
        %v2237 = vpop.f32.mrf.mxu0
        %v2238 = vadd.f32 %v2149, %v2237
        %2239 = vmatmul.bf16.gmra.mxu0 %v1785
        %v2240 = vpop.f32.mrf.mxu0
        %v2241 = vadd.f32 %v2152, %v2240
        %v2242 = vpop.f32.mrf.mxu0
        %v2243 = vadd.f32 %v2154, %v2242
        %2244 = vdwg.mxu0
        %v2309 = vunpack.c.l.b16 %v1352
        %v2310 = vunpack.c.h.b16 %v1352
        %v2311 = vunpack.c.l.b16 %v1353
        %v2312 = vunpack.c.l.b16 %v1354
        %v2313 = vunpack.c.h.b16 %v1354
        %v2314 = vunpack.c.l.b16 %v1355
        %v2315 = vunpack.c.l.b16 %v1356
        %v2316 = vunpack.c.h.b16 %v1356
        %v2317 = vunpack.c.l.b16 %v1357
        %v2318 = vunpack.c.l.b16 %v1358
        %v2319 = vunpack.c.h.b16 %v1358
        %v2320 = vunpack.c.l.b16 %v1359
        %v2321 = vunpack.c.l.b16 %v1360
        %v2322 = vunpack.c.h.b16 %v1360
        %v2323 = vunpack.c.l.b16 %v1361
        %v2324 = vunpack.c.l.b16 %v1362
        %v2325 = vunpack.c.h.b16 %v1362
        %v2326 = vunpack.c.l.b16 %v1363
        %v2327 = vunpack.c.l.b16 %v1364
        %v2328 = vunpack.c.h.b16 %v1364
        %v2329 = vunpack.c.l.b16 %v1365
        %v2330 = vunpack.c.l.b16 %v1366
        %v2331 = vunpack.c.h.b16 %v1366
        %v2332 = vunpack.c.l.b16 %v1367
        %v2333 = vunpack.c.l.b16 %v1368
        %v2334 = vunpack.c.h.b16 %v1368
        %v2335 = vunpack.c.l.b16 %v1369
        %v2336 = vunpack.c.l.b16 %v1370
        %v2337 = vunpack.c.h.b16 %v1370
        %v2338 = vunpack.c.l.b16 %v1371
        %v2339 = vunpack.c.l.b16 %v1372
        %v2340 = vunpack.c.h.b16 %v1372
        %v2341 = vunpack.c.l.b16 %v1373
        %v2342 = vunpack.c.l.b16 %v1374
        %v2343 = vunpack.c.h.b16 %v1374
        %v2344 = vunpack.c.l.b16 %v1375
        %v2345 = vunpack.c.l.b16 %v1376
        %v2346 = vunpack.c.h.b16 %v1376
        %v2347 = vunpack.c.l.b16 %v1377
        %v2348 = vunpack.c.l.b16 %v1378
        %v2349 = vunpack.c.h.b16 %v1378
        %v2350 = vunpack.c.l.b16 %v1379
        %v2351 = vunpack.c.l.b16 %v1380
        %v2352 = vunpack.c.h.b16 %v1380
        %v2353 = vunpack.c.l.b16 %v1381
        %v2354 = vunpack.c.l.b16 %v1382
        %v2355 = vunpack.c.h.b16 %v1382
        %v2356 = vunpack.c.l.b16 %v1383
        %v2357 = vunpack.c.l.b16 %v1384
        %v2358 = vunpack.c.h.b16 %v1384
        %v2359 = vunpack.c.l.b16 %v1385
        %v2360 = vunpack.c.l.b16 %v1386
        %v2361 = vunpack.c.h.b16 %v1386
        %v2362 = vunpack.c.l.b16 %v1387
        %v2363 = vunpack.c.l.b16 %v1388
        %v2364 = vunpack.c.h.b16 %v1388
        %v2365 = vunpack.c.l.b16 %v1389
        %v2366 = vunpack.c.l.b16 %v1390
        %v2367 = vunpack.c.h.b16 %v1390
        %v2368 = vunpack.c.l.b16 %v1391
        %v2369 = vunpack.c.l.b16 %v1392
        %v2370 = vunpack.c.h.b16 %v1392
        %v2371 = vunpack.c.l.b16 %v1393
        %v2372 = vunpack.c.l.b16 %v1394
        %v2373 = vunpack.c.h.b16 %v1394
        %v2374 = vunpack.c.l.b16 %v1395
        %v2375 = vunpack.c.l.b16 %v1396
        %v2376 = vunpack.c.h.b16 %v1396
        %v2377 = vunpack.c.l.b16 %v1397
        %v2378 = vunpack.c.l.b16 %v1398
        %v2379 = vunpack.c.h.b16 %v1398
        %v2380 = vunpack.c.l.b16 %v1399
        %v2381 = vunpack.c.l.b16 %v1400
        %v2382 = vunpack.c.h.b16 %v1400
        %v2383 = vunpack.c.l.b16 %v1401
        %v2384 = vunpack.c.l.b16 %v1402
        %v2385 = vunpack.c.h.b16 %v1402
        %v2386 = vunpack.c.l.b16 %v1403
        %v2387 = vunpack.c.l.b16 %v1404
        %v2388 = vunpack.c.h.b16 %v1404
        %v2389 = vunpack.c.l.b16 %v1405
        %v2390 = vunpack.c.l.b16 %v1406
        %v2391 = vunpack.c.h.b16 %v1406
        %v2392 = vunpack.c.l.b16 %v1407
        %v2393 = vunpack.c.l.b16 %v1408
        %v2394 = vunpack.c.h.b16 %v1408
        %v2395 = vunpack.c.l.b16 %v1409
        %v2396 = vunpack.c.l.b16 %v1410
        %v2397 = vunpack.c.h.b16 %v1410
        %v2398 = vunpack.c.l.b16 %v1411
        %v2399 = vunpack.c.l.b16 %v1412
        %v2400 = vunpack.c.h.b16 %v1412
        %v2401 = vunpack.c.l.b16 %v1413
        %v2402 = vunpack.c.l.b16 %v1414
        %v2403 = vunpack.c.h.b16 %v1414
        %v2404 = vunpack.c.l.b16 %v1415
        %v2405 = vpack.c.b16 %v2312, %v2309
        %v2406 = vpack.c.b16 %v2313, %v2310
        %v2407 = vpack.c.b16 %v2314, %v2311
        %v2408 = vpack.c.b16 %v2318, %v2315
        %v2409 = vpack.c.b16 %v2319, %v2316
        %v2410 = vpack.c.b16 %v2320, %v2317
        %v2411 = vpack.c.b16 %v2324, %v2321
        %v2412 = vpack.c.b16 %v2325, %v2322
        %v2413 = vpack.c.b16 %v2326, %v2323
        %v2414 = vpack.c.b16 %v2330, %v2327
        %v2415 = vpack.c.b16 %v2331, %v2328
        %v2416 = vpack.c.b16 %v2332, %v2329
        %v2417 = vpack.c.b16 %v2336, %v2333
        %v2418 = vpack.c.b16 %v2337, %v2334
        %v2419 = vpack.c.b16 %v2338, %v2335
        %v2420 = vpack.c.b16 %v2342, %v2339
        %v2421 = vpack.c.b16 %v2343, %v2340
        %v2422 = vpack.c.b16 %v2344, %v2341
        %v2423 = vpack.c.b16 %v2348, %v2345
        %v2424 = vpack.c.b16 %v2349, %v2346
        %v2425 = vpack.c.b16 %v2350, %v2347
        %v2426 = vpack.c.b16 %v2354, %v2351
        %v2427 = vpack.c.b16 %v2355, %v2352
        %v2428 = vpack.c.b16 %v2356, %v2353
        %v2429 = vpack.c.b16 %v2360, %v2357
        %v2430 = vpack.c.b16 %v2361, %v2358
        %v2431 = vpack.c.b16 %v2362, %v2359
        %v2432 = vpack.c.b16 %v2366, %v2363
        %v2433 = vpack.c.b16 %v2367, %v2364
        %v2434 = vpack.c.b16 %v2368, %v2365
        %v2435 = vpack.c.b16 %v2372, %v2369
        %v2436 = vpack.c.b16 %v2373, %v2370
        %v2437 = vpack.c.b16 %v2374, %v2371
        %v2438 = vpack.c.b16 %v2378, %v2375
        %v2439 = vpack.c.b16 %v2379, %v2376
        %v2440 = vpack.c.b16 %v2380, %v2377
        %v2441 = vpack.c.b16 %v2384, %v2381
        %v2442 = vpack.c.b16 %v2385, %v2382
        %v2443 = vpack.c.b16 %v2386, %v2383
        %v2444 = vpack.c.b16 %v2390, %v2387
        %v2445 = vpack.c.b16 %v2391, %v2388
        %v2446 = vpack.c.b16 %v2392, %v2389
        %v2447 = vpack.c.b16 %v2396, %v2393
        %v2448 = vpack.c.b16 %v2397, %v2394
        %v2449 = vpack.c.b16 %v2398, %v2395
        %v2450 = vpack.c.b16 %v2402, %v2399
        %v2451 = vpack.c.b16 %v2403, %v2400
        %v2452 = vpack.c.b16 %v2404, %v2401
        %v2549 = vunpack.c.l.b16 %v1416
        %v2550 = vunpack.c.l.b16 %v1417
        %v2551 = vunpack.c.l.b16 %v1418
        %v2552 = vunpack.c.l.b16 %v1419
        %v2553 = vunpack.c.l.b16 %v1420
        %v2554 = vunpack.c.l.b16 %v1421
        %v2555 = vunpack.c.l.b16 %v1422
        %v2556 = vunpack.c.l.b16 %v1423
        %v2557 = vunpack.c.l.b16 %v1424
        %v2558 = vunpack.c.l.b16 %v1425
        %v2559 = vunpack.c.l.b16 %v1426
        %v2560 = vunpack.c.l.b16 %v1427
        %v2561 = vunpack.c.l.b16 %v1428
        %v2562 = vunpack.c.l.b16 %v1429
        %v2563 = vunpack.c.l.b16 %v1430
        %v2564 = vunpack.c.l.b16 %v1431
        %v2565 = vunpack.c.l.b16 %v1432
        %v2566 = vunpack.c.l.b16 %v1433
        %v2567 = vunpack.c.l.b16 %v1434
        %v2568 = vunpack.c.l.b16 %v1435
        %v2569 = vunpack.c.l.b16 %v1436
        %v2570 = vunpack.c.l.b16 %v1437
        %v2571 = vunpack.c.l.b16 %v1438
        %v2572 = vunpack.c.l.b16 %v1439
        %v2573 = vunpack.c.l.b16 %v1440
        %v2574 = vunpack.c.l.b16 %v1441
        %v2575 = vunpack.c.l.b16 %v1442
        %v2576 = vunpack.c.l.b16 %v1443
        %v2577 = vunpack.c.l.b16 %v1444
        %v2578 = vunpack.c.l.b16 %v1445
        %v2579 = vunpack.c.l.b16 %v1446
        %v2580 = vunpack.c.l.b16 %v1447
        %v2581 = vunpack.c.l.b16 %v1448
        %v2582 = vunpack.c.l.b16 %v1449
        %v2583 = vunpack.c.l.b16 %v1450
        %v2584 = vunpack.c.l.b16 %v1451
        %v2585 = vunpack.c.l.b16 %v1452
        %v2586 = vunpack.c.l.b16 %v1453
        %v2587 = vunpack.c.l.b16 %v1454
        %v2588 = vunpack.c.l.b16 %v1455
        %v2589 = vunpack.c.l.b16 %v1456
        %v2590 = vunpack.c.l.b16 %v1457
        %v2591 = vunpack.c.l.b16 %v1458
        %v2592 = vunpack.c.l.b16 %v1459
        %v2593 = vunpack.c.l.b16 %v1460
        %v2594 = vunpack.c.l.b16 %v1461
        %v2595 = vunpack.c.l.b16 %v1462
        %v2596 = vunpack.c.l.b16 %v1463
        %v2597 = vpack.c.b16 %v2550, %v2549
        %v2598 = vpack.c.b16 %v2552, %v2551
        %v2599 = vpack.c.b16 %v2554, %v2553
        %v2600 = vpack.c.b16 %v2556, %v2555
        %v2601 = vpack.c.b16 %v2558, %v2557
        %v2602 = vpack.c.b16 %v2560, %v2559
        %v2603 = vpack.c.b16 %v2562, %v2561
        %v2604 = vpack.c.b16 %v2564, %v2563
        %v2605 = vpack.c.b16 %v2566, %v2565
        %v2606 = vpack.c.b16 %v2568, %v2567
        %v2607 = vpack.c.b16 %v2570, %v2569
        %v2608 = vpack.c.b16 %v2572, %v2571
        %v2609 = vpack.c.b16 %v2574, %v2573
        %v2610 = vpack.c.b16 %v2576, %v2575
        %v2611 = vpack.c.b16 %v2578, %v2577
        %v2612 = vpack.c.b16 %v2580, %v2579
        %v2613 = vpack.c.b16 %v2582, %v2581
        %v2614 = vpack.c.b16 %v2584, %v2583
        %v2615 = vpack.c.b16 %v2586, %v2585
        %v2616 = vpack.c.b16 %v2588, %v2587
        %v2617 = vpack.c.b16 %v2590, %v2589
        %v2618 = vpack.c.b16 %v2592, %v2591
        %v2619 = vpack.c.b16 %v2594, %v2593
        %v2620 = vpack.c.b16 %v2596, %v2595
        %2645 = vmatpush.bf16.msra.mxu0 %v2604
        %2646 = vmatpush.bf16.msra.mxu0 %v2603
        %2647 = vmatpush.bf16.msra.mxu0 %v2602
        %2648 = vmatpush.bf16.msra.mxu0 %v2601
        %2649 = vmatpush.bf16.msra.mxu0 %v2600
        %2650 = vmatpush.bf16.msra.mxu0 %v2599
        %2651 = vmatpush.bf16.msra.mxu0 %v2598
        %2652 = vmatpush.bf16.msra.mxu0 %v2597
        %2653 = vmatmul.bf16.gmra.mxu0 %v2405
        %v2654 = vpop.f32.mrf.mxu0
        %v2655 = vadd.f32 %v2166, %v2654
        %v2656 = vpop.f32.mrf.mxu0
        %v2657 = vadd.f32 %v2168, %v2656
        %2658 = vmatmul.bf16.gmra.mxu0 %v2408
        %v2659 = vpop.f32.mrf.mxu0
        %v2660 = vadd.f32 %v2171, %v2659
        %v2661 = vpop.f32.mrf.mxu0
        %v2662 = vadd.f32 %v2173, %v2661
        %2663 = vmatmul.bf16.gmra.mxu0 %v2411
        %v2664 = vpop.f32.mrf.mxu0
        %v2665 = vadd.f32 %v2176, %v2664
        %v2666 = vpop.f32.mrf.mxu0
        %v2667 = vadd.f32 %v2178, %v2666
        %2668 = vmatmul.bf16.gmra.mxu0 %v2414
        %v2669 = vpop.f32.mrf.mxu0
        %v2670 = vadd.f32 %v2181, %v2669
        %v2671 = vpop.f32.mrf.mxu0
        %v2672 = vadd.f32 %v2183, %v2671
        %2673 = vmatmul.bf16.gmra.mxu0 %v2417
        %v2674 = vpop.f32.mrf.mxu0
        %v2675 = vadd.f32 %v2186, %v2674
        %v2676 = vpop.f32.mrf.mxu0
        %v2677 = vadd.f32 %v2188, %v2676
        %2678 = vmatmul.bf16.gmra.mxu0 %v2420
        %v2679 = vpop.f32.mrf.mxu0
        %v2680 = vadd.f32 %v2191, %v2679
        %v2681 = vpop.f32.mrf.mxu0
        %v2682 = vadd.f32 %v2193, %v2681
        %2683 = vmatmul.bf16.gmra.mxu0 %v2423
        %v2684 = vpop.f32.mrf.mxu0
        %v2685 = vadd.f32 %v2196, %v2684
        %v2686 = vpop.f32.mrf.mxu0
        %v2687 = vadd.f32 %v2198, %v2686
        %2688 = vmatmul.bf16.gmra.mxu0 %v2426
        %v2689 = vpop.f32.mrf.mxu0
        %v2690 = vadd.f32 %v2201, %v2689
        %v2691 = vpop.f32.mrf.mxu0
        %v2692 = vadd.f32 %v2203, %v2691
        %2693 = vmatmul.bf16.gmra.mxu0 %v2429
        %v2694 = vpop.f32.mrf.mxu0
        %v2695 = vadd.f32 %v2206, %v2694
        %v2696 = vpop.f32.mrf.mxu0
        %v2697 = vadd.f32 %v2208, %v2696
        %2698 = vmatmul.bf16.gmra.mxu0 %v2432
        %v2699 = vpop.f32.mrf.mxu0
        %v2700 = vadd.f32 %v2211, %v2699
        %v2701 = vpop.f32.mrf.mxu0
        %v2702 = vadd.f32 %v2213, %v2701
        %2703 = vmatmul.bf16.gmra.mxu0 %v2435
        %v2704 = vpop.f32.mrf.mxu0
        %v2705 = vadd.f32 %v2216, %v2704
        %v2706 = vpop.f32.mrf.mxu0
        %v2707 = vadd.f32 %v2218, %v2706
        %2708 = vmatmul.bf16.gmra.mxu0 %v2438
        %v2709 = vpop.f32.mrf.mxu0
        %v2710 = vadd.f32 %v2221, %v2709
        %v2711 = vpop.f32.mrf.mxu0
        %v2712 = vadd.f32 %v2223, %v2711
        %2713 = vmatmul.bf16.gmra.mxu0 %v2441
        %v2714 = vpop.f32.mrf.mxu0
        %v2715 = vadd.f32 %v2226, %v2714
        %v2716 = vpop.f32.mrf.mxu0
        %v2717 = vadd.f32 %v2228, %v2716
        %2718 = vmatmul.bf16.gmra.mxu0 %v2444
        %v2719 = vpop.f32.mrf.mxu0
        %v2720 = vadd.f32 %v2231, %v2719
        %v2721 = vpop.f32.mrf.mxu0
        %v2722 = vadd.f32 %v2233, %v2721
        %2723 = vmatmul.bf16.gmra.mxu0 %v2447
        %v2724 = vpop.f32.mrf.mxu0
        %v2725 = vadd.f32 %v2236, %v2724
        %v2726 = vpop.f32.mrf.mxu0
        %v2727 = vadd.f32 %v2238, %v2726
        %2728 = vmatmul.bf16.gmra.mxu0 %v2450
        %v2729 = vpop.f32.mrf.mxu0
        %v2730 = vadd.f32 %v2241, %v2729
        %v2731 = vpop.f32.mrf.mxu0
        %v2732 = vadd.f32 %v2243, %v2731
        %2733 = vdwg.mxu0
        %2734 = vmatpush.bf16.msra.mxu0 %v2612
        %2735 = vmatpush.bf16.msra.mxu0 %v2611
        %2736 = vmatpush.bf16.msra.mxu0 %v2610
        %2737 = vmatpush.bf16.msra.mxu0 %v2609
        %2738 = vmatpush.bf16.msra.mxu0 %v2608
        %2739 = vmatpush.bf16.msra.mxu0 %v2607
        %2740 = vmatpush.bf16.msra.mxu0 %v2606
        %2741 = vmatpush.bf16.msra.mxu0 %v2605
        %2742 = vmatmul.bf16.gmra.mxu0 %v2406
        %v2743 = vpop.f32.mrf.mxu0
        %v2744 = vadd.f32 %v2655, %v2743
        %v2745 = vpop.f32.mrf.mxu0
        %v2746 = vadd.f32 %v2657, %v2745
        %2747 = vmatmul.bf16.gmra.mxu0 %v2409
        %v2748 = vpop.f32.mrf.mxu0
        %v2749 = vadd.f32 %v2660, %v2748
        %v2750 = vpop.f32.mrf.mxu0
        %v2751 = vadd.f32 %v2662, %v2750
        %2752 = vmatmul.bf16.gmra.mxu0 %v2412
        %v2753 = vpop.f32.mrf.mxu0
        %v2754 = vadd.f32 %v2665, %v2753
        %v2755 = vpop.f32.mrf.mxu0
        %v2756 = vadd.f32 %v2667, %v2755
        %2757 = vmatmul.bf16.gmra.mxu0 %v2415
        %v2758 = vpop.f32.mrf.mxu0
        %v2759 = vadd.f32 %v2670, %v2758
        %v2760 = vpop.f32.mrf.mxu0
        %v2761 = vadd.f32 %v2672, %v2760
        %2762 = vmatmul.bf16.gmra.mxu0 %v2418
        %v2763 = vpop.f32.mrf.mxu0
        %v2764 = vadd.f32 %v2675, %v2763
        %v2765 = vpop.f32.mrf.mxu0
        %v2766 = vadd.f32 %v2677, %v2765
        %2767 = vmatmul.bf16.gmra.mxu0 %v2421
        %v2768 = vpop.f32.mrf.mxu0
        %v2769 = vadd.f32 %v2680, %v2768
        %v2770 = vpop.f32.mrf.mxu0
        %v2771 = vadd.f32 %v2682, %v2770
        %2772 = vmatmul.bf16.gmra.mxu0 %v2424
        %v2773 = vpop.f32.mrf.mxu0
        %v2774 = vadd.f32 %v2685, %v2773
        %v2775 = vpop.f32.mrf.mxu0
        %v2776 = vadd.f32 %v2687, %v2775
        %2777 = vmatmul.bf16.gmra.mxu0 %v2427
        %v2778 = vpop.f32.mrf.mxu0
        %v2779 = vadd.f32 %v2690, %v2778
        %v2780 = vpop.f32.mrf.mxu0
        %v2781 = vadd.f32 %v2692, %v2780
        %2782 = vmatmul.bf16.gmra.mxu0 %v2430
        %v2783 = vpop.f32.mrf.mxu0
        %v2784 = vadd.f32 %v2695, %v2783
        %v2785 = vpop.f32.mrf.mxu0
        %v2786 = vadd.f32 %v2697, %v2785
        %2787 = vmatmul.bf16.gmra.mxu0 %v2433
        %v2788 = vpop.f32.mrf.mxu0
        %v2789 = vadd.f32 %v2700, %v2788
        %v2790 = vpop.f32.mrf.mxu0
        %v2791 = vadd.f32 %v2702, %v2790
        %2792 = vmatmul.bf16.gmra.mxu0 %v2436
        %v2793 = vpop.f32.mrf.mxu0
        %v2794 = vadd.f32 %v2705, %v2793
        %v2795 = vpop.f32.mrf.mxu0
        %v2796 = vadd.f32 %v2707, %v2795
        %2797 = vmatmul.bf16.gmra.mxu0 %v2439
        %v2798 = vpop.f32.mrf.mxu0
        %v2799 = vadd.f32 %v2710, %v2798
        %v2800 = vpop.f32.mrf.mxu0
        %v2801 = vadd.f32 %v2712, %v2800
        %2802 = vmatmul.bf16.gmra.mxu0 %v2442
        %v2803 = vpop.f32.mrf.mxu0
        %v2804 = vadd.f32 %v2715, %v2803
        %v2805 = vpop.f32.mrf.mxu0
        %v2806 = vadd.f32 %v2717, %v2805
        %2807 = vmatmul.bf16.gmra.mxu0 %v2445
        %v2808 = vpop.f32.mrf.mxu0
        %v2809 = vadd.f32 %v2720, %v2808
        %v2810 = vpop.f32.mrf.mxu0
        %v2811 = vadd.f32 %v2722, %v2810
        %2812 = vmatmul.bf16.gmra.mxu0 %v2448
        %v2813 = vpop.f32.mrf.mxu0
        %v2814 = vadd.f32 %v2725, %v2813
        %v2815 = vpop.f32.mrf.mxu0
        %v2816 = vadd.f32 %v2727, %v2815
        %2817 = vmatmul.bf16.gmra.mxu0 %v2451
        %v2818 = vpop.f32.mrf.mxu0
        %v2819 = vadd.f32 %v2730, %v2818
        %v2820 = vpop.f32.mrf.mxu0
        %v2821 = vadd.f32 %v2732, %v2820
        %2822 = vdwg.mxu0
        %2823 = vmatpush.bf16.msra.mxu0 %v2620
        %2824 = vmatpush.bf16.msra.mxu0 %v2619
        %2825 = vmatpush.bf16.msra.mxu0 %v2618
        %2826 = vmatpush.bf16.msra.mxu0 %v2617
        %2827 = vmatpush.bf16.msra.mxu0 %v2616
        %2828 = vmatpush.bf16.msra.mxu0 %v2615
        %2829 = vmatpush.bf16.msra.mxu0 %v2614
        %2830 = vmatpush.bf16.msra.mxu0 %v2613
        %2831 = vmatmul.bf16.gmra.mxu0 %v2407
        %v2832 = vpop.f32.mrf.mxu0
        %v2833 = vadd.f32 %v2744, %v2832
        %v2834 = vpop.f32.mrf.mxu0
        %v2835 = vadd.f32 %v2746, %v2834
        %2836 = vmatmul.bf16.gmra.mxu0 %v2410
        %v2837 = vpop.f32.mrf.mxu0
        %v2838 = vadd.f32 %v2749, %v2837
        %v2839 = vpop.f32.mrf.mxu0
        %v2840 = vadd.f32 %v2751, %v2839
        %2841 = vmatmul.bf16.gmra.mxu0 %v2413
        %v2842 = vpop.f32.mrf.mxu0
        %v2843 = vadd.f32 %v2754, %v2842
        %v2844 = vpop.f32.mrf.mxu0
        %v2845 = vadd.f32 %v2756, %v2844
        %2846 = vmatmul.bf16.gmra.mxu0 %v2416
        %v2847 = vpop.f32.mrf.mxu0
        %v2848 = vadd.f32 %v2759, %v2847
        %v2849 = vpop.f32.mrf.mxu0
        %v2850 = vadd.f32 %v2761, %v2849
        %2851 = vmatmul.bf16.gmra.mxu0 %v2419
        %v2852 = vpop.f32.mrf.mxu0
        %v2853 = vadd.f32 %v2764, %v2852
        %v2854 = vpop.f32.mrf.mxu0
        %v2855 = vadd.f32 %v2766, %v2854
        %2856 = vmatmul.bf16.gmra.mxu0 %v2422
        %v2857 = vpop.f32.mrf.mxu0
        %v2858 = vadd.f32 %v2769, %v2857
        %v2859 = vpop.f32.mrf.mxu0
        %v2860 = vadd.f32 %v2771, %v2859
        %2861 = vmatmul.bf16.gmra.mxu0 %v2425
        %v2862 = vpop.f32.mrf.mxu0
        %v2863 = vadd.f32 %v2774, %v2862
        %v2864 = vpop.f32.mrf.mxu0
        %v2865 = vadd.f32 %v2776, %v2864
        %2866 = vmatmul.bf16.gmra.mxu0 %v2428
        %v2867 = vpop.f32.mrf.mxu0
        %v2868 = vadd.f32 %v2779, %v2867
        %v2869 = vpop.f32.mrf.mxu0
        %v2870 = vadd.f32 %v2781, %v2869
        %2871 = vmatmul.bf16.gmra.mxu0 %v2431
        %v2872 = vpop.f32.mrf.mxu0
        %v2873 = vadd.f32 %v2784, %v2872
        %v2874 = vpop.f32.mrf.mxu0
        %v2875 = vadd.f32 %v2786, %v2874
        %2876 = vmatmul.bf16.gmra.mxu0 %v2434
        %v2877 = vpop.f32.mrf.mxu0
        %v2878 = vadd.f32 %v2789, %v2877
        %v2879 = vpop.f32.mrf.mxu0
        %v2880 = vadd.f32 %v2791, %v2879
        %2881 = vmatmul.bf16.gmra.mxu0 %v2437
        %v2882 = vpop.f32.mrf.mxu0
        %v2883 = vadd.f32 %v2794, %v2882
        %v2884 = vpop.f32.mrf.mxu0
        %v2885 = vadd.f32 %v2796, %v2884
        %2886 = vmatmul.bf16.gmra.mxu0 %v2440
        %v2887 = vpop.f32.mrf.mxu0
        %v2888 = vadd.f32 %v2799, %v2887
        %v2889 = vpop.f32.mrf.mxu0
        %v2890 = vadd.f32 %v2801, %v2889
        %2891 = vmatmul.bf16.gmra.mxu0 %v2443
        %v2892 = vpop.f32.mrf.mxu0
        %v2893 = vadd.f32 %v2804, %v2892
        %v2894 = vpop.f32.mrf.mxu0
        %v2895 = vadd.f32 %v2806, %v2894
        %2896 = vmatmul.bf16.gmra.mxu0 %v2446
        %v2897 = vpop.f32.mrf.mxu0
        %v2898 = vadd.f32 %v2809, %v2897
        %v2899 = vpop.f32.mrf.mxu0
        %v2900 = vadd.f32 %v2811, %v2899
        %2901 = vmatmul.bf16.gmra.mxu0 %v2449
        %v2902 = vpop.f32.mrf.mxu0
        %v2903 = vadd.f32 %v2814, %v2902
        %v2904 = vpop.f32.mrf.mxu0
        %v2905 = vadd.f32 %v2816, %v2904
        %2906 = vmatmul.bf16.gmra.mxu0 %v2452
        %v2907 = vpop.f32.mrf.mxu0
        %v2908 = vadd.f32 %v2819, %v2907
        %v2909 = vpop.f32.mrf.mxu0
        %v2910 = vadd.f32 %v2821, %v2909
        %2911 = vdwg.mxu0
        %s2912 = scalar_lea.vmem [#allocation2], 48
        %v2913 = vld [vmem:[%s2912] sm:$0xff]
        %v2914 = vld [vmem:[%s2912 + $0x8] sm:$0xf]
        %v2915 = vld [vmem:[%s2912 + $0xc] sm:$0xff]
        %v2916 = vld [vmem:[%s2912 + $0x14] sm:$0xf]
        %v2917 = vld [vmem:[%s2912 + $0x18] sm:$0xff]
        %v2918 = vld [vmem:[%s2912 + $0x20] sm:$0xf]
        %v2919 = vld [vmem:[%s2912 + $0x24] sm:$0xff]
        %v2920 = vld [vmem:[%s2912 + $0x2c] sm:$0xf]
        %v2921 = vld [vmem:[%s2912 + $0x30] sm:$0xff]
        %v2922 = vld [vmem:[%s2912 + $0x38] sm:$0xf]
        %v2923 = vld [vmem:[%s2912 + $0x3c] sm:$0xff]
        %v2924 = vld [vmem:[%s2912 + $0x44] sm:$0xf]
        %v2925 = vld [vmem:[%s2912 + $0x48] sm:$0xff]
        %v2926 = vld [vmem:[%s2912 + $0x50] sm:$0xf]
        %v2927 = vld [vmem:[%s2912 + $0x54] sm:$0xff]
        %v2928 = vld [vmem:[%s2912 + $0x5c] sm:$0xf]
        %v2929 = vld [vmem:[%s2912 + $0x60] sm:$0xff]
        %v2930 = vld [vmem:[%s2912 + $0x68] sm:$0xf]
        %v2931 = vld [vmem:[%s2912 + $0x6c] sm:$0xff]
        %v2932 = vld [vmem:[%s2912 + $0x74] sm:$0xf]
        %v2933 = vld [vmem:[%s2912 + $0x78] sm:$0xff]
        %v2934 = vld [vmem:[%s2912 + $0x80] sm:$0xf]
        %v2935 = vld [vmem:[%s2912 + $0x84] sm:$0xff]
        %v2936 = vld [vmem:[%s2912 + $0x8c] sm:$0xf]
        %v2937 = vld [vmem:[%s2912 + $0x90] sm:$0xff]
        %v2938 = vld [vmem:[%s2912 + $0x98] sm:$0xf]
        %v2939 = vld [vmem:[%s2912 + $0x9c] sm:$0xff]
        %v2940 = vld [vmem:[%s2912 + $0xa4] sm:$0xf]
        %v2941 = vld [vmem:[%s2912 + $0xa8] sm:$0xff]
        %v2942 = vld [vmem:[%s2912 + $0xb0] sm:$0xf]
        %v2943 = vld [vmem:[%s2912 + $0xb4] sm:$0xff]
        %v2944 = vld [vmem:[%s2912 + $0xbc] sm:$0xf]
        %v2945 = vld [vmem:[%s2912 + $0xc0] sm:$0xff]
        %v2946 = vld [vmem:[%s2912 + $0xc8] sm:$0xf]
        %v2947 = vld [vmem:[%s2912 + $0xcc] sm:$0xff]
        %v2948 = vld [vmem:[%s2912 + $0xd4] sm:$0xf]
        %v2949 = vld [vmem:[%s2912 + $0xd8] sm:$0xff]
        %v2950 = vld [vmem:[%s2912 + $0xe0] sm:$0xf]
        %v2951 = vld [vmem:[%s2912 + $0xe4] sm:$0xff]
        %v2952 = vld [vmem:[%s2912 + $0xec] sm:$0xf]
        %v2953 = vld [vmem:[%s2912 + $0xf0] sm:$0xff]
        %v2954 = vld [vmem:[%s2912 + $0xf8] sm:$0xf]
        %v2955 = vld [vmem:[%s2912 + $0xfc] sm:$0xff]
        %v2956 = vld [vmem:[%s2912 + $0x104] sm:$0xf]
        %v2957 = vld [vmem:[%s2912 + $0x108] sm:$0xff]
        %v2958 = vld [vmem:[%s2912 + $0x110] sm:$0xf]
        %v2959 = vld [vmem:[%s2912 + $0x114] sm:$0xff]
        %v2960 = vld [vmem:[%s2912 + $0x11c] sm:$0xf]
        %v2961 = vld [vmem:[%s2912 + $0x120] sm:$0xff]
        %v2962 = vld [vmem:[%s2912 + $0x128] sm:$0xf]
        %v2963 = vld [vmem:[%s2912 + $0x12c] sm:$0xff]
        %v2964 = vld [vmem:[%s2912 + $0x134] sm:$0xf]
        %v2965 = vld [vmem:[%s2912 + $0x138] sm:$0xff]
        %v2966 = vld [vmem:[%s2912 + $0x140] sm:$0xf]
        %v2967 = vld [vmem:[%s2912 + $0x144] sm:$0xff]
        %v2968 = vld [vmem:[%s2912 + $0x14c] sm:$0xf]
        %v2969 = vld [vmem:[%s2912 + $0x150] sm:$0xff]
        %v2970 = vld [vmem:[%s2912 + $0x158] sm:$0xf]
        %v2971 = vld [vmem:[%s2912 + $0x15c] sm:$0xff]
        %v2972 = vld [vmem:[%s2912 + $0x164] sm:$0xf]
        %v2973 = vld [vmem:[%s2912 + $0x168] sm:$0xff]
        %v2974 = vld [vmem:[%s2912 + $0x170] sm:$0xf]
        %v2975 = vld [vmem:[%s2912 + $0x174] sm:$0xff]
        %v2976 = vld [vmem:[%s2912 + $0x17c] sm:$0xf]
        %s2977 = scalar_lea.vmem [#allocation11], 384
        %v2978 = vld [vmem:[%s2977] sm:$0xf]
        %v2979 = vld [vmem:[%s2977 + $0x4] sm:$0xf]
        %v2980 = vld [vmem:[%s2977 + $0x8] sm:$0xf]
        %v2981 = vld [vmem:[%s2977 + $0xc] sm:$0xf]
        %v2982 = vld [vmem:[%s2977 + $0x10] sm:$0xf]
        %v2983 = vld [vmem:[%s2977 + $0x14] sm:$0xf]
        %v2984 = vld [vmem:[%s2977 + $0x18] sm:$0xf]
        %v2985 = vld [vmem:[%s2977 + $0x1c] sm:$0xf]
        %v2986 = vld [vmem:[%s2977 + $0x20] sm:$0xf]
        %v2987 = vld [vmem:[%s2977 + $0x24] sm:$0xf]
        %v2988 = vld [vmem:[%s2977 + $0x28] sm:$0xf]
        %v2989 = vld [vmem:[%s2977 + $0x2c] sm:$0xf]
        %v2990 = vld [vmem:[%s2977 + $0x30] sm:$0xf]
        %v2991 = vld [vmem:[%s2977 + $0x34] sm:$0xf]
        %v2992 = vld [vmem:[%s2977 + $0x38] sm:$0xf]
        %v2993 = vld [vmem:[%s2977 + $0x3c] sm:$0xf]
        %v2994 = vld [vmem:[%s2977 + $0x40] sm:$0xf]
        %v2995 = vld [vmem:[%s2977 + $0x44] sm:$0xf]
        %v2996 = vld [vmem:[%s2977 + $0x48] sm:$0xf]
        %v2997 = vld [vmem:[%s2977 + $0x4c] sm:$0xf]
        %v2998 = vld [vmem:[%s2977 + $0x50] sm:$0xf]
        %v2999 = vld [vmem:[%s2977 + $0x54] sm:$0xf]
        %v3000 = vld [vmem:[%s2977 + $0x58] sm:$0xf]
        %v3001 = vld [vmem:[%s2977 + $0x5c] sm:$0xf]
        %v3002 = vld [vmem:[%s2977 + $0x60] sm:$0xf]
        %v3003 = vld [vmem:[%s2977 + $0x64] sm:$0xf]
        %v3004 = vld [vmem:[%s2977 + $0x68] sm:$0xf]
        %v3005 = vld [vmem:[%s2977 + $0x6c] sm:$0xf]
        %v3006 = vld [vmem:[%s2977 + $0x70] sm:$0xf]
        %v3007 = vld [vmem:[%s2977 + $0x74] sm:$0xf]
        %v3008 = vld [vmem:[%s2977 + $0x78] sm:$0xf]
        %v3009 = vld [vmem:[%s2977 + $0x7c] sm:$0xf]
        %v3010 = vld [vmem:[%s2977 + $0x80] sm:$0xf]
        %v3011 = vld [vmem:[%s2977 + $0x84] sm:$0xf]
        %v3012 = vld [vmem:[%s2977 + $0x88] sm:$0xf]
        %v3013 = vld [vmem:[%s2977 + $0x8c] sm:$0xf]
        %v3014 = vld [vmem:[%s2977 + $0x90] sm:$0xf]
        %v3015 = vld [vmem:[%s2977 + $0x94] sm:$0xf]
        %v3016 = vld [vmem:[%s2977 + $0x98] sm:$0xf]
        %v3017 = vld [vmem:[%s2977 + $0x9c] sm:$0xf]
        %v3018 = vld [vmem:[%s2977 + $0xa0] sm:$0xf]
        %v3019 = vld [vmem:[%s2977 + $0xa4] sm:$0xf]
        %v3020 = vld [vmem:[%s2977 + $0xa8] sm:$0xf]
        %v3021 = vld [vmem:[%s2977 + $0xac] sm:$0xf]
        %v3022 = vld [vmem:[%s2977 + $0xb0] sm:$0xf]
        %v3023 = vld [vmem:[%s2977 + $0xb4] sm:$0xf]
        %v3024 = vld [vmem:[%s2977 + $0xb8] sm:$0xf]
        %v3025 = vld [vmem:[%s2977 + $0xbc] sm:$0xf]
        %v3090 = vunpack.c.l.b16 %v2913
        %v3091 = vunpack.c.h.b16 %v2913
        %v3092 = vunpack.c.l.b16 %v2914
        %v3093 = vunpack.c.l.b16 %v2915
        %v3094 = vunpack.c.h.b16 %v2915
        %v3095 = vunpack.c.l.b16 %v2916
        %v3096 = vunpack.c.l.b16 %v2917
        %v3097 = vunpack.c.h.b16 %v2917
        %v3098 = vunpack.c.l.b16 %v2918
        %v3099 = vunpack.c.l.b16 %v2919
        %v3100 = vunpack.c.h.b16 %v2919
        %v3101 = vunpack.c.l.b16 %v2920
        %v3102 = vunpack.c.l.b16 %v2921
        %v3103 = vunpack.c.h.b16 %v2921
        %v3104 = vunpack.c.l.b16 %v2922
        %v3105 = vunpack.c.l.b16 %v2923
        %v3106 = vunpack.c.h.b16 %v2923
        %v3107 = vunpack.c.l.b16 %v2924
        %v3108 = vunpack.c.l.b16 %v2925
        %v3109 = vunpack.c.h.b16 %v2925
        %v3110 = vunpack.c.l.b16 %v2926
        %v3111 = vunpack.c.l.b16 %v2927
        %v3112 = vunpack.c.h.b16 %v2927
        %v3113 = vunpack.c.l.b16 %v2928
        %v3114 = vunpack.c.l.b16 %v2929
        %v3115 = vunpack.c.h.b16 %v2929
        %v3116 = vunpack.c.l.b16 %v2930
        %v3117 = vunpack.c.l.b16 %v2931
        %v3118 = vunpack.c.h.b16 %v2931
        %v3119 = vunpack.c.l.b16 %v2932
        %v3120 = vunpack.c.l.b16 %v2933
        %v3121 = vunpack.c.h.b16 %v2933
        %v3122 = vunpack.c.l.b16 %v2934
        %v3123 = vunpack.c.l.b16 %v2935
        %v3124 = vunpack.c.h.b16 %v2935
        %v3125 = vunpack.c.l.b16 %v2936
        %v3126 = vunpack.c.l.b16 %v2937
        %v3127 = vunpack.c.h.b16 %v2937
        %v3128 = vunpack.c.l.b16 %v2938
        %v3129 = vunpack.c.l.b16 %v2939
        %v3130 = vunpack.c.h.b16 %v2939
        %v3131 = vunpack.c.l.b16 %v2940
        %v3132 = vunpack.c.l.b16 %v2941
        %v3133 = vunpack.c.h.b16 %v2941
        %v3134 = vunpack.c.l.b16 %v2942
        %v3135 = vunpack.c.l.b16 %v2943
        %v3136 = vunpack.c.h.b16 %v2943
        %v3137 = vunpack.c.l.b16 %v2944
        %v3138 = vunpack.c.l.b16 %v2945
        %v3139 = vunpack.c.h.b16 %v2945
        %v3140 = vunpack.c.l.b16 %v2946
        %v3141 = vunpack.c.l.b16 %v2947
        %v3142 = vunpack.c.h.b16 %v2947
        %v3143 = vunpack.c.l.b16 %v2948
        %v3144 = vunpack.c.l.b16 %v2949
        %v3145 = vunpack.c.h.b16 %v2949
        %v3146 = vunpack.c.l.b16 %v2950
        %v3147 = vunpack.c.l.b16 %v2951
        %v3148 = vunpack.c.h.b16 %v2951
        %v3149 = vunpack.c.l.b16 %v2952
        %v3150 = vunpack.c.l.b16 %v2953
        %v3151 = vunpack.c.h.b16 %v2953
        %v3152 = vunpack.c.l.b16 %v2954
        %v3153 = vunpack.c.l.b16 %v2955
        %v3154 = vunpack.c.h.b16 %v2955
        %v3155 = vunpack.c.l.b16 %v2956
        %v3156 = vunpack.c.l.b16 %v2957
        %v3157 = vunpack.c.h.b16 %v2957
        %v3158 = vunpack.c.l.b16 %v2958
        %v3159 = vunpack.c.l.b16 %v2959
        %v3160 = vunpack.c.h.b16 %v2959
        %v3161 = vunpack.c.l.b16 %v2960
        %v3162 = vunpack.c.l.b16 %v2961
        %v3163 = vunpack.c.h.b16 %v2961
        %v3164 = vunpack.c.l.b16 %v2962
        %v3165 = vunpack.c.l.b16 %v2963
        %v3166 = vunpack.c.h.b16 %v2963
        %v3167 = vunpack.c.l.b16 %v2964
        %v3168 = vunpack.c.l.b16 %v2965
        %v3169 = vunpack.c.h.b16 %v2965
        %v3170 = vunpack.c.l.b16 %v2966
        %v3171 = vunpack.c.l.b16 %v2967
        %v3172 = vunpack.c.h.b16 %v2967
        %v3173 = vunpack.c.l.b16 %v2968
        %v3174 = vunpack.c.l.b16 %v2969
        %v3175 = vunpack.c.h.b16 %v2969
        %v3176 = vunpack.c.l.b16 %v2970
        %v3177 = vunpack.c.l.b16 %v2971
        %v3178 = vunpack.c.h.b16 %v2971
        %v3179 = vunpack.c.l.b16 %v2972
        %v3180 = vunpack.c.l.b16 %v2973
        %v3181 = vunpack.c.h.b16 %v2973
        %v3182 = vunpack.c.l.b16 %v2974
        %v3183 = vunpack.c.l.b16 %v2975
        %v3184 = vunpack.c.h.b16 %v2975
        %v3185 = vunpack.c.l.b16 %v2976
        %v3186 = vpack.c.b16 %v3093, %v3090
        %v3187 = vpack.c.b16 %v3094, %v3091
        %v3188 = vpack.c.b16 %v3095, %v3092
        %v3189 = vpack.c.b16 %v3099, %v3096
        %v3190 = vpack.c.b16 %v3100, %v3097
        %v3191 = vpack.c.b16 %v3101, %v3098
        %v3192 = vpack.c.b16 %v3105, %v3102
        %v3193 = vpack.c.b16 %v3106, %v3103
        %v3194 = vpack.c.b16 %v3107, %v3104
        %v3195 = vpack.c.b16 %v3111, %v3108
        %v3196 = vpack.c.b16 %v3112, %v3109
        %v3197 = vpack.c.b16 %v3113, %v3110
        %v3198 = vpack.c.b16 %v3117, %v3114
        %v3199 = vpack.c.b16 %v3118, %v3115
        %v3200 = vpack.c.b16 %v3119, %v3116
        %v3201 = vpack.c.b16 %v3123, %v3120
        %v3202 = vpack.c.b16 %v3124, %v3121
        %v3203 = vpack.c.b16 %v3125, %v3122
        %v3204 = vpack.c.b16 %v3129, %v3126
        %v3205 = vpack.c.b16 %v3130, %v3127
        %v3206 = vpack.c.b16 %v3131, %v3128
        %v3207 = vpack.c.b16 %v3135, %v3132
        %v3208 = vpack.c.b16 %v3136, %v3133
        %v3209 = vpack.c.b16 %v3137, %v3134
        %v3210 = vpack.c.b16 %v3141, %v3138
        %v3211 = vpack.c.b16 %v3142, %v3139
        %v3212 = vpack.c.b16 %v3143, %v3140
        %v3213 = vpack.c.b16 %v3147, %v3144
        %v3214 = vpack.c.b16 %v3148, %v3145
        %v3215 = vpack.c.b16 %v3149, %v3146
        %v3216 = vpack.c.b16 %v3153, %v3150
        %v3217 = vpack.c.b16 %v3154, %v3151
        %v3218 = vpack.c.b16 %v3155, %v3152
        %v3219 = vpack.c.b16 %v3159, %v3156
        %v3220 = vpack.c.b16 %v3160, %v3157
        %v3221 = vpack.c.b16 %v3161, %v3158
        %v3222 = vpack.c.b16 %v3165, %v3162
        %v3223 = vpack.c.b16 %v3166, %v3163
        %v3224 = vpack.c.b16 %v3167, %v3164
        %v3225 = vpack.c.b16 %v3171, %v3168
        %v3226 = vpack.c.b16 %v3172, %v3169
        %v3227 = vpack.c.b16 %v3173, %v3170
        %v3228 = vpack.c.b16 %v3177, %v3174
        %v3229 = vpack.c.b16 %v3178, %v3175
        %v3230 = vpack.c.b16 %v3179, %v3176
        %v3231 = vpack.c.b16 %v3183, %v3180
        %v3232 = vpack.c.b16 %v3184, %v3181
        %v3233 = vpack.c.b16 %v3185, %v3182
        %v3330 = vunpack.c.l.b16 %v2978
        %v3331 = vunpack.c.l.b16 %v2979
        %v3332 = vunpack.c.l.b16 %v2980
        %v3333 = vunpack.c.l.b16 %v2981
        %v3334 = vunpack.c.l.b16 %v2982
        %v3335 = vunpack.c.l.b16 %v2983
        %v3336 = vunpack.c.l.b16 %v2984
        %v3337 = vunpack.c.l.b16 %v2985
        %v3338 = vunpack.c.l.b16 %v2986
        %v3339 = vunpack.c.l.b16 %v2987
        %v3340 = vunpack.c.l.b16 %v2988
        %v3341 = vunpack.c.l.b16 %v2989
        %v3342 = vunpack.c.l.b16 %v2990
        %v3343 = vunpack.c.l.b16 %v2991
        %v3344 = vunpack.c.l.b16 %v2992
        %v3345 = vunpack.c.l.b16 %v2993
        %v3346 = vunpack.c.l.b16 %v2994
        %v3347 = vunpack.c.l.b16 %v2995
        %v3348 = vunpack.c.l.b16 %v2996
        %v3349 = vunpack.c.l.b16 %v2997
        %v3350 = vunpack.c.l.b16 %v2998
        %v3351 = vunpack.c.l.b16 %v2999
        %v3352 = vunpack.c.l.b16 %v3000
        %v3353 = vunpack.c.l.b16 %v3001
        %v3354 = vunpack.c.l.b16 %v3002
        %v3355 = vunpack.c.l.b16 %v3003
        %v3356 = vunpack.c.l.b16 %v3004
        %v3357 = vunpack.c.l.b16 %v3005
        %v3358 = vunpack.c.l.b16 %v3006
        %v3359 = vunpack.c.l.b16 %v3007
        %v3360 = vunpack.c.l.b16 %v3008
        %v3361 = vunpack.c.l.b16 %v3009
        %v3362 = vunpack.c.l.b16 %v3010
        %v3363 = vunpack.c.l.b16 %v3011
        %v3364 = vunpack.c.l.b16 %v3012
        %v3365 = vunpack.c.l.b16 %v3013
        %v3366 = vunpack.c.l.b16 %v3014
        %v3367 = vunpack.c.l.b16 %v3015
        %v3368 = vunpack.c.l.b16 %v3016
        %v3369 = vunpack.c.l.b16 %v3017
        %v3370 = vunpack.c.l.b16 %v3018
        %v3371 = vunpack.c.l.b16 %v3019
        %v3372 = vunpack.c.l.b16 %v3020
        %v3373 = vunpack.c.l.b16 %v3021
        %v3374 = vunpack.c.l.b16 %v3022
        %v3375 = vunpack.c.l.b16 %v3023
        %v3376 = vunpack.c.l.b16 %v3024
        %v3377 = vunpack.c.l.b16 %v3025
        %v3378 = vpack.c.b16 %v3331, %v3330
        %v3379 = vpack.c.b16 %v3333, %v3332
        %v3380 = vpack.c.b16 %v3335, %v3334
        %v3381 = vpack.c.b16 %v3337, %v3336
        %v3382 = vpack.c.b16 %v3339, %v3338
        %v3383 = vpack.c.b16 %v3341, %v3340
        %v3384 = vpack.c.b16 %v3343, %v3342
        %v3385 = vpack.c.b16 %v3345, %v3344
        %v3386 = vpack.c.b16 %v3347, %v3346
        %v3387 = vpack.c.b16 %v3349, %v3348
        %v3388 = vpack.c.b16 %v3351, %v3350
        %v3389 = vpack.c.b16 %v3353, %v3352
        %v3390 = vpack.c.b16 %v3355, %v3354
        %v3391 = vpack.c.b16 %v3357, %v3356
        %v3392 = vpack.c.b16 %v3359, %v3358
        %v3393 = vpack.c.b16 %v3361, %v3360
        %v3394 = vpack.c.b16 %v3363, %v3362
        %v3395 = vpack.c.b16 %v3365, %v3364
        %v3396 = vpack.c.b16 %v3367, %v3366
        %v3397 = vpack.c.b16 %v3369, %v3368
        %v3398 = vpack.c.b16 %v3371, %v3370
        %v3399 = vpack.c.b16 %v3373, %v3372
        %v3400 = vpack.c.b16 %v3375, %v3374
        %v3401 = vpack.c.b16 %v3377, %v3376
        %3426 = vmatpush.bf16.msra.mxu0 %v3385
        %3427 = vmatpush.bf16.msra.mxu0 %v3384
        %3428 = vmatpush.bf16.msra.mxu0 %v3383
        %3429 = vmatpush.bf16.msra.mxu0 %v3382
        %3430 = vmatpush.bf16.msra.mxu0 %v3381
        %3431 = vmatpush.bf16.msra.mxu0 %v3380
        %3432 = vmatpush.bf16.msra.mxu0 %v3379
        %3433 = vmatpush.bf16.msra.mxu0 %v3378
        %3434 = vmatmul.bf16.gmra.mxu0 %v3186
        %v3435 = vpop.f32.mrf.mxu0
        %v3436 = vadd.f32 0.0, %v3435
        %v3437 = vpop.f32.mrf.mxu0
        %v3438 = vadd.f32 0.0, %v3437
        %3439 = vmatmul.bf16.gmra.mxu0 %v3189
        %v3440 = vpop.f32.mrf.mxu0
        %v3441 = vadd.f32 0.0, %v3440
        %v3442 = vpop.f32.mrf.mxu0
        %v3443 = vadd.f32 0.0, %v3442
        %3444 = vmatmul.bf16.gmra.mxu0 %v3192
        %v3445 = vpop.f32.mrf.mxu0
        %v3446 = vadd.f32 0.0, %v3445
        %v3447 = vpop.f32.mrf.mxu0
        %v3448 = vadd.f32 0.0, %v3447
        %3449 = vmatmul.bf16.gmra.mxu0 %v3195
        %v3450 = vpop.f32.mrf.mxu0
        %v3451 = vadd.f32 0.0, %v3450
        %v3452 = vpop.f32.mrf.mxu0
        %v3453 = vadd.f32 0.0, %v3452
        %3454 = vmatmul.bf16.gmra.mxu0 %v3198
        %v3455 = vpop.f32.mrf.mxu0
        %v3456 = vadd.f32 0.0, %v3455
        %v3457 = vpop.f32.mrf.mxu0
        %v3458 = vadd.f32 0.0, %v3457
        %3459 = vmatmul.bf16.gmra.mxu0 %v3201
        %v3460 = vpop.f32.mrf.mxu0
        %v3461 = vadd.f32 0.0, %v3460
        %v3462 = vpop.f32.mrf.mxu0
        %v3463 = vadd.f32 0.0, %v3462
        %3464 = vmatmul.bf16.gmra.mxu0 %v3204
        %v3465 = vpop.f32.mrf.mxu0
        %v3466 = vadd.f32 0.0, %v3465
        %v3467 = vpop.f32.mrf.mxu0
        %v3468 = vadd.f32 0.0, %v3467
        %3469 = vmatmul.bf16.gmra.mxu0 %v3207
        %v3470 = vpop.f32.mrf.mxu0
        %v3471 = vadd.f32 0.0, %v3470
        %v3472 = vpop.f32.mrf.mxu0
        %v3473 = vadd.f32 0.0, %v3472
        %3474 = vmatmul.bf16.gmra.mxu0 %v3210
        %v3475 = vpop.f32.mrf.mxu0
        %v3476 = vadd.f32 0.0, %v3475
        %v3477 = vpop.f32.mrf.mxu0
        %v3478 = vadd.f32 0.0, %v3477
        %3479 = vmatmul.bf16.gmra.mxu0 %v3213
        %v3480 = vpop.f32.mrf.mxu0
        %v3481 = vadd.f32 0.0, %v3480
        %v3482 = vpop.f32.mrf.mxu0
        %v3483 = vadd.f32 0.0, %v3482
        %3484 = vmatmul.bf16.gmra.mxu0 %v3216
        %v3485 = vpop.f32.mrf.mxu0
        %v3486 = vadd.f32 0.0, %v3485
        %v3487 = vpop.f32.mrf.mxu0
        %v3488 = vadd.f32 0.0, %v3487
        %3489 = vmatmul.bf16.gmra.mxu0 %v3219
        %v3490 = vpop.f32.mrf.mxu0
        %v3491 = vadd.f32 0.0, %v3490
        %v3492 = vpop.f32.mrf.mxu0
        %v3493 = vadd.f32 0.0, %v3492
        %3494 = vmatmul.bf16.gmra.mxu0 %v3222
        %v3495 = vpop.f32.mrf.mxu0
        %v3496 = vadd.f32 0.0, %v3495
        %v3497 = vpop.f32.mrf.mxu0
        %v3498 = vadd.f32 0.0, %v3497
        %3499 = vmatmul.bf16.gmra.mxu0 %v3225
        %v3500 = vpop.f32.mrf.mxu0
        %v3501 = vadd.f32 0.0, %v3500
        %v3502 = vpop.f32.mrf.mxu0
        %v3503 = vadd.f32 0.0, %v3502
        %3504 = vmatmul.bf16.gmra.mxu0 %v3228
        %v3505 = vpop.f32.mrf.mxu0
        %v3506 = vadd.f32 0.0, %v3505
        %v3507 = vpop.f32.mrf.mxu0
        %v3508 = vadd.f32 0.0, %v3507
        %3509 = vmatmul.bf16.gmra.mxu0 %v3231
        %v3510 = vpop.f32.mrf.mxu0
        %v3511 = vadd.f32 0.0, %v3510
        %v3512 = vpop.f32.mrf.mxu0
        %v3513 = vadd.f32 0.0, %v3512
        %3514 = vdwg.mxu0
        %3515 = vmatpush.bf16.msra.mxu0 %v3393
        %3516 = vmatpush.bf16.msra.mxu0 %v3392
        %3517 = vmatpush.bf16.msra.mxu0 %v3391
        %3518 = vmatpush.bf16.msra.mxu0 %v3390
        %3519 = vmatpush.bf16.msra.mxu0 %v3389
        %3520 = vmatpush.bf16.msra.mxu0 %v3388
        %3521 = vmatpush.bf16.msra.mxu0 %v3387
        %3522 = vmatpush.bf16.msra.mxu0 %v3386
        %3523 = vmatmul.bf16.gmra.mxu0 %v3187
        %v3524 = vpop.f32.mrf.mxu0
        %v3525 = vadd.f32 %v3436, %v3524
        %v3526 = vpop.f32.mrf.mxu0
        %v3527 = vadd.f32 %v3438, %v3526
        %3528 = vmatmul.bf16.gmra.mxu0 %v3190
        %v3529 = vpop.f32.mrf.mxu0
        %v3530 = vadd.f32 %v3441, %v3529
        %v3531 = vpop.f32.mrf.mxu0
        %v3532 = vadd.f32 %v3443, %v3531
        %3533 = vmatmul.bf16.gmra.mxu0 %v3193
        %v3534 = vpop.f32.mrf.mxu0
        %v3535 = vadd.f32 %v3446, %v3534
        %v3536 = vpop.f32.mrf.mxu0
        %v3537 = vadd.f32 %v3448, %v3536
        %3538 = vmatmul.bf16.gmra.mxu0 %v3196
        %v3539 = vpop.f32.mrf.mxu0
        %v3540 = vadd.f32 %v3451, %v3539
        %v3541 = vpop.f32.mrf.mxu0
        %v3542 = vadd.f32 %v3453, %v3541
        %3543 = vmatmul.bf16.gmra.mxu0 %v3199
        %v3544 = vpop.f32.mrf.mxu0
        %v3545 = vadd.f32 %v3456, %v3544
        %v3546 = vpop.f32.mrf.mxu0
        %v3547 = vadd.f32 %v3458, %v3546
        %3548 = vmatmul.bf16.gmra.mxu0 %v3202
        %v3549 = vpop.f32.mrf.mxu0
        %v3550 = vadd.f32 %v3461, %v3549
        %v3551 = vpop.f32.mrf.mxu0
        %v3552 = vadd.f32 %v3463, %v3551
        %3553 = vmatmul.bf16.gmra.mxu0 %v3205
        %v3554 = vpop.f32.mrf.mxu0
        %v3555 = vadd.f32 %v3466, %v3554
        %v3556 = vpop.f32.mrf.mxu0
        %v3557 = vadd.f32 %v3468, %v3556
        %3558 = vmatmul.bf16.gmra.mxu0 %v3208
        %v3559 = vpop.f32.mrf.mxu0
        %v3560 = vadd.f32 %v3471, %v3559
        %v3561 = vpop.f32.mrf.mxu0
        %v3562 = vadd.f32 %v3473, %v3561
        %3563 = vmatmul.bf16.gmra.mxu0 %v3211
        %v3564 = vpop.f32.mrf.mxu0
        %v3565 = vadd.f32 %v3476, %v3564
        %v3566 = vpop.f32.mrf.mxu0
        %v3567 = vadd.f32 %v3478, %v3566
        %3568 = vmatmul.bf16.gmra.mxu0 %v3214
        %v3569 = vpop.f32.mrf.mxu0
        %v3570 = vadd.f32 %v3481, %v3569
        %v3571 = vpop.f32.mrf.mxu0
        %v3572 = vadd.f32 %v3483, %v3571
        %3573 = vmatmul.bf16.gmra.mxu0 %v3217
        %v3574 = vpop.f32.mrf.mxu0
        %v3575 = vadd.f32 %v3486, %v3574
        %v3576 = vpop.f32.mrf.mxu0
        %v3577 = vadd.f32 %v3488, %v3576
        %3578 = vmatmul.bf16.gmra.mxu0 %v3220
        %v3579 = vpop.f32.mrf.mxu0
        %v3580 = vadd.f32 %v3491, %v3579
        %v3581 = vpop.f32.mrf.mxu0
        %v3582 = vadd.f32 %v3493, %v3581
        %3583 = vmatmul.bf16.gmra.mxu0 %v3223
        %v3584 = vpop.f32.mrf.mxu0
        %v3585 = vadd.f32 %v3496, %v3584
        %v3586 = vpop.f32.mrf.mxu0
        %v3587 = vadd.f32 %v3498, %v3586
        %3588 = vmatmul.bf16.gmra.mxu0 %v3226
        %v3589 = vpop.f32.mrf.mxu0
        %v3590 = vadd.f32 %v3501, %v3589
        %v3591 = vpop.f32.mrf.mxu0
        %v3592 = vadd.f32 %v3503, %v3591
        %3593 = vmatmul.bf16.gmra.mxu0 %v3229
        %v3594 = vpop.f32.mrf.mxu0
        %v3595 = vadd.f32 %v3506, %v3594
        %v3596 = vpop.f32.mrf.mxu0
        %v3597 = vadd.f32 %v3508, %v3596
        %3598 = vmatmul.bf16.gmra.mxu0 %v3232
        %v3599 = vpop.f32.mrf.mxu0
        %v3600 = vadd.f32 %v3511, %v3599
        %v3601 = vpop.f32.mrf.mxu0
        %v3602 = vadd.f32 %v3513, %v3601
        %3603 = vdwg.mxu0
        %3604 = vmatpush.bf16.msra.mxu0 %v3401
        %3605 = vmatpush.bf16.msra.mxu0 %v3400
        %3606 = vmatpush.bf16.msra.mxu0 %v3399
        %3607 = vmatpush.bf16.msra.mxu0 %v3398
        %3608 = vmatpush.bf16.msra.mxu0 %v3397
        %3609 = vmatpush.bf16.msra.mxu0 %v3396
        %3610 = vmatpush.bf16.msra.mxu0 %v3395
        %3611 = vmatpush.bf16.msra.mxu0 %v3394
        %3612 = vmatmul.bf16.gmra.mxu0 %v3188
        %v3613 = vpop.f32.mrf.mxu0
        %v3614 = vadd.f32 %v3525, %v3613
        %v3615 = vpop.f32.mrf.mxu0
        %v3616 = vadd.f32 %v3527, %v3615
        %3617 = vmatmul.bf16.gmra.mxu0 %v3191
        %v3618 = vpop.f32.mrf.mxu0
        %v3619 = vadd.f32 %v3530, %v3618
        %v3620 = vpop.f32.mrf.mxu0
        %v3621 = vadd.f32 %v3532, %v3620
        %3622 = vmatmul.bf16.gmra.mxu0 %v3194
        %v3623 = vpop.f32.mrf.mxu0
        %v3624 = vadd.f32 %v3535, %v3623
        %v3625 = vpop.f32.mrf.mxu0
        %v3626 = vadd.f32 %v3537, %v3625
        %3627 = vmatmul.bf16.gmra.mxu0 %v3197
        %v3628 = vpop.f32.mrf.mxu0
        %v3629 = vadd.f32 %v3540, %v3628
        %v3630 = vpop.f32.mrf.mxu0
        %v3631 = vadd.f32 %v3542, %v3630
        %3632 = vmatmul.bf16.gmra.mxu0 %v3200
        %v3633 = vpop.f32.mrf.mxu0
        %v3634 = vadd.f32 %v3545, %v3633
        %v3635 = vpop.f32.mrf.mxu0
        %v3636 = vadd.f32 %v3547, %v3635
        %3637 = vmatmul.bf16.gmra.mxu0 %v3203
        %v3638 = vpop.f32.mrf.mxu0
        %v3639 = vadd.f32 %v3550, %v3638
        %v3640 = vpop.f32.mrf.mxu0
        %v3641 = vadd.f32 %v3552, %v3640
        %3642 = vmatmul.bf16.gmra.mxu0 %v3206
        %v3643 = vpop.f32.mrf.mxu0
        %v3644 = vadd.f32 %v3555, %v3643
        %v3645 = vpop.f32.mrf.mxu0
        %v3646 = vadd.f32 %v3557, %v3645
        %3647 = vmatmul.bf16.gmra.mxu0 %v3209
        %v3648 = vpop.f32.mrf.mxu0
        %v3649 = vadd.f32 %v3560, %v3648
        %v3650 = vpop.f32.mrf.mxu0
        %v3651 = vadd.f32 %v3562, %v3650
        %3652 = vmatmul.bf16.gmra.mxu0 %v3212
        %v3653 = vpop.f32.mrf.mxu0
        %v3654 = vadd.f32 %v3565, %v3653
        %v3655 = vpop.f32.mrf.mxu0
        %v3656 = vadd.f32 %v3567, %v3655
        %3657 = vmatmul.bf16.gmra.mxu0 %v3215
        %v3658 = vpop.f32.mrf.mxu0
        %v3659 = vadd.f32 %v3570, %v3658
        %v3660 = vpop.f32.mrf.mxu0
        %v3661 = vadd.f32 %v3572, %v3660
        %3662 = vmatmul.bf16.gmra.mxu0 %v3218
        %v3663 = vpop.f32.mrf.mxu0
        %v3664 = vadd.f32 %v3575, %v3663
        %v3665 = vpop.f32.mrf.mxu0
        %v3666 = vadd.f32 %v3577, %v3665
        %3667 = vmatmul.bf16.gmra.mxu0 %v3221
        %v3668 = vpop.f32.mrf.mxu0
        %v3669 = vadd.f32 %v3580, %v3668
        %v3670 = vpop.f32.mrf.mxu0
        %v3671 = vadd.f32 %v3582, %v3670
        %3672 = vmatmul.bf16.gmra.mxu0 %v3224
        %v3673 = vpop.f32.mrf.mxu0
        %v3674 = vadd.f32 %v3585, %v3673
        %v3675 = vpop.f32.mrf.mxu0
        %v3676 = vadd.f32 %v3587, %v3675
        %3677 = vmatmul.bf16.gmra.mxu0 %v3227
        %v3678 = vpop.f32.mrf.mxu0
        %v3679 = vadd.f32 %v3590, %v3678
        %v3680 = vpop.f32.mrf.mxu0
        %v3681 = vadd.f32 %v3592, %v3680
        %3682 = vmatmul.bf16.gmra.mxu0 %v3230
        %v3683 = vpop.f32.mrf.mxu0
        %v3684 = vadd.f32 %v3595, %v3683
        %v3685 = vpop.f32.mrf.mxu0
        %v3686 = vadd.f32 %v3597, %v3685
        %3687 = vmatmul.bf16.gmra.mxu0 %v3233
        %v3688 = vpop.f32.mrf.mxu0
        %v3689 = vadd.f32 %v3600, %v3688
        %v3690 = vpop.f32.mrf.mxu0
        %v3691 = vadd.f32 %v3602, %v3690
        %3692 = vdwg.mxu0
        %v3693 = vadd.f32 %v2833, %v3614
        %v3694 = vadd.f32 %v2835, %v3616
        %v3695 = vadd.f32 %v2838, %v3619
        %v3696 = vadd.f32 %v2840, %v3621
        %v3697 = vadd.f32 %v2843, %v3624
        %v3698 = vadd.f32 %v2845, %v3626
        %v3699 = vadd.f32 %v2848, %v3629
        %v3700 = vadd.f32 %v2850, %v3631
        %v3701 = vadd.f32 %v2853, %v3634
        %v3702 = vadd.f32 %v2855, %v3636
        %v3703 = vadd.f32 %v2858, %v3639
        %v3704 = vadd.f32 %v2860, %v3641
        %v3705 = vadd.f32 %v2863, %v3644
        %v3706 = vadd.f32 %v2865, %v3646
        %v3707 = vadd.f32 %v2868, %v3649
        %v3708 = vadd.f32 %v2870, %v3651
        %v3709 = vadd.f32 %v2873, %v3654
        %v3710 = vadd.f32 %v2875, %v3656
        %v3711 = vadd.f32 %v2878, %v3659
        %v3712 = vadd.f32 %v2880, %v3661
        %v3713 = vadd.f32 %v2883, %v3664
        %v3714 = vadd.f32 %v2885, %v3666
        %v3715 = vadd.f32 %v2888, %v3669
        %v3716 = vadd.f32 %v2890, %v3671
        %v3717 = vadd.f32 %v2893, %v3674
        %v3718 = vadd.f32 %v2895, %v3676
        %v3719 = vadd.f32 %v2898, %v3679
        %v3720 = vadd.f32 %v2900, %v3681
        %v3721 = vadd.f32 %v2903, %v3684
        %v3722 = vadd.f32 %v2905, %v3686
        %v3723 = vadd.f32 %v2908, %v3689
        %v3724 = vadd.f32 %v2910, %v3691
        %v3725 = vld [vmem:[%s6] sm:$0x1]
        %v3727 = vperm.slane %v3725, 0
        %v3729 = vadd.f32 %v3693, %v3727
        %v3730 = vadd.f32 %v3694, %v3727
        %v3731 = vadd.f32 %v3695, %v3727
        %v3732 = vadd.f32 %v3696, %v3727
        %v3733 = vadd.f32 %v3697, %v3727
        %v3734 = vadd.f32 %v3698, %v3727
        %v3735 = vadd.f32 %v3699, %v3727
        %v3736 = vadd.f32 %v3700, %v3727
        %v3737 = vadd.f32 %v3701, %v3727
        %v3738 = vadd.f32 %v3702, %v3727
        %v3739 = vadd.f32 %v3703, %v3727
        %v3740 = vadd.f32 %v3704, %v3727
        %v3741 = vadd.f32 %v3705, %v3727
        %v3742 = vadd.f32 %v3706, %v3727
        %v3743 = vadd.f32 %v3707, %v3727
        %v3744 = vadd.f32 %v3708, %v3727
        %v3745 = vadd.f32 %v3709, %v3727
        %v3746 = vadd.f32 %v3710, %v3727
        %v3747 = vadd.f32 %v3711, %v3727
        %v3748 = vadd.f32 %v3712, %v3727
        %v3749 = vadd.f32 %v3713, %v3727
        %v3750 = vadd.f32 %v3714, %v3727
        %v3751 = vadd.f32 %v3715, %v3727
        %v3752 = vadd.f32 %v3716, %v3727
        %v3753 = vadd.f32 %v3717, %v3727
        %v3754 = vadd.f32 %v3718, %v3727
        %v3755 = vadd.f32 %v3719, %v3727
        %v3756 = vadd.f32 %v3720, %v3727
        %v3757 = vadd.f32 %v3721, %v3727
        %v3758 = vadd.f32 %v3722, %v3727
        %v3759 = vadd.f32 %v3723, %v3727
        %v3760 = vadd.f32 %v3724, %v3727
        %v3761 = vadd.f32 %v3729, 3.0
        %v3762 = vadd.f32 %v3730, 3.0
        %v3763 = vadd.f32 %v3731, 3.0
        %v3764 = vadd.f32 %v3732, 3.0
        %v3765 = vadd.f32 %v3733, 3.0
        %v3766 = vadd.f32 %v3734, 3.0
        %v3767 = vadd.f32 %v3735, 3.0
        %v3768 = vadd.f32 %v3736, 3.0
        %v3769 = vadd.f32 %v3737, 3.0
        %v3770 = vadd.f32 %v3738, 3.0
        %v3771 = vadd.f32 %v3739, 3.0
        %v3772 = vadd.f32 %v3740, 3.0
        %v3773 = vadd.f32 %v3741, 3.0
        %v3774 = vadd.f32 %v3742, 3.0
        %v3775 = vadd.f32 %v3743, 3.0
        %v3776 = vadd.f32 %v3744, 3.0
        %v3777 = vadd.f32 %v3745, 3.0
        %v3778 = vadd.f32 %v3746, 3.0
        %v3779 = vadd.f32 %v3747, 3.0
        %v3780 = vadd.f32 %v3748, 3.0
        %v3781 = vadd.f32 %v3749, 3.0
        %v3782 = vadd.f32 %v3750, 3.0
        %v3783 = vadd.f32 %v3751, 3.0
        %v3784 = vadd.f32 %v3752, 3.0
        %v3785 = vadd.f32 %v3753, 3.0
        %v3786 = vadd.f32 %v3754, 3.0
        %v3787 = vadd.f32 %v3755, 3.0
        %v3788 = vadd.f32 %v3756, 3.0
        %v3789 = vadd.f32 %v3757, 3.0
        %v3790 = vadd.f32 %v3758, 3.0
        %v3791 = vadd.f32 %v3759, 3.0
        %v3792 = vadd.f32 %v3760, 3.0
        %v3793 = vmax.f32 %v3761, 0.0
        %v3794 = vmax.f32 %v3762, 0.0
        %v3795 = vmax.f32 %v3763, 0.0
        %v3796 = vmax.f32 %v3764, 0.0
        %v3797 = vmax.f32 %v3765, 0.0
        %v3798 = vmax.f32 %v3766, 0.0
        %v3799 = vmax.f32 %v3767, 0.0
        %v3800 = vmax.f32 %v3768, 0.0
        %v3801 = vmax.f32 %v3769, 0.0
        %v3802 = vmax.f32 %v3770, 0.0
        %v3803 = vmax.f32 %v3771, 0.0
        %v3804 = vmax.f32 %v3772, 0.0
        %v3805 = vmax.f32 %v3773, 0.0
        %v3806 = vmax.f32 %v3774, 0.0
        %v3807 = vmax.f32 %v3775, 0.0
        %v3808 = vmax.f32 %v3776, 0.0
        %v3809 = vmax.f32 %v3777, 0.0
        %v3810 = vmax.f32 %v3778, 0.0
        %v3811 = vmax.f32 %v3779, 0.0
        %v3812 = vmax.f32 %v3780, 0.0
        %v3813 = vmax.f32 %v3781, 0.0
        %v3814 = vmax.f32 %v3782, 0.0
        %v3815 = vmax.f32 %v3783, 0.0
        %v3816 = vmax.f32 %v3784, 0.0
        %v3817 = vmax.f32 %v3785, 0.0
        %v3818 = vmax.f32 %v3786, 0.0
        %v3819 = vmax.f32 %v3787, 0.0
        %v3820 = vmax.f32 %v3788, 0.0
        %v3821 = vmax.f32 %v3789, 0.0
        %v3822 = vmax.f32 %v3790, 0.0
        %v3823 = vmax.f32 %v3791, 0.0
        %v3824 = vmax.f32 %v3792, 0.0
        %v3825 = vmin.f32 %v3793, 6.0
        %v3826 = vmin.f32 %v3794, 6.0
        %v3827 = vmin.f32 %v3795, 6.0
        %v3828 = vmin.f32 %v3796, 6.0
        %v3829 = vmin.f32 %v3797, 6.0
        %v3830 = vmin.f32 %v3798, 6.0
        %v3831 = vmin.f32 %v3799, 6.0
        %v3832 = vmin.f32 %v3800, 6.0
        %v3833 = vmin.f32 %v3801, 6.0
        %v3834 = vmin.f32 %v3802, 6.0
        %v3835 = vmin.f32 %v3803, 6.0
        %v3836 = vmin.f32 %v3804, 6.0
        %v3837 = vmin.f32 %v3805, 6.0
        %v3838 = vmin.f32 %v3806, 6.0
        %v3839 = vmin.f32 %v3807, 6.0
        %v3840 = vmin.f32 %v3808, 6.0
        %v3841 = vmin.f32 %v3809, 6.0
        %v3842 = vmin.f32 %v3810, 6.0
        %v3843 = vmin.f32 %v3811, 6.0
        %v3844 = vmin.f32 %v3812, 6.0
        %v3845 = vmin.f32 %v3813, 6.0
        %v3846 = vmin.f32 %v3814, 6.0
        %v3847 = vmin.f32 %v3815, 6.0
        %v3848 = vmin.f32 %v3816, 6.0
        %v3849 = vmin.f32 %v3817, 6.0
        %v3850 = vmin.f32 %v3818, 6.0
        %v3851 = vmin.f32 %v3819, 6.0
        %v3852 = vmin.f32 %v3820, 6.0
        %v3853 = vmin.f32 %v3821, 6.0
        %v3854 = vmin.f32 %v3822, 6.0
        %v3855 = vmin.f32 %v3823, 6.0
        %v3856 = vmin.f32 %v3824, 6.0
        %v3857 = vmul.f32 %v3729, %v3825
        %v3858 = vmul.f32 %v3730, %v3826
        %v3859 = vmul.f32 %v3731, %v3827
        %v3860 = vmul.f32 %v3732, %v3828
        %v3861 = vmul.f32 %v3733, %v3829
        %v3862 = vmul.f32 %v3734, %v3830
        %v3863 = vmul.f32 %v3735, %v3831
        %v3864 = vmul.f32 %v3736, %v3832
        %v3865 = vmul.f32 %v3737, %v3833
        %v3866 = vmul.f32 %v3738, %v3834
        %v3867 = vmul.f32 %v3739, %v3835
        %v3868 = vmul.f32 %v3740, %v3836
        %v3869 = vmul.f32 %v3741, %v3837
        %v3870 = vmul.f32 %v3742, %v3838
        %v3871 = vmul.f32 %v3743, %v3839
        %v3872 = vmul.f32 %v3744, %v3840
        %v3873 = vmul.f32 %v3745, %v3841
        %v3874 = vmul.f32 %v3746, %v3842
        %v3875 = vmul.f32 %v3747, %v3843
        %v3876 = vmul.f32 %v3748, %v3844
        %v3877 = vmul.f32 %v3749, %v3845
        %v3878 = vmul.f32 %v3750, %v3846
        %v3879 = vmul.f32 %v3751, %v3847
        %v3880 = vmul.f32 %v3752, %v3848
        %v3881 = vmul.f32 %v3753, %v3849
        %v3882 = vmul.f32 %v3754, %v3850
        %v3883 = vmul.f32 %v3755, %v3851
        %v3884 = vmul.f32 %v3756, %v3852
        %v3885 = vmul.f32 %v3757, %v3853
        %v3886 = vmul.f32 %v3758, %v3854
        %v3887 = vmul.f32 %v3759, %v3855
        %v3888 = vmul.f32 %v3760, %v3856
        %v3889 = vmul.f32 %v3857, %v904
        %v3890 = vmul.f32 %v3858, %v904
        %v3891 = vmul.f32 %v3859, %v904
        %v3892 = vmul.f32 %v3860, %v904
        %v3893 = vmul.f32 %v3861, %v904
        %v3894 = vmul.f32 %v3862, %v904
        %v3895 = vmul.f32 %v3863, %v904
        %v3896 = vmul.f32 %v3864, %v904
        %v3897 = vmul.f32 %v3865, %v904
        %v3898 = vmul.f32 %v3866, %v904
        %v3899 = vmul.f32 %v3867, %v904
        %v3900 = vmul.f32 %v3868, %v904
        %v3901 = vmul.f32 %v3869, %v904
        %v3902 = vmul.f32 %v3870, %v904
        %v3903 = vmul.f32 %v3871, %v904
        %v3904 = vmul.f32 %v3872, %v904
        %v3905 = vmul.f32 %v3873, %v904
        %v3906 = vmul.f32 %v3874, %v904
        %v3907 = vmul.f32 %v3875, %v904
        %v3908 = vmul.f32 %v3876, %v904
        %v3909 = vmul.f32 %v3877, %v904
        %v3910 = vmul.f32 %v3878, %v904
        %v3911 = vmul.f32 %v3879, %v904
        %v3912 = vmul.f32 %v3880, %v904
        %v3913 = vmul.f32 %v3881, %v904
        %v3914 = vmul.f32 %v3882, %v904
        %v3915 = vmul.f32 %v3883, %v904
        %v3916 = vmul.f32 %v3884, %v904
        %v3917 = vmul.f32 %v3885, %v904
        %v3918 = vmul.f32 %v3886, %v904
        %v3919 = vmul.f32 %v3887, %v904
        %v3920 = vmul.f32 %v3888, %v904
        %v3921 = vunpack.c.l.bf16 %v443
        %v3922 = vunpack.c.l.bf16 %v444
        %v3923 = vunpack.c.l.bf16 %v445
        %v3924 = vunpack.c.l.bf16 %v446
        %v3925 = vunpack.c.l.bf16 %v447
        %v3926 = vunpack.c.l.bf16 %v448
        %v3927 = vunpack.c.l.bf16 %v449
        %v3928 = vunpack.c.l.bf16 %v450
        %v3929 = vunpack.c.l.bf16 %v451
        %v3930 = vunpack.c.l.bf16 %v452
        %v3931 = vunpack.c.l.bf16 %v453
        %v3932 = vunpack.c.l.bf16 %v454
        %v3933 = vunpack.c.l.bf16 %v455
        %v3934 = vunpack.c.l.bf16 %v456
        %v3935 = vunpack.c.l.bf16 %v457
        %v3936 = vunpack.c.l.bf16 %v458
        %v3937 = vunpack.c.l.bf16 %v459
        %v3938 = vunpack.c.l.bf16 %v460
        %v3939 = vunpack.c.l.bf16 %v461
        %v3940 = vunpack.c.l.bf16 %v462
        %v3941 = vunpack.c.l.bf16 %v463
        %v3942 = vunpack.c.l.bf16 %v464
        %v3943 = vunpack.c.l.bf16 %v465
        %v3944 = vunpack.c.l.bf16 %v466
        %v3945 = vunpack.c.l.bf16 %v467
        %v3946 = vunpack.c.l.bf16 %v468
        %v3947 = vunpack.c.l.bf16 %v469
        %v3948 = vunpack.c.l.bf16 %v470
        %v3949 = vunpack.c.l.bf16 %v471
        %v3950 = vunpack.c.l.bf16 %v472
        %v3951 = vunpack.c.l.bf16 %v473
        %v3952 = vunpack.c.l.bf16 %v474
        %v3953 = vadd.f32 %v3889, %v3921
        %v3954 = vadd.f32 %v3890, %v3922
        %v3955 = vadd.f32 %v3891, %v3923
        %v3956 = vadd.f32 %v3892, %v3924
        %v3957 = vadd.f32 %v3893, %v3925
        %v3958 = vadd.f32 %v3894, %v3926
        %v3959 = vadd.f32 %v3895, %v3927
        %v3960 = vadd.f32 %v3896, %v3928
        %v3961 = vadd.f32 %v3897, %v3929
        %v3962 = vadd.f32 %v3898, %v3930
        %v3963 = vadd.f32 %v3899, %v3931
        %v3964 = vadd.f32 %v3900, %v3932
        %v3965 = vadd.f32 %v3901, %v3933
        %v3966 = vadd.f32 %v3902, %v3934
        %v3967 = vadd.f32 %v3903, %v3935
        %v3968 = vadd.f32 %v3904, %v3936
        %v3969 = vadd.f32 %v3905, %v3937
        %v3970 = vadd.f32 %v3906, %v3938
        %v3971 = vadd.f32 %v3907, %v3939
        %v3972 = vadd.f32 %v3908, %v3940
        %v3973 = vadd.f32 %v3909, %v3941
        %v3974 = vadd.f32 %v3910, %v3942
        %v3975 = vadd.f32 %v3911, %v3943
        %v3976 = vadd.f32 %v3912, %v3944
        %v3977 = vadd.f32 %v3913, %v3945
        %v3978 = vadd.f32 %v3914, %v3946
        %v3979 = vadd.f32 %v3915, %v3947
        %v3980 = vadd.f32 %v3916, %v3948
        %v3981 = vadd.f32 %v3917, %v3949
        %v3982 = vadd.f32 %v3918, %v3950
        %v3983 = vadd.f32 %v3919, %v3951
        %v3984 = vadd.f32 %v3920, %v3952
        %3985 = vst [vmem:[%s439] sm:$0xff] %v3953
        %3986 = vst [vmem:[%s439 + $0x8] sm:$0xff] %v3954
        %3987 = vst [vmem:[%s439 + $0x10] sm:$0xff] %v3955
        %3988 = vst [vmem:[%s439 + $0x18] sm:$0xff] %v3956
        %3989 = vst [vmem:[%s439 + $0x20] sm:$0xff] %v3957
        %3990 = vst [vmem:[%s439 + $0x28] sm:$0xff] %v3958
        %3991 = vst [vmem:[%s439 + $0x30] sm:$0xff] %v3959
        %3992 = vst [vmem:[%s439 + $0x38] sm:$0xff] %v3960
        %3993 = vst [vmem:[%s439 + $0x40] sm:$0xff] %v3961
        %3994 = vst [vmem:[%s439 + $0x48] sm:$0xff] %v3962
        %3995 = vst [vmem:[%s439 + $0x50] sm:$0xff] %v3963
        %3996 = vst [vmem:[%s439 + $0x58] sm:$0xff] %v3964
        %3997 = vst [vmem:[%s439 + $0x60] sm:$0xff] %v3965
        %3998 = vst [vmem:[%s439 + $0x68] sm:$0xff] %v3966
        %3999 = vst [vmem:[%s439 + $0x70] sm:$0xff] %v3967
        %4000 = vst [vmem:[%s439 + $0x78] sm:$0xff] %v3968
        %4001 = vst [vmem:[%s439 + $0x80] sm:$0xff] %v3969
        %4002 = vst [vmem:[%s439 + $0x88] sm:$0xff] %v3970
        %4003 = vst [vmem:[%s439 + $0x90] sm:$0xff] %v3971
        %4004 = vst [vmem:[%s439 + $0x98] sm:$0xff] %v3972
        %4005 = vst [vmem:[%s439 + $0xa0] sm:$0xff] %v3973
        %4006 = vst [vmem:[%s439 + $0xa8] sm:$0xff] %v3974
        %4007 = vst [vmem:[%s439 + $0xb0] sm:$0xff] %v3975
        %4008 = vst [vmem:[%s439 + $0xb8] sm:$0xff] %v3976
        %4009 = vst [vmem:[%s439 + $0xc0] sm:$0xff] %v3977
        %4010 = vst [vmem:[%s439 + $0xc8] sm:$0xff] %v3978
        %4011 = vst [vmem:[%s439 + $0xd0] sm:$0xff] %v3979
        %4012 = vst [vmem:[%s439 + $0xd8] sm:$0xff] %v3980
        %4013 = vst [vmem:[%s439 + $0xe0] sm:$0xff] %v3981
        %4014 = vst [vmem:[%s439 + $0xe8] sm:$0xff] %v3982
        %4015 = vst [vmem:[%s439 + $0xf0] sm:$0xff] %v3983
        %4016 = vst [vmem:[%s439 + $0xf8] sm:$0xff] %v3984
        %s4017 = sand.u32 %s218, 1
        %s4018 = scalar_lea.sflag [#allocation5], %s4017
        %s4019 = sand.u32 %s218, 1
        %s4020 = smul.addr %s4019, 256
        %s4021 = scalar_lea.vmem [#allocation12], %s4020
        // Predicated region
        $region73: #{tpu_custom_call.1} parent=47 // pred_check
          %p4022 = pneg %p228
        $region74: #{tpu_custom_call.1} parent=47 // pred_check_branch
          %4024 = sbr.rel (%p4022) target = $region76
        $region75: #{tpu_custom_call.1} parent=47 // pred_region
          %s4025 = smul.u32 16, %s33
          %4027 = vsyncadd %s4018, 0
          %s4028 = smul.addr %s4025, 2
          %s4029 = smul.addr %s32, 32
          %s4030 = sadd.s32 %s4028, %s4029
          %s4031 = smul.addr %s4030, 8
          %s4032 = scalar_lea.hbm %s7, %s4031
          %s4033 = sshll.u32 %s4021, 4
          %s4034 = int_to_ptr.vmem [resolvable:$true] %s4033
          %s4035 = sshll.u32 %s4032, 4
          %s4036 = int_to_ptr.hbm [resolvable:$true] %s4035
          %4041 = dma.vmem_to_hbm [thread:$0]  %s4034, 4096, %s4036, %s4018, 128, 128, 8
        $region76: #{tpu_custom_call.1} parent=47 // pred_fallthru
          _
      $region48: #{tpu_custom_call.1} parent=5 // pred_fallthru
        _
      %p4042 = scmp.le.s32.totalorder 2, %s23
      // Predicated region
      $region77: #{tpu_custom_call.1} parent=5 // pred_check
        %p4043 = pneg %p4042
      $region78: #{tpu_custom_call.1} parent=5 // pred_check_branch
        %4045 = sbr.rel (%p4043) target = $region80
      $region79: #{tpu_custom_call.1} parent=5 // pred_region
        %s4046 = ssub.s32 %s23, 2
        // Predicated region
        $region81: #{tpu_custom_call.1} parent=79 // pred_check
          %p4047 = pneg %p234
        $region82: #{tpu_custom_call.1} parent=79 // pred_check_branch
          %4049 = sbr.rel (%p4047) target = $region84
        $region83: #{tpu_custom_call.1} parent=79 // pred_region
          %s4050 = sand.u32 %s219, 1
          %s4051 = scalar_lea.sflag [#allocation5], %s4050
          %s4052 = sand.u32 %s219, 1
          %s4053 = smul.addr %s4052, 256
          %s4054 = scalar_lea.vmem [#allocation12], %s4053
          %4056 = dma.done %s4051, 4096
        $region84: #{tpu_custom_call.1} parent=79 // pred_fallthru
          _
      $region80: #{tpu_custom_call.1} parent=5 // pred_fallthru
        _
    $region6: #{tpu_custom_call.1} parent=1 // loop_footer
      %s27 = sadd.s32 1, %s23
    $region7: #{tpu_custom_call.1} parent=1 // loop_footer_branch
      %22 = sbr.rel target = $region3
    $region8: #{tpu_custom_call.1} parent=1 // loop_exit
      _
    %4057 = vsyncpa [#allocation4], 1
    %s4058 = scalar_lea.sflag [#allocation4], 1
    %4059 = vsyncpa %s4058, 1
    %4060 = vsyncpa [#allocation7], 1
    %s4061 = scalar_lea.sflag [#allocation7], 1
    %4062 = vsyncpa %s4061, 1
    %4063 = vsyncpa [#allocation10], 1
    %4064 = vsyncpa [#allocation5], 1
    %s4065 = scalar_lea.sflag [#allocation5], 1
    %4066 = vsyncpa %s4065, 1

// kernel: tpu_custom_call.1
$region0: #{tpu_custom_call.1}
  #allocation0 [shape = 'u32[]', space=smem, size = 0x4, offset = 0x4, fixed_abs, tag = 'smem constant byte address 0x4 - core index']
  #allocation1 [shape = 'u32[72,128]{1,0:T(1,128)}', space=vmem, size = 0x9000, scoped, tag = 'internal scratch']
  #allocation2 [shape = 'bf16[18,16,384]{2,1,0:T(8,128)(2,1)}', space=vmem, size = 0x36000, scoped, tag = 'scratch operand']
  %s0 = inlined_call_operand.hbm [shape: bf16[2,1,16,128], index: 0, kind: input, shape index: {}]
  %s1 = inlined_call_operand.hbm [shape: bf16[2,16,16,128], index: 1, kind: input, shape index: {}]
  %s2 = inlined_call_operand.hbm [shape: bf16[2,1,16,128], index: 2, kind: input, shape index: {}]
  %s3 = inlined_call_operand.hbm [shape: bf16[128,128], index: 3, kind: input, shape index: {}]
  %s4 = inlined_call_operand.vmem [shape: f32[1,128], index: 4, kind: input, shape index: {}]
  %s5 = inlined_call_operand.hbm [shape: bf16[3,384,128], index: 5, kind: input, shape index: {}]
  %s6 = inlined_call_operand.vmem [shape: f32[1,128], index: 6, kind: input, shape index: {}]
  %s7 = inlined_call_operand.hbm [shape: f32[2,16,16,128], index: 7, kind: output, shape index: {}]
  %s8 = sld [smem:[#allocation0]]
  $region85: #{tpu_custom_call.1} parent=0
    _
  %s10 = ssub.s32 1, %s8
  %s11 = scalar_select 0, %s10, %s8
  $region1: #{tpu_custom_call.1} parent=0
    #allocation3 [shape = 'u8[8192]{0}', space=vmem, size = 0x2000, scoped, tag = 'input window, operand 0']
    #allocation4 [shape = 's32[2]{0}', space=sflag, size = 0x8, scoped, tag = 'scoped memory for tpu_custom_call.1']
    #allocation5 [shape = 's32[2]{0}', space=sflag, size = 0x8, scoped, tag = 'scoped memory for tpu_custom_call.1']
    #allocation6 [shape = 'u8[131072]{0}', space=vmem, size = 0x20000, scoped, tag = 'input window, operand 1']
    #allocation7 [shape = 's32[2]{0}', space=sflag, size = 0x8, scoped, tag = 'scoped memory for tpu_custom_call.1']
    #allocation8 [shape = 'u8[8192]{0}', space=vmem, size = 0x2000, scoped, tag = 'input window, operand 2']
    #allocation9 [shape = 'u8[32768]{0}', space=vmem, size = 0x8000, scoped, tag = 'input window, operand 3, single buffered']
    #allocation10 [shape = 's32[1]{0}', space=sflag, size = 0x4, scoped, tag = 'scoped memory for tpu_custom_call.1']
    #allocation11 [shape = 'u8[294912]{0}', space=vmem, size = 0x48000, scoped, tag = 'input window, operand 5, single buffered']
    #allocation12 [shape = 'u8[262144]{0}', space=vmem, size = 0x40000, scoped, tag = 'output window, operand 0']
    %12 = vsyncpa [#allocation4], 0
    %s13 = scalar_lea.sflag [#allocation4], 1
    %14 = vsyncpa %s13, 0
    %15 = vsyncpa [#allocation7], 0
    %s16 = scalar_lea.sflag [#allocation7], 1
    %17 = vsyncpa %s16, 0
    %18 = vsyncpa [#allocation10], 0
    %19 = vsyncpa [#allocation5], 0
    %s20 = scalar_lea.sflag [#allocation5], 1
    %21 = vsyncpa %s20, 0
    loop: start=0, step=1, limit=4
    $region2: #{tpu_custom_call.1} parent=1 // loop_pre_header
      _
    $region3: #{tpu_custom_call.1} parent=1 // loop_header
      %s23 = sphi 0, %s27
      %p24 = scmp.ge.s32.totalorder %s23, 4
      %s30 = sphi 0, %s42
      %s31 = sphi 0, %s38
      %s32 = sphi 0, %s30
      %s33 = sphi 0, %s31
      %s34 = sphi 0, %s32
      %s35 = sphi 0, %s33
      %s47 = sphi 0, %s49
      %s50 = sphi 0, %s47
      %s51 = sphi 0, %s50
      %s67 = sphi 0, %s51
      %s75 = sphi 0, %s77
      %s78 = sphi 0, %s75
      %s79 = sphi 0, %s78
      %s95 = sphi 0, %s79
      %s103 = sphi 0, %s105
      %s106 = sphi 0, %s103
      %s107 = sphi 0, %s106
      %s123 = sphi 0, %s107
      %s127 = sphi 0, %s127
      %s129 = sphi 0, %s127
      %s130 = sphi 0, %s129
      %s144 = sphi 0, %s130
      %s148 = sphi 0, %s148
      %s150 = sphi 0, %s148
      %s151 = sphi 0, %s150
      %s165 = sphi 0, %s151
      %s169 = sphi 0, %s169
      %s171 = sphi 0, %s169
      %s172 = sphi 0, %s171
      %s186 = sphi 0, %s172
      %s190 = sphi 0, %s190
      %s192 = sphi 0, %s190
      %s193 = sphi 0, %s192
      %s207 = sphi 0, %s193
      %s215 = sphi 0, %s217
      %s218 = sphi 0, %s215
      %s219 = sphi 0, %s218
      %s235 = sphi 0, %s219
    $region4: #{tpu_custom_call.1} parent=1 // loop_header_branch
      %26 = sbr.rel (%p24) target = $region8
    $region5: #{tpu_custom_call.1} parent=1 // loop_body
      %s28 = ssub.s32 %s23, 1
      %s29 = ssub.s32 %s23, 2
      %s36 = sadd.s32 1, %s31
      %p37 = scmp.ge.s32.totalorder %s36, 1
      %s38 = scalar_select %p37, 0, %s36
      %s39 = sadd.s32 1, %s30
      %s40 = scalar_select %p37, %s39, %s30
      %p41 = scmp.ge.s32.totalorder %s40, 2
      %s42 = scalar_select %p41, 0, %s40
      %s43 = ssub.s32 %s30, %s42
      %s44 = ssub.s32 %s31, %s38
      %s45 = sor.u32 %s43, %s44
      %p46 = scmp.eq.s32.totalorder %s45, 0
      %s48 = sadd.s32 %s47, 1
      %s49 = scalar_select %p46, %s47, %s48
      %p52 = pneg %p46
      %p53 = scmp.eq.s32.totalorder %s23, 1
      %p54 = por %p52, %p53
      %p55 = scmp.ne.s32.totalorder %s47, %s50
      %p56 = scmp.eq.s32.totalorder %s23, 0
      %p57 = por %p55, %p56
      %p58 = scmp.ne.s32.totalorder %s47, %s50
      %p59 = scmp.eq.s32.totalorder %s28, 1
      %p60 = por %p58, %p59
      %p61 = scmp.ne.s32.totalorder %s50, %s51
      %p62 = scmp.eq.s32.totalorder %s28, 0
      %p63 = por %p61, %p62
      %p64 = scmp.ne.s32.totalorder %s50, %s51
      %p65 = scmp.eq.s32.totalorder %s29, 1
      %p66 = por %p64, %p65
      %p68 = scmp.ne.s32.totalorder %s51, %s67
      %p69 = scmp.eq.s32.totalorder %s29, 0
      %p70 = por %p68, %p69
      %s71 = ssub.s32 %s30, %s42
      %s72 = ssub.s32 %s31, %s38
      %s73 = sor.u32 %s71, %s72
      %p74 = scmp.eq.s32.totalorder %s73, 0
      %s76 = sadd.s32 %s75, 1
      %s77 = scalar_select %p74, %s75, %s76
      %p80 = pneg %p74
      %p81 = scmp.eq.s32.totalorder %s23, 1
      %p82 = por %p80, %p81
      %p83 = scmp.ne.s32.totalorder %s75, %s78
      %p84 = scmp.eq.s32.totalorder %s23, 0
      %p85 = por %p83, %p84
      %p86 = scmp.ne.s32.totalorder %s75, %s78
      %p87 = scmp.eq.s32.totalorder %s28, 1
      %p88 = por %p86, %p87
      %p89 = scmp.ne.s32.totalorder %s78, %s79
      %p90 = scmp.eq.s32.totalorder %s28, 0
      %p91 = por %p89, %p90
      %p92 = scmp.ne.s32.totalorder %s78, %s79
      %p93 = scmp.eq.s32.totalorder %s29, 1
      %p94 = por %p92, %p93
      %p96 = scmp.ne.s32.totalorder %s79, %s95
      %p97 = scmp.eq.s32.totalorder %s29, 0
      %p98 = por %p96, %p97
      %s99 = ssub.s32 %s30, %s42
      %s100 = ssub.s32 %s31, %s38
      %s101 = sor.u32 %s99, %s100
      %p102 = scmp.eq.s32.totalorder %s101, 0
      %s104 = sadd.s32 %s103, 1
      %s105 = scalar_select %p102, %s103, %s104
      %p108 = pneg %p102
      %p109 = scmp.eq.s32.totalorder %s23, 1
      %p110 = por %p108, %p109
      %p111 = scmp.ne.s32.totalorder %s103, %s106
      %p112 = scmp.eq.s32.totalorder %s23, 0
      %p113 = por %p111, %p112
      %p114 = scmp.ne.s32.totalorder %s103, %s106
      %p115 = scmp.eq.s32.totalorder %s28, 1
      %p116 = por %p114, %p115
      %p117 = scmp.ne.s32.totalorder %s106, %s107
      %p118 = scmp.eq.s32.totalorder %s28, 0
      %p119 = por %p117, %p118
      %p120 = scmp.ne.s32.totalorder %s106, %s107
      %p121 = scmp.eq.s32.totalorder %s29, 1
      %p122 = por %p120, %p121
      %p124 = scmp.ne.s32.totalorder %s107, %s123
      %p125 = scmp.eq.s32.totalorder %s29, 0
      %p126 = por %p124, %p125
      %s128 = sadd.s32 %s127, 1
      %p131 = scmp.eq.s32.totalorder %s23, 1
      %p132 = scmp.ne.s32.totalorder %s127, %s129
      %p133 = scmp.eq.s32.totalorder %s23, 0
      %p134 = por %p132, %p133
      %p135 = scmp.ne.s32.totalorder %s127, %s129
      %p136 = scmp.eq.s32.totalorder %s28, 1
      %p137 = por %p135, %p136
      %p138 = scmp.ne.s32.totalorder %s129, %s130
      %p139 = scmp.eq.s32.totalorder %s28, 0
      %p140 = por %p138, %p139
      %p141 = scmp.ne.s32.totalorder %s129, %s130
      %p142 = scmp.eq.s32.totalorder %s29, 1
      %p143 = por %p141, %p142
      %p145 = scmp.ne.s32.totalorder %s130, %s144
      %p146 = scmp.eq.s32.totalorder %s29, 0
      %p147 = por %p145, %p146
      %s149 = sadd.s32 %s148, 1
      %p152 = scmp.eq.s32.totalorder %s23, 1
      %p153 = scmp.ne.s32.totalorder %s148, %s150
      %p154 = scmp.eq.s32.totalorder %s23, 0
      %p155 = por %p153, %p154
      %p156 = scmp.ne.s32.totalorder %s148, %s150
      %p157 = scmp.eq.s32.totalorder %s28, 1
      %p158 = por %p156, %p157
      %p159 = scmp.ne.s32.totalorder %s150, %s151
      %p160 = scmp.eq.s32.totalorder %s28, 0
      %p161 = por %p159, %p160
      %p162 = scmp.ne.s32.totalorder %s150, %s151
      %p163 = scmp.eq.s32.totalorder %s29, 1
      %p164 = por %p162, %p163
      %p166 = scmp.ne.s32.totalorder %s151, %s165
      %p167 = scmp.eq.s32.totalorder %s29, 0
      %p168 = por %p166, %p167
      %s170 = sadd.s32 %s169, 1
      %p173 = scmp.eq.s32.totalorder %s23, 1
      %p174 = scmp.ne.s32.totalorder %s169, %s171
      %p175 = scmp.eq.s32.totalorder %s23, 0
      %p176 = por %p174, %p175
      %p177 = scmp.ne.s32.totalorder %s169, %s171
      %p178 = scmp.eq.s32.totalorder %s28, 1
      %p179 = por %p177, %p178
      %p180 = scmp.ne.s32.totalorder %s171, %s172
      %p181 = scmp.eq.s32.totalorder %s28, 0
      %p182 = por %p180, %p181
      %p183 = scmp.ne.s32.totalorder %s171, %s172
      %p184 = scmp.eq.s32.totalorder %s29, 1
      %p185 = por %p183, %p184
      %p187 = scmp.ne.s32.totalorder %s172, %s186
      %p188 = scmp.eq.s32.totalorder %s29, 0
      %p189 = por %p187, %p188
      %s191 = sadd.s32 %s190, 1
      %p194 = scmp.eq.s32.totalorder %s23, 1
      %p195 = scmp.ne.s32.totalorder %s190, %s192
      %p196 = scmp.eq.s32.totalorder %s23, 0
      %p197 = por %p195, %p196
      %p198 = scmp.ne.s32.totalorder %s190, %s192
      %p199 = scmp.eq.s32.totalorder %s28, 1
      %p200 = por %p198, %p199
      %p201 = scmp.ne.s32.totalorder %s192, %s193
      %p202 = scmp.eq.s32.totalorder %s28, 0
      %p203 = por %p201, %p202
      %p204 = scmp.ne.s32.totalorder %s192, %s193
      %p205 = scmp.eq.s32.totalorder %s29, 1
      %p206 = por %p204, %p205
      %p208 = scmp.ne.s32.totalorder %s193, %s207
      %p209 = scmp.eq.s32.totalorder %s29, 0
      %p210 = por %p208, %p209
      %s211 = ssub.s32 %s30, %s42
      %s212 = ssub.s32 %s31, %s38
      %s213 = sor.u32 %s211, %s212
      %p214 = scmp.eq.s32.totalorder %s213, 0
      %s216 = sadd.s32 %s215, 1
      %s217 = scalar_select %p214, %s215, %s216
      %p220 = pneg %p214
      %p221 = scmp.eq.s32.totalorder %s23, 1
      %p222 = por %p220, %p221
      %p223 = scmp.ne.s32.totalorder %s215, %s218
      %p224 = scmp.eq.s32.totalorder %s23, 0
      %p225 = por %p223, %p224
      %p226 = scmp.ne.s32.totalorder %s215, %s218
      %p227 = scmp.eq.s32.totalorder %s28, 1
      %p228 = por %p226, %p227
      %p229 = scmp.ne.s32.totalorder %s218, %s219
      %p230 = scmp.eq.s32.totalorder %s28, 0
      %p231 = por %p229, %p230
      %p232 = scmp.ne.s32.totalorder %s218, %s219
      %p233 = scmp.eq.s32.totalorder %s29, 1
      %p234 = por %p232, %p233
      %p236 = scmp.ne.s32.totalorder %s219, %s235
      %p237 = scmp.eq.s32.totalorder %s29, 0
      %p238 = por %p236, %p237
      %p239 = scmp.le.s32.totalorder 1, %s23
      %p240 = scmp.lt.s32.totalorder %s23, 3
      %p241 = pnand %p239, %p240
      %p242 = pneg %p241
      // Predicated region
      $region9: #{tpu_custom_call.1} parent=5 // pred_check
        _
      $region10: #{tpu_custom_call.1} parent=5 // pred_check_branch
        %244 = sbr.rel (%p241) target = $region12
      $region11: #{tpu_custom_call.1} parent=5 // pred_region
        %s245 = ssub.s32 %s23, 1
        // Predicated region
        $region13: #{tpu_custom_call.1} parent=11 // pred_check
          %p246 = pneg %p140
        $region14: #{tpu_custom_call.1} parent=11 // pred_check_branch
          %248 = sbr.rel (%p246) target = $region16
        $region15: #{tpu_custom_call.1} parent=11 // pred_region
          %250 = vsyncadd [#allocation10], 0
          %s251 = sshll.u32 %s3, 4
          %s252 = int_to_ptr.hbm [resolvable:$true] %s251
          %s253 = sshll.u32 [#allocation9], 4
          %s254 = int_to_ptr.vmem [resolvable:$true] %s253
          %259 = dma.hbm_to_vmem [thread:$0]  %s252, 1024, %s254, [#allocation10], 64, 64, 4
        $region16: #{tpu_custom_call.1} parent=11 // pred_fallthru
          _
        // Predicated region
        $region17: #{tpu_custom_call.1} parent=11 // pred_check
          %p260 = pneg %p161
        $region18: #{tpu_custom_call.1} parent=11 // pred_check_branch
          %262 = sbr.rel (%p260) target = $region20
        $region19: #{tpu_custom_call.1} parent=11 // pred_region
          _
        $region20: #{tpu_custom_call.1} parent=11 // pred_fallthru
          _
        // Predicated region
        $region21: #{tpu_custom_call.1} parent=11 // pred_check
          %p263 = pneg %p182
        $region22: #{tpu_custom_call.1} parent=11 // pred_check_branch
          %265 = sbr.rel (%p263) target = $region24
        $region23: #{tpu_custom_call.1} parent=11 // pred_region
          %267 = vsyncadd [#allocation10], 0
          %s268 = sshll.u32 %s5, 4
          %s269 = int_to_ptr.hbm [resolvable:$true] %s268
          %s270 = sshll.u32 [#allocation11], 4
          %s271 = int_to_ptr.vmem [resolvable:$true] %s270
          %276 = dma.hbm_to_vmem [thread:$0]  %s269, 9216, %s271, [#allocation10], 64, 64, 4
        $region24: #{tpu_custom_call.1} parent=11 // pred_fallthru
          _
        // Predicated region
        $region25: #{tpu_custom_call.1} parent=11 // pred_check
          %p277 = pneg %p203
        $region26: #{tpu_custom_call.1} parent=11 // pred_check_branch
          %279 = sbr.rel (%p277) target = $region28
        $region27: #{tpu_custom_call.1} parent=11 // pred_region
          _
        $region28: #{tpu_custom_call.1} parent=11 // pred_fallthru
          _
      $region12: #{tpu_custom_call.1} parent=5 // pred_fallthru
        _
      %p280 = scmp.lt.s32.totalorder %s23, 2
      // Predicated region
      $region29: #{tpu_custom_call.1} parent=5 // pred_check
        %p281 = pneg %p280
      $region30: #{tpu_custom_call.1} parent=5 // pred_check_branch
        %283 = sbr.rel (%p281) target = $region32
      $region31: #{tpu_custom_call.1} parent=5 // pred_region
        // Predicated region
        $region33: #{tpu_custom_call.1} parent=31 // pred_check
          %p284 = pneg %p57
        $region34: #{tpu_custom_call.1} parent=31 // pred_check_branch
          %286 = sbr.rel (%p284) target = $region36
        $region35: #{tpu_custom_call.1} parent=31 // pred_region
          %s287 = sand.u32 %s47, 1
          %s288 = scalar_lea.sflag [#allocation4], %s287
          %s289 = sand.u32 %s47, 1
          %s290 = smul.addr %s289, 8
          %s291 = scalar_lea.vmem [#allocation3], %s290
          %293 = vsyncadd %s288, 0
          %s294 = smul.addr %s31, 2
          %s295 = smul.addr %s30, 2
          %s296 = sadd.s32 %s294, %s295
          %s297 = smul.addr %s296, 4
          %s298 = scalar_lea.hbm %s0, %s297
          %s299 = sshll.u32 %s298, 4
          %s300 = int_to_ptr.hbm [resolvable:$true] %s299
          %s301 = sshll.u32 %s291, 4
          %s302 = int_to_ptr.vmem [resolvable:$true] %s301
          %307 = dma.hbm_to_vmem [thread:$0]  %s300, 128, %s302, %s288, 64, 64, 4
        $region36: #{tpu_custom_call.1} parent=31 // pred_fallthru
          _
        // Predicated region
        $region37: #{tpu_custom_call.1} parent=31 // pred_check
          %p308 = pneg %p85
        $region38: #{tpu_custom_call.1} parent=31 // pred_check_branch
          %310 = sbr.rel (%p308) target = $region40
        $region39: #{tpu_custom_call.1} parent=31 // pred_region
          %s311 = sand.u32 %s23, 1
          %s312 = scalar_lea.sflag [#allocation7], %s311
          %s313 = sand.u32 %s75, 1
          %s314 = smul.addr %s313, 128
          %s315 = scalar_lea.vmem [#allocation6], %s314
          %s316 = smul.u32 16, %s31
          %318 = vsyncadd %s312, 0
          %s319 = smul.addr %s316, 2
          %s320 = smul.addr %s30, 32
          %s321 = sadd.s32 %s319, %s320
          %s322 = smul.addr %s321, 4
          %s323 = scalar_lea.hbm %s1, %s322
          %s324 = sshll.u32 %s323, 4
          %s325 = int_to_ptr.hbm [resolvable:$true] %s324
          %s326 = sshll.u32 %s315, 4
          %s327 = int_to_ptr.vmem [resolvable:$true] %s326
          %332 = dma.hbm_to_vmem [thread:$0]  %s325, 2048, %s327, %s312, 64, 64, 4
        $region40: #{tpu_custom_call.1} parent=31 // pred_fallthru
          _
        // Predicated region
        $region41: #{tpu_custom_call.1} parent=31 // pred_check
          %p333 = pneg %p113
        $region42: #{tpu_custom_call.1} parent=31 // pred_check_branch
          %335 = sbr.rel (%p333) target = $region44
        $region43: #{tpu_custom_call.1} parent=31 // pred_region
          %s336 = sand.u32 %s23, 1
          %s337 = scalar_lea.sflag [#allocation7], %s336
          %s338 = sand.u32 %s103, 1
          %s339 = smul.addr %s338, 8
          %s340 = scalar_lea.vmem [#allocation8], %s339
          %342 = vsyncadd %s337, 0
          %s343 = smul.addr %s31, 2
          %s344 = smul.addr %s30, 2
          %s345 = sadd.s32 %s343, %s344
          %s346 = smul.addr %s345, 4
          %s347 = scalar_lea.hbm %s2, %s346
          %s348 = sshll.u32 %s347, 4
          %s349 = int_to_ptr.hbm [resolvable:$true] %s348
          %s350 = sshll.u32 %s340, 4
          %s351 = int_to_ptr.vmem [resolvable:$true] %s350
          %356 = dma.hbm_to_vmem [thread:$0]  %s349, 128, %s351, %s337, 64, 64, 4
        $region44: #{tpu_custom_call.1} parent=31 // pred_fallthru
          _
      $region32: #{tpu_custom_call.1} parent=5 // pred_fallthru
        _
      %p357 = scmp.le.s32.totalorder 1, %s23
      %p358 = scmp.lt.s32.totalorder %s23, 3
      %p359 = pnand %p357, %p358
      %p360 = pneg %p359
      // Predicated region
      $region45: #{tpu_custom_call.1} parent=5 // pred_check
        _
      $region46: #{tpu_custom_call.1} parent=5 // pred_check_branch
        %362 = sbr.rel (%p359) target = $region48
      $region47: #{tpu_custom_call.1} parent=5 // pred_region
        %s363 = ssub.s32 %s23, 1
        %s364 = sand.u32 %s50, 1
        %s365 = scalar_lea.sflag [#allocation4], %s364
        %s366 = sand.u32 %s50, 1
        %s367 = smul.addr %s366, 8
        %s368 = scalar_lea.vmem [#allocation3], %s367
        // Predicated region
        $region49: #{tpu_custom_call.1} parent=47 // pred_check
          %p369 = pneg %p63
        $region50: #{tpu_custom_call.1} parent=47 // pred_check_branch
          %371 = sbr.rel (%p369) target = $region52
        $region51: #{tpu_custom_call.1} parent=47 // pred_region
          %373 = dma.done %s365, 128
        $region52: #{tpu_custom_call.1} parent=47 // pred_fallthru
          _
        %s374 = sand.u32 %s28, 1
        %s375 = scalar_lea.sflag [#allocation7], %s374
        %s376 = sand.u32 %s78, 1
        %s377 = smul.addr %s376, 128
        %s378 = scalar_lea.vmem [#allocation6], %s377
        // Predicated region
        $region53: #{tpu_custom_call.1} parent=47 // pred_check
          %p379 = pneg %p91
        $region54: #{tpu_custom_call.1} parent=47 // pred_check_branch
          %381 = sbr.rel (%p379) target = $region56
        $region55: #{tpu_custom_call.1} parent=47 // pred_region
          %383 = dma.done %s375, 2048
        $region56: #{tpu_custom_call.1} parent=47 // pred_fallthru
          _
        %s384 = sand.u32 %s28, 1
        %s385 = scalar_lea.sflag [#allocation7], %s384
        %s386 = sand.u32 %s106, 1
        %s387 = smul.addr %s386, 8
        %s388 = scalar_lea.vmem [#allocation8], %s387
        // Predicated region
        $region57: #{tpu_custom_call.1} parent=47 // pred_check
          %p389 = pneg %p119
        $region58: #{tpu_custom_call.1} parent=47 // pred_check_branch
          %391 = sbr.rel (%p389) target = $region60
        $region59: #{tpu_custom_call.1} parent=47 // pred_region
          %393 = dma.done %s385, 128
        $region60: #{tpu_custom_call.1} parent=47 // pred_fallthru
          _
        // Predicated region
        $region61: #{tpu_custom_call.1} parent=47 // pred_check
          %p394 = pneg %p140
        $region62: #{tpu_custom_call.1} parent=47 // pred_check_branch
          %396 = sbr.rel (%p394) target = $region64
        $region63: #{tpu_custom_call.1} parent=47 // pred_region
          %398 = dma.done [#allocation10], 1024
        $region64: #{tpu_custom_call.1} parent=47 // pred_fallthru
          _
        // Predicated region
        $region65: #{tpu_custom_call.1} parent=47 // pred_check
          %p399 = pneg %p182
        $region66: #{tpu_custom_call.1} parent=47 // pred_check_branch
          %401 = sbr.rel (%p399) target = $region68
        $region67: #{tpu_custom_call.1} parent=47 // pred_region
          %403 = dma.done [#allocation10], 9216
        $region68: #{tpu_custom_call.1} parent=47 // pred_fallthru
          _
        %s404 = sand.u32 %s50, 1
        %s405 = scalar_lea.sflag [#allocation4], %s404
        %s406 = sand.u32 %s50, 1
        %s407 = smul.addr %s406, 8
        %s408 = scalar_lea.vmem [#allocation3], %s407
        %p409 = pneg %p63
        %p410 = pneg %p60
        %s411 = sand.u32 %s28, 1
        %s412 = scalar_lea.sflag [#allocation7], %s411
        %s413 = sand.u32 %s78, 1
        %s414 = smul.addr %s413, 128
        %s415 = scalar_lea.vmem [#allocation6], %s414
        %p416 = pneg %p91
        %p417 = pneg %p88
        %s418 = sand.u32 %s28, 1
        %s419 = scalar_lea.sflag [#allocation7], %s418
        %s420 = sand.u32 %s106, 1
        %s421 = smul.addr %s420, 8
        %s422 = scalar_lea.vmem [#allocation8], %s421
        %p423 = pneg %p119
        %p424 = pneg %p116
        %p425 = pneg %p140
        %p426 = pneg %p137
        %p427 = pneg %p161
        %p428 = pneg %p158
        %p429 = pneg %p182
        %p430 = pneg %p179
        %p431 = pneg %p203
        %p432 = pneg %p200
        %p433 = pneg %p231
        %p434 = pneg %p228
        %s435 = sand.u32 %s218, 1
        %s436 = scalar_lea.sflag [#allocation5], %s435
        %s437 = sand.u32 %s218, 1
        %s438 = smul.addr %s437, 256
        %s439 = scalar_lea.vmem [#allocation12], %s438
        %s440 = smul.u32 16, %s33
        %s441 = smul.u32 16, %s33
        %v443 = vld [vmem:[%s378] sm:$0xf]
        %v444 = vld [vmem:[%s378 + $0x4] sm:$0xf]
        %v445 = vld [vmem:[%s378 + $0x8] sm:$0xf]
        %v446 = vld [vmem:[%s378 + $0xc] sm:$0xf]
        %v447 = vld [vmem:[%s378 + $0x10] sm:$0xf]
        %v448 = vld [vmem:[%s378 + $0x14] sm:$0xf]
        %v449 = vld [vmem:[%s378 + $0x18] sm:$0xf]
        %v450 = vld [vmem:[%s378 + $0x1c] sm:$0xf]
        %v451 = vld [vmem:[%s378 + $0x20] sm:$0xf]
        %v452 = vld [vmem:[%s378 + $0x24] sm:$0xf]
        %v453 = vld [vmem:[%s378 + $0x28] sm:$0xf]
        %v454 = vld [vmem:[%s378 + $0x2c] sm:$0xf]
        %v455 = vld [vmem:[%s378 + $0x30] sm:$0xf]
        %v456 = vld [vmem:[%s378 + $0x34] sm:$0xf]
        %v457 = vld [vmem:[%s378 + $0x38] sm:$0xf]
        %v458 = vld [vmem:[%s378 + $0x3c] sm:$0xf]
        %v459 = vld [vmem:[%s378 + $0x40] sm:$0xf]
        %v460 = vld [vmem:[%s378 + $0x44] sm:$0xf]
        %v461 = vld [vmem:[%s378 + $0x48] sm:$0xf]
        %v462 = vld [vmem:[%s378 + $0x4c] sm:$0xf]
        %v463 = vld [vmem:[%s378 + $0x50] sm:$0xf]
        %v464 = vld [vmem:[%s378 + $0x54] sm:$0xf]
        %v465 = vld [vmem:[%s378 + $0x58] sm:$0xf]
        %v466 = vld [vmem:[%s378 + $0x5c] sm:$0xf]
        %v467 = vld [vmem:[%s378 + $0x60] sm:$0xf]
        %v468 = vld [vmem:[%s378 + $0x64] sm:$0xf]
        %v469 = vld [vmem:[%s378 + $0x68] sm:$0xf]
        %v470 = vld [vmem:[%s378 + $0x6c] sm:$0xf]
        %v471 = vld [vmem:[%s378 + $0x70] sm:$0xf]
        %v472 = vld [vmem:[%s378 + $0x74] sm:$0xf]
        %v473 = vld [vmem:[%s378 + $0x78] sm:$0xf]
        %v474 = vld [vmem:[%s378 + $0x7c] sm:$0xf]
        %v475 = vld [vmem:[%s368] sm:$0xf]
        %v476 = vld [vmem:[%s368 + $0x4] sm:$0xf]
        %v477 = vld [vmem:[%s388] sm:$0xf]
        %v478 = vld [vmem:[%s388 + $0x4] sm:$0xf]
        %v479 = vld [vmem:[#allocation9] sm:$0xf]
        %v480 = vld [vmem:[#allocation9 + $0x4] sm:$0xf]
        %v481 = vld [vmem:[#allocation9 + $0x8] sm:$0xf]
        %v482 = vld [vmem:[#allocation9 + $0xc] sm:$0xf]
        %v483 = vld [vmem:[#allocation9 + $0x10] sm:$0xf]
        %v484 = vld [vmem:[#allocation9 + $0x14] sm:$0xf]
        %v485 = vld [vmem:[#allocation9 + $0x18] sm:$0xf]
        %v486 = vld [vmem:[#allocation9 + $0x1c] sm:$0xf]
        %v487 = vld [vmem:[#allocation9 + $0x20] sm:$0xf]
        %v488 = vld [vmem:[#allocation9 + $0x24] sm:$0xf]
        %v489 = vld [vmem:[#allocation9 + $0x28] sm:$0xf]
        %v490 = vld [vmem:[#allocation9 + $0x2c] sm:$0xf]
        %v491 = vld [vmem:[#allocation9 + $0x30] sm:$0xf]
        %v492 = vld [vmem:[#allocation9 + $0x34] sm:$0xf]
        %v493 = vld [vmem:[#allocation9 + $0x38] sm:$0xf]
        %v494 = vld [vmem:[#allocation9 + $0x3c] sm:$0xf]
        %v495 = vld [vmem:[%s4] sm:$0x1]
        %v497 = vperm.slane %v495, 0
        %v535 = vunpack.c.l.b16 %v475
        %v536 = vunpack.c.l.b16 %v476
        %v537 = vunpack.c.l.b16 %v443
        %v538 = vunpack.c.l.b16 %v444
        %v539 = vunpack.c.l.b16 %v445
        %v540 = vunpack.c.l.b16 %v446
        %v541 = vunpack.c.l.b16 %v447
        %v542 = vunpack.c.l.b16 %v448
        %v543 = vunpack.c.l.b16 %v449
        %v544 = vunpack.c.l.b16 %v450
        %v545 = vunpack.c.l.b16 %v451
        %v546 = vunpack.c.l.b16 %v452
        %v547 = vunpack.c.l.b16 %v453
        %v548 = vunpack.c.l.b16 %v454
        %v549 = vunpack.c.l.b16 %v455
        %v550 = vunpack.c.l.b16 %v456
        %v551 = vunpack.c.l.b16 %v457
        %v552 = vunpack.c.l.b16 %v458
        %v553 = vunpack.c.l.b16 %v459
        %v554 = vunpack.c.l.b16 %v460
        %v555 = vunpack.c.l.b16 %v461
        %v556 = vunpack.c.l.b16 %v462
        %v557 = vunpack.c.l.b16 %v463
        %v558 = vunpack.c.l.b16 %v464
        %v559 = vunpack.c.l.b16 %v465
        %v560 = vunpack.c.l.b16 %v466
        %v561 = vunpack.c.l.b16 %v467
        %v562 = vunpack.c.l.b16 %v468
        %v563 = vunpack.c.l.b16 %v469
        %v564 = vunpack.c.l.b16 %v470
        %v565 = vunpack.c.l.b16 %v471
        %v566 = vunpack.c.l.b16 %v472
        %v567 = vunpack.c.l.b16 %v473
        %v568 = vunpack.c.l.b16 %v474
        %v569 = vunpack.c.l.b16 %v477
        %v570 = vunpack.c.l.b16 %v478
        %v571 = vpack.c.b16 %v536, %v535
        %v572 = vpack.c.b16 %v538, %v537
        %v573 = vpack.c.b16 %v540, %v539
        %v574 = vpack.c.b16 %v542, %v541
        %v575 = vpack.c.b16 %v544, %v543
        %v576 = vpack.c.b16 %v546, %v545
        %v577 = vpack.c.b16 %v548, %v547
        %v578 = vpack.c.b16 %v550, %v549
        %v579 = vpack.c.b16 %v552, %v551
        %v580 = vpack.c.b16 %v554, %v553
        %v581 = vpack.c.b16 %v556, %v555
        %v582 = vpack.c.b16 %v558, %v557
        %v583 = vpack.c.b16 %v560, %v559
        %v584 = vpack.c.b16 %v562, %v561
        %v585 = vpack.c.b16 %v564, %v563
        %v586 = vpack.c.b16 %v566, %v565
        %v587 = vpack.c.b16 %v568, %v567
        %v588 = vpack.c.b16 %v570, %v569
        %v623 = vunpack.c.l.b16 %v479
        %v624 = vunpack.c.l.b16 %v480
        %v625 = vunpack.c.l.b16 %v481
        %v626 = vunpack.c.l.b16 %v482
        %v627 = vunpack.c.l.b16 %v483
        %v628 = vunpack.c.l.b16 %v484
        %v629 = vunpack.c.l.b16 %v485
        %v630 = vunpack.c.l.b16 %v486
        %v631 = vunpack.c.l.b16 %v487
        %v632 = vunpack.c.l.b16 %v488
        %v633 = vunpack.c.l.b16 %v489
        %v634 = vunpack.c.l.b16 %v490
        %v635 = vunpack.c.l.b16 %v491
        %v636 = vunpack.c.l.b16 %v492
        %v637 = vunpack.c.l.b16 %v493
        %v638 = vunpack.c.l.b16 %v494
        %v639 = vpack.c.b16 %v624, %v623
        %v640 = vpack.c.b16 %v626, %v625
        %v641 = vpack.c.b16 %v628, %v627
        %v642 = vpack.c.b16 %v630, %v629
        %v643 = vpack.c.b16 %v632, %v631
        %v644 = vpack.c.b16 %v634, %v633
        %v645 = vpack.c.b16 %v636, %v635
        %v646 = vpack.c.b16 %v638, %v637
        %655 = vmatpush.bf16.msra.mxu0 %v646
        %656 = vmatpush.bf16.msra.mxu0 %v645
        %657 = vmatpush.bf16.msra.mxu0 %v644
        %658 = vmatpush.bf16.msra.mxu0 %v643
        %659 = vmatpush.bf16.msra.mxu0 %v642
        %660 = vmatpush.bf16.msra.mxu0 %v641
        %661 = vmatpush.bf16.msra.mxu0 %v640
        %662 = vmatpush.bf16.msra.mxu0 %v639
        %663 = vmatmul.bf16.gmra.mxu0 %v571
        %v664 = vpop.f32.mrf.mxu0
        %v665 = vadd.f32 %v497, %v664
        %v666 = vpop.f32.mrf.mxu0
        %v667 = vadd.f32 %v497, %v666
        %668 = vmatmul.bf16.gmra.mxu0 %v572
        %v669 = vpop.f32.mrf.mxu0
        %v670 = vadd.f32 %v497, %v669
        %v671 = vpop.f32.mrf.mxu0
        %v672 = vadd.f32 %v497, %v671
        %673 = vmatmul.bf16.gmra.mxu0 %v573
        %v674 = vpop.f32.mrf.mxu0
        %v675 = vadd.f32 %v497, %v674
        %v676 = vpop.f32.mrf.mxu0
        %v677 = vadd.f32 %v497, %v676
        %678 = vmatmul.bf16.gmra.mxu0 %v574
        %v679 = vpop.f32.mrf.mxu0
        %v680 = vadd.f32 %v497, %v679
        %v681 = vpop.f32.mrf.mxu0
        %v682 = vadd.f32 %v497, %v681
        %683 = vmatmul.bf16.gmra.mxu0 %v575
        %v684 = vpop.f32.mrf.mxu0
        %v685 = vadd.f32 %v497, %v684
        %v686 = vpop.f32.mrf.mxu0
        %v687 = vadd.f32 %v497, %v686
        %688 = vmatmul.bf16.gmra.mxu0 %v576
        %v689 = vpop.f32.mrf.mxu0
        %v690 = vadd.f32 %v497, %v689
        %v691 = vpop.f32.mrf.mxu0
        %v692 = vadd.f32 %v497, %v691
        %693 = vmatmul.bf16.gmra.mxu0 %v577
        %v694 = vpop.f32.mrf.mxu0
        %v695 = vadd.f32 %v497, %v694
        %v696 = vpop.f32.mrf.mxu0
        %v697 = vadd.f32 %v497, %v696
        %698 = vmatmul.bf16.gmra.mxu0 %v578
        %v699 = vpop.f32.mrf.mxu0
        %v700 = vadd.f32 %v497, %v699
        %v701 = vpop.f32.mrf.mxu0
        %v702 = vadd.f32 %v497, %v701
        %703 = vmatmul.bf16.gmra.mxu0 %v579
        %v704 = vpop.f32.mrf.mxu0
        %v705 = vadd.f32 %v497, %v704
        %v706 = vpop.f32.mrf.mxu0
        %v707 = vadd.f32 %v497, %v706
        %708 = vmatmul.bf16.gmra.mxu0 %v580
        %v709 = vpop.f32.mrf.mxu0
        %v710 = vadd.f32 %v497, %v709
        %v711 = vpop.f32.mrf.mxu0
        %v712 = vadd.f32 %v497, %v711
        %713 = vmatmul.bf16.gmra.mxu0 %v581
        %v714 = vpop.f32.mrf.mxu0
        %v715 = vadd.f32 %v497, %v714
        %v716 = vpop.f32.mrf.mxu0
        %v717 = vadd.f32 %v497, %v716
        %718 = vmatmul.bf16.gmra.mxu0 %v582
        %v719 = vpop.f32.mrf.mxu0
        %v720 = vadd.f32 %v497, %v719
        %v721 = vpop.f32.mrf.mxu0
        %v722 = vadd.f32 %v497, %v721
        %723 = vmatmul.bf16.gmra.mxu0 %v583
        %v724 = vpop.f32.mrf.mxu0
        %v725 = vadd.f32 %v497, %v724
        %v726 = vpop.f32.mrf.mxu0
        %v727 = vadd.f32 %v497, %v726
        %728 = vmatmul.bf16.gmra.mxu0 %v584
        %v729 = vpop.f32.mrf.mxu0
        %v730 = vadd.f32 %v497, %v729
        %v731 = vpop.f32.mrf.mxu0
        %v732 = vadd.f32 %v497, %v731
        %733 = vmatmul.bf16.gmra.mxu0 %v585
        %v734 = vpop.f32.mrf.mxu0
        %v735 = vadd.f32 %v497, %v734
        %v736 = vpop.f32.mrf.mxu0
        %v737 = vadd.f32 %v497, %v736
        %738 = vmatmul.bf16.gmra.mxu0 %v586
        %v739 = vpop.f32.mrf.mxu0
        %v740 = vadd.f32 %v497, %v739
        %v741 = vpop.f32.mrf.mxu0
        %v742 = vadd.f32 %v497, %v741
        %743 = vmatmul.bf16.gmra.mxu0 %v587
        %v744 = vpop.f32.mrf.mxu0
        %v745 = vadd.f32 %v497, %v744
        %v746 = vpop.f32.mrf.mxu0
        %v747 = vadd.f32 %v497, %v746
        %748 = vmatmul.bf16.gmra.mxu0 %v588
        %v749 = vpop.f32.mrf.mxu0
        %v750 = vadd.f32 %v497, %v749
        %v751 = vpop.f32.mrf.mxu0
        %v752 = vadd.f32 %v497, %v751
        %753 = vdwg.mxu0
        %v754 = vadd.f32 %v665, 3.0
        %v755 = vadd.f32 %v667, 3.0
        %v756 = vadd.f32 %v670, 3.0
        %v757 = vadd.f32 %v672, 3.0
        %v758 = vadd.f32 %v675, 3.0
        %v759 = vadd.f32 %v677, 3.0
        %v760 = vadd.f32 %v680, 3.0
        %v761 = vadd.f32 %v682, 3.0
        %v762 = vadd.f32 %v685, 3.0
        %v763 = vadd.f32 %v687, 3.0
        %v764 = vadd.f32 %v690, 3.0
        %v765 = vadd.f32 %v692, 3.0
        %v766 = vadd.f32 %v695, 3.0
        %v767 = vadd.f32 %v697, 3.0
        %v768 = vadd.f32 %v700, 3.0
        %v769 = vadd.f32 %v702, 3.0
        %v770 = vadd.f32 %v705, 3.0
        %v771 = vadd.f32 %v707, 3.0
        %v772 = vadd.f32 %v710, 3.0
        %v773 = vadd.f32 %v712, 3.0
        %v774 = vadd.f32 %v715, 3.0
        %v775 = vadd.f32 %v717, 3.0
        %v776 = vadd.f32 %v720, 3.0
        %v777 = vadd.f32 %v722, 3.0
        %v778 = vadd.f32 %v725, 3.0
        %v779 = vadd.f32 %v727, 3.0
        %v780 = vadd.f32 %v730, 3.0
        %v781 = vadd.f32 %v732, 3.0
        %v782 = vadd.f32 %v735, 3.0
        %v783 = vadd.f32 %v737, 3.0
        %v784 = vadd.f32 %v740, 3.0
        %v785 = vadd.f32 %v742, 3.0
        %v786 = vadd.f32 %v745, 3.0
        %v787 = vadd.f32 %v747, 3.0
        %v788 = vadd.f32 %v750, 3.0
        %v789 = vadd.f32 %v752, 3.0
        %v790 = vmax.f32 %v754, 0.0
        %v791 = vmax.f32 %v755, 0.0
        %v792 = vmax.f32 %v756, 0.0
        %v793 = vmax.f32 %v757, 0.0
        %v794 = vmax.f32 %v758, 0.0
        %v795 = vmax.f32 %v759, 0.0
        %v796 = vmax.f32 %v760, 0.0
        %v797 = vmax.f32 %v761, 0.0
        %v798 = vmax.f32 %v762, 0.0
        %v799 = vmax.f32 %v763, 0.0
        %v800 = vmax.f32 %v764, 0.0
        %v801 = vmax.f32 %v765, 0.0
        %v802 = vmax.f32 %v766, 0.0
        %v803 = vmax.f32 %v767, 0.0
        %v804 = vmax.f32 %v768, 0.0
        %v805 = vmax.f32 %v769, 0.0
        %v806 = vmax.f32 %v770, 0.0
        %v807 = vmax.f32 %v771, 0.0
        %v808 = vmax.f32 %v772, 0.0
        %v809 = vmax.f32 %v773, 0.0
        %v810 = vmax.f32 %v774, 0.0
        %v811 = vmax.f32 %v775, 0.0
        %v812 = vmax.f32 %v776, 0.0
        %v813 = vmax.f32 %v777, 0.0
        %v814 = vmax.f32 %v778, 0.0
        %v815 = vmax.f32 %v779, 0.0
        %v816 = vmax.f32 %v780, 0.0
        %v817 = vmax.f32 %v781, 0.0
        %v818 = vmax.f32 %v782, 0.0
        %v819 = vmax.f32 %v783, 0.0
        %v820 = vmax.f32 %v784, 0.0
        %v821 = vmax.f32 %v785, 0.0
        %v822 = vmax.f32 %v786, 0.0
        %v823 = vmax.f32 %v787, 0.0
        %v824 = vmax.f32 %v788, 0.0
        %v825 = vmax.f32 %v789, 0.0
        %v826 = vmin.f32 %v790, 6.0
        %v827 = vmin.f32 %v791, 6.0
        %v828 = vmin.f32 %v792, 6.0
        %v829 = vmin.f32 %v793, 6.0
        %v830 = vmin.f32 %v794, 6.0
        %v831 = vmin.f32 %v795, 6.0
        %v832 = vmin.f32 %v796, 6.0
        %v833 = vmin.f32 %v797, 6.0
        %v834 = vmin.f32 %v798, 6.0
        %v835 = vmin.f32 %v799, 6.0
        %v836 = vmin.f32 %v800, 6.0
        %v837 = vmin.f32 %v801, 6.0
        %v838 = vmin.f32 %v802, 6.0
        %v839 = vmin.f32 %v803, 6.0
        %v840 = vmin.f32 %v804, 6.0
        %v841 = vmin.f32 %v805, 6.0
        %v842 = vmin.f32 %v806, 6.0
        %v843 = vmin.f32 %v807, 6.0
        %v844 = vmin.f32 %v808, 6.0
        %v845 = vmin.f32 %v809, 6.0
        %v846 = vmin.f32 %v810, 6.0
        %v847 = vmin.f32 %v811, 6.0
        %v848 = vmin.f32 %v812, 6.0
        %v849 = vmin.f32 %v813, 6.0
        %v850 = vmin.f32 %v814, 6.0
        %v851 = vmin.f32 %v815, 6.0
        %v852 = vmin.f32 %v816, 6.0
        %v853 = vmin.f32 %v817, 6.0
        %v854 = vmin.f32 %v818, 6.0
        %v855 = vmin.f32 %v819, 6.0
        %v856 = vmin.f32 %v820, 6.0
        %v857 = vmin.f32 %v821, 6.0
        %v858 = vmin.f32 %v822, 6.0
        %v859 = vmin.f32 %v823, 6.0
        %v860 = vmin.f32 %v824, 6.0
        %v861 = vmin.f32 %v825, 6.0
        %v862 = vmul.f32 %v665, %v826
        %v863 = vmul.f32 %v667, %v827
        %v864 = vmul.f32 %v670, %v828
        %v865 = vmul.f32 %v672, %v829
        %v866 = vmul.f32 %v675, %v830
        %v867 = vmul.f32 %v677, %v831
        %v868 = vmul.f32 %v680, %v832
        %v869 = vmul.f32 %v682, %v833
        %v870 = vmul.f32 %v685, %v834
        %v871 = vmul.f32 %v687, %v835
        %v872 = vmul.f32 %v690, %v836
        %v873 = vmul.f32 %v692, %v837
        %v874 = vmul.f32 %v695, %v838
        %v875 = vmul.f32 %v697, %v839
        %v876 = vmul.f32 %v700, %v840
        %v877 = vmul.f32 %v702, %v841
        %v878 = vmul.f32 %v705, %v842
        %v879 = vmul.f32 %v707, %v843
        %v880 = vmul.f32 %v710, %v844
        %v881 = vmul.f32 %v712, %v845
        %v882 = vmul.f32 %v715, %v846
        %v883 = vmul.f32 %v717, %v847
        %v884 = vmul.f32 %v720, %v848
        %v885 = vmul.f32 %v722, %v849
        %v886 = vmul.f32 %v725, %v850
        %v887 = vmul.f32 %v727, %v851
        %v888 = vmul.f32 %v730, %v852
        %v889 = vmul.f32 %v732, %v853
        %v890 = vmul.f32 %v735, %v854
        %v891 = vmul.f32 %v737, %v855
        %v892 = vmul.f32 %v740, %v856
        %v893 = vmul.f32 %v742, %v857
        %v894 = vmul.f32 %v745, %v858
        %v895 = vmul.f32 %v747, %v859
        %v896 = vmul.f32 %v750, %v860
        %v897 = vmul.f32 %v752, %v861
        %v898 = vrcp.pop 6.0
        %v899 = vmul.f32 6.0, %v898
        %v900 = vsub.f32 1.0, %v899
        %v901 = vmul.f32 %v898, %v900
        %v902 = vadd.f32 %v898, %v901
        %vm903 = vweird.f32 %v898
        %v904 = vsel %vm903, %v898, %v902
        %v905 = vmul.f32 %v862, %v904
        %v906 = vmul.f32 %v863, %v904
        %v907 = vmul.f32 %v864, %v904
        %v908 = vmul.f32 %v865, %v904
        %v909 = vmul.f32 %v866, %v904
        %v910 = vmul.f32 %v867, %v904
        %v911 = vmul.f32 %v868, %v904
        %v912 = vmul.f32 %v869, %v904
        %v913 = vmul.f32 %v870, %v904
        %v914 = vmul.f32 %v871, %v904
        %v915 = vmul.f32 %v872, %v904
        %v916 = vmul.f32 %v873, %v904
        %v917 = vmul.f32 %v874, %v904
        %v918 = vmul.f32 %v875, %v904
        %v919 = vmul.f32 %v876, %v904
        %v920 = vmul.f32 %v877, %v904
        %v921 = vmul.f32 %v878, %v904
        %v922 = vmul.f32 %v879, %v904
        %v923 = vmul.f32 %v880, %v904
        %v924 = vmul.f32 %v881, %v904
        %v925 = vmul.f32 %v882, %v904
        %v926 = vmul.f32 %v883, %v904
        %v927 = vmul.f32 %v884, %v904
        %v928 = vmul.f32 %v885, %v904
        %v929 = vmul.f32 %v886, %v904
        %v930 = vmul.f32 %v887, %v904
        %v931 = vmul.f32 %v888, %v904
        %v932 = vmul.f32 %v889, %v904
        %v933 = vmul.f32 %v890, %v904
        %v934 = vmul.f32 %v891, %v904
        %v935 = vmul.f32 %v892, %v904
        %v936 = vmul.f32 %v893, %v904
        %v937 = vmul.f32 %v894, %v904
        %v938 = vmul.f32 %v895, %v904
        %v939 = vmul.f32 %v896, %v904
        %v940 = vmul.f32 %v897, %v904
        %vm977 = vcmask 1040384
        %v978 = vrot.slane %v905, 7
        %v979 = vrot.slane %v906, 7
        %v980 = vsel %vm977, %v978, %v979
        %v981 = vrot.slane %v907, 7
        %v982 = vrot.slane %v908, 7
        %v983 = vsel %vm977, %v981, %v982
        %v984 = vrot.slane %v909, 7
        %v985 = vrot.slane %v910, 7
        %v986 = vsel %vm977, %v984, %v985
        %v987 = vrot.slane %v911, 7
        %v988 = vrot.slane %v912, 7
        %v989 = vsel %vm977, %v987, %v988
        %v990 = vrot.slane %v913, 7
        %v991 = vrot.slane %v914, 7
        %v992 = vsel %vm977, %v990, %v991
        %v993 = vrot.slane %v915, 7
        %v994 = vrot.slane %v916, 7
        %v995 = vsel %vm977, %v993, %v994
        %v996 = vrot.slane %v917, 7
        %v997 = vrot.slane %v918, 7
        %v998 = vsel %vm977, %v996, %v997
        %v999 = vrot.slane %v919, 7
        %v1000 = vrot.slane %v920, 7
        %v1001 = vsel %vm977, %v999, %v1000
        %v1002 = vrot.slane %v921, 7
        %v1003 = vrot.slane %v922, 7
        %v1004 = vsel %vm977, %v1002, %v1003
        %v1005 = vrot.slane %v923, 7
        %v1006 = vrot.slane %v924, 7
        %v1007 = vsel %vm977, %v1005, %v1006
        %v1008 = vrot.slane %v925, 7
        %v1009 = vrot.slane %v926, 7
        %v1010 = vsel %vm977, %v1008, %v1009
        %v1011 = vrot.slane %v927, 7
        %v1012 = vrot.slane %v928, 7
        %v1013 = vsel %vm977, %v1011, %v1012
        %v1014 = vrot.slane %v929, 7
        %v1015 = vrot.slane %v930, 7
        %v1016 = vsel %vm977, %v1014, %v1015
        %v1017 = vrot.slane %v931, 7
        %v1018 = vrot.slane %v932, 7
        %v1019 = vsel %vm977, %v1017, %v1018
        %v1020 = vrot.slane %v933, 7
        %v1021 = vrot.slane %v934, 7
        %v1022 = vsel %vm977, %v1020, %v1021
        %v1023 = vrot.slane %v935, 7
        %v1024 = vrot.slane %v936, 7
        %v1025 = vsel %vm977, %v1023, %v1024
        %v1026 = vrot.slane %v937, 7
        %v1027 = vrot.slane %v938, 7
        %v1028 = vsel %vm977, %v1026, %v1027
        %v1029 = vrot.slane %v939, 7
        %v1030 = vrot.slane %v940, 7
        %v1031 = vsel %vm977, %v1029, %v1030
        %v1068 = vsel %vm977, 0.0, %v978
        %v1069 = vsel %vm977, 0.0, %v981
        %v1070 = vsel %vm977, 0.0, %v984
        %v1071 = vsel %vm977, 0.0, %v987
        %v1072 = vsel %vm977, 0.0, %v990
        %v1073 = vsel %vm977, 0.0, %v993
        %v1074 = vsel %vm977, 0.0, %v996
        %v1075 = vsel %vm977, 0.0, %v999
        %v1076 = vsel %vm977, 0.0, %v1002
        %v1077 = vsel %vm977, 0.0, %v1005
        %v1078 = vsel %vm977, 0.0, %v1008
        %v1079 = vsel %vm977, 0.0, %v1011
        %v1080 = vsel %vm977, 0.0, %v1014
        %v1081 = vsel %vm977, 0.0, %v1017
        %v1082 = vsel %vm977, 0.0, %v1020
        %v1083 = vsel %vm977, 0.0, %v1023
        %v1084 = vsel %vm977, 0.0, %v1026
        %v1085 = vsel %vm977, 0.0, %v1029
        %vm1086 = vcmask 1046528
        %v1087 = vrot.slane %v905, 1
        %v1088 = vrot.slane %v906, 1
        %v1089 = vsel %vm1086, %v1087, %v1088
        %v1090 = vrot.slane %v907, 1
        %v1091 = vrot.slane %v908, 1
        %v1092 = vsel %vm1086, %v1090, %v1091
        %v1093 = vrot.slane %v909, 1
        %v1094 = vrot.slane %v910, 1
        %v1095 = vsel %vm1086, %v1093, %v1094
        %v1096 = vrot.slane %v911, 1
        %v1097 = vrot.slane %v912, 1
        %v1098 = vsel %vm1086, %v1096, %v1097
        %v1099 = vrot.slane %v913, 1
        %v1100 = vrot.slane %v914, 1
        %v1101 = vsel %vm1086, %v1099, %v1100
        %v1102 = vrot.slane %v915, 1
        %v1103 = vrot.slane %v916, 1
        %v1104 = vsel %vm1086, %v1102, %v1103
        %v1105 = vrot.slane %v917, 1
        %v1106 = vrot.slane %v918, 1
        %v1107 = vsel %vm1086, %v1105, %v1106
        %v1108 = vrot.slane %v919, 1
        %v1109 = vrot.slane %v920, 1
        %v1110 = vsel %vm1086, %v1108, %v1109
        %v1111 = vrot.slane %v921, 1
        %v1112 = vrot.slane %v922, 1
        %v1113 = vsel %vm1086, %v1111, %v1112
        %v1114 = vrot.slane %v923, 1
        %v1115 = vrot.slane %v924, 1
        %v1116 = vsel %vm1086, %v1114, %v1115
        %v1117 = vrot.slane %v925, 1
        %v1118 = vrot.slane %v926, 1
        %v1119 = vsel %vm1086, %v1117, %v1118
        %v1120 = vrot.slane %v927, 1
        %v1121 = vrot.slane %v928, 1
        %v1122 = vsel %vm1086, %v1120, %v1121
        %v1123 = vrot.slane %v929, 1
        %v1124 = vrot.slane %v930, 1
        %v1125 = vsel %vm1086, %v1123, %v1124
        %v1126 = vrot.slane %v931, 1
        %v1127 = vrot.slane %v932, 1
        %v1128 = vsel %vm1086, %v1126, %v1127
        %v1129 = vrot.slane %v933, 1
        %v1130 = vrot.slane %v934, 1
        %v1131 = vsel %vm1086, %v1129, %v1130
        %v1132 = vrot.slane %v935, 1
        %v1133 = vrot.slane %v936, 1
        %v1134 = vsel %vm1086, %v1132, %v1133
        %v1135 = vrot.slane %v937, 1
        %v1136 = vrot.slane %v938, 1
        %v1137 = vsel %vm1086, %v1135, %v1136
        %v1138 = vrot.slane %v939, 1
        %v1139 = vrot.slane %v940, 1
        %v1140 = vsel %vm1086, %v1138, %v1139
        %v1177 = vsel %vm1086, %v1088, 0.0
        %v1178 = vsel %vm1086, %v1091, 0.0
        %v1179 = vsel %vm1086, %v1094, 0.0
        %v1180 = vsel %vm1086, %v1097, 0.0
        %v1181 = vsel %vm1086, %v1100, 0.0
        %v1182 = vsel %vm1086, %v1103, 0.0
        %v1183 = vsel %vm1086, %v1106, 0.0
        %v1184 = vsel %vm1086, %v1109, 0.0
        %v1185 = vsel %vm1086, %v1112, 0.0
        %v1186 = vsel %vm1086, %v1115, 0.0
        %v1187 = vsel %vm1086, %v1118, 0.0
        %v1188 = vsel %vm1086, %v1121, 0.0
        %v1189 = vsel %vm1086, %v1124, 0.0
        %v1190 = vsel %vm1086, %v1127, 0.0
        %v1191 = vsel %vm1086, %v1130, 0.0
        %v1192 = vsel %vm1086, %v1133, 0.0
        %v1193 = vsel %vm1086, %v1136, 0.0
        %v1194 = vsel %vm1086, %v1139, 0.0
        %v1195 = vpack.c.bf16 %v905, %v1068
        %v1196 = vpack.c.bf16 %v1089, %v1089
        %v1197 = vpack.c.bf16 %v906, %v980
        %v1198 = vpack.c.bf16 %v1177, %v1177
        %v1199 = vpack.c.bf16 %v907, %v1069
        %v1200 = vpack.c.bf16 %v1092, %v1092
        %v1201 = vpack.c.bf16 %v908, %v983
        %v1202 = vpack.c.bf16 %v1178, %v1178
        %v1203 = vpack.c.bf16 %v909, %v1070
        %v1204 = vpack.c.bf16 %v1095, %v1095
        %v1205 = vpack.c.bf16 %v910, %v986
        %v1206 = vpack.c.bf16 %v1179, %v1179
        %v1207 = vpack.c.bf16 %v911, %v1071
        %v1208 = vpack.c.bf16 %v1098, %v1098
        %v1209 = vpack.c.bf16 %v912, %v989
        %v1210 = vpack.c.bf16 %v1180, %v1180
        %v1211 = vpack.c.bf16 %v913, %v1072
        %v1212 = vpack.c.bf16 %v1101, %v1101
        %v1213 = vpack.c.bf16 %v914, %v992
        %v1214 = vpack.c.bf16 %v1181, %v1181
        %v1215 = vpack.c.bf16 %v915, %v1073
        %v1216 = vpack.c.bf16 %v1104, %v1104
        %v1217 = vpack.c.bf16 %v916, %v995
        %v1218 = vpack.c.bf16 %v1182, %v1182
        %v1219 = vpack.c.bf16 %v917, %v1074
        %v1220 = vpack.c.bf16 %v1107, %v1107
        %v1221 = vpack.c.bf16 %v918, %v998
        %v1222 = vpack.c.bf16 %v1183, %v1183
        %v1223 = vpack.c.bf16 %v919, %v1075
        %v1224 = vpack.c.bf16 %v1110, %v1110
        %v1225 = vpack.c.bf16 %v920, %v1001
        %v1226 = vpack.c.bf16 %v1184, %v1184
        %v1227 = vpack.c.bf16 %v921, %v1076
        %v1228 = vpack.c.bf16 %v1113, %v1113
        %v1229 = vpack.c.bf16 %v922, %v1004
        %v1230 = vpack.c.bf16 %v1185, %v1185
        %v1231 = vpack.c.bf16 %v923, %v1077
        %v1232 = vpack.c.bf16 %v1116, %v1116
        %v1233 = vpack.c.bf16 %v924, %v1007
        %v1234 = vpack.c.bf16 %v1186, %v1186
        %v1235 = vpack.c.bf16 %v925, %v1078
        %v1236 = vpack.c.bf16 %v1119, %v1119
        %v1237 = vpack.c.bf16 %v926, %v1010
        %v1238 = vpack.c.bf16 %v1187, %v1187
        %v1239 = vpack.c.bf16 %v927, %v1079
        %v1240 = vpack.c.bf16 %v1122, %v1122
        %v1241 = vpack.c.bf16 %v928, %v1013
        %v1242 = vpack.c.bf16 %v1188, %v1188
        %v1243 = vpack.c.bf16 %v929, %v1080
        %v1244 = vpack.c.bf16 %v1125, %v1125
        %v1245 = vpack.c.bf16 %v930, %v1016
        %v1246 = vpack.c.bf16 %v1189, %v1189
        %v1247 = vpack.c.bf16 %v931, %v1081
        %v1248 = vpack.c.bf16 %v1128, %v1128
        %v1249 = vpack.c.bf16 %v932, %v1019
        %v1250 = vpack.c.bf16 %v1190, %v1190
        %v1251 = vpack.c.bf16 %v933, %v1082
        %v1252 = vpack.c.bf16 %v1131, %v1131
        %v1253 = vpack.c.bf16 %v934, %v1022
        %v1254 = vpack.c.bf16 %v1191, %v1191
        %v1255 = vpack.c.bf16 %v935, %v1083
        %v1256 = vpack.c.bf16 %v1134, %v1134
        %v1257 = vpack.c.bf16 %v936, %v1025
        %v1258 = vpack.c.bf16 %v1192, %v1192
        %v1259 = vpack.c.bf16 %v937, %v1084
        %v1260 = vpack.c.bf16 %v1137, %v1137
        %v1261 = vpack.c.bf16 %v938, %v1028
        %v1262 = vpack.c.bf16 %v1193, %v1193
        %v1263 = vpack.c.bf16 %v939, %v1085
        %v1264 = vpack.c.bf16 %v1140, %v1140
        %v1265 = vpack.c.bf16 %v940, %v1031
        %v1266 = vpack.c.bf16 %v1194, %v1194
        %1267 = vst [vmem:[#allocation2] sm:$0xff] %v1195
        %1268 = vst [vmem:[#allocation2 + $0x8] sm:$0xf] %v1196
        %1269 = vst [vmem:[#allocation2 + $0xc] sm:$0xff] %v1197
        %1270 = vst [vmem:[#allocation2 + $0x14] sm:$0xf] %v1198
        %1271 = vst [vmem:[#allocation2 + $0x18] sm:$0xff] %v1199
        %1272 = vst [vmem:[#allocation2 + $0x20] sm:$0xf] %v1200
        %1273 = vst [vmem:[#allocation2 + $0x24] sm:$0xff] %v1201
        %1274 = vst [vmem:[#allocation2 + $0x2c] sm:$0xf] %v1202
        %1275 = vst [vmem:[#allocation2 + $0x30] sm:$0xff] %v1203
        %1276 = vst [vmem:[#allocation2 + $0x38] sm:$0xf] %v1204
        %1277 = vst [vmem:[#allocation2 + $0x3c] sm:$0xff] %v1205
        %1278 = vst [vmem:[#allocation2 + $0x44] sm:$0xf] %v1206
        %1279 = vst [vmem:[#allocation2 + $0x48] sm:$0xff] %v1207
        %1280 = vst [vmem:[#allocation2 + $0x50] sm:$0xf] %v1208
        %1281 = vst [vmem:[#allocation2 + $0x54] sm:$0xff] %v1209
        %1282 = vst [vmem:[#allocation2 + $0x5c] sm:$0xf] %v1210
        %1283 = vst [vmem:[#allocation2 + $0x60] sm:$0xff] %v1211
        %1284 = vst [vmem:[#allocation2 + $0x68] sm:$0xf] %v1212
        %1285 = vst [vmem:[#allocation2 + $0x6c] sm:$0xff] %v1213
        %1286 = vst [vmem:[#allocation2 + $0x74] sm:$0xf] %v1214
        %1287 = vst [vmem:[#allocation2 + $0x78] sm:$0xff] %v1215
        %1288 = vst [vmem:[#allocation2 + $0x80] sm:$0xf] %v1216
        %1289 = vst [vmem:[#allocation2 + $0x84] sm:$0xff] %v1217
        %1290 = vst [vmem:[#allocation2 + $0x8c] sm:$0xf] %v1218
        %1291 = vst [vmem:[#allocation2 + $0x90] sm:$0xff] %v1219
        %1292 = vst [vmem:[#allocation2 + $0x98] sm:$0xf] %v1220
        %1293 = vst [vmem:[#allocation2 + $0x9c] sm:$0xff] %v1221
        %1294 = vst [vmem:[#allocation2 + $0xa4] sm:$0xf] %v1222
        %1295 = vst [vmem:[#allocation2 + $0xa8] sm:$0xff] %v1223
        %1296 = vst [vmem:[#allocation2 + $0xb0] sm:$0xf] %v1224
        %1297 = vst [vmem:[#allocation2 + $0xb4] sm:$0xff] %v1225
        %1298 = vst [vmem:[#allocation2 + $0xbc] sm:$0xf] %v1226
        %1299 = vst [vmem:[#allocation2 + $0xc0] sm:$0xff] %v1227
        %1300 = vst [vmem:[#allocation2 + $0xc8] sm:$0xf] %v1228
        %1301 = vst [vmem:[#allocation2 + $0xcc] sm:$0xff] %v1229
        %1302 = vst [vmem:[#allocation2 + $0xd4] sm:$0xf] %v1230
        %1303 = vst [vmem:[#allocation2 + $0xd8] sm:$0xff] %v1231
        %1304 = vst [vmem:[#allocation2 + $0xe0] sm:$0xf] %v1232
        %1305 = vst [vmem:[#allocation2 + $0xe4] sm:$0xff] %v1233
        %1306 = vst [vmem:[#allocation2 + $0xec] sm:$0xf] %v1234
        %1307 = vst [vmem:[#allocation2 + $0xf0] sm:$0xff] %v1235
        %1308 = vst [vmem:[#allocation2 + $0xf8] sm:$0xf] %v1236
        %1309 = vst [vmem:[#allocation2 + $0xfc] sm:$0xff] %v1237
        %1310 = vst [vmem:[#allocation2 + $0x104] sm:$0xf] %v1238
        %1311 = vst [vmem:[#allocation2 + $0x108] sm:$0xff] %v1239
        %1312 = vst [vmem:[#allocation2 + $0x110] sm:$0xf] %v1240
        %1313 = vst [vmem:[#allocation2 + $0x114] sm:$0xff] %v1241
        %1314 = vst [vmem:[#allocation2 + $0x11c] sm:$0xf] %v1242
        %1315 = vst [vmem:[#allocation2 + $0x120] sm:$0xff] %v1243
        %1316 = vst [vmem:[#allocation2 + $0x128] sm:$0xf] %v1244
        %1317 = vst [vmem:[#allocation2 + $0x12c] sm:$0xff] %v1245
        %1318 = vst [vmem:[#allocation2 + $0x134] sm:$0xf] %v1246
        %1319 = vst [vmem:[#allocation2 + $0x138] sm:$0xff] %v1247
        %1320 = vst [vmem:[#allocation2 + $0x140] sm:$0xf] %v1248
        %1321 = vst [vmem:[#allocation2 + $0x144] sm:$0xff] %v1249
        %1322 = vst [vmem:[#allocation2 + $0x14c] sm:$0xf] %v1250
        %1323 = vst [vmem:[#allocation2 + $0x150] sm:$0xff] %v1251
        %1324 = vst [vmem:[#allocation2 + $0x158] sm:$0xf] %v1252
        %1325 = vst [vmem:[#allocation2 + $0x15c] sm:$0xff] %v1253
        %1326 = vst [vmem:[#allocation2 + $0x164] sm:$0xf] %v1254
        %1327 = vst [vmem:[#allocation2 + $0x168] sm:$0xff] %v1255
        %1328 = vst [vmem:[#allocation2 + $0x170] sm:$0xf] %v1256
        %1329 = vst [vmem:[#allocation2 + $0x174] sm:$0xff] %v1257
        %1330 = vst [vmem:[#allocation2 + $0x17c] sm:$0xf] %v1258
        %1331 = vst [vmem:[#allocation2 + $0x180] sm:$0xff] %v1259
        %1332 = vst [vmem:[#allocation2 + $0x188] sm:$0xf] %v1260
        %1333 = vst [vmem:[#allocation2 + $0x18c] sm:$0xff] %v1261
        %1334 = vst [vmem:[#allocation2 + $0x194] sm:$0xf] %v1262
        %1335 = vst [vmem:[#allocation2 + $0x198] sm:$0xff] %v1263
        %1336 = vst [vmem:[#allocation2 + $0x1a0] sm:$0xf] %v1264
        %1337 = vst [vmem:[#allocation2 + $0x1a4] sm:$0xff] %v1265
        %1338 = vst [vmem:[#allocation2 + $0x1ac] sm:$0xf] %v1266
        %p1339 = scmp.eq.s32.totalorder %s33, 0
        // Predicated region
        $region69: #{tpu_custom_call.1} parent=47 // pred_check
          %p1340 = pneg %p1339
        $region70: #{tpu_custom_call.1} parent=47 // pred_check_branch
          %1342 = sbr.rel (%p1340) target = $region72
        $region71: #{tpu_custom_call.1} parent=47 // pred_region
          %1343 = vst [vmem:[#allocation2] sm:$0xff] 0
          %1344 = vst [vmem:[#allocation2 + $0x8] sm:$0xf] 0
          %1345 = vst [vmem:[#allocation2 + $0xc] sm:$0xff] 0
          %1346 = vst [vmem:[#allocation2 + $0x14] sm:$0xf] 0
          %s1347 = scalar_lea.vmem [#allocation2], 408
          %1348 = vst [vmem:[%s1347] sm:$0xff] 0
          %1349 = vst [vmem:[%s1347 + $0x8] sm:$0xf] 0
          %1350 = vst [vmem:[%s1347 + $0xc] sm:$0xff] 0
          %1351 = vst [vmem:[%s1347 + $0x14] sm:$0xf] 0
        $region72: #{tpu_custom_call.1} parent=47 // pred_fallthru
          _
        %v1352 = vld [vmem:[#allocation2] sm:$0xff]
        %v1353 = vld [vmem:[#allocation2 + $0x8] sm:$0xf]
        %v1354 = vld [vmem:[#allocation2 + $0xc] sm:$0xff]
        %v1355 = vld [vmem:[#allocation2 + $0x14] sm:$0xf]
        %v1356 = vld [vmem:[#allocation2 + $0x18] sm:$0xff]
        %v1357 = vld [vmem:[#allocation2 + $0x20] sm:$0xf]
        %v1358 = vld [vmem:[#allocation2 + $0x24] sm:$0xff]
        %v1359 = vld [vmem:[#allocation2 + $0x2c] sm:$0xf]
        %v1360 = vld [vmem:[#allocation2 + $0x30] sm:$0xff]
        %v1361 = vld [vmem:[#allocation2 + $0x38] sm:$0xf]
        %v1362 = vld [vmem:[#allocation2 + $0x3c] sm:$0xff]
        %v1363 = vld [vmem:[#allocation2 + $0x44] sm:$0xf]
        %v1364 = vld [vmem:[#allocation2 + $0x48] sm:$0xff]
        %v1365 = vld [vmem:[#allocation2 + $0x50] sm:$0xf]
        %v1366 = vld [vmem:[#allocation2 + $0x54] sm:$0xff]
        %v1367 = vld [vmem:[#allocation2 + $0x5c] sm:$0xf]
        %v1368 = vld [vmem:[#allocation2 + $0x60] sm:$0xff]
        %v1369 = vld [vmem:[#allocation2 + $0x68] sm:$0xf]
        %v1370 = vld [vmem:[#allocation2 + $0x6c] sm:$0xff]
        %v1371 = vld [vmem:[#allocation2 + $0x74] sm:$0xf]
        %v1372 = vld [vmem:[#allocation2 + $0x78] sm:$0xff]
        %v1373 = vld [vmem:[#allocation2 + $0x80] sm:$0xf]
        %v1374 = vld [vmem:[#allocation2 + $0x84] sm:$0xff]
        %v1375 = vld [vmem:[#allocation2 + $0x8c] sm:$0xf]
        %v1376 = vld [vmem:[#allocation2 + $0x90] sm:$0xff]
        %v1377 = vld [vmem:[#allocation2 + $0x98] sm:$0xf]
        %v1378 = vld [vmem:[#allocation2 + $0x9c] sm:$0xff]
        %v1379 = vld [vmem:[#allocation2 + $0xa4] sm:$0xf]
        %v1380 = vld [vmem:[#allocation2 + $0xa8] sm:$0xff]
        %v1381 = vld [vmem:[#allocation2 + $0xb0] sm:$0xf]
        %v1382 = vld [vmem:[#allocation2 + $0xb4] sm:$0xff]
        %v1383 = vld [vmem:[#allocation2 + $0xbc] sm:$0xf]
        %v1384 = vld [vmem:[#allocation2 + $0xc0] sm:$0xff]
        %v1385 = vld [vmem:[#allocation2 + $0xc8] sm:$0xf]
        %v1386 = vld [vmem:[#allocation2 + $0xcc] sm:$0xff]
        %v1387 = vld [vmem:[#allocation2 + $0xd4] sm:$0xf]
        %v1388 = vld [vmem:[#allocation2 + $0xd8] sm:$0xff]
        %v1389 = vld [vmem:[#allocation2 + $0xe0] sm:$0xf]
        %v1390 = vld [vmem:[#allocation2 + $0xe4] sm:$0xff]
        %v1391 = vld [vmem:[#allocation2 + $0xec] sm:$0xf]
        %v1392 = vld [vmem:[#allocation2 + $0xf0] sm:$0xff]
        %v1393 = vld [vmem:[#allocation2 + $0xf8] sm:$0xf]
        %v1394 = vld [vmem:[#allocation2 + $0xfc] sm:$0xff]
        %v1395 = vld [vmem:[#allocation2 + $0x104] sm:$0xf]
        %v1396 = vld [vmem:[#allocation2 + $0x108] sm:$0xff]
        %v1397 = vld [vmem:[#allocation2 + $0x110] sm:$0xf]
        %v1398 = vld [vmem:[#allocation2 + $0x114] sm:$0xff]
        %v1399 = vld [vmem:[#allocation2 + $0x11c] sm:$0xf]
        %v1400 = vld [vmem:[#allocation2 + $0x120] sm:$0xff]
        %v1401 = vld [vmem:[#allocation2 + $0x128] sm:$0xf]
        %v1402 = vld [vmem:[#allocation2 + $0x12c] sm:$0xff]
        %v1403 = vld [vmem:[#allocation2 + $0x134] sm:$0xf]
        %v1404 = vld [vmem:[#allocation2 + $0x138] sm:$0xff]
        %v1405 = vld [vmem:[#allocation2 + $0x140] sm:$0xf]
        %v1406 = vld [vmem:[#allocation2 + $0x144] sm:$0xff]
        %v1407 = vld [vmem:[#allocation2 + $0x14c] sm:$0xf]
        %v1408 = vld [vmem:[#allocation2 + $0x150] sm:$0xff]
        %v1409 = vld [vmem:[#allocation2 + $0x158] sm:$0xf]
        %v1410 = vld [vmem:[#allocation2 + $0x15c] sm:$0xff]
        %v1411 = vld [vmem:[#allocation2 + $0x164] sm:$0xf]
        %v1412 = vld [vmem:[#allocation2 + $0x168] sm:$0xff]
        %v1413 = vld [vmem:[#allocation2 + $0x170] sm:$0xf]
        %v1414 = vld [vmem:[#allocation2 + $0x174] sm:$0xff]
        %v1415 = vld [vmem:[#allocation2 + $0x17c] sm:$0xf]
        %v1416 = vld [vmem:[#allocation11] sm:$0xf]
        %v1417 = vld [vmem:[#allocation11 + $0x4] sm:$0xf]
        %v1418 = vld [vmem:[#allocation11 + $0x8] sm:$0xf]
        %v1419 = vld [vmem:[#allocation11 + $0xc] sm:$0xf]
        %v1420 = vld [vmem:[#allocation11 + $0x10] sm:$0xf]
        %v1421 = vld [vmem:[#allocation11 + $0x14] sm:$0xf]
        %v1422 = vld [vmem:[#allocation11 + $0x18] sm:$0xf]
        %v1423 = vld [vmem:[#allocation11 + $0x1c] sm:$0xf]
        %v1424 = vld [vmem:[#allocation11 + $0x20] sm:$0xf]
        %v1425 = vld [vmem:[#allocation11 + $0x24] sm:$0xf]
        %v1426 = vld [vmem:[#allocation11 + $0x28] sm:$0xf]
        %v1427 = vld [vmem:[#allocation11 + $0x2c] sm:$0xf]
        %v1428 = vld [vmem:[#allocation11 + $0x30] sm:$0xf]
        %v1429 = vld [vmem:[#allocation11 + $0x34] sm:$0xf]
        %v1430 = vld [vmem:[#allocation11 + $0x38] sm:$0xf]
        %v1431 = vld [vmem:[#allocation11 + $0x3c] sm:$0xf]
        %v1432 = vld [vmem:[#allocation11 + $0x40] sm:$0xf]
        %v1433 = vld [vmem:[#allocation11 + $0x44] sm:$0xf]
        %v1434 = vld [vmem:[#allocation11 + $0x48] sm:$0xf]
        %v1435 = vld [vmem:[#allocation11 + $0x4c] sm:$0xf]
        %v1436 = vld [vmem:[#allocation11 + $0x50] sm:$0xf]
        %v1437 = vld [vmem:[#allocation11 + $0x54] sm:$0xf]
        %v1438 = vld [vmem:[#allocation11 + $0x58] sm:$0xf]
        %v1439 = vld [vmem:[#allocation11 + $0x5c] sm:$0xf]
        %v1440 = vld [vmem:[#allocation11 + $0x60] sm:$0xf]
        %v1441 = vld [vmem:[#allocation11 + $0x64] sm:$0xf]
        %v1442 = vld [vmem:[#allocation11 + $0x68] sm:$0xf]
        %v1443 = vld [vmem:[#allocation11 + $0x6c] sm:$0xf]
        %v1444 = vld [vmem:[#allocation11 + $0x70] sm:$0xf]
        %v1445 = vld [vmem:[#allocation11 + $0x74] sm:$0xf]
        %v1446 = vld [vmem:[#allocation11 + $0x78] sm:$0xf]
        %v1447 = vld [vmem:[#allocation11 + $0x7c] sm:$0xf]
        %v1448 = vld [vmem:[#allocation11 + $0x80] sm:$0xf]
        %v1449 = vld [vmem:[#allocation11 + $0x84] sm:$0xf]
        %v1450 = vld [vmem:[#allocation11 + $0x88] sm:$0xf]
        %v1451 = vld [vmem:[#allocation11 + $0x8c] sm:$0xf]
        %v1452 = vld [vmem:[#allocation11 + $0x90] sm:$0xf]
        %v1453 = vld [vmem:[#allocation11 + $0x94] sm:$0xf]
        %v1454 = vld [vmem:[#allocation11 + $0x98] sm:$0xf]
        %v1455 = vld [vmem:[#allocation11 + $0x9c] sm:$0xf]
        %v1456 = vld [vmem:[#allocation11 + $0xa0] sm:$0xf]
        %v1457 = vld [vmem:[#allocation11 + $0xa4] sm:$0xf]
        %v1458 = vld [vmem:[#allocation11 + $0xa8] sm:$0xf]
        %v1459 = vld [vmem:[#allocation11 + $0xac] sm:$0xf]
        %v1460 = vld [vmem:[#allocation11 + $0xb0] sm:$0xf]
        %v1461 = vld [vmem:[#allocation11 + $0xb4] sm:$0xf]
        %v1462 = vld [vmem:[#allocation11 + $0xb8] sm:$0xf]
        %v1463 = vld [vmem:[#allocation11 + $0xbc] sm:$0xf]
        %s1464 = scalar_lea.vmem [#allocation2], 24
        %v1465 = vld [vmem:[%s1464] sm:$0xff]
        %v1466 = vld [vmem:[%s1464 + $0x8] sm:$0xf]
        %v1467 = vld [vmem:[%s1464 + $0xc] sm:$0xff]
        %v1468 = vld [vmem:[%s1464 + $0x14] sm:$0xf]
        %v1469 = vld [vmem:[%s1464 + $0x18] sm:$0xff]
        %v1470 = vld [vmem:[%s1464 + $0x20] sm:$0xf]
        %v1471 = vld [vmem:[%s1464 + $0x24] sm:$0xff]
        %v1472 = vld [vmem:[%s1464 + $0x2c] sm:$0xf]
        %v1473 = vld [vmem:[%s1464 + $0x30] sm:$0xff]
        %v1474 = vld [vmem:[%s1464 + $0x38] sm:$0xf]
        %v1475 = vld [vmem:[%s1464 + $0x3c] sm:$0xff]
        %v1476 = vld [vmem:[%s1464 + $0x44] sm:$0xf]
        %v1477 = vld [vmem:[%s1464 + $0x48] sm:$0xff]
        %v1478 = vld [vmem:[%s1464 + $0x50] sm:$0xf]
        %v1479 = vld [vmem:[%s1464 + $0x54] sm:$0xff]
        %v1480 = vld [vmem:[%s1464 + $0x5c] sm:$0xf]
        %v1481 = vld [vmem:[%s1464 + $0x60] sm:$0xff]
        %v1482 = vld [vmem:[%s1464 + $0x68] sm:$0xf]
        %v1483 = vld [vmem:[%s1464 + $0x6c] sm:$0xff]
        %v1484 = vld [vmem:[%s1464 + $0x74] sm:$0xf]
        %v1485 = vld [vmem:[%s1464 + $0x78] sm:$0xff]
        %v1486 = vld [vmem:[%s1464 + $0x80] sm:$0xf]
        %v1487 = vld [vmem:[%s1464 + $0x84] sm:$0xff]
        %v1488 = vld [vmem:[%s1464 + $0x8c] sm:$0xf]
        %v1489 = vld [vmem:[%s1464 + $0x90] sm:$0xff]
        %v1490 = vld [vmem:[%s1464 + $0x98] sm:$0xf]
        %v1491 = vld [vmem:[%s1464 + $0x9c] sm:$0xff]
        %v1492 = vld [vmem:[%s1464 + $0xa4] sm:$0xf]
        %v1493 = vld [vmem:[%s1464 + $0xa8] sm:$0xff]
        %v1494 = vld [vmem:[%s1464 + $0xb0] sm:$0xf]
        %v1495 = vld [vmem:[%s1464 + $0xb4] sm:$0xff]
        %v1496 = vld [vmem:[%s1464 + $0xbc] sm:$0xf]
        %v1497 = vld [vmem:[%s1464 + $0xc0] sm:$0xff]
        %v1498 = vld [vmem:[%s1464 + $0xc8] sm:$0xf]
        %v1499 = vld [vmem:[%s1464 + $0xcc] sm:$0xff]
        %v1500 = vld [vmem:[%s1464 + $0xd4] sm:$0xf]
        %v1501 = vld [vmem:[%s1464 + $0xd8] sm:$0xff]
        %v1502 = vld [vmem:[%s1464 + $0xe0] sm:$0xf]
        %v1503 = vld [vmem:[%s1464 + $0xe4] sm:$0xff]
        %v1504 = vld [vmem:[%s1464 + $0xec] sm:$0xf]
        %v1505 = vld [vmem:[%s1464 + $0xf0] sm:$0xff]
        %v1506 = vld [vmem:[%s1464 + $0xf8] sm:$0xf]
        %v1507 = vld [vmem:[%s1464 + $0xfc] sm:$0xff]
        %v1508 = vld [vmem:[%s1464 + $0x104] sm:$0xf]
        %v1509 = vld [vmem:[%s1464 + $0x108] sm:$0xff]
        %v1510 = vld [vmem:[%s1464 + $0x110] sm:$0xf]
        %v1511 = vld [vmem:[%s1464 + $0x114] sm:$0xff]
        %v1512 = vld [vmem:[%s1464 + $0x11c] sm:$0xf]
        %v1513 = vld [vmem:[%s1464 + $0x120] sm:$0xff]
        %v1514 = vld [vmem:[%s1464 + $0x128] sm:$0xf]
        %v1515 = vld [vmem:[%s1464 + $0x12c] sm:$0xff]
        %v1516 = vld [vmem:[%s1464 + $0x134] sm:$0xf]
        %v1517 = vld [vmem:[%s1464 + $0x138] sm:$0xff]
        %v1518 = vld [vmem:[%s1464 + $0x140] sm:$0xf]
        %v1519 = vld [vmem:[%s1464 + $0x144] sm:$0xff]
        %v1520 = vld [vmem:[%s1464 + $0x14c] sm:$0xf]
        %v1521 = vld [vmem:[%s1464 + $0x150] sm:$0xff]
        %v1522 = vld [vmem:[%s1464 + $0x158] sm:$0xf]
        %v1523 = vld [vmem:[%s1464 + $0x15c] sm:$0xff]
        %v1524 = vld [vmem:[%s1464 + $0x164] sm:$0xf]
        %v1525 = vld [vmem:[%s1464 + $0x168] sm:$0xff]
        %v1526 = vld [vmem:[%s1464 + $0x170] sm:$0xf]
        %v1527 = vld [vmem:[%s1464 + $0x174] sm:$0xff]
        %v1528 = vld [vmem:[%s1464 + $0x17c] sm:$0xf]
        %s1529 = scalar_lea.vmem [#allocation11], 192
        %v1530 = vld [vmem:[%s1529] sm:$0xf]
        %v1531 = vld [vmem:[%s1529 + $0x4] sm:$0xf]
        %v1532 = vld [vmem:[%s1529 + $0x8] sm:$0xf]
        %v1533 = vld [vmem:[%s1529 + $0xc] sm:$0xf]
        %v1534 = vld [vmem:[%s1529 + $0x10] sm:$0xf]
        %v1535 = vld [vmem:[%s1529 + $0x14] sm:$0xf]
        %v1536 = vld [vmem:[%s1529 + $0x18] sm:$0xf]
        %v1537 = vld [vmem:[%s1529 + $0x1c] sm:$0xf]
        %v1538 = vld [vmem:[%s1529 + $0x20] sm:$0xf]
        %v1539 = vld [vmem:[%s1529 + $0x24] sm:$0xf]
        %v1540 = vld [vmem:[%s1529 + $0x28] sm:$0xf]
        %v1541 = vld [vmem:[%s1529 + $0x2c] sm:$0xf]
        %v1542 = vld [vmem:[%s1529 + $0x30] sm:$0xf]
        %v1543 = vld [vmem:[%s1529 + $0x34] sm:$0xf]
        %v1544 = vld [vmem:[%s1529 + $0x38] sm:$0xf]
        %v1545 = vld [vmem:[%s1529 + $0x3c] sm:$0xf]
        %v1546 = vld [vmem:[%s1529 + $0x40] sm:$0xf]
        %v1547 = vld [vmem:[%s1529 + $0x44] sm:$0xf]
        %v1548 = vld [vmem:[%s1529 + $0x48] sm:$0xf]
        %v1549 = vld [vmem:[%s1529 + $0x4c] sm:$0xf]
        %v1550 = vld [vmem:[%s1529 + $0x50] sm:$0xf]
        %v1551 = vld [vmem:[%s1529 + $0x54] sm:$0xf]
        %v1552 = vld [vmem:[%s1529 + $0x58] sm:$0xf]
        %v1553 = vld [vmem:[%s1529 + $0x5c] sm:$0xf]
        %v1554 = vld [vmem:[%s1529 + $0x60] sm:$0xf]
        %v1555 = vld [vmem:[%s1529 + $0x64] sm:$0xf]
        %v1556 = vld [vmem:[%s1529 + $0x68] sm:$0xf]
        %v1557 = vld [vmem:[%s1529 + $0x6c] sm:$0xf]
        %v1558 = vld [vmem:[%s1529 + $0x70] sm:$0xf]
        %v1559 = vld [vmem:[%s1529 + $0x74] sm:$0xf]
        %v1560 = vld [vmem:[%s1529 + $0x78] sm:$0xf]
        %v1561 = vld [vmem:[%s1529 + $0x7c] sm:$0xf]
        %v1562 = vld [vmem:[%s1529 + $0x80] sm:$0xf]
        %v1563 = vld [vmem:[%s1529 + $0x84] sm:$0xf]
        %v1564 = vld [vmem:[%s1529 + $0x88] sm:$0xf]
        %v1565 = vld [vmem:[%s1529 + $0x8c] sm:$0xf]
        %v1566 = vld [vmem:[%s1529 + $0x90] sm:$0xf]
        %v1567 = vld [vmem:[%s1529 + $0x94] sm:$0xf]
        %v1568 = vld [vmem:[%s1529 + $0x98] sm:$0xf]
        %v1569 = vld [vmem:[%s1529 + $0x9c] sm:$0xf]
        %v1570 = vld [vmem:[%s1529 + $0xa0] sm:$0xf]
        %v1571 = vld [vmem:[%s1529 + $0xa4] sm:$0xf]
        %v1572 = vld [vmem:[%s1529 + $0xa8] sm:$0xf]
        %v1573 = vld [vmem:[%s1529 + $0xac] sm:$0xf]
        %v1574 = vld [vmem:[%s1529 + $0xb0] sm:$0xf]
        %v1575 = vld [vmem:[%s1529 + $0xb4] sm:$0xf]
        %v1576 = vld [vmem:[%s1529 + $0xb8] sm:$0xf]
        %v1577 = vld [vmem:[%s1529 + $0xbc] sm:$0xf]
        %v1642 = vunpack.c.l.b16 %v1465
        %v1643 = vunpack.c.h.b16 %v1465
        %v1644 = vunpack.c.l.b16 %v1466
        %v1645 = vunpack.c.l.b16 %v1467
        %v1646 = vunpack.c.h.b16 %v1467
        %v1647 = vunpack.c.l.b16 %v1468
        %v1648 = vunpack.c.l.b16 %v1469
        %v1649 = vunpack.c.h.b16 %v1469
        %v1650 = vunpack.c.l.b16 %v1470
        %v1651 = vunpack.c.l.b16 %v1471
        %v1652 = vunpack.c.h.b16 %v1471
        %v1653 = vunpack.c.l.b16 %v1472
        %v1654 = vunpack.c.l.b16 %v1473
        %v1655 = vunpack.c.h.b16 %v1473
        %v1656 = vunpack.c.l.b16 %v1474
        %v1657 = vunpack.c.l.b16 %v1475
        %v1658 = vunpack.c.h.b16 %v1475
        %v1659 = vunpack.c.l.b16 %v1476
        %v1660 = vunpack.c.l.b16 %v1477
        %v1661 = vunpack.c.h.b16 %v1477
        %v1662 = vunpack.c.l.b16 %v1478
        %v1663 = vunpack.c.l.b16 %v1479
        %v1664 = vunpack.c.h.b16 %v1479
        %v1665 = vunpack.c.l.b16 %v1480
        %v1666 = vunpack.c.l.b16 %v1481
        %v1667 = vunpack.c.h.b16 %v1481
        %v1668 = vunpack.c.l.b16 %v1482
        %v1669 = vunpack.c.l.b16 %v1483
        %v1670 = vunpack.c.h.b16 %v1483
        %v1671 = vunpack.c.l.b16 %v1484
        %v1672 = vunpack.c.l.b16 %v1485
        %v1673 = vunpack.c.h.b16 %v1485
        %v1674 = vunpack.c.l.b16 %v1486
        %v1675 = vunpack.c.l.b16 %v1487
        %v1676 = vunpack.c.h.b16 %v1487
        %v1677 = vunpack.c.l.b16 %v1488
        %v1678 = vunpack.c.l.b16 %v1489
        %v1679 = vunpack.c.h.b16 %v1489
        %v1680 = vunpack.c.l.b16 %v1490
        %v1681 = vunpack.c.l.b16 %v1491
        %v1682 = vunpack.c.h.b16 %v1491
        %v1683 = vunpack.c.l.b16 %v1492
        %v1684 = vunpack.c.l.b16 %v1493
        %v1685 = vunpack.c.h.b16 %v1493
        %v1686 = vunpack.c.l.b16 %v1494
        %v1687 = vunpack.c.l.b16 %v1495
        %v1688 = vunpack.c.h.b16 %v1495
        %v1689 = vunpack.c.l.b16 %v1496
        %v1690 = vunpack.c.l.b16 %v1497
        %v1691 = vunpack.c.h.b16 %v1497
        %v1692 = vunpack.c.l.b16 %v1498
        %v1693 = vunpack.c.l.b16 %v1499
        %v1694 = vunpack.c.h.b16 %v1499
        %v1695 = vunpack.c.l.b16 %v1500
        %v1696 = vunpack.c.l.b16 %v1501
        %v1697 = vunpack.c.h.b16 %v1501
        %v1698 = vunpack.c.l.b16 %v1502
        %v1699 = vunpack.c.l.b16 %v1503
        %v1700 = vunpack.c.h.b16 %v1503
        %v1701 = vunpack.c.l.b16 %v1504
        %v1702 = vunpack.c.l.b16 %v1505
        %v1703 = vunpack.c.h.b16 %v1505
        %v1704 = vunpack.c.l.b16 %v1506
        %v1705 = vunpack.c.l.b16 %v1507
        %v1706 = vunpack.c.h.b16 %v1507
        %v1707 = vunpack.c.l.b16 %v1508
        %v1708 = vunpack.c.l.b16 %v1509
        %v1709 = vunpack.c.h.b16 %v1509
        %v1710 = vunpack.c.l.b16 %v1510
        %v1711 = vunpack.c.l.b16 %v1511
        %v1712 = vunpack.c.h.b16 %v1511
        %v1713 = vunpack.c.l.b16 %v1512
        %v1714 = vunpack.c.l.b16 %v1513
        %v1715 = vunpack.c.h.b16 %v1513
        %v1716 = vunpack.c.l.b16 %v1514
        %v1717 = vunpack.c.l.b16 %v1515
        %v1718 = vunpack.c.h.b16 %v1515
        %v1719 = vunpack.c.l.b16 %v1516
        %v1720 = vunpack.c.l.b16 %v1517
        %v1721 = vunpack.c.h.b16 %v1517
        %v1722 = vunpack.c.l.b16 %v1518
        %v1723 = vunpack.c.l.b16 %v1519
        %v1724 = vunpack.c.h.b16 %v1519
        %v1725 = vunpack.c.l.b16 %v1520
        %v1726 = vunpack.c.l.b16 %v1521
        %v1727 = vunpack.c.h.b16 %v1521
        %v1728 = vunpack.c.l.b16 %v1522
        %v1729 = vunpack.c.l.b16 %v1523
        %v1730 = vunpack.c.h.b16 %v1523
        %v1731 = vunpack.c.l.b16 %v1524
        %v1732 = vunpack.c.l.b16 %v1525
        %v1733 = vunpack.c.h.b16 %v1525
        %v1734 = vunpack.c.l.b16 %v1526
        %v1735 = vunpack.c.l.b16 %v1527
        %v1736 = vunpack.c.h.b16 %v1527
        %v1737 = vunpack.c.l.b16 %v1528
        %v1738 = vpack.c.b16 %v1645, %v1642
        %v1739 = vpack.c.b16 %v1646, %v1643
        %v1740 = vpack.c.b16 %v1647, %v1644
        %v1741 = vpack.c.b16 %v1651, %v1648
        %v1742 = vpack.c.b16 %v1652, %v1649
        %v1743 = vpack.c.b16 %v1653, %v1650
        %v1744 = vpack.c.b16 %v1657, %v1654
        %v1745 = vpack.c.b16 %v1658, %v1655
        %v1746 = vpack.c.b16 %v1659, %v1656
        %v1747 = vpack.c.b16 %v1663, %v1660
        %v1748 = vpack.c.b16 %v1664, %v1661
        %v1749 = vpack.c.b16 %v1665, %v1662
        %v1750 = vpack.c.b16 %v1669, %v1666
        %v1751 = vpack.c.b16 %v1670, %v1667
        %v1752 = vpack.c.b16 %v1671, %v1668
        %v1753 = vpack.c.b16 %v1675, %v1672
        %v1754 = vpack.c.b16 %v1676, %v1673
        %v1755 = vpack.c.b16 %v1677, %v1674
        %v1756 = vpack.c.b16 %v1681, %v1678
        %v1757 = vpack.c.b16 %v1682, %v1679
        %v1758 = vpack.c.b16 %v1683, %v1680
        %v1759 = vpack.c.b16 %v1687, %v1684
        %v1760 = vpack.c.b16 %v1688, %v1685
        %v1761 = vpack.c.b16 %v1689, %v1686
        %v1762 = vpack.c.b16 %v1693, %v1690
        %v1763 = vpack.c.b16 %v1694, %v1691
        %v1764 = vpack.c.b16 %v1695, %v1692
        %v1765 = vpack.c.b16 %v1699, %v1696
        %v1766 = vpack.c.b16 %v1700, %v1697
        %v1767 = vpack.c.b16 %v1701, %v1698
        %v1768 = vpack.c.b16 %v1705, %v1702
        %v1769 = vpack.c.b16 %v1706, %v1703
        %v1770 = vpack.c.b16 %v1707, %v1704
        %v1771 = vpack.c.b16 %v1711, %v1708
        %v1772 = vpack.c.b16 %v1712, %v1709
        %v1773 = vpack.c.b16 %v1713, %v1710
        %v1774 = vpack.c.b16 %v1717, %v1714
        %v1775 = vpack.c.b16 %v1718, %v1715
        %v1776 = vpack.c.b16 %v1719, %v1716
        %v1777 = vpack.c.b16 %v1723, %v1720
        %v1778 = vpack.c.b16 %v1724, %v1721
        %v1779 = vpack.c.b16 %v1725, %v1722
        %v1780 = vpack.c.b16 %v1729, %v1726
        %v1781 = vpack.c.b16 %v1730, %v1727
        %v1782 = vpack.c.b16 %v1731, %v1728
        %v1783 = vpack.c.b16 %v1735, %v1732
        %v1784 = vpack.c.b16 %v1736, %v1733
        %v1785 = vpack.c.b16 %v1737, %v1734
        %v1882 = vunpack.c.l.b16 %v1530
        %v1883 = vunpack.c.l.b16 %v1531
        %v1884 = vunpack.c.l.b16 %v1532
        %v1885 = vunpack.c.l.b16 %v1533
        %v1886 = vunpack.c.l.b16 %v1534
        %v1887 = vunpack.c.l.b16 %v1535
        %v1888 = vunpack.c.l.b16 %v1536
        %v1889 = vunpack.c.l.b16 %v1537
        %v1890 = vunpack.c.l.b16 %v1538
        %v1891 = vunpack.c.l.b16 %v1539
        %v1892 = vunpack.c.l.b16 %v1540
        %v1893 = vunpack.c.l.b16 %v1541
        %v1894 = vunpack.c.l.b16 %v1542
        %v1895 = vunpack.c.l.b16 %v1543
        %v1896 = vunpack.c.l.b16 %v1544
        %v1897 = vunpack.c.l.b16 %v1545
        %v1898 = vunpack.c.l.b16 %v1546
        %v1899 = vunpack.c.l.b16 %v1547
        %v1900 = vunpack.c.l.b16 %v1548
        %v1901 = vunpack.c.l.b16 %v1549
        %v1902 = vunpack.c.l.b16 %v1550
        %v1903 = vunpack.c.l.b16 %v1551
        %v1904 = vunpack.c.l.b16 %v1552
        %v1905 = vunpack.c.l.b16 %v1553
        %v1906 = vunpack.c.l.b16 %v1554
        %v1907 = vunpack.c.l.b16 %v1555
        %v1908 = vunpack.c.l.b16 %v1556
        %v1909 = vunpack.c.l.b16 %v1557
        %v1910 = vunpack.c.l.b16 %v1558
        %v1911 = vunpack.c.l.b16 %v1559
        %v1912 = vunpack.c.l.b16 %v1560
        %v1913 = vunpack.c.l.b16 %v1561
        %v1914 = vunpack.c.l.b16 %v1562
        %v1915 = vunpack.c.l.b16 %v1563
        %v1916 = vunpack.c.l.b16 %v1564
        %v1917 = vunpack.c.l.b16 %v1565
        %v1918 = vunpack.c.l.b16 %v1566
        %v1919 = vunpack.c.l.b16 %v1567
        %v1920 = vunpack.c.l.b16 %v1568
        %v1921 = vunpack.c.l.b16 %v1569
        %v1922 = vunpack.c.l.b16 %v1570
        %v1923 = vunpack.c.l.b16 %v1571
        %v1924 = vunpack.c.l.b16 %v1572
        %v1925 = vunpack.c.l.b16 %v1573
        %v1926 = vunpack.c.l.b16 %v1574
        %v1927 = vunpack.c.l.b16 %v1575
        %v1928 = vunpack.c.l.b16 %v1576
        %v1929 = vunpack.c.l.b16 %v1577
        %v1930 = vpack.c.b16 %v1883, %v1882
        %v1931 = vpack.c.b16 %v1885, %v1884
        %v1932 = vpack.c.b16 %v1887, %v1886
        %v1933 = vpack.c.b16 %v1889, %v1888
        %v1934 = vpack.c.b16 %v1891, %v1890
        %v1935 = vpack.c.b16 %v1893, %v1892
        %v1936 = vpack.c.b16 %v1895, %v1894
        %v1937 = vpack.c.b16 %v1897, %v1896
        %v1938 = vpack.c.b16 %v1899, %v1898
        %v1939 = vpack.c.b16 %v1901, %v1900
        %v1940 = vpack.c.b16 %v1903, %v1902
        %v1941 = vpack.c.b16 %v1905, %v1904
        %v1942 = vpack.c.b16 %v1907, %v1906
        %v1943 = vpack.c.b16 %v1909, %v1908
        %v1944 = vpack.c.b16 %v1911, %v1910
        %v1945 = vpack.c.b16 %v1913, %v1912
        %v1946 = vpack.c.b16 %v1915, %v1914
        %v1947 = vpack.c.b16 %v1917, %v1916
        %v1948 = vpack.c.b16 %v1919, %v1918
        %v1949 = vpack.c.b16 %v1921, %v1920
        %v1950 = vpack.c.b16 %v1923, %v1922
        %v1951 = vpack.c.b16 %v1925, %v1924
        %v1952 = vpack.c.b16 %v1927, %v1926
        %v1953 = vpack.c.b16 %v1929, %v1928
        %1978 = vmatpush.bf16.msra.mxu0 %v1937
        %1979 = vmatpush.bf16.msra.mxu0 %v1936
        %1980 = vmatpush.bf16.msra.mxu0 %v1935
        %1981 = vmatpush.bf16.msra.mxu0 %v1934
        %1982 = vmatpush.bf16.msra.mxu0 %v1933
        %1983 = vmatpush.bf16.msra.mxu0 %v1932
        %1984 = vmatpush.bf16.msra.mxu0 %v1931
        %1985 = vmatpush.bf16.msra.mxu0 %v1930
        %1986 = vmatmul.bf16.gmra.mxu0 %v1738
        %v1987 = vpop.f32.mrf.mxu0
        %v1988 = vadd.f32 0.0, %v1987
        %v1989 = vpop.f32.mrf.mxu0
        %v1990 = vadd.f32 0.0, %v1989
        %1991 = vmatmul.bf16.gmra.mxu0 %v1741
        %v1992 = vpop.f32.mrf.mxu0
        %v1993 = vadd.f32 0.0, %v1992
        %v1994 = vpop.f32.mrf.mxu0
        %v1995 = vadd.f32 0.0, %v1994
        %1996 = vmatmul.bf16.gmra.mxu0 %v1744
        %v1997 = vpop.f32.mrf.mxu0
        %v1998 = vadd.f32 0.0, %v1997
        %v1999 = vpop.f32.mrf.mxu0
        %v2000 = vadd.f32 0.0, %v1999
        %2001 = vmatmul.bf16.gmra.mxu0 %v1747
        %v2002 = vpop.f32.mrf.mxu0
        %v2003 = vadd.f32 0.0, %v2002
        %v2004 = vpop.f32.mrf.mxu0
        %v2005 = vadd.f32 0.0, %v2004
        %2006 = vmatmul.bf16.gmra.mxu0 %v1750
        %v2007 = vpop.f32.mrf.mxu0
        %v2008 = vadd.f32 0.0, %v2007
        %v2009 = vpop.f32.mrf.mxu0
        %v2010 = vadd.f32 0.0, %v2009
        %2011 = vmatmul.bf16.gmra.mxu0 %v1753
        %v2012 = vpop.f32.mrf.mxu0
        %v2013 = vadd.f32 0.0, %v2012
        %v2014 = vpop.f32.mrf.mxu0
        %v2015 = vadd.f32 0.0, %v2014
        %2016 = vmatmul.bf16.gmra.mxu0 %v1756
        %v2017 = vpop.f32.mrf.mxu0
        %v2018 = vadd.f32 0.0, %v2017
        %v2019 = vpop.f32.mrf.mxu0
        %v2020 = vadd.f32 0.0, %v2019
        %2021 = vmatmul.bf16.gmra.mxu0 %v1759
        %v2022 = vpop.f32.mrf.mxu0
        %v2023 = vadd.f32 0.0, %v2022
        %v2024 = vpop.f32.mrf.mxu0
        %v2025 = vadd.f32 0.0, %v2024
        %2026 = vmatmul.bf16.gmra.mxu0 %v1762
        %v2027 = vpop.f32.mrf.mxu0
        %v2028 = vadd.f32 0.0, %v2027
        %v2029 = vpop.f32.mrf.mxu0
        %v2030 = vadd.f32 0.0, %v2029
        %2031 = vmatmul.bf16.gmra.mxu0 %v1765
        %v2032 = vpop.f32.mrf.mxu0
        %v2033 = vadd.f32 0.0, %v2032
        %v2034 = vpop.f32.mrf.mxu0
        %v2035 = vadd.f32 0.0, %v2034
        %2036 = vmatmul.bf16.gmra.mxu0 %v1768
        %v2037 = vpop.f32.mrf.mxu0
        %v2038 = vadd.f32 0.0, %v2037
        %v2039 = vpop.f32.mrf.mxu0
        %v2040 = vadd.f32 0.0, %v2039
        %2041 = vmatmul.bf16.gmra.mxu0 %v1771
        %v2042 = vpop.f32.mrf.mxu0
        %v2043 = vadd.f32 0.0, %v2042
        %v2044 = vpop.f32.mrf.mxu0
        %v2045 = vadd.f32 0.0, %v2044
        %2046 = vmatmul.bf16.gmra.mxu0 %v1774
        %v2047 = vpop.f32.mrf.mxu0
        %v2048 = vadd.f32 0.0, %v2047
        %v2049 = vpop.f32.mrf.mxu0
        %v2050 = vadd.f32 0.0, %v2049
        %2051 = vmatmul.bf16.gmra.mxu0 %v1777
        %v2052 = vpop.f32.mrf.mxu0
        %v2053 = vadd.f32 0.0, %v2052
        %v2054 = vpop.f32.mrf.mxu0
        %v2055 = vadd.f32 0.0, %v2054
        %2056 = vmatmul.bf16.gmra.mxu0 %v1780
        %v2057 = vpop.f32.mrf.mxu0
        %v2058 = vadd.f32 0.0, %v2057
        %v2059 = vpop.f32.mrf.mxu0
        %v2060 = vadd.f32 0.0, %v2059
        %2061 = vmatmul.bf16.gmra.mxu0 %v1783
        %v2062 = vpop.f32.mrf.mxu0
        %v2063 = vadd.f32 0.0, %v2062
        %v2064 = vpop.f32.mrf.mxu0
        %v2065 = vadd.f32 0.0, %v2064
        %2066 = vdwg.mxu0
        %2067 = vmatpush.bf16.msra.mxu0 %v1945
        %2068 = vmatpush.bf16.msra.mxu0 %v1944
        %2069 = vmatpush.bf16.msra.mxu0 %v1943
        %2070 = vmatpush.bf16.msra.mxu0 %v1942
        %2071 = vmatpush.bf16.msra.mxu0 %v1941
        %2072 = vmatpush.bf16.msra.mxu0 %v1940
        %2073 = vmatpush.bf16.msra.mxu0 %v1939
        %2074 = vmatpush.bf16.msra.mxu0 %v1938
        %2075 = vmatmul.bf16.gmra.mxu0 %v1739
        %v2076 = vpop.f32.mrf.mxu0
        %v2077 = vadd.f32 %v1988, %v2076
        %v2078 = vpop.f32.mrf.mxu0
        %v2079 = vadd.f32 %v1990, %v2078
        %2080 = vmatmul.bf16.gmra.mxu0 %v1742
        %v2081 = vpop.f32.mrf.mxu0
        %v2082 = vadd.f32 %v1993, %v2081
        %v2083 = vpop.f32.mrf.mxu0
        %v2084 = vadd.f32 %v1995, %v2083
        %2085 = vmatmul.bf16.gmra.mxu0 %v1745
        %v2086 = vpop.f32.mrf.mxu0
        %v2087 = vadd.f32 %v1998, %v2086
        %v2088 = vpop.f32.mrf.mxu0
        %v2089 = vadd.f32 %v2000, %v2088
        %2090 = vmatmul.bf16.gmra.mxu0 %v1748
        %v2091 = vpop.f32.mrf.mxu0
        %v2092 = vadd.f32 %v2003, %v2091
        %v2093 = vpop.f32.mrf.mxu0
        %v2094 = vadd.f32 %v2005, %v2093
        %2095 = vmatmul.bf16.gmra.mxu0 %v1751
        %v2096 = vpop.f32.mrf.mxu0
        %v2097 = vadd.f32 %v2008, %v2096
        %v2098 = vpop.f32.mrf.mxu0
        %v2099 = vadd.f32 %v2010, %v2098
        %2100 = vmatmul.bf16.gmra.mxu0 %v1754
        %v2101 = vpop.f32.mrf.mxu0
        %v2102 = vadd.f32 %v2013, %v2101
        %v2103 = vpop.f32.mrf.mxu0
        %v2104 = vadd.f32 %v2015, %v2103
        %2105 = vmatmul.bf16.gmra.mxu0 %v1757
        %v2106 = vpop.f32.mrf.mxu0
        %v2107 = vadd.f32 %v2018, %v2106
        %v2108 = vpop.f32.mrf.mxu0
        %v2109 = vadd.f32 %v2020, %v2108
        %2110 = vmatmul.bf16.gmra.mxu0 %v1760
        %v2111 = vpop.f32.mrf.mxu0
        %v2112 = vadd.f32 %v2023, %v2111
        %v2113 = vpop.f32.mrf.mxu0
        %v2114 = vadd.f32 %v2025, %v2113
        %2115 = vmatmul.bf16.gmra.mxu0 %v1763
        %v2116 = vpop.f32.mrf.mxu0
        %v2117 = vadd.f32 %v2028, %v2116
        %v2118 = vpop.f32.mrf.mxu0
        %v2119 = vadd.f32 %v2030, %v2118
        %2120 = vmatmul.bf16.gmra.mxu0 %v1766
        %v2121 = vpop.f32.mrf.mxu0
        %v2122 = vadd.f32 %v2033, %v2121
        %v2123 = vpop.f32.mrf.mxu0
        %v2124 = vadd.f32 %v2035, %v2123
        %2125 = vmatmul.bf16.gmra.mxu0 %v1769
        %v2126 = vpop.f32.mrf.mxu0
        %v2127 = vadd.f32 %v2038, %v2126
        %v2128 = vpop.f32.mrf.mxu0
        %v2129 = vadd.f32 %v2040, %v2128
        %2130 = vmatmul.bf16.gmra.mxu0 %v1772
        %v2131 = vpop.f32.mrf.mxu0
        %v2132 = vadd.f32 %v2043, %v2131
        %v2133 = vpop.f32.mrf.mxu0
        %v2134 = vadd.f32 %v2045, %v2133
        %2135 = vmatmul.bf16.gmra.mxu0 %v1775
        %v2136 = vpop.f32.mrf.mxu0
        %v2137 = vadd.f32 %v2048, %v2136
        %v2138 = vpop.f32.mrf.mxu0
        %v2139 = vadd.f32 %v2050, %v2138
        %2140 = vmatmul.bf16.gmra.mxu0 %v1778
        %v2141 = vpop.f32.mrf.mxu0
        %v2142 = vadd.f32 %v2053, %v2141
        %v2143 = vpop.f32.mrf.mxu0
        %v2144 = vadd.f32 %v2055, %v2143
        %2145 = vmatmul.bf16.gmra.mxu0 %v1781
        %v2146 = vpop.f32.mrf.mxu0
        %v2147 = vadd.f32 %v2058, %v2146
        %v2148 = vpop.f32.mrf.mxu0
        %v2149 = vadd.f32 %v2060, %v2148
        %2150 = vmatmul.bf16.gmra.mxu0 %v1784
        %v2151 = vpop.f32.mrf.mxu0
        %v2152 = vadd.f32 %v2063, %v2151
        %v2153 = vpop.f32.mrf.mxu0
        %v2154 = vadd.f32 %v2065, %v2153
        %2155 = vdwg.mxu0
        %2156 = vmatpush.bf16.msra.mxu0 %v1953
        %2157 = vmatpush.bf16.msra.mxu0 %v1952
        %2158 = vmatpush.bf16.msra.mxu0 %v1951
        %2159 = vmatpush.bf16.msra.mxu0 %v1950
        %2160 = vmatpush.bf16.msra.mxu0 %v1949
        %2161 = vmatpush.bf16.msra.mxu0 %v1948
        %2162 = vmatpush.bf16.msra.mxu0 %v1947
        %2163 = vmatpush.bf16.msra.mxu0 %v1946
        %2164 = vmatmul.bf16.gmra.mxu0 %v1740
        %v2165 = vpop.f32.mrf.mxu0
        %v2166 = vadd.f32 %v2077, %v2165
        %v2167 = vpop.f32.mrf.mxu0
        %v2168 = vadd.f32 %v2079, %v2167
        %2169 = vmatmul.bf16.gmra.mxu0 %v1743
        %v2170 = vpop.f32.mrf.mxu0
        %v2171 = vadd.f32 %v2082, %v2170
        %v2172 = vpop.f32.mrf.mxu0
        %v2173 = vadd.f32 %v2084, %v2172
        %2174 = vmatmul.bf16.gmra.mxu0 %v1746
        %v2175 = vpop.f32.mrf.mxu0
        %v2176 = vadd.f32 %v2087, %v2175
        %v2177 = vpop.f32.mrf.mxu0
        %v2178 = vadd.f32 %v2089, %v2177
        %2179 = vmatmul.bf16.gmra.mxu0 %v1749
        %v2180 = vpop.f32.mrf.mxu0
        %v2181 = vadd.f32 %v2092, %v2180
        %v2182 = vpop.f32.mrf.mxu0
        %v2183 = vadd.f32 %v2094, %v2182
        %2184 = vmatmul.bf16.gmra.mxu0 %v1752
        %v2185 = vpop.f32.mrf.mxu0
        %v2186 = vadd.f32 %v2097, %v2185
        %v2187 = vpop.f32.mrf.mxu0
        %v2188 = vadd.f32 %v2099, %v2187
        %2189 = vmatmul.bf16.gmra.mxu0 %v1755
        %v2190 = vpop.f32.mrf.mxu0
        %v2191 = vadd.f32 %v2102, %v2190
        %v2192 = vpop.f32.mrf.mxu0
        %v2193 = vadd.f32 %v2104, %v2192
        %2194 = vmatmul.bf16.gmra.mxu0 %v1758
        %v2195 = vpop.f32.mrf.mxu0
        %v2196 = vadd.f32 %v2107, %v2195
        %v2197 = vpop.f32.mrf.mxu0
        %v2198 = vadd.f32 %v2109, %v2197
        %2199 = vmatmul.bf16.gmra.mxu0 %v1761
        %v2200 = vpop.f32.mrf.mxu0
        %v2201 = vadd.f32 %v2112, %v2200
        %v2202 = vpop.f32.mrf.mxu0
        %v2203 = vadd.f32 %v2114, %v2202
        %2204 = vmatmul.bf16.gmra.mxu0 %v1764
        %v2205 = vpop.f32.mrf.mxu0
        %v2206 = vadd.f32 %v2117, %v2205
        %v2207 = vpop.f32.mrf.mxu0
        %v2208 = vadd.f32 %v2119, %v2207
        %2209 = vmatmul.bf16.gmra.mxu0 %v1767
        %v2210 = vpop.f32.mrf.mxu0
        %v2211 = vadd.f32 %v2122, %v2210
        %v2212 = vpop.f32.mrf.mxu0
        %v2213 = vadd.f32 %v2124, %v2212
        %2214 = vmatmul.bf16.gmra.mxu0 %v1770
        %v2215 = vpop.f32.mrf.mxu0
        %v2216 = vadd.f32 %v2127, %v2215
        %v2217 = vpop.f32.mrf.mxu0
        %v2218 = vadd.f32 %v2129, %v2217
        %2219 = vmatmul.bf16.gmra.mxu0 %v1773
        %v2220 = vpop.f32.mrf.mxu0
        %v2221 = vadd.f32 %v2132, %v2220
        %v2222 = vpop.f32.mrf.mxu0
        %v2223 = vadd.f32 %v2134, %v2222
        %2224 = vmatmul.bf16.gmra.mxu0 %v1776
        %v2225 = vpop.f32.mrf.mxu0
        %v2226 = vadd.f32 %v2137, %v2225
        %v2227 = vpop.f32.mrf.mxu0
        %v2228 = vadd.f32 %v2139, %v2227
        %2229 = vmatmul.bf16.gmra.mxu0 %v1779
        %v2230 = vpop.f32.mrf.mxu0
        %v2231 = vadd.f32 %v2142, %v2230
        %v2232 = vpop.f32.mrf.mxu0
        %v2233 = vadd.f32 %v2144, %v2232
        %2234 = vmatmul.bf16.gmra.mxu0 %v1782
        %v2235 = vpop.f32.mrf.mxu0
        %v2236 = vadd.f32 %v2147, %v2235
        %v2237 = vpop.f32.mrf.mxu0
        %v2238 = vadd.f32 %v2149, %v2237
        %2239 = vmatmul.bf16.gmra.mxu0 %v1785
        %v2240 = vpop.f32.mrf.mxu0
        %v2241 = vadd.f32 %v2152, %v2240
        %v2242 = vpop.f32.mrf.mxu0
        %v2243 = vadd.f32 %v2154, %v2242
        %2244 = vdwg.mxu0
        %v2309 = vunpack.c.l.b16 %v1352
        %v2310 = vunpack.c.h.b16 %v1352
        %v2311 = vunpack.c.l.b16 %v1353
        %v2312 = vunpack.c.l.b16 %v1354
        %v2313 = vunpack.c.h.b16 %v1354
        %v2314 = vunpack.c.l.b16 %v1355
        %v2315 = vunpack.c.l.b16 %v1356
        %v2316 = vunpack.c.h.b16 %v1356
        %v2317 = vunpack.c.l.b16 %v1357
        %v2318 = vunpack.c.l.b16 %v1358
        %v2319 = vunpack.c.h.b16 %v1358
        %v2320 = vunpack.c.l.b16 %v1359
        %v2321 = vunpack.c.l.b16 %v1360
        %v2322 = vunpack.c.h.b16 %v1360
        %v2323 = vunpack.c.l.b16 %v1361
        %v2324 = vunpack.c.l.b16 %v1362
        %v2325 = vunpack.c.h.b16 %v1362
        %v2326 = vunpack.c.l.b16 %v1363
        %v2327 = vunpack.c.l.b16 %v1364
        %v2328 = vunpack.c.h.b16 %v1364
        %v2329 = vunpack.c.l.b16 %v1365
        %v2330 = vunpack.c.l.b16 %v1366
        %v2331 = vunpack.c.h.b16 %v1366
        %v2332 = vunpack.c.l.b16 %v1367
        %v2333 = vunpack.c.l.b16 %v1368
        %v2334 = vunpack.c.h.b16 %v1368
        %v2335 = vunpack.c.l.b16 %v1369
        %v2336 = vunpack.c.l.b16 %v1370
        %v2337 = vunpack.c.h.b16 %v1370
        %v2338 = vunpack.c.l.b16 %v1371
        %v2339 = vunpack.c.l.b16 %v1372
        %v2340 = vunpack.c.h.b16 %v1372
        %v2341 = vunpack.c.l.b16 %v1373
        %v2342 = vunpack.c.l.b16 %v1374
        %v2343 = vunpack.c.h.b16 %v1374
        %v2344 = vunpack.c.l.b16 %v1375
        %v2345 = vunpack.c.l.b16 %v1376
        %v2346 = vunpack.c.h.b16 %v1376
        %v2347 = vunpack.c.l.b16 %v1377
        %v2348 = vunpack.c.l.b16 %v1378
        %v2349 = vunpack.c.h.b16 %v1378
        %v2350 = vunpack.c.l.b16 %v1379
        %v2351 = vunpack.c.l.b16 %v1380
        %v2352 = vunpack.c.h.b16 %v1380
        %v2353 = vunpack.c.l.b16 %v1381
        %v2354 = vunpack.c.l.b16 %v1382
        %v2355 = vunpack.c.h.b16 %v1382
        %v2356 = vunpack.c.l.b16 %v1383
        %v2357 = vunpack.c.l.b16 %v1384
        %v2358 = vunpack.c.h.b16 %v1384
        %v2359 = vunpack.c.l.b16 %v1385
        %v2360 = vunpack.c.l.b16 %v1386
        %v2361 = vunpack.c.h.b16 %v1386
        %v2362 = vunpack.c.l.b16 %v1387
        %v2363 = vunpack.c.l.b16 %v1388
        %v2364 = vunpack.c.h.b16 %v1388
        %v2365 = vunpack.c.l.b16 %v1389
        %v2366 = vunpack.c.l.b16 %v1390
        %v2367 = vunpack.c.h.b16 %v1390
        %v2368 = vunpack.c.l.b16 %v1391
        %v2369 = vunpack.c.l.b16 %v1392
        %v2370 = vunpack.c.h.b16 %v1392
        %v2371 = vunpack.c.l.b16 %v1393
        %v2372 = vunpack.c.l.b16 %v1394
        %v2373 = vunpack.c.h.b16 %v1394
        %v2374 = vunpack.c.l.b16 %v1395
        %v2375 = vunpack.c.l.b16 %v1396
        %v2376 = vunpack.c.h.b16 %v1396
        %v2377 = vunpack.c.l.b16 %v1397
        %v2378 = vunpack.c.l.b16 %v1398
        %v2379 = vunpack.c.h.b16 %v1398
        %v2380 = vunpack.c.l.b16 %v1399
        %v2381 = vunpack.c.l.b16 %v1400
        %v2382 = vunpack.c.h.b16 %v1400
        %v2383 = vunpack.c.l.b16 %v1401
        %v2384 = vunpack.c.l.b16 %v1402
        %v2385 = vunpack.c.h.b16 %v1402
        %v2386 = vunpack.c.l.b16 %v1403
        %v2387 = vunpack.c.l.b16 %v1404
        %v2388 = vunpack.c.h.b16 %v1404
        %v2389 = vunpack.c.l.b16 %v1405
        %v2390 = vunpack.c.l.b16 %v1406
        %v2391 = vunpack.c.h.b16 %v1406
        %v2392 = vunpack.c.l.b16 %v1407
        %v2393 = vunpack.c.l.b16 %v1408
        %v2394 = vunpack.c.h.b16 %v1408
        %v2395 = vunpack.c.l.b16 %v1409
        %v2396 = vunpack.c.l.b16 %v1410
        %v2397 = vunpack.c.h.b16 %v1410
        %v2398 = vunpack.c.l.b16 %v1411
        %v2399 = vunpack.c.l.b16 %v1412
        %v2400 = vunpack.c.h.b16 %v1412
        %v2401 = vunpack.c.l.b16 %v1413
        %v2402 = vunpack.c.l.b16 %v1414
        %v2403 = vunpack.c.h.b16 %v1414
        %v2404 = vunpack.c.l.b16 %v1415
        %v2405 = vpack.c.b16 %v2312, %v2309
        %v2406 = vpack.c.b16 %v2313, %v2310
        %v2407 = vpack.c.b16 %v2314, %v2311
        %v2408 = vpack.c.b16 %v2318, %v2315
        %v2409 = vpack.c.b16 %v2319, %v2316
        %v2410 = vpack.c.b16 %v2320, %v2317
        %v2411 = vpack.c.b16 %v2324, %v2321
        %v2412 = vpack.c.b16 %v2325, %v2322
        %v2413 = vpack.c.b16 %v2326, %v2323
        %v2414 = vpack.c.b16 %v2330, %v2327
        %v2415 = vpack.c.b16 %v2331, %v2328
        %v2416 = vpack.c.b16 %v2332, %v2329
        %v2417 = vpack.c.b16 %v2336, %v2333
        %v2418 = vpack.c.b16 %v2337, %v2334
        %v2419 = vpack.c.b16 %v2338, %v2335
        %v2420 = vpack.c.b16 %v2342, %v2339
        %v2421 = vpack.c.b16 %v2343, %v2340
        %v2422 = vpack.c.b16 %v2344, %v2341
        %v2423 = vpack.c.b16 %v2348, %v2345
        %v2424 = vpack.c.b16 %v2349, %v2346
        %v2425 = vpack.c.b16 %v2350, %v2347
        %v2426 = vpack.c.b16 %v2354, %v2351
        %v2427 = vpack.c.b16 %v2355, %v2352
        %v2428 = vpack.c.b16 %v2356, %v2353
        %v2429 = vpack.c.b16 %v2360, %v2357
        %v2430 = vpack.c.b16 %v2361, %v2358
        %v2431 = vpack.c.b16 %v2362, %v2359
        %v2432 = vpack.c.b16 %v2366, %v2363
        %v2433 = vpack.c.b16 %v2367, %v2364
        %v2434 = vpack.c.b16 %v2368, %v2365
        %v2435 = vpack.c.b16 %v2372, %v2369
        %v2436 = vpack.c.b16 %v2373, %v2370
        %v2437 = vpack.c.b16 %v2374, %v2371
        %v2438 = vpack.c.b16 %v2378, %v2375
        %v2439 = vpack.c.b16 %v2379, %v2376
        %v2440 = vpack.c.b16 %v2380, %v2377
        %v2441 = vpack.c.b16 %v2384, %v2381
        %v2442 = vpack.c.b16 %v2385, %v2382
        %v2443 = vpack.c.b16 %v2386, %v2383
        %v2444 = vpack.c.b16 %v2390, %v2387
        %v2445 = vpack.c.b16 %v2391, %v2388
        %v2446 = vpack.c.b16 %v2392, %v2389
        %v2447 = vpack.c.b16 %v2396, %v2393
        %v2448 = vpack.c.b16 %v2397, %v2394
        %v2449 = vpack.c.b16 %v2398, %v2395
        %v2450 = vpack.c.b16 %v2402, %v2399
        %v2451 = vpack.c.b16 %v2403, %v2400
        %v2452 = vpack.c.b16 %v2404, %v2401
        %v2549 = vunpack.c.l.b16 %v1416
        %v2550 = vunpack.c.l.b16 %v1417
        %v2551 = vunpack.c.l.b16 %v1418
        %v2552 = vunpack.c.l.b16 %v1419
        %v2553 = vunpack.c.l.b16 %v1420
        %v2554 = vunpack.c.l.b16 %v1421
        %v2555 = vunpack.c.l.b16 %v1422
        %v2556 = vunpack.c.l.b16 %v1423
        %v2557 = vunpack.c.l.b16 %v1424
        %v2558 = vunpack.c.l.b16 %v1425
        %v2559 = vunpack.c.l.b16 %v1426
        %v2560 = vunpack.c.l.b16 %v1427
        %v2561 = vunpack.c.l.b16 %v1428
        %v2562 = vunpack.c.l.b16 %v1429
        %v2563 = vunpack.c.l.b16 %v1430
        %v2564 = vunpack.c.l.b16 %v1431
        %v2565 = vunpack.c.l.b16 %v1432
        %v2566 = vunpack.c.l.b16 %v1433
        %v2567 = vunpack.c.l.b16 %v1434
        %v2568 = vunpack.c.l.b16 %v1435
        %v2569 = vunpack.c.l.b16 %v1436
        %v2570 = vunpack.c.l.b16 %v1437
        %v2571 = vunpack.c.l.b16 %v1438
        %v2572 = vunpack.c.l.b16 %v1439
        %v2573 = vunpack.c.l.b16 %v1440
        %v2574 = vunpack.c.l.b16 %v1441
        %v2575 = vunpack.c.l.b16 %v1442
        %v2576 = vunpack.c.l.b16 %v1443
        %v2577 = vunpack.c.l.b16 %v1444
        %v2578 = vunpack.c.l.b16 %v1445
        %v2579 = vunpack.c.l.b16 %v1446
        %v2580 = vunpack.c.l.b16 %v1447
        %v2581 = vunpack.c.l.b16 %v1448
        %v2582 = vunpack.c.l.b16 %v1449
        %v2583 = vunpack.c.l.b16 %v1450
        %v2584 = vunpack.c.l.b16 %v1451
        %v2585 = vunpack.c.l.b16 %v1452
        %v2586 = vunpack.c.l.b16 %v1453
        %v2587 = vunpack.c.l.b16 %v1454
        %v2588 = vunpack.c.l.b16 %v1455
        %v2589 = vunpack.c.l.b16 %v1456
        %v2590 = vunpack.c.l.b16 %v1457
        %v2591 = vunpack.c.l.b16 %v1458
        %v2592 = vunpack.c.l.b16 %v1459
        %v2593 = vunpack.c.l.b16 %v1460
        %v2594 = vunpack.c.l.b16 %v1461
        %v2595 = vunpack.c.l.b16 %v1462
        %v2596 = vunpack.c.l.b16 %v1463
        %v2597 = vpack.c.b16 %v2550, %v2549
        %v2598 = vpack.c.b16 %v2552, %v2551
        %v2599 = vpack.c.b16 %v2554, %v2553
        %v2600 = vpack.c.b16 %v2556, %v2555
        %v2601 = vpack.c.b16 %v2558, %v2557
        %v2602 = vpack.c.b16 %v2560, %v2559
        %v2603 = vpack.c.b16 %v2562, %v2561
        %v2604 = vpack.c.b16 %v2564, %v2563
        %v2605 = vpack.c.b16 %v2566, %v2565
        %v2606 = vpack.c.b16 %v2568, %v2567
        %v2607 = vpack.c.b16 %v2570, %v2569
        %v2608 = vpack.c.b16 %v2572, %v2571
        %v2609 = vpack.c.b16 %v2574, %v2573
        %v2610 = vpack.c.b16 %v2576, %v2575
        %v2611 = vpack.c.b16 %v2578, %v2577
        %v2612 = vpack.c.b16 %v2580, %v2579
        %v2613 = vpack.c.b16 %v2582, %v2581
        %v2614 = vpack.c.b16 %v2584, %v2583
        %v2615 = vpack.c.b16 %v2586, %v2585
        %v2616 = vpack.c.b16 %v2588, %v2587
        %v2617 = vpack.c.b16 %v2590, %v2589
        %v2618 = vpack.c.b16 %v2592, %v2591
        %v2619 = vpack.c.b16 %v2594, %v2593
        %v2620 = vpack.c.b16 %v2596, %v2595
        %2645 = vmatpush.bf16.msra.mxu0 %v2604
        %2646 = vmatpush.bf16.msra.mxu0 %v2603
        %2647 = vmatpush.bf16.msra.mxu0 %v2602
        %2648 = vmatpush.bf16.msra.mxu0 %v2601
        %2649 = vmatpush.bf16.msra.mxu0 %v2600
        %2650 = vmatpush.bf16.msra.mxu0 %v2599
        %2651 = vmatpush.bf16.msra.mxu0 %v2598
        %2652 = vmatpush.bf16.msra.mxu0 %v2597
        %2653 = vmatmul.bf16.gmra.mxu0 %v2405
        %v2654 = vpop.f32.mrf.mxu0
        %v2655 = vadd.f32 %v2166, %v2654
        %v2656 = vpop.f32.mrf.mxu0
        %v2657 = vadd.f32 %v2168, %v2656
        %2658 = vmatmul.bf16.gmra.mxu0 %v2408
        %v2659 = vpop.f32.mrf.mxu0
        %v2660 = vadd.f32 %v2171, %v2659
        %v2661 = vpop.f32.mrf.mxu0
        %v2662 = vadd.f32 %v2173, %v2661
        %2663 = vmatmul.bf16.gmra.mxu0 %v2411
        %v2664 = vpop.f32.mrf.mxu0
        %v2665 = vadd.f32 %v2176, %v2664
        %v2666 = vpop.f32.mrf.mxu0
        %v2667 = vadd.f32 %v2178, %v2666
        %2668 = vmatmul.bf16.gmra.mxu0 %v2414
        %v2669 = vpop.f32.mrf.mxu0
        %v2670 = vadd.f32 %v2181, %v2669
        %v2671 = vpop.f32.mrf.mxu0
        %v2672 = vadd.f32 %v2183, %v2671
        %2673 = vmatmul.bf16.gmra.mxu0 %v2417
        %v2674 = vpop.f32.mrf.mxu0
        %v2675 = vadd.f32 %v2186, %v2674
        %v2676 = vpop.f32.mrf.mxu0
        %v2677 = vadd.f32 %v2188, %v2676
        %2678 = vmatmul.bf16.gmra.mxu0 %v2420
        %v2679 = vpop.f32.mrf.mxu0
        %v2680 = vadd.f32 %v2191, %v2679
        %v2681 = vpop.f32.mrf.mxu0
        %v2682 = vadd.f32 %v2193, %v2681
        %2683 = vmatmul.bf16.gmra.mxu0 %v2423
        %v2684 = vpop.f32.mrf.mxu0
        %v2685 = vadd.f32 %v2196, %v2684
        %v2686 = vpop.f32.mrf.mxu0
        %v2687 = vadd.f32 %v2198, %v2686
        %2688 = vmatmul.bf16.gmra.mxu0 %v2426
        %v2689 = vpop.f32.mrf.mxu0
        %v2690 = vadd.f32 %v2201, %v2689
        %v2691 = vpop.f32.mrf.mxu0
        %v2692 = vadd.f32 %v2203, %v2691
        %2693 = vmatmul.bf16.gmra.mxu0 %v2429
        %v2694 = vpop.f32.mrf.mxu0
        %v2695 = vadd.f32 %v2206, %v2694
        %v2696 = vpop.f32.mrf.mxu0
        %v2697 = vadd.f32 %v2208, %v2696
        %2698 = vmatmul.bf16.gmra.mxu0 %v2432
        %v2699 = vpop.f32.mrf.mxu0
        %v2700 = vadd.f32 %v2211, %v2699
        %v2701 = vpop.f32.mrf.mxu0
        %v2702 = vadd.f32 %v2213, %v2701
        %2703 = vmatmul.bf16.gmra.mxu0 %v2435
        %v2704 = vpop.f32.mrf.mxu0
        %v2705 = vadd.f32 %v2216, %v2704
        %v2706 = vpop.f32.mrf.mxu0
        %v2707 = vadd.f32 %v2218, %v2706
        %2708 = vmatmul.bf16.gmra.mxu0 %v2438
        %v2709 = vpop.f32.mrf.mxu0
        %v2710 = vadd.f32 %v2221, %v2709
        %v2711 = vpop.f32.mrf.mxu0
        %v2712 = vadd.f32 %v2223, %v2711
        %2713 = vmatmul.bf16.gmra.mxu0 %v2441
        %v2714 = vpop.f32.mrf.mxu0
        %v2715 = vadd.f32 %v2226, %v2714
        %v2716 = vpop.f32.mrf.mxu0
        %v2717 = vadd.f32 %v2228, %v2716
        %2718 = vmatmul.bf16.gmra.mxu0 %v2444
        %v2719 = vpop.f32.mrf.mxu0
        %v2720 = vadd.f32 %v2231, %v2719
        %v2721 = vpop.f32.mrf.mxu0
        %v2722 = vadd.f32 %v2233, %v2721
        %2723 = vmatmul.bf16.gmra.mxu0 %v2447
        %v2724 = vpop.f32.mrf.mxu0
        %v2725 = vadd.f32 %v2236, %v2724
        %v2726 = vpop.f32.mrf.mxu0
        %v2727 = vadd.f32 %v2238, %v2726
        %2728 = vmatmul.bf16.gmra.mxu0 %v2450
        %v2729 = vpop.f32.mrf.mxu0
        %v2730 = vadd.f32 %v2241, %v2729
        %v2731 = vpop.f32.mrf.mxu0
        %v2732 = vadd.f32 %v2243, %v2731
        %2733 = vdwg.mxu0
        %2734 = vmatpush.bf16.msra.mxu0 %v2612
        %2735 = vmatpush.bf16.msra.mxu0 %v2611
        %2736 = vmatpush.bf16.msra.mxu0 %v2610
        %2737 = vmatpush.bf16.msra.mxu0 %v2609
        %2738 = vmatpush.bf16.msra.mxu0 %v2608
        %2739 = vmatpush.bf16.msra.mxu0 %v2607
        %2740 = vmatpush.bf16.msra.mxu0 %v2606
        %2741 = vmatpush.bf16.msra.mxu0 %v2605
        %2742 = vmatmul.bf16.gmra.mxu0 %v2406
        %v2743 = vpop.f32.mrf.mxu0
        %v2744 = vadd.f32 %v2655, %v2743
        %v2745 = vpop.f32.mrf.mxu0
        %v2746 = vadd.f32 %v2657, %v2745
        %2747 = vmatmul.bf16.gmra.mxu0 %v2409
        %v2748 = vpop.f32.mrf.mxu0
        %v2749 = vadd.f32 %v2660, %v2748
        %v2750 = vpop.f32.mrf.mxu0
        %v2751 = vadd.f32 %v2662, %v2750
        %2752 = vmatmul.bf16.gmra.mxu0 %v2412
        %v2753 = vpop.f32.mrf.mxu0
        %v2754 = vadd.f32 %v2665, %v2753
        %v2755 = vpop.f32.mrf.mxu0
        %v2756 = vadd.f32 %v2667, %v2755
        %2757 = vmatmul.bf16.gmra.mxu0 %v2415
        %v2758 = vpop.f32.mrf.mxu0
        %v2759 = vadd.f32 %v2670, %v2758
        %v2760 = vpop.f32.mrf.mxu0
        %v2761 = vadd.f32 %v2672, %v2760
        %2762 = vmatmul.bf16.gmra.mxu0 %v2418
        %v2763 = vpop.f32.mrf.mxu0
        %v2764 = vadd.f32 %v2675, %v2763
        %v2765 = vpop.f32.mrf.mxu0
        %v2766 = vadd.f32 %v2677, %v2765
        %2767 = vmatmul.bf16.gmra.mxu0 %v2421
        %v2768 = vpop.f32.mrf.mxu0
        %v2769 = vadd.f32 %v2680, %v2768
        %v2770 = vpop.f32.mrf.mxu0
        %v2771 = vadd.f32 %v2682, %v2770
        %2772 = vmatmul.bf16.gmra.mxu0 %v2424
        %v2773 = vpop.f32.mrf.mxu0
        %v2774 = vadd.f32 %v2685, %v2773
        %v2775 = vpop.f32.mrf.mxu0
        %v2776 = vadd.f32 %v2687, %v2775
        %2777 = vmatmul.bf16.gmra.mxu0 %v2427
        %v2778 = vpop.f32.mrf.mxu0
        %v2779 = vadd.f32 %v2690, %v2778
        %v2780 = vpop.f32.mrf.mxu0
        %v2781 = vadd.f32 %v2692, %v2780
        %2782 = vmatmul.bf16.gmra.mxu0 %v2430
        %v2783 = vpop.f32.mrf.mxu0
        %v2784 = vadd.f32 %v2695, %v2783
        %v2785 = vpop.f32.mrf.mxu0
        %v2786 = vadd.f32 %v2697, %v2785
        %2787 = vmatmul.bf16.gmra.mxu0 %v2433
        %v2788 = vpop.f32.mrf.mxu0
        %v2789 = vadd.f32 %v2700, %v2788
        %v2790 = vpop.f32.mrf.mxu0
        %v2791 = vadd.f32 %v2702, %v2790
        %2792 = vmatmul.bf16.gmra.mxu0 %v2436
        %v2793 = vpop.f32.mrf.mxu0
        %v2794 = vadd.f32 %v2705, %v2793
        %v2795 = vpop.f32.mrf.mxu0
        %v2796 = vadd.f32 %v2707, %v2795
        %2797 = vmatmul.bf16.gmra.mxu0 %v2439
        %v2798 = vpop.f32.mrf.mxu0
        %v2799 = vadd.f32 %v2710, %v2798
        %v2800 = vpop.f32.mrf.mxu0
        %v2801 = vadd.f32 %v2712, %v2800
        %2802 = vmatmul.bf16.gmra.mxu0 %v2442
        %v2803 = vpop.f32.mrf.mxu0
        %v2804 = vadd.f32 %v2715, %v2803
        %v2805 = vpop.f32.mrf.mxu0
        %v2806 = vadd.f32 %v2717, %v2805
        %2807 = vmatmul.bf16.gmra.mxu0 %v2445
        %v2808 = vpop.f32.mrf.mxu0
        %v2809 = vadd.f32 %v2720, %v2808
        %v2810 = vpop.f32.mrf.mxu0
        %v2811 = vadd.f32 %v2722, %v2810
        %2812 = vmatmul.bf16.gmra.mxu0 %v2448
        %v2813 = vpop.f32.mrf.mxu0
        %v2814 = vadd.f32 %v2725, %v2813
        %v2815 = vpop.f32.mrf.mxu0
        %v2816 = vadd.f32 %v2727, %v2815
        %2817 = vmatmul.bf16.gmra.mxu0 %v2451
        %v2818 = vpop.f32.mrf.mxu0
        %v2819 = vadd.f32 %v2730, %v2818
        %v2820 = vpop.f32.mrf.mxu0
        %v2821 = vadd.f32 %v2732, %v2820
        %2822 = vdwg.mxu0
        %2823 = vmatpush.bf16.msra.mxu0 %v2620
        %2824 = vmatpush.bf16.msra.mxu0 %v2619
        %2825 = vmatpush.bf16.msra.mxu0 %v2618
        %2826 = vmatpush.bf16.msra.mxu0 %v2617
        %2827 = vmatpush.bf16.msra.mxu0 %v2616
        %2828 = vmatpush.bf16.msra.mxu0 %v2615
        %2829 = vmatpush.bf16.msra.mxu0 %v2614
        %2830 = vmatpush.bf16.msra.mxu0 %v2613
        %2831 = vmatmul.bf16.gmra.mxu0 %v2407
        %v2832 = vpop.f32.mrf.mxu0
        %v2833 = vadd.f32 %v2744, %v2832
        %v2834 = vpop.f32.mrf.mxu0
        %v2835 = vadd.f32 %v2746, %v2834
        %2836 = vmatmul.bf16.gmra.mxu0 %v2410
        %v2837 = vpop.f32.mrf.mxu0
        %v2838 = vadd.f32 %v2749, %v2837
        %v2839 = vpop.f32.mrf.mxu0
        %v2840 = vadd.f32 %v2751, %v2839
        %2841 = vmatmul.bf16.gmra.mxu0 %v2413
        %v2842 = vpop.f32.mrf.mxu0
        %v2843 = vadd.f32 %v2754, %v2842
        %v2844 = vpop.f32.mrf.mxu0
        %v2845 = vadd.f32 %v2756, %v2844
        %2846 = vmatmul.bf16.gmra.mxu0 %v2416
        %v2847 = vpop.f32.mrf.mxu0
        %v2848 = vadd.f32 %v2759, %v2847
        %v2849 = vpop.f32.mrf.mxu0
        %v2850 = vadd.f32 %v2761, %v2849
        %2851 = vmatmul.bf16.gmra.mxu0 %v2419
        %v2852 = vpop.f32.mrf.mxu0
        %v2853 = vadd.f32 %v2764, %v2852
        %v2854 = vpop.f32.mrf.mxu0
        %v2855 = vadd.f32 %v2766, %v2854
        %2856 = vmatmul.bf16.gmra.mxu0 %v2422
        %v2857 = vpop.f32.mrf.mxu0
        %v2858 = vadd.f32 %v2769, %v2857
        %v2859 = vpop.f32.mrf.mxu0
        %v2860 = vadd.f32 %v2771, %v2859
        %2861 = vmatmul.bf16.gmra.mxu0 %v2425
        %v2862 = vpop.f32.mrf.mxu0
        %v2863 = vadd.f32 %v2774, %v2862
        %v2864 = vpop.f32.mrf.mxu0
        %v2865 = vadd.f32 %v2776, %v2864
        %2866 = vmatmul.bf16.gmra.mxu0 %v2428
        %v2867 = vpop.f32.mrf.mxu0
        %v2868 = vadd.f32 %v2779, %v2867
        %v2869 = vpop.f32.mrf.mxu0
        %v2870 = vadd.f32 %v2781, %v2869
        %2871 = vmatmul.bf16.gmra.mxu0 %v2431
        %v2872 = vpop.f32.mrf.mxu0
        %v2873 = vadd.f32 %v2784, %v2872
        %v2874 = vpop.f32.mrf.mxu0
        %v2875 = vadd.f32 %v2786, %v2874
        %2876 = vmatmul.bf16.gmra.mxu0 %v2434
        %v2877 = vpop.f32.mrf.mxu0
        %v2878 = vadd.f32 %v2789, %v2877
        %v2879 = vpop.f32.mrf.mxu0
        %v2880 = vadd.f32 %v2791, %v2879
        %2881 = vmatmul.bf16.gmra.mxu0 %v2437
        %v2882 = vpop.f32.mrf.mxu0
        %v2883 = vadd.f32 %v2794, %v2882
        %v2884 = vpop.f32.mrf.mxu0
        %v2885 = vadd.f32 %v2796, %v2884
        %2886 = vmatmul.bf16.gmra.mxu0 %v2440
        %v2887 = vpop.f32.mrf.mxu0
        %v2888 = vadd.f32 %v2799, %v2887
        %v2889 = vpop.f32.mrf.mxu0
        %v2890 = vadd.f32 %v2801, %v2889
        %2891 = vmatmul.bf16.gmra.mxu0 %v2443
        %v2892 = vpop.f32.mrf.mxu0
        %v2893 = vadd.f32 %v2804, %v2892
        %v2894 = vpop.f32.mrf.mxu0
        %v2895 = vadd.f32 %v2806, %v2894
        %2896 = vmatmul.bf16.gmra.mxu0 %v2446
        %v2897 = vpop.f32.mrf.mxu0
        %v2898 = vadd.f32 %v2809, %v2897
        %v2899 = vpop.f32.mrf.mxu0
        %v2900 = vadd.f32 %v2811, %v2899
        %2901 = vmatmul.bf16.gmra.mxu0 %v2449
        %v2902 = vpop.f32.mrf.mxu0
        %v2903 = vadd.f32 %v2814, %v2902
        %v2904 = vpop.f32.mrf.mxu0
        %v2905 = vadd.f32 %v2816, %v2904
        %2906 = vmatmul.bf16.gmra.mxu0 %v2452
        %v2907 = vpop.f32.mrf.mxu0
        %v2908 = vadd.f32 %v2819, %v2907
        %v2909 = vpop.f32.mrf.mxu0
        %v2910 = vadd.f32 %v2821, %v2909
        %2911 = vdwg.mxu0
        %s2912 = scalar_lea.vmem [#allocation2], 48
        %v2913 = vld [vmem:[%s2912] sm:$0xff]
        %v2914 = vld [vmem:[%s2912 + $0x8] sm:$0xf]
        %v2915 = vld [vmem:[%s2912 + $0xc] sm:$0xff]
        %v2916 = vld [vmem:[%s2912 + $0x14] sm:$0xf]
        %v2917 = vld [vmem:[%s2912 + $0x18] sm:$0xff]
        %v2918 = vld [vmem:[%s2912 + $0x20] sm:$0xf]
        %v2919 = vld [vmem:[%s2912 + $0x24] sm:$0xff]
        %v2920 = vld [vmem:[%s2912 + $0x2c] sm:$0xf]
        %v2921 = vld [vmem:[%s2912 + $0x30] sm:$0xff]
        %v2922 = vld [vmem:[%s2912 + $0x38] sm:$0xf]
        %v2923 = vld [vmem:[%s2912 + $0x3c] sm:$0xff]
        %v2924 = vld [vmem:[%s2912 + $0x44] sm:$0xf]
        %v2925 = vld [vmem:[%s2912 + $0x48] sm:$0xff]
        %v2926 = vld [vmem:[%s2912 + $0x50] sm:$0xf]
        %v2927 = vld [vmem:[%s2912 + $0x54] sm:$0xff]
        %v2928 = vld [vmem:[%s2912 + $0x5c] sm:$0xf]
        %v2929 = vld [vmem:[%s2912 + $0x60] sm:$0xff]
        %v2930 = vld [vmem:[%s2912 + $0x68] sm:$0xf]
        %v2931 = vld [vmem:[%s2912 + $0x6c] sm:$0xff]
        %v2932 = vld [vmem:[%s2912 + $0x74] sm:$0xf]
        %v2933 = vld [vmem:[%s2912 + $0x78] sm:$0xff]
        %v2934 = vld [vmem:[%s2912 + $0x80] sm:$0xf]
        %v2935 = vld [vmem:[%s2912 + $0x84] sm:$0xff]
        %v2936 = vld [vmem:[%s2912 + $0x8c] sm:$0xf]
        %v2937 = vld [vmem:[%s2912 + $0x90] sm:$0xff]
        %v2938 = vld [vmem:[%s2912 + $0x98] sm:$0xf]
        %v2939 = vld [vmem:[%s2912 + $0x9c] sm:$0xff]
        %v2940 = vld [vmem:[%s2912 + $0xa4] sm:$0xf]
        %v2941 = vld [vmem:[%s2912 + $0xa8] sm:$0xff]
        %v2942 = vld [vmem:[%s2912 + $0xb0] sm:$0xf]
        %v2943 = vld [vmem:[%s2912 + $0xb4] sm:$0xff]
        %v2944 = vld [vmem:[%s2912 + $0xbc] sm:$0xf]
        %v2945 = vld [vmem:[%s2912 + $0xc0] sm:$0xff]
        %v2946 = vld [vmem:[%s2912 + $0xc8] sm:$0xf]
        %v2947 = vld [vmem:[%s2912 + $0xcc] sm:$0xff]
        %v2948 = vld [vmem:[%s2912 + $0xd4] sm:$0xf]
        %v2949 = vld [vmem:[%s2912 + $0xd8] sm:$0xff]
        %v2950 = vld [vmem:[%s2912 + $0xe0] sm:$0xf]
        %v2951 = vld [vmem:[%s2912 + $0xe4] sm:$0xff]
        %v2952 = vld [vmem:[%s2912 + $0xec] sm:$0xf]
        %v2953 = vld [vmem:[%s2912 + $0xf0] sm:$0xff]
        %v2954 = vld [vmem:[%s2912 + $0xf8] sm:$0xf]
        %v2955 = vld [vmem:[%s2912 + $0xfc] sm:$0xff]
        %v2956 = vld [vmem:[%s2912 + $0x104] sm:$0xf]
        %v2957 = vld [vmem:[%s2912 + $0x108] sm:$0xff]
        %v2958 = vld [vmem:[%s2912 + $0x110] sm:$0xf]
        %v2959 = vld [vmem:[%s2912 + $0x114] sm:$0xff]
        %v2960 = vld [vmem:[%s2912 + $0x11c] sm:$0xf]
        %v2961 = vld [vmem:[%s2912 + $0x120] sm:$0xff]
        %v2962 = vld [vmem:[%s2912 + $0x128] sm:$0xf]
        %v2963 = vld [vmem:[%s2912 + $0x12c] sm:$0xff]
        %v2964 = vld [vmem:[%s2912 + $0x134] sm:$0xf]
        %v2965 = vld [vmem:[%s2912 + $0x138] sm:$0xff]
        %v2966 = vld [vmem:[%s2912 + $0x140] sm:$0xf]
        %v2967 = vld [vmem:[%s2912 + $0x144] sm:$0xff]
        %v2968 = vld [vmem:[%s2912 + $0x14c] sm:$0xf]
        %v2969 = vld [vmem:[%s2912 + $0x150] sm:$0xff]
        %v2970 = vld [vmem:[%s2912 + $0x158] sm:$0xf]
        %v2971 = vld [vmem:[%s2912 + $0x15c] sm:$0xff]
        %v2972 = vld [vmem:[%s2912 + $0x164] sm:$0xf]
        %v2973 = vld [vmem:[%s2912 + $0x168] sm:$0xff]
        %v2974 = vld [vmem:[%s2912 + $0x170] sm:$0xf]
        %v2975 = vld [vmem:[%s2912 + $0x174] sm:$0xff]
        %v2976 = vld [vmem:[%s2912 + $0x17c] sm:$0xf]
        %s2977 = scalar_lea.vmem [#allocation11], 384
        %v2978 = vld [vmem:[%s2977] sm:$0xf]
        %v2979 = vld [vmem:[%s2977 + $0x4] sm:$0xf]
        %v2980 = vld [vmem:[%s2977 + $0x8] sm:$0xf]
        %v2981 = vld [vmem:[%s2977 + $0xc] sm:$0xf]
        %v2982 = vld [vmem:[%s2977 + $0x10] sm:$0xf]
        %v2983 = vld [vmem:[%s2977 + $0x14] sm:$0xf]
        %v2984 = vld [vmem:[%s2977 + $0x18] sm:$0xf]
        %v2985 = vld [vmem:[%s2977 + $0x1c] sm:$0xf]
        %v2986 = vld [vmem:[%s2977 + $0x20] sm:$0xf]
        %v2987 = vld [vmem:[%s2977 + $0x24] sm:$0xf]
        %v2988 = vld [vmem:[%s2977 + $0x28] sm:$0xf]
        %v2989 = vld [vmem:[%s2977 + $0x2c] sm:$0xf]
        %v2990 = vld [vmem:[%s2977 + $0x30] sm:$0xf]
        %v2991 = vld [vmem:[%s2977 + $0x34] sm:$0xf]
        %v2992 = vld [vmem:[%s2977 + $0x38] sm:$0xf]
        %v2993 = vld [vmem:[%s2977 + $0x3c] sm:$0xf]
        %v2994 = vld [vmem:[%s2977 + $0x40] sm:$0xf]
        %v2995 = vld [vmem:[%s2977 + $0x44] sm:$0xf]
        %v2996 = vld [vmem:[%s2977 + $0x48] sm:$0xf]
        %v2997 = vld [vmem:[%s2977 + $0x4c] sm:$0xf]
        %v2998 = vld [vmem:[%s2977 + $0x50] sm:$0xf]
        %v2999 = vld [vmem:[%s2977 + $0x54] sm:$0xf]
        %v3000 = vld [vmem:[%s2977 + $0x58] sm:$0xf]
        %v3001 = vld [vmem:[%s2977 + $0x5c] sm:$0xf]
        %v3002 = vld [vmem:[%s2977 + $0x60] sm:$0xf]
        %v3003 = vld [vmem:[%s2977 + $0x64] sm:$0xf]
        %v3004 = vld [vmem:[%s2977 + $0x68] sm:$0xf]
        %v3005 = vld [vmem:[%s2977 + $0x6c] sm:$0xf]
        %v3006 = vld [vmem:[%s2977 + $0x70] sm:$0xf]
        %v3007 = vld [vmem:[%s2977 + $0x74] sm:$0xf]
        %v3008 = vld [vmem:[%s2977 + $0x78] sm:$0xf]
        %v3009 = vld [vmem:[%s2977 + $0x7c] sm:$0xf]
        %v3010 = vld [vmem:[%s2977 + $0x80] sm:$0xf]
        %v3011 = vld [vmem:[%s2977 + $0x84] sm:$0xf]
        %v3012 = vld [vmem:[%s2977 + $0x88] sm:$0xf]
        %v3013 = vld [vmem:[%s2977 + $0x8c] sm:$0xf]
        %v3014 = vld [vmem:[%s2977 + $0x90] sm:$0xf]
        %v3015 = vld [vmem:[%s2977 + $0x94] sm:$0xf]
        %v3016 = vld [vmem:[%s2977 + $0x98] sm:$0xf]
        %v3017 = vld [vmem:[%s2977 + $0x9c] sm:$0xf]
        %v3018 = vld [vmem:[%s2977 + $0xa0] sm:$0xf]
        %v3019 = vld [vmem:[%s2977 + $0xa4] sm:$0xf]
        %v3020 = vld [vmem:[%s2977 + $0xa8] sm:$0xf]
        %v3021 = vld [vmem:[%s2977 + $0xac] sm:$0xf]
        %v3022 = vld [vmem:[%s2977 + $0xb0] sm:$0xf]
        %v3023 = vld [vmem:[%s2977 + $0xb4] sm:$0xf]
        %v3024 = vld [vmem:[%s2977 + $0xb8] sm:$0xf]
        %v3025 = vld [vmem:[%s2977 + $0xbc] sm:$0xf]
        %v3090 = vunpack.c.l.b16 %v2913
        %v3091 = vunpack.c.h.b16 %v2913
        %v3092 = vunpack.c.l.b16 %v2914
        %v3093 = vunpack.c.l.b16 %v2915
        %v3094 = vunpack.c.h.b16 %v2915
        %v3095 = vunpack.c.l.b16 %v2916
        %v3096 = vunpack.c.l.b16 %v2917
        %v3097 = vunpack.c.h.b16 %v2917
        %v3098 = vunpack.c.l.b16 %v2918
        %v3099 = vunpack.c.l.b16 %v2919
        %v3100 = vunpack.c.h.b16 %v2919
        %v3101 = vunpack.c.l.b16 %v2920
        %v3102 = vunpack.c.l.b16 %v2921
        %v3103 = vunpack.c.h.b16 %v2921
        %v3104 = vunpack.c.l.b16 %v2922
        %v3105 = vunpack.c.l.b16 %v2923
        %v3106 = vunpack.c.h.b16 %v2923
        %v3107 = vunpack.c.l.b16 %v2924
        %v3108 = vunpack.c.l.b16 %v2925
        %v3109 = vunpack.c.h.b16 %v2925
        %v3110 = vunpack.c.l.b16 %v2926
        %v3111 = vunpack.c.l.b16 %v2927
        %v3112 = vunpack.c.h.b16 %v2927
        %v3113 = vunpack.c.l.b16 %v2928
        %v3114 = vunpack.c.l.b16 %v2929
        %v3115 = vunpack.c.h.b16 %v2929
        %v3116 = vunpack.c.l.b16 %v2930
        %v3117 = vunpack.c.l.b16 %v2931
        %v3118 = vunpack.c.h.b16 %v2931
        %v3119 = vunpack.c.l.b16 %v2932
        %v3120 = vunpack.c.l.b16 %v2933
        %v3121 = vunpack.c.h.b16 %v2933
        %v3122 = vunpack.c.l.b16 %v2934
        %v3123 = vunpack.c.l.b16 %v2935
        %v3124 = vunpack.c.h.b16 %v2935
        %v3125 = vunpack.c.l.b16 %v2936
        %v3126 = vunpack.c.l.b16 %v2937
        %v3127 = vunpack.c.h.b16 %v2937
        %v3128 = vunpack.c.l.b16 %v2938
        %v3129 = vunpack.c.l.b16 %v2939
        %v3130 = vunpack.c.h.b16 %v2939
        %v3131 = vunpack.c.l.b16 %v2940
        %v3132 = vunpack.c.l.b16 %v2941
        %v3133 = vunpack.c.h.b16 %v2941
        %v3134 = vunpack.c.l.b16 %v2942
        %v3135 = vunpack.c.l.b16 %v2943
        %v3136 = vunpack.c.h.b16 %v2943
        %v3137 = vunpack.c.l.b16 %v2944
        %v3138 = vunpack.c.l.b16 %v2945
        %v3139 = vunpack.c.h.b16 %v2945
        %v3140 = vunpack.c.l.b16 %v2946
        %v3141 = vunpack.c.l.b16 %v2947
        %v3142 = vunpack.c.h.b16 %v2947
        %v3143 = vunpack.c.l.b16 %v2948
        %v3144 = vunpack.c.l.b16 %v2949
        %v3145 = vunpack.c.h.b16 %v2949
        %v3146 = vunpack.c.l.b16 %v2950
        %v3147 = vunpack.c.l.b16 %v2951
        %v3148 = vunpack.c.h.b16 %v2951
        %v3149 = vunpack.c.l.b16 %v2952
        %v3150 = vunpack.c.l.b16 %v2953
        %v3151 = vunpack.c.h.b16 %v2953
        %v3152 = vunpack.c.l.b16 %v2954
        %v3153 = vunpack.c.l.b16 %v2955
        %v3154 = vunpack.c.h.b16 %v2955
        %v3155 = vunpack.c.l.b16 %v2956
        %v3156 = vunpack.c.l.b16 %v2957
        %v3157 = vunpack.c.h.b16 %v2957
        %v3158 = vunpack.c.l.b16 %v2958
        %v3159 = vunpack.c.l.b16 %v2959
        %v3160 = vunpack.c.h.b16 %v2959
        %v3161 = vunpack.c.l.b16 %v2960
        %v3162 = vunpack.c.l.b16 %v2961
        %v3163 = vunpack.c.h.b16 %v2961
        %v3164 = vunpack.c.l.b16 %v2962
        %v3165 = vunpack.c.l.b16 %v2963
        %v3166 = vunpack.c.h.b16 %v2963
        %v3167 = vunpack.c.l.b16 %v2964
        %v3168 = vunpack.c.l.b16 %v2965
        %v3169 = vunpack.c.h.b16 %v2965
        %v3170 = vunpack.c.l.b16 %v2966
        %v3171 = vunpack.c.l.b16 %v2967
        %v3172 = vunpack.c.h.b16 %v2967
        %v3173 = vunpack.c.l.b16 %v2968
        %v3174 = vunpack.c.l.b16 %v2969
        %v3175 = vunpack.c.h.b16 %v2969
        %v3176 = vunpack.c.l.b16 %v2970
        %v3177 = vunpack.c.l.b16 %v2971
        %v3178 = vunpack.c.h.b16 %v2971
        %v3179 = vunpack.c.l.b16 %v2972
        %v3180 = vunpack.c.l.b16 %v2973
        %v3181 = vunpack.c.h.b16 %v2973
        %v3182 = vunpack.c.l.b16 %v2974
        %v3183 = vunpack.c.l.b16 %v2975
        %v3184 = vunpack.c.h.b16 %v2975
        %v3185 = vunpack.c.l.b16 %v2976
        %v3186 = vpack.c.b16 %v3093, %v3090
        %v3187 = vpack.c.b16 %v3094, %v3091
        %v3188 = vpack.c.b16 %v3095, %v3092
        %v3189 = vpack.c.b16 %v3099, %v3096
        %v3190 = vpack.c.b16 %v3100, %v3097
        %v3191 = vpack.c.b16 %v3101, %v3098
        %v3192 = vpack.c.b16 %v3105, %v3102
        %v3193 = vpack.c.b16 %v3106, %v3103
        %v3194 = vpack.c.b16 %v3107, %v3104
        %v3195 = vpack.c.b16 %v3111, %v3108
        %v3196 = vpack.c.b16 %v3112, %v3109
        %v3197 = vpack.c.b16 %v3113, %v3110
        %v3198 = vpack.c.b16 %v3117, %v3114
        %v3199 = vpack.c.b16 %v3118, %v3115
        %v3200 = vpack.c.b16 %v3119, %v3116
        %v3201 = vpack.c.b16 %v3123, %v3120
        %v3202 = vpack.c.b16 %v3124, %v3121
        %v3203 = vpack.c.b16 %v3125, %v3122
        %v3204 = vpack.c.b16 %v3129, %v3126
        %v3205 = vpack.c.b16 %v3130, %v3127
        %v3206 = vpack.c.b16 %v3131, %v3128
        %v3207 = vpack.c.b16 %v3135, %v3132
        %v3208 = vpack.c.b16 %v3136, %v3133
        %v3209 = vpack.c.b16 %v3137, %v3134
        %v3210 = vpack.c.b16 %v3141, %v3138
        %v3211 = vpack.c.b16 %v3142, %v3139
        %v3212 = vpack.c.b16 %v3143, %v3140
        %v3213 = vpack.c.b16 %v3147, %v3144
        %v3214 = vpack.c.b16 %v3148, %v3145
        %v3215 = vpack.c.b16 %v3149, %v3146
        %v3216 = vpack.c.b16 %v3153, %v3150
        %v3217 = vpack.c.b16 %v3154, %v3151
        %v3218 = vpack.c.b16 %v3155, %v3152
        %v3219 = vpack.c.b16 %v3159, %v3156
        %v3220 = vpack.c.b16 %v3160, %v3157
        %v3221 = vpack.c.b16 %v3161, %v3158
        %v3222 = vpack.c.b16 %v3165, %v3162
        %v3223 = vpack.c.b16 %v3166, %v3163
        %v3224 = vpack.c.b16 %v3167, %v3164
        %v3225 = vpack.c.b16 %v3171, %v3168
        %v3226 = vpack.c.b16 %v3172, %v3169
        %v3227 = vpack.c.b16 %v3173, %v3170
        %v3228 = vpack.c.b16 %v3177, %v3174
        %v3229 = vpack.c.b16 %v3178, %v3175
        %v3230 = vpack.c.b16 %v3179, %v3176
        %v3231 = vpack.c.b16 %v3183, %v3180
        %v3232 = vpack.c.b16 %v3184, %v3181
        %v3233 = vpack.c.b16 %v3185, %v3182
        %v3330 = vunpack.c.l.b16 %v2978
        %v3331 = vunpack.c.l.b16 %v2979
        %v3332 = vunpack.c.l.b16 %v2980
        %v3333 = vunpack.c.l.b16 %v2981
        %v3334 = vunpack.c.l.b16 %v2982
        %v3335 = vunpack.c.l.b16 %v2983
        %v3336 = vunpack.c.l.b16 %v2984
        %v3337 = vunpack.c.l.b16 %v2985
        %v3338 = vunpack.c.l.b16 %v2986
        %v3339 = vunpack.c.l.b16 %v2987
        %v3340 = vunpack.c.l.b16 %v2988
        %v3341 = vunpack.c.l.b16 %v2989
        %v3342 = vunpack.c.l.b16 %v2990
        %v3343 = vunpack.c.l.b16 %v2991
        %v3344 = vunpack.c.l.b16 %v2992
        %v3345 = vunpack.c.l.b16 %v2993
        %v3346 = vunpack.c.l.b16 %v2994
        %v3347 = vunpack.c.l.b16 %v2995
        %v3348 = vunpack.c.l.b16 %v2996
        %v3349 = vunpack.c.l.b16 %v2997
        %v3350 = vunpack.c.l.b16 %v2998
        %v3351 = vunpack.c.l.b16 %v2999
        %v3352 = vunpack.c.l.b16 %v3000
        %v3353 = vunpack.c.l.b16 %v3001
        %v3354 = vunpack.c.l.b16 %v3002
        %v3355 = vunpack.c.l.b16 %v3003
        %v3356 = vunpack.c.l.b16 %v3004
        %v3357 = vunpack.c.l.b16 %v3005
        %v3358 = vunpack.c.l.b16 %v3006
        %v3359 = vunpack.c.l.b16 %v3007
        %v3360 = vunpack.c.l.b16 %v3008
        %v3361 = vunpack.c.l.b16 %v3009
        %v3362 = vunpack.c.l.b16 %v3010
        %v3363 = vunpack.c.l.b16 %v3011
        %v3364 = vunpack.c.l.b16 %v3012
        %v3365 = vunpack.c.l.b16 %v3013
        %v3366 = vunpack.c.l.b16 %v3014
        %v3367 = vunpack.c.l.b16 %v3015
        %v3368 = vunpack.c.l.b16 %v3016
        %v3369 = vunpack.c.l.b16 %v3017
        %v3370 = vunpack.c.l.b16 %v3018
        %v3371 = vunpack.c.l.b16 %v3019
        %v3372 = vunpack.c.l.b16 %v3020
        %v3373 = vunpack.c.l.b16 %v3021
        %v3374 = vunpack.c.l.b16 %v3022
        %v3375 = vunpack.c.l.b16 %v3023
        %v3376 = vunpack.c.l.b16 %v3024
        %v3377 = vunpack.c.l.b16 %v3025
        %v3378 = vpack.c.b16 %v3331, %v3330
        %v3379 = vpack.c.b16 %v3333, %v3332
        %v3380 = vpack.c.b16 %v3335, %v3334
        %v3381 = vpack.c.b16 %v3337, %v3336
        %v3382 = vpack.c.b16 %v3339, %v3338
        %v3383 = vpack.c.b16 %v3341, %v3340
        %v3384 = vpack.c.b16 %v3343, %v3342
        %v3385 = vpack.c.b16 %v3345, %v3344
        %v3386 = vpack.c.b16 %v3347, %v3346
        %v3387 = vpack.c.b16 %v3349, %v3348
        %v3388 = vpack.c.b16 %v3351, %v3350
        %v3389 = vpack.c.b16 %v3353, %v3352
        %v3390 = vpack.c.b16 %v3355, %v3354
        %v3391 = vpack.c.b16 %v3357, %v3356
        %v3392 = vpack.c.b16 %v3359, %v3358
        %v3393 = vpack.c.b16 %v3361, %v3360
        %v3394 = vpack.c.b16 %v3363, %v3362
        %v3395 = vpack.c.b16 %v3365, %v3364
        %v3396 = vpack.c.b16 %v3367, %v3366
        %v3397 = vpack.c.b16 %v3369, %v3368
        %v3398 = vpack.c.b16 %v3371, %v3370
        %v3399 = vpack.c.b16 %v3373, %v3372
        %v3400 = vpack.c.b16 %v3375, %v3374
        %v3401 = vpack.c.b16 %v3377, %v3376
        %3426 = vmatpush.bf16.msra.mxu0 %v3385
        %3427 = vmatpush.bf16.msra.mxu0 %v3384
        %3428 = vmatpush.bf16.msra.mxu0 %v3383
        %3429 = vmatpush.bf16.msra.mxu0 %v3382
        %3430 = vmatpush.bf16.msra.mxu0 %v3381
        %3431 = vmatpush.bf16.msra.mxu0 %v3380
        %3432 = vmatpush.bf16.msra.mxu0 %v3379
        %3433 = vmatpush.bf16.msra.mxu0 %v3378
        %3434 = vmatmul.bf16.gmra.mxu0 %v3186
        %v3435 = vpop.f32.mrf.mxu0
        %v3436 = vadd.f32 0.0, %v3435
        %v3437 = vpop.f32.mrf.mxu0
        %v3438 = vadd.f32 0.0, %v3437
        %3439 = vmatmul.bf16.gmra.mxu0 %v3189
        %v3440 = vpop.f32.mrf.mxu0
        %v3441 = vadd.f32 0.0, %v3440
        %v3442 = vpop.f32.mrf.mxu0
        %v3443 = vadd.f32 0.0, %v3442
        %3444 = vmatmul.bf16.gmra.mxu0 %v3192
        %v3445 = vpop.f32.mrf.mxu0
        %v3446 = vadd.f32 0.0, %v3445
        %v3447 = vpop.f32.mrf.mxu0
        %v3448 = vadd.f32 0.0, %v3447
        %3449 = vmatmul.bf16.gmra.mxu0 %v3195
        %v3450 = vpop.f32.mrf.mxu0
        %v3451 = vadd.f32 0.0, %v3450
        %v3452 = vpop.f32.mrf.mxu0
        %v3453 = vadd.f32 0.0, %v3452
        %3454 = vmatmul.bf16.gmra.mxu0 %v3198
        %v3455 = vpop.f32.mrf.mxu0
        %v3456 = vadd.f32 0.0, %v3455
        %v3457 = vpop.f32.mrf.mxu0
        %v3458 = vadd.f32 0.0, %v3457
        %3459 = vmatmul.bf16.gmra.mxu0 %v3201
        %v3460 = vpop.f32.mrf.mxu0
        %v3461 = vadd.f32 0.0, %v3460
        %v3462 = vpop.f32.mrf.mxu0
        %v3463 = vadd.f32 0.0, %v3462
        %3464 = vmatmul.bf16.gmra.mxu0 %v3204
        %v3465 = vpop.f32.mrf.mxu0
        %v3466 = vadd.f32 0.0, %v3465
        %v3467 = vpop.f32.mrf.mxu0
        %v3468 = vadd.f32 0.0, %v3467
        %3469 = vmatmul.bf16.gmra.mxu0 %v3207
        %v3470 = vpop.f32.mrf.mxu0
        %v3471 = vadd.f32 0.0, %v3470
        %v3472 = vpop.f32.mrf.mxu0
        %v3473 = vadd.f32 0.0, %v3472
        %3474 = vmatmul.bf16.gmra.mxu0 %v3210
        %v3475 = vpop.f32.mrf.mxu0
        %v3476 = vadd.f32 0.0, %v3475
        %v3477 = vpop.f32.mrf.mxu0
        %v3478 = vadd.f32 0.0, %v3477
        %3479 = vmatmul.bf16.gmra.mxu0 %v3213
        %v3480 = vpop.f32.mrf.mxu0
        %v3481 = vadd.f32 0.0, %v3480
        %v3482 = vpop.f32.mrf.mxu0
        %v3483 = vadd.f32 0.0, %v3482
        %3484 = vmatmul.bf16.gmra.mxu0 %v3216
        %v3485 = vpop.f32.mrf.mxu0
        %v3486 = vadd.f32 0.0, %v3485
        %v3487 = vpop.f32.mrf.mxu0
        %v3488 = vadd.f32 0.0, %v3487
        %3489 = vmatmul.bf16.gmra.mxu0 %v3219
        %v3490 = vpop.f32.mrf.mxu0
        %v3491 = vadd.f32 0.0, %v3490
        %v3492 = vpop.f32.mrf.mxu0
        %v3493 = vadd.f32 0.0, %v3492
        %3494 = vmatmul.bf16.gmra.mxu0 %v3222
        %v3495 = vpop.f32.mrf.mxu0
        %v3496 = vadd.f32 0.0, %v3495
        %v3497 = vpop.f32.mrf.mxu0
        %v3498 = vadd.f32 0.0, %v3497
        %3499 = vmatmul.bf16.gmra.mxu0 %v3225
        %v3500 = vpop.f32.mrf.mxu0
        %v3501 = vadd.f32 0.0, %v3500
        %v3502 = vpop.f32.mrf.mxu0
        %v3503 = vadd.f32 0.0, %v3502
        %3504 = vmatmul.bf16.gmra.mxu0 %v3228
        %v3505 = vpop.f32.mrf.mxu0
        %v3506 = vadd.f32 0.0, %v3505
        %v3507 = vpop.f32.mrf.mxu0
        %v3508 = vadd.f32 0.0, %v3507
        %3509 = vmatmul.bf16.gmra.mxu0 %v3231
        %v3510 = vpop.f32.mrf.mxu0
        %v3511 = vadd.f32 0.0, %v3510
        %v3512 = vpop.f32.mrf.mxu0
        %v3513 = vadd.f32 0.0, %v3512
        %3514 = vdwg.mxu0
        %3515 = vmatpush.bf16.msra.mxu0 %v3393
        %3516 = vmatpush.bf16.msra.mxu0 %v3392
        %3517 = vmatpush.bf16.msra.mxu0 %v3391
        %3518 = vmatpush.bf16.msra.mxu0 %v3390
        %3519 = vmatpush.bf16.msra.mxu0 %v3389
        %3520 = vmatpush.bf16.msra.mxu0 %v3388
        %3521 = vmatpush.bf16.msra.mxu0 %v3387
        %3522 = vmatpush.bf16.msra.mxu0 %v3386
        %3523 = vmatmul.bf16.gmra.mxu0 %v3187
        %v3524 = vpop.f32.mrf.mxu0
        %v3525 = vadd.f32 %v3436, %v3524
        %v3526 = vpop.f32.mrf.mxu0
        %v3527 = vadd.f32 %v3438, %v3526
        %3528 = vmatmul.bf16.gmra.mxu0 %v3190
        %v3529 = vpop.f32.mrf.mxu0
        %v3530 = vadd.f32 %v3441, %v3529
        %v3531 = vpop.f32.mrf.mxu0
        %v3532 = vadd.f32 %v3443, %v3531
        %3533 = vmatmul.bf16.gmra.mxu0 %v3193
        %v3534 = vpop.f32.mrf.mxu0
        %v3535 = vadd.f32 %v3446, %v3534
        %v3536 = vpop.f32.mrf.mxu0
        %v3537 = vadd.f32 %v3448, %v3536
        %3538 = vmatmul.bf16.gmra.mxu0 %v3196
        %v3539 = vpop.f32.mrf.mxu0
        %v3540 = vadd.f32 %v3451, %v3539
        %v3541 = vpop.f32.mrf.mxu0
        %v3542 = vadd.f32 %v3453, %v3541
        %3543 = vmatmul.bf16.gmra.mxu0 %v3199
        %v3544 = vpop.f32.mrf.mxu0
        %v3545 = vadd.f32 %v3456, %v3544
        %v3546 = vpop.f32.mrf.mxu0
        %v3547 = vadd.f32 %v3458, %v3546
        %3548 = vmatmul.bf16.gmra.mxu0 %v3202
        %v3549 = vpop.f32.mrf.mxu0
        %v3550 = vadd.f32 %v3461, %v3549
        %v3551 = vpop.f32.mrf.mxu0
        %v3552 = vadd.f32 %v3463, %v3551
        %3553 = vmatmul.bf16.gmra.mxu0 %v3205
        %v3554 = vpop.f32.mrf.mxu0
        %v3555 = vadd.f32 %v3466, %v3554
        %v3556 = vpop.f32.mrf.mxu0
        %v3557 = vadd.f32 %v3468, %v3556
        %3558 = vmatmul.bf16.gmra.mxu0 %v3208
        %v3559 = vpop.f32.mrf.mxu0
        %v3560 = vadd.f32 %v3471, %v3559
        %v3561 = vpop.f32.mrf.mxu0
        %v3562 = vadd.f32 %v3473, %v3561
        %3563 = vmatmul.bf16.gmra.mxu0 %v3211
        %v3564 = vpop.f32.mrf.mxu0
        %v3565 = vadd.f32 %v3476, %v3564
        %v3566 = vpop.f32.mrf.mxu0
        %v3567 = vadd.f32 %v3478, %v3566
        %3568 = vmatmul.bf16.gmra.mxu0 %v3214
        %v3569 = vpop.f32.mrf.mxu0
        %v3570 = vadd.f32 %v3481, %v3569
        %v3571 = vpop.f32.mrf.mxu0
        %v3572 = vadd.f32 %v3483, %v3571
        %3573 = vmatmul.bf16.gmra.mxu0 %v3217
        %v3574 = vpop.f32.mrf.mxu0
        %v3575 = vadd.f32 %v3486, %v3574
        %v3576 = vpop.f32.mrf.mxu0
        %v3577 = vadd.f32 %v3488, %v3576
        %3578 = vmatmul.bf16.gmra.mxu0 %v3220
        %v3579 = vpop.f32.mrf.mxu0
        %v3580 = vadd.f32 %v3491, %v3579
        %v3581 = vpop.f32.mrf.mxu0
        %v3582 = vadd.f32 %v3493, %v3581
        %3583 = vmatmul.bf16.gmra.mxu0 %v3223
        %v3584 = vpop.f32.mrf.mxu0
        %v3585 = vadd.f32 %v3496, %v3584
        %v3586 = vpop.f32.mrf.mxu0
        %v3587 = vadd.f32 %v3498, %v3586
        %3588 = vmatmul.bf16.gmra.mxu0 %v3226
        %v3589 = vpop.f32.mrf.mxu0
        %v3590 = vadd.f32 %v3501, %v3589
        %v3591 = vpop.f32.mrf.mxu0
        %v3592 = vadd.f32 %v3503, %v3591
        %3593 = vmatmul.bf16.gmra.mxu0 %v3229
        %v3594 = vpop.f32.mrf.mxu0
        %v3595 = vadd.f32 %v3506, %v3594
        %v3596 = vpop.f32.mrf.mxu0
        %v3597 = vadd.f32 %v3508, %v3596
        %3598 = vmatmul.bf16.gmra.mxu0 %v3232
        %v3599 = vpop.f32.mrf.mxu0
        %v3600 = vadd.f32 %v3511, %v3599
        %v3601 = vpop.f32.mrf.mxu0
        %v3602 = vadd.f32 %v3513, %v3601
        %3603 = vdwg.mxu0
        %3604 = vmatpush.bf16.msra.mxu0 %v3401
        %3605 = vmatpush.bf16.msra.mxu0 %v3400
        %3606 = vmatpush.bf16.msra.mxu0 %v3399
        %3607 = vmatpush.bf16.msra.mxu0 %v3398
        %3608 = vmatpush.bf16.msra.mxu0 %v3397
        %3609 = vmatpush.bf16.msra.mxu0 %v3396
        %3610 = vmatpush.bf16.msra.mxu0 %v3395
        %3611 = vmatpush.bf16.msra.mxu0 %v3394
        %3612 = vmatmul.bf16.gmra.mxu0 %v3188
        %v3613 = vpop.f32.mrf.mxu0
        %v3614 = vadd.f32 %v3525, %v3613
        %v3615 = vpop.f32.mrf.mxu0
        %v3616 = vadd.f32 %v3527, %v3615
        %3617 = vmatmul.bf16.gmra.mxu0 %v3191
        %v3618 = vpop.f32.mrf.mxu0
        %v3619 = vadd.f32 %v3530, %v3618
        %v3620 = vpop.f32.mrf.mxu0
        %v3621 = vadd.f32 %v3532, %v3620
        %3622 = vmatmul.bf16.gmra.mxu0 %v3194
        %v3623 = vpop.f32.mrf.mxu0
        %v3624 = vadd.f32 %v3535, %v3623
        %v3625 = vpop.f32.mrf.mxu0
        %v3626 = vadd.f32 %v3537, %v3625
        %3627 = vmatmul.bf16.gmra.mxu0 %v3197
        %v3628 = vpop.f32.mrf.mxu0
        %v3629 = vadd.f32 %v3540, %v3628
        %v3630 = vpop.f32.mrf.mxu0
        %v3631 = vadd.f32 %v3542, %v3630
        %3632 = vmatmul.bf16.gmra.mxu0 %v3200
        %v3633 = vpop.f32.mrf.mxu0
        %v3634 = vadd.f32 %v3545, %v3633
        %v3635 = vpop.f32.mrf.mxu0
        %v3636 = vadd.f32 %v3547, %v3635
        %3637 = vmatmul.bf16.gmra.mxu0 %v3203
        %v3638 = vpop.f32.mrf.mxu0
        %v3639 = vadd.f32 %v3550, %v3638
        %v3640 = vpop.f32.mrf.mxu0
        %v3641 = vadd.f32 %v3552, %v3640
        %3642 = vmatmul.bf16.gmra.mxu0 %v3206
        %v3643 = vpop.f32.mrf.mxu0
        %v3644 = vadd.f32 %v3555, %v3643
        %v3645 = vpop.f32.mrf.mxu0
        %v3646 = vadd.f32 %v3557, %v3645
        %3647 = vmatmul.bf16.gmra.mxu0 %v3209
        %v3648 = vpop.f32.mrf.mxu0
        %v3649 = vadd.f32 %v3560, %v3648
        %v3650 = vpop.f32.mrf.mxu0
        %v3651 = vadd.f32 %v3562, %v3650
        %3652 = vmatmul.bf16.gmra.mxu0 %v3212
        %v3653 = vpop.f32.mrf.mxu0
        %v3654 = vadd.f32 %v3565, %v3653
        %v3655 = vpop.f32.mrf.mxu0
        %v3656 = vadd.f32 %v3567, %v3655
        %3657 = vmatmul.bf16.gmra.mxu0 %v3215
        %v3658 = vpop.f32.mrf.mxu0
        %v3659 = vadd.f32 %v3570, %v3658
        %v3660 = vpop.f32.mrf.mxu0
        %v3661 = vadd.f32 %v3572, %v3660
        %3662 = vmatmul.bf16.gmra.mxu0 %v3218
        %v3663 = vpop.f32.mrf.mxu0
        %v3664 = vadd.f32 %v3575, %v3663
        %v3665 = vpop.f32.mrf.mxu0
        %v3666 = vadd.f32 %v3577, %v3665
        %3667 = vmatmul.bf16.gmra.mxu0 %v3221
        %v3668 = vpop.f32.mrf.mxu0
        %v3669 = vadd.f32 %v3580, %v3668
        %v3670 = vpop.f32.mrf.mxu0
        %v3671 = vadd.f32 %v3582, %v3670
        %3672 = vmatmul.bf16.gmra.mxu0 %v3224
        %v3673 = vpop.f32.mrf.mxu0
        %v3674 = vadd.f32 %v3585, %v3673
        %v3675 = vpop.f32.mrf.mxu0
        %v3676 = vadd.f32 %v3587, %v3675
        %3677 = vmatmul.bf16.gmra.mxu0 %v3227
        %v3678 = vpop.f32.mrf.mxu0
        %v3679 = vadd.f32 %v3590, %v3678
        %v3680 = vpop.f32.mrf.mxu0
        %v3681 = vadd.f32 %v3592, %v3680
        %3682 = vmatmul.bf16.gmra.mxu0 %v3230
        %v3683 = vpop.f32.mrf.mxu0
        %v3684 = vadd.f32 %v3595, %v3683
        %v3685 = vpop.f32.mrf.mxu0
        %v3686 = vadd.f32 %v3597, %v3685
        %3687 = vmatmul.bf16.gmra.mxu0 %v3233
        %v3688 = vpop.f32.mrf.mxu0
        %v3689 = vadd.f32 %v3600, %v3688
        %v3690 = vpop.f32.mrf.mxu0
        %v3691 = vadd.f32 %v3602, %v3690
        %3692 = vdwg.mxu0
        %v3693 = vadd.f32 %v2833, %v3614
        %v3694 = vadd.f32 %v2835, %v3616
        %v3695 = vadd.f32 %v2838, %v3619
        %v3696 = vadd.f32 %v2840, %v3621
        %v3697 = vadd.f32 %v2843, %v3624
        %v3698 = vadd.f32 %v2845, %v3626
        %v3699 = vadd.f32 %v2848, %v3629
        %v3700 = vadd.f32 %v2850, %v3631
        %v3701 = vadd.f32 %v2853, %v3634
        %v3702 = vadd.f32 %v2855, %v3636
        %v3703 = vadd.f32 %v2858, %v3639
        %v3704 = vadd.f32 %v2860, %v3641
        %v3705 = vadd.f32 %v2863, %v3644
        %v3706 = vadd.f32 %v2865, %v3646
        %v3707 = vadd.f32 %v2868, %v3649
        %v3708 = vadd.f32 %v2870, %v3651
        %v3709 = vadd.f32 %v2873, %v3654
        %v3710 = vadd.f32 %v2875, %v3656
        %v3711 = vadd.f32 %v2878, %v3659
        %v3712 = vadd.f32 %v2880, %v3661
        %v3713 = vadd.f32 %v2883, %v3664
        %v3714 = vadd.f32 %v2885, %v3666
        %v3715 = vadd.f32 %v2888, %v3669
        %v3716 = vadd.f32 %v2890, %v3671
        %v3717 = vadd.f32 %v2893, %v3674
        %v3718 = vadd.f32 %v2895, %v3676
        %v3719 = vadd.f32 %v2898, %v3679
        %v3720 = vadd.f32 %v2900, %v3681
        %v3721 = vadd.f32 %v2903, %v3684
        %v3722 = vadd.f32 %v2905, %v3686
        %v3723 = vadd.f32 %v2908, %v3689
        %v3724 = vadd.f32 %v2910, %v3691
        %v3725 = vld [vmem:[%s6] sm:$0x1]
        %v3727 = vperm.slane %v3725, 0
        %v3729 = vadd.f32 %v3693, %v3727
        %v3730 = vadd.f32 %v3694, %v3727
        %v3731 = vadd.f32 %v3695, %v3727
        %v3732 = vadd.f32 %v3696, %v3727
        %v3733 = vadd.f32 %v3697, %v3727
        %v3734 = vadd.f32 %v3698, %v3727
        %v3735 = vadd.f32 %v3699, %v3727
        %v3736 = vadd.f32 %v3700, %v3727
        %v3737 = vadd.f32 %v3701, %v3727
        %v3738 = vadd.f32 %v3702, %v3727
        %v3739 = vadd.f32 %v3703, %v3727
        %v3740 = vadd.f32 %v3704, %v3727
        %v3741 = vadd.f32 %v3705, %v3727
        %v3742 = vadd.f32 %v3706, %v3727
        %v3743 = vadd.f32 %v3707, %v3727
        %v3744 = vadd.f32 %v3708, %v3727
        %v3745 = vadd.f32 %v3709, %v3727
        %v3746 = vadd.f32 %v3710, %v3727
        %v3747 = vadd.f32 %v3711, %v3727
        %v3748 = vadd.f32 %v3712, %v3727
        %v3749 = vadd.f32 %v3713, %v3727
        %v3750 = vadd.f32 %v3714, %v3727
        %v3751 = vadd.f32 %v3715, %v3727
        %v3752 = vadd.f32 %v3716, %v3727
        %v3753 = vadd.f32 %v3717, %v3727
        %v3754 = vadd.f32 %v3718, %v3727
        %v3755 = vadd.f32 %v3719, %v3727
        %v3756 = vadd.f32 %v3720, %v3727
        %v3757 = vadd.f32 %v3721, %v3727
        %v3758 = vadd.f32 %v3722, %v3727
        %v3759 = vadd.f32 %v3723, %v3727
        %v3760 = vadd.f32 %v3724, %v3727
        %v3761 = vadd.f32 %v3729, 3.0
        %v3762 = vadd.f32 %v3730, 3.0
        %v3763 = vadd.f32 %v3731, 3.0
        %v3764 = vadd.f32 %v3732, 3.0
        %v3765 = vadd.f32 %v3733, 3.0
        %v3766 = vadd.f32 %v3734, 3.0
        %v3767 = vadd.f32 %v3735, 3.0
        %v3768 = vadd.f32 %v3736, 3.0
        %v3769 = vadd.f32 %v3737, 3.0
        %v3770 = vadd.f32 %v3738, 3.0
        %v3771 = vadd.f32 %v3739, 3.0
        %v3772 = vadd.f32 %v3740, 3.0
        %v3773 = vadd.f32 %v3741, 3.0
        %v3774 = vadd.f32 %v3742, 3.0
        %v3775 = vadd.f32 %v3743, 3.0
        %v3776 = vadd.f32 %v3744, 3.0
        %v3777 = vadd.f32 %v3745, 3.0
        %v3778 = vadd.f32 %v3746, 3.0
        %v3779 = vadd.f32 %v3747, 3.0
        %v3780 = vadd.f32 %v3748, 3.0
        %v3781 = vadd.f32 %v3749, 3.0
        %v3782 = vadd.f32 %v3750, 3.0
        %v3783 = vadd.f32 %v3751, 3.0
        %v3784 = vadd.f32 %v3752, 3.0
        %v3785 = vadd.f32 %v3753, 3.0
        %v3786 = vadd.f32 %v3754, 3.0
        %v3787 = vadd.f32 %v3755, 3.0
        %v3788 = vadd.f32 %v3756, 3.0
        %v3789 = vadd.f32 %v3757, 3.0
        %v3790 = vadd.f32 %v3758, 3.0
        %v3791 = vadd.f32 %v3759, 3.0
        %v3792 = vadd.f32 %v3760, 3.0
        %v3793 = vmax.f32 %v3761, 0.0
        %v3794 = vmax.f32 %v3762, 0.0
        %v3795 = vmax.f32 %v3763, 0.0
        %v3796 = vmax.f32 %v3764, 0.0
        %v3797 = vmax.f32 %v3765, 0.0
        %v3798 = vmax.f32 %v3766, 0.0
        %v3799 = vmax.f32 %v3767, 0.0
        %v3800 = vmax.f32 %v3768, 0.0
        %v3801 = vmax.f32 %v3769, 0.0
        %v3802 = vmax.f32 %v3770, 0.0
        %v3803 = vmax.f32 %v3771, 0.0
        %v3804 = vmax.f32 %v3772, 0.0
        %v3805 = vmax.f32 %v3773, 0.0
        %v3806 = vmax.f32 %v3774, 0.0
        %v3807 = vmax.f32 %v3775, 0.0
        %v3808 = vmax.f32 %v3776, 0.0
        %v3809 = vmax.f32 %v3777, 0.0
        %v3810 = vmax.f32 %v3778, 0.0
        %v3811 = vmax.f32 %v3779, 0.0
        %v3812 = vmax.f32 %v3780, 0.0
        %v3813 = vmax.f32 %v3781, 0.0
        %v3814 = vmax.f32 %v3782, 0.0
        %v3815 = vmax.f32 %v3783, 0.0
        %v3816 = vmax.f32 %v3784, 0.0
        %v3817 = vmax.f32 %v3785, 0.0
        %v3818 = vmax.f32 %v3786, 0.0
        %v3819 = vmax.f32 %v3787, 0.0
        %v3820 = vmax.f32 %v3788, 0.0
        %v3821 = vmax.f32 %v3789, 0.0
        %v3822 = vmax.f32 %v3790, 0.0
        %v3823 = vmax.f32 %v3791, 0.0
        %v3824 = vmax.f32 %v3792, 0.0
        %v3825 = vmin.f32 %v3793, 6.0
        %v3826 = vmin.f32 %v3794, 6.0
        %v3827 = vmin.f32 %v3795, 6.0
        %v3828 = vmin.f32 %v3796, 6.0
        %v3829 = vmin.f32 %v3797, 6.0
        %v3830 = vmin.f32 %v3798, 6.0
        %v3831 = vmin.f32 %v3799, 6.0
        %v3832 = vmin.f32 %v3800, 6.0
        %v3833 = vmin.f32 %v3801, 6.0
        %v3834 = vmin.f32 %v3802, 6.0
        %v3835 = vmin.f32 %v3803, 6.0
        %v3836 = vmin.f32 %v3804, 6.0
        %v3837 = vmin.f32 %v3805, 6.0
        %v3838 = vmin.f32 %v3806, 6.0
        %v3839 = vmin.f32 %v3807, 6.0
        %v3840 = vmin.f32 %v3808, 6.0
        %v3841 = vmin.f32 %v3809, 6.0
        %v3842 = vmin.f32 %v3810, 6.0
        %v3843 = vmin.f32 %v3811, 6.0
        %v3844 = vmin.f32 %v3812, 6.0
        %v3845 = vmin.f32 %v3813, 6.0
        %v3846 = vmin.f32 %v3814, 6.0
        %v3847 = vmin.f32 %v3815, 6.0
        %v3848 = vmin.f32 %v3816, 6.0
        %v3849 = vmin.f32 %v3817, 6.0
        %v3850 = vmin.f32 %v3818, 6.0
        %v3851 = vmin.f32 %v3819, 6.0
        %v3852 = vmin.f32 %v3820, 6.0
        %v3853 = vmin.f32 %v3821, 6.0
        %v3854 = vmin.f32 %v3822, 6.0
        %v3855 = vmin.f32 %v3823, 6.0
        %v3856 = vmin.f32 %v3824, 6.0
        %v3857 = vmul.f32 %v3729, %v3825
        %v3858 = vmul.f32 %v3730, %v3826
        %v3859 = vmul.f32 %v3731, %v3827
        %v3860 = vmul.f32 %v3732, %v3828
        %v3861 = vmul.f32 %v3733, %v3829
        %v3862 = vmul.f32 %v3734, %v3830
        %v3863 = vmul.f32 %v3735, %v3831
        %v3864 = vmul.f32 %v3736, %v3832
        %v3865 = vmul.f32 %v3737, %v3833
        %v3866 = vmul.f32 %v3738, %v3834
        %v3867 = vmul.f32 %v3739, %v3835
        %v3868 = vmul.f32 %v3740, %v3836
        %v3869 = vmul.f32 %v3741, %v3837
        %v3870 = vmul.f32 %v3742, %v3838
        %v3871 = vmul.f32 %v3743, %v3839
        %v3872 = vmul.f32 %v3744, %v3840
        %v3873 = vmul.f32 %v3745, %v3841
        %v3874 = vmul.f32 %v3746, %v3842
        %v3875 = vmul.f32 %v3747, %v3843
        %v3876 = vmul.f32 %v3748, %v3844
        %v3877 = vmul.f32 %v3749, %v3845
        %v3878 = vmul.f32 %v3750, %v3846
        %v3879 = vmul.f32 %v3751, %v3847
        %v3880 = vmul.f32 %v3752, %v3848
        %v3881 = vmul.f32 %v3753, %v3849
        %v3882 = vmul.f32 %v3754, %v3850
        %v3883 = vmul.f32 %v3755, %v3851
        %v3884 = vmul.f32 %v3756, %v3852
        %v3885 = vmul.f32 %v3757, %v3853
        %v3886 = vmul.f32 %v3758, %v3854
        %v3887 = vmul.f32 %v3759, %v3855
        %v3888 = vmul.f32 %v3760, %v3856
        %v3889 = vmul.f32 %v3857, %v904
        %v3890 = vmul.f32 %v3858, %v904
        %v3891 = vmul.f32 %v3859, %v904
        %v3892 = vmul.f32 %v3860, %v904
        %v3893 = vmul.f32 %v3861, %v904
        %v3894 = vmul.f32 %v3862, %v904
        %v3895 = vmul.f32 %v3863, %v904
        %v3896 = vmul.f32 %v3864, %v904
        %v3897 = vmul.f32 %v3865, %v904
        %v3898 = vmul.f32 %v3866, %v904
        %v3899 = vmul.f32 %v3867, %v904
        %v3900 = vmul.f32 %v3868, %v904
        %v3901 = vmul.f32 %v3869, %v904
        %v3902 = vmul.f32 %v3870, %v904
        %v3903 = vmul.f32 %v3871, %v904
        %v3904 = vmul.f32 %v3872, %v904
        %v3905 = vmul.f32 %v3873, %v904
        %v3906 = vmul.f32 %v3874, %v904
        %v3907 = vmul.f32 %v3875, %v904
        %v3908 = vmul.f32 %v3876, %v904
        %v3909 = vmul.f32 %v3877, %v904
        %v3910 = vmul.f32 %v3878, %v904
        %v3911 = vmul.f32 %v3879, %v904
        %v3912 = vmul.f32 %v3880, %v904
        %v3913 = vmul.f32 %v3881, %v904
        %v3914 = vmul.f32 %v3882, %v904
        %v3915 = vmul.f32 %v3883, %v904
        %v3916 = vmul.f32 %v3884, %v904
        %v3917 = vmul.f32 %v3885, %v904
        %v3918 = vmul.f32 %v3886, %v904
        %v3919 = vmul.f32 %v3887, %v904
        %v3920 = vmul.f32 %v3888, %v904
        %v3921 = vunpack.c.l.bf16 %v443
        %v3922 = vunpack.c.l.bf16 %v444
        %v3923 = vunpack.c.l.bf16 %v445
        %v3924 = vunpack.c.l.bf16 %v446
        %v3925 = vunpack.c.l.bf16 %v447
        %v3926 = vunpack.c.l.bf16 %v448
        %v3927 = vunpack.c.l.bf16 %v449
        %v3928 = vunpack.c.l.bf16 %v450
        %v3929 = vunpack.c.l.bf16 %v451
        %v3930 = vunpack.c.l.bf16 %v452
        %v3931 = vunpack.c.l.bf16 %v453
        %v3932 = vunpack.c.l.bf16 %v454
        %v3933 = vunpack.c.l.bf16 %v455
        %v3934 = vunpack.c.l.bf16 %v456
        %v3935 = vunpack.c.l.bf16 %v457
        %v3936 = vunpack.c.l.bf16 %v458
        %v3937 = vunpack.c.l.bf16 %v459
        %v3938 = vunpack.c.l.bf16 %v460
        %v3939 = vunpack.c.l.bf16 %v461
        %v3940 = vunpack.c.l.bf16 %v462
        %v3941 = vunpack.c.l.bf16 %v463
        %v3942 = vunpack.c.l.bf16 %v464
        %v3943 = vunpack.c.l.bf16 %v465
        %v3944 = vunpack.c.l.bf16 %v466
        %v3945 = vunpack.c.l.bf16 %v467
        %v3946 = vunpack.c.l.bf16 %v468
        %v3947 = vunpack.c.l.bf16 %v469
        %v3948 = vunpack.c.l.bf16 %v470
        %v3949 = vunpack.c.l.bf16 %v471
        %v3950 = vunpack.c.l.bf16 %v472
        %v3951 = vunpack.c.l.bf16 %v473
        %v3952 = vunpack.c.l.bf16 %v474
        %v3953 = vadd.f32 %v3889, %v3921
        %v3954 = vadd.f32 %v3890, %v3922
        %v3955 = vadd.f32 %v3891, %v3923
        %v3956 = vadd.f32 %v3892, %v3924
        %v3957 = vadd.f32 %v3893, %v3925
        %v3958 = vadd.f32 %v3894, %v3926
        %v3959 = vadd.f32 %v3895, %v3927
        %v3960 = vadd.f32 %v3896, %v3928
        %v3961 = vadd.f32 %v3897, %v3929
        %v3962 = vadd.f32 %v3898, %v3930
        %v3963 = vadd.f32 %v3899, %v3931
        %v3964 = vadd.f32 %v3900, %v3932
        %v3965 = vadd.f32 %v3901, %v3933
        %v3966 = vadd.f32 %v3902, %v3934
        %v3967 = vadd.f32 %v3903, %v3935
        %v3968 = vadd.f32 %v3904, %v3936
        %v3969 = vadd.f32 %v3905, %v3937
        %v3970 = vadd.f32 %v3906, %v3938
        %v3971 = vadd.f32 %v3907, %v3939
        %v3972 = vadd.f32 %v3908, %v3940
        %v3973 = vadd.f32 %v3909, %v3941
        %v3974 = vadd.f32 %v3910, %v3942
        %v3975 = vadd.f32 %v3911, %v3943
        %v3976 = vadd.f32 %v3912, %v3944
        %v3977 = vadd.f32 %v3913, %v3945
        %v3978 = vadd.f32 %v3914, %v3946
        %v3979 = vadd.f32 %v3915, %v3947
        %v3980 = vadd.f32 %v3916, %v3948
        %v3981 = vadd.f32 %v3917, %v3949
        %v3982 = vadd.f32 %v3918, %v3950
        %v3983 = vadd.f32 %v3919, %v3951
        %v3984 = vadd.f32 %v3920, %v3952
        %3985 = vst [vmem:[%s439] sm:$0xff] %v3953
        %3986 = vst [vmem:[%s439 + $0x8] sm:$0xff] %v3954
        %3987 = vst [vmem:[%s439 + $0x10] sm:$0xff] %v3955
        %3988 = vst [vmem:[%s439 + $0x18] sm:$0xff] %v3956
        %3989 = vst [vmem:[%s439 + $0x20] sm:$0xff] %v3957
        %3990 = vst [vmem:[%s439 + $0x28] sm:$0xff] %v3958
        %3991 = vst [vmem:[%s439 + $0x30] sm:$0xff] %v3959
        %3992 = vst [vmem:[%s439 + $0x38] sm:$0xff] %v3960
        %3993 = vst [vmem:[%s439 + $0x40] sm:$0xff] %v3961
        %3994 = vst [vmem:[%s439 + $0x48] sm:$0xff] %v3962
        %3995 = vst [vmem:[%s439 + $0x50] sm:$0xff] %v3963
        %3996 = vst [vmem:[%s439 + $0x58] sm:$0xff] %v3964
        %3997 = vst [vmem:[%s439 + $0x60] sm:$0xff] %v3965
        %3998 = vst [vmem:[%s439 + $0x68] sm:$0xff] %v3966
        %3999 = vst [vmem:[%s439 + $0x70] sm:$0xff] %v3967
        %4000 = vst [vmem:[%s439 + $0x78] sm:$0xff] %v3968
        %4001 = vst [vmem:[%s439 + $0x80] sm:$0xff] %v3969
        %4002 = vst [vmem:[%s439 + $0x88] sm:$0xff] %v3970
        %4003 = vst [vmem:[%s439 + $0x90] sm:$0xff] %v3971
        %4004 = vst [vmem:[%s439 + $0x98] sm:$0xff] %v3972
        %4005 = vst [vmem:[%s439 + $0xa0] sm:$0xff] %v3973
        %4006 = vst [vmem:[%s439 + $0xa8] sm:$0xff] %v3974
        %4007 = vst [vmem:[%s439 + $0xb0] sm:$0xff] %v3975
        %4008 = vst [vmem:[%s439 + $0xb8] sm:$0xff] %v3976
        %4009 = vst [vmem:[%s439 + $0xc0] sm:$0xff] %v3977
        %4010 = vst [vmem:[%s439 + $0xc8] sm:$0xff] %v3978
        %4011 = vst [vmem:[%s439 + $0xd0] sm:$0xff] %v3979
        %4012 = vst [vmem:[%s439 + $0xd8] sm:$0xff] %v3980
        %4013 = vst [vmem:[%s439 + $0xe0] sm:$0xff] %v3981
        %4014 = vst [vmem:[%s439 + $0xe8] sm:$0xff] %v3982
        %4015 = vst [vmem:[%s439 + $0xf0] sm:$0xff] %v3983
        %4016 = vst [vmem:[%s439 + $0xf8] sm:$0xff] %v3984
        %s4017 = sand.u32 %s218, 1
        %s4018 = scalar_lea.sflag [#allocation5], %s4017
        %s4019 = sand.u32 %s218, 1
        %s4020 = smul.addr %s4019, 256
        %s4021 = scalar_lea.vmem [#allocation12], %s4020
        // Predicated region
        $region73: #{tpu_custom_call.1} parent=47 // pred_check
          %p4022 = pneg %p228
        $region74: #{tpu_custom_call.1} parent=47 // pred_check_branch
          %4024 = sbr.rel (%p4022) target = $region76
        $region75: #{tpu_custom_call.1} parent=47 // pred_region
          %s4025 = smul.u32 16, %s33
          %4027 = vsyncadd %s4018, 0
          %s4028 = smul.addr %s4025, 2
          %s4029 = smul.addr %s32, 32
          %s4030 = sadd.s32 %s4028, %s4029
          %s4031 = smul.addr %s4030, 8
          %s4032 = scalar_lea.hbm %s7, %s4031
          %s4033 = sshll.u32 %s4021, 4
          %s4034 = int_to_ptr.vmem [resolvable:$true] %s4033
          %s4035 = sshll.u32 %s4032, 4
          %s4036 = int_to_ptr.hbm [resolvable:$true] %s4035
          %4041 = dma.vmem_to_hbm [thread:$0]  %s4034, 4096, %s4036, %s4018, 128, 128, 8
        $region76: #{tpu_custom_call.1} parent=47 // pred_fallthru
          _
      $region48: #{tpu_custom_call.1} parent=5 // pred_fallthru
        _
      %p4042 = scmp.le.s32.totalorder 2, %s23
      // Predicated region
      $region77: #{tpu_custom_call.1} parent=5 // pred_check
        %p4043 = pneg %p4042
      $region78: #{tpu_custom_call.1} parent=5 // pred_check_branch
        %4045 = sbr.rel (%p4043) target = $region80
      $region79: #{tpu_custom_call.1} parent=5 // pred_region
        %s4046 = ssub.s32 %s23, 2
        // Predicated region
        $region81: #{tpu_custom_call.1} parent=79 // pred_check
          %p4047 = pneg %p234
        $region82: #{tpu_custom_call.1} parent=79 // pred_check_branch
          %4049 = sbr.rel (%p4047) target = $region84
        $region83: #{tpu_custom_call.1} parent=79 // pred_region
          %s4050 = sand.u32 %s219, 1
          %s4051 = scalar_lea.sflag [#allocation5], %s4050
          %s4052 = sand.u32 %s219, 1
          %s4053 = smul.addr %s4052, 256
          %s4054 = scalar_lea.vmem [#allocation12], %s4053
          %4056 = dma.done %s4051, 4096
        $region84: #{tpu_custom_call.1} parent=79 // pred_fallthru
          _
      $region80: #{tpu_custom_call.1} parent=5 // pred_fallthru
        _
    $region6: #{tpu_custom_call.1} parent=1 // loop_footer
      %s27 = sadd.s32 1, %s23
    $region7: #{tpu_custom_call.1} parent=1 // loop_footer_branch
      %22 = sbr.rel target = $region3
    $region8: #{tpu_custom_call.1} parent=1 // loop_exit
      _
    %4057 = vsyncpa [#allocation4], 1
    %s4058 = scalar_lea.sflag [#allocation4], 1
    %4059 = vsyncpa %s4058, 1
    %4060 = vsyncpa [#allocation7], 1
    %s4061 = scalar_lea.sflag [#allocation7], 1
    %4062 = vsyncpa %s4061, 1
    %4063 = vsyncpa [#allocation10], 1
    %4064 = vsyncpa [#allocation5], 1
    %s4065 = scalar_lea.sflag [#allocation5], 1
    %4066 = vsyncpa %s4065, 1

</llo_original>
